<compile_context>
chip_gen: v6e
topology: v6e:2x2x1
jax: 0.10.0
libtpu: 0.0.40
codegen_flags: <defaults>
</compile_context>

<pallas_src>
import functools

import numpy as np
import jax
import jax.numpy as jnp
from jax.experimental import pallas as pl
from jax.experimental.pallas import tpu as pltpu


# ----------------------------------------------------------------------------
# Tiny constant-matrix builders (weight-independent ones are NumPy -> jit constants)
# ----------------------------------------------------------------------------
def _interp_matrix(n_in, n_out):
    """Bilinear interpolation matrix, torch Upsample(align_corners=True) semantics."""
    if n_in == 1:
        return np.ones((n_out, 1), np.float32)
    idx = np.arange(n_out, dtype=np.float64) * (n_in - 1) / (n_out - 1)
    lo = np.clip(np.floor(idx).astype(np.int64), 0, n_in - 2)
    frac = idx - lo
    m = np.zeros((n_out, n_in), np.float64)
    m[np.arange(n_out), lo] += 1.0 - frac
    m[np.arange(n_out), lo + 1] += frac
    return m.astype(np.float32)


def _conv_sel(n_in, n_out, k, s, p):
    """S[t, o, i] = 1  iff  i == s*o + t - p   (Conv2d tap selection, zero padding)."""
    S = np.zeros((k, n_out, n_in), np.float32)
    for t in range(k):
        for o in range(n_out):
            i = s * o + t - p
            if 0 <= i < n_in:
                S[t, o, i] = 1.0
    return S


def _tconv_sel(n_in, n_out, k, s, p):
    """S[t, o, i] = 1  iff  o == s*i + t - p   (ConvTranspose2d tap selection)."""
    S = np.zeros((k, n_out, n_in), np.float32)
    for t in range(k):
        for i in range(n_in):
            o = s * i + t - p
            if 0 <= o < n_out:
                S[t, o, i] = 1.0
    return S


def _right_from_sel(S, N):
    """(k, Wo, Wi) selection -> per-tap right matrices (k, N*Wi, N*Wo), block-diag over batch."""
    k, Wo, Wi = S.shape
    R = np.zeros((k, N * Wi, N * Wo), np.float32)
    for t in range(k):
        for n in range(N):
            R[t, n * Wi:(n + 1) * Wi, n * Wo:(n + 1) * Wo] = S[t].T
    return R


def _conv_layer_ops(w, N, Cin, H, Cout, k, s, p, upsample):
    """Per-tap Q (k, Cout*Ho, Cin*H_contract) [jnp] and R (k, N*H, N*Ho) [np] for a Conv2d,
    optionally with a fused x2 bilinear upsample (align_corners=True) in front."""
    Hin = 2 * H if upsample else H
    Ho = (Hin + 2 * p - k) // s + 1
    SH = _conv_sel(Hin, Ho, k, s, p)                       # (k, Ho, Hin)
    R = _right_from_sel(SH, N)                             # (k, N*Hin, N*Ho)
    Q = jnp.einsum("ocij,iah->joach", w.astype(jnp.float32), jnp.asarray(SH))
    Q = Q.reshape(k, Cout * Ho, Cin * Hin)
    if upsample:                                           # fold the upsample into Q and R
        L = _interp_matrix(H, Hin)                         # (Hin, H)
        Q = jnp.einsum("kab,bc->kac", Q,
                       jnp.asarray(np.kron(np.eye(Cin, dtype=np.float32), L)))
        R = np.einsum("ab,kbc->kac",
                      np.kron(np.eye(N, dtype=np.float32), L.T), R)
    return Q, R, Ho


def _tconv_layer_ops(wT, N, Cin, H, Cout, k, s, p):
    """ConvTranspose2d(k, s, p); torch weight layout (Cin, Cout, kh, kw)."""
    Ho = (H - 1) * s - 2 * p + k
    SH = _tconv_sel(H, Ho, k, s, p)                        # (k, Ho, H)
    R = _right_from_sel(SH, N)                             # (k, N*H, N*Ho)
    Q = jnp.einsum("coij,iah->joach", wT.astype(jnp.float32), jnp.asarray(SH))
    Q = Q.reshape(k, Cout * Ho, Cin * H)
    return Q, R, Ho


# ----------------------------------------------------------------------------
# The single fused Pallas kernel
# ----------------------------------------------------------------------------
def _fused_autoencoder_kernel(plan, a_ref, q_ref, r_ref, bavg_ref, vec_ref,
                              out_ref, p_ref):
    """Whole Autoencoder forward.  Activation layout A[c*H + h, n*W + w] end-to-end;
    the plan carries only static Python offsets/sizes into the packed constant slabs."""
    a = a_ref[...]
    for L in plan:
        # blockUNet order: activation first (layer1 has none).
        if L["act"] == "leaky":
            a = jnp.where(a > 0, a, 0.2 * a)
        elif L["act"] == "relu":
            a = jnp.maximum(a, 0.0)

        k, ra, rc = L["k"], L["rows_a"], L["rcols"]
        # ---- stage 1: k independent width-tap matmuls, row-stacked into VMEM scratch ----
        if k == 1:
            pstack = jnp.dot(a, r_ref[L["r_off"]:L["r_off"] + L["rpt"], 0:rc],
                             preferred_element_type=jnp.float32)
        else:
            for j in range(k):
                r0 = L["r_off"] + j * L["rpt"]
                p_ref[j * ra:(j + 1) * ra, 0:rc] = jnp.dot(
                    a, r_ref[r0:r0 + L["rpt"], 0:rc],
                    preferred_element_type=jnp.float32)
            pstack = p_ref[0:k * ra, 0:rc]

        # ---- stage 2: ONE fused (height taps x conv weights) matmul, K = k*rows_a ----
        q = q_ref[L["q_off"]:L["q_off"] + L["out_rows"], 0:k * ra]
        y = jnp.dot(q, pstack, preferred_element_type=jnp.float32)

        rows = L["out_rows"]
        if L["bn"]:
            # training-mode BatchNorm2d (batch stats, biased variance); one MXU op per layer:
            # lane sums of y and y*y (XLU), then bavg @ [s1 | s2] -> per-row mean and E[y^2].
            bavg = bavg_ref[L["b_off"]:L["b_off"] + rows, 0:rows]
            s1 = jnp.sum(y, axis=1, keepdims=True)
            s2 = jnp.sum(y * y, axis=1, keepdims=True)
            m = jnp.dot(bavg, jnp.concatenate([s1, s2], axis=1),
                        preferred_element_type=jnp.float32)
            mean = m[:, 0:1]
            var = jnp.maximum(m[:, 1:2] - mean * mean, 0.0)
            g = vec_ref[0:rows, L["g_col"]:L["g_col"] + 1]
            be = vec_ref[0:rows, L["be_col"]:L["be_col"] + 1]
            y = (y - mean) * (g * jax.lax.rsqrt(var + 1e-5)) + be
        else:
            y = y + vec_ref[0:rows, L["bias_col"]:L["bias_col"] + 1]
        a = y
    out_ref[...] = a


# ----------------------------------------------------------------------------
# Model definition / wrapper
# ----------------------------------------------------------------------------
# name, kind, Cin, Cout, kernel, stride, pad, activation, batchnorm
_LAYERS = (
    ("l1", "conv",    2,  4, 4, 2, 1, "none",  False),
    ("l2", "conv",    4,  4, 4, 2, 1, "leaky", True),
    ("l3", "conv",    4,  8, 4, 2, 1, "leaky", True),
    ("l4", "conv",    8,  8, 4, 2, 1, "leaky", True),
    ("l5", "conv",    8, 16, 2, 2, 0, "leaky", True),
    ("d5", "upconv", 16,  8, 1, 1, 0, "relu",  True),
    ("d4", "upconv",  8,  8, 3, 1, 1, "relu",  True),
    ("d3", "upconv",  8,  4, 3, 1, 1, "relu",  True),
    ("d2", "upconv",  4,  4, 3, 1, 1, "relu",  True),
    ("d1", "tconv",   4,  2, 4, 2, 1, "relu",  False),
)


def autoencoder_forward(x, params):
    N, C0, H0, W0 = x.shape
    assert H0 == W0, "square spatial input expected"
    # NCHW -> packed layout A[c*H + h, n*W + w]  (one-time boundary conversion)
    a0 = jnp.transpose(x, (1, 2, 0, 3)).reshape(C0 * H0, N * W0).astype(jnp.float32)

    plan, q_blocks, r_blocks, bavg_blocks, vcols = [], [], [], [], []
    q_off = r_off = b_off = vcol = 0
    H, rows_a = H0, C0 * H0
    for name, kind, Cin, Cout, k, s, pad, act, bn in _LAYERS:
        w = params[f"{name}_w"]
        if kind == "tconv":
            Q3, R3, Ho = _tconv_layer_ops(w, N, Cin, H, Cout, k, s, pad)
        else:
            Q3, R3, Ho = _conv_layer_ops(w, N, Cin, H, Cout, k, s, pad,
                                         upsample=(kind == "upconv"))
        out_rows, rcols, rpt = Cout * Ho, N * Ho, N * H
        # Q_cat: hstack over taps -> one big stage-2 operand per layer (weights folded in)
        q_blocks.append(jnp.transpose(Q3, (1, 0, 2)).reshape(out_rows, k * rows_a))
        # R: taps row-stacked (sublane aligned); pad each layer block to a multiple of 8 rows
        r_stack = R3.reshape(k * rpt, rcols)
        rpad = ((k * rpt + 7) // 8) * 8
        r_blocks.append(np.pad(r_stack, ((0, rpad - k * rpt), (0, 0))))

        entry = dict(act=act, bn=bn, k=k, rows_a=rows_a, rcols=rcols, rpt=rpt,
                     out_rows=out_rows, q_off=q_off, r_off=r_off)
        q_off += out_rows
        r_off += rpad
        if bn:
            # conv bias of BN layers is exactly cancelled by the batch-mean subtraction.
            cnt = float(Ho * N * Ho)
            bavg_blocks.append(np.kron(np.eye(Cout, dtype=np.float32),
                                       np.ones((Ho, Ho), np.float32)) / cnt)
            entry["b_off"] = b_off
            b_off += out_rows
            entry["g_col"] = vcol
            vcols.append(jnp.repeat(params[f"{name}_g"].astype(jnp.float32), Ho)); vcol += 1
            entry["be_col"] = vcol
            vcols.append(jnp.repeat(params[f"{name}_be"].astype(jnp.float32), Ho)); vcol += 1
        else:
            entry["bias_col"] = vcol
            vcols.append(jnp.repeat(params[f"{name}_b"].astype(jnp.float32), Ho)); vcol += 1
        plan.append(entry)
        H, rows_a = Ho, out_rows

    # Static slab widths
    QW = max(e["k"] * e["rows_a"] for e in plan)     # stage-2 contraction width (256)
    RW = max(e["rcols"] for e in plan)               # max output lane width (N*32)
    BW = max(e["out_rows"] for e in plan if e["bn"])
    VR = max(e["out_rows"] for e in plan)

    # Pack everything into 5 buffers -> ~5 prologue DMAs instead of ~35 small ones.
    q_slab = jnp.concatenate([jnp.pad(b, ((0, 0), (0, QW - b.shape[1])))
                              for b in q_blocks], axis=0)
    r_slab = jnp.asarray(np.concatenate([np.pad(b, ((0, 0), (0, RW - b.shape[1])))
                                         for b in r_blocks], axis=0))
    bavg_slab = jnp.asarray(np.concatenate([np.pad(b, ((0, 0), (0, BW - b.shape[1])))
                                            for b in bavg_blocks], axis=0))
    vec_slab = jnp.stack([jnp.pad(v, (0, VR - v.shape[0])) for v in vcols], axis=1)

    out_rows_f, out_cols_f = plan[-1]["out_rows"], plan[-1]["rcols"]
    Hf = H                                    # final spatial (== H0)
    Cf = out_rows_f // Hf

    out2 = pl.pallas_call(
        functools.partial(_fused_autoencoder_kernel, tuple(plan)),
        out_shape=jax.ShapeDtypeStruct((out_rows_f, out_cols_f), jnp.float32),
        grid=(1,),
        in_specs=[
            pl.BlockSpec(a0.shape, lambda i: (0, 0)),
            pl.BlockSpec(q_slab.shape, lambda i: (0, 0)),
            pl.BlockSpec(r_slab.shape, lambda i: (0, 0)),
            pl.BlockSpec(bavg_slab.shape, lambda i: (0, 0)),
            pl.BlockSpec(vec_slab.shape, lambda i: (0, 0)),
        ],
        out_specs=pl.BlockSpec((out_rows_f, out_cols_f), lambda i: (0, 0)),
        scratch_shapes=[pltpu.VMEM((QW, RW), jnp.float32)],   # row-stacked P_j per layer
        compiler_params=pltpu.CompilerParams(dimension_semantics=("arbitrary",)),
        # TODO(synk): v7x's second TensorCore could take half the batch, but training-mode BN
        # uses full-batch statistics, so a batch split needs a cross-core reduction first.
    )(a0, q_slab, r_slab, bavg_slab, vec_slab)

    # back to NCHW only at the model boundary
    return out2.reshape(Cf, Hf, N, Hf).transpose(2, 0, 1, 3)


# ----------------------------------------------------------------------------
# Parameters (torch-equivalent shapes / init)
# ----------------------------------------------------------------------------
def init_params(key):
    p = {}
    keys = iter(jax.random.split(key, 24))

    def nrm(shape, scale=0.1):
        return jax.random.normal(next(keys), shape, jnp.float32) * scale

    # Conv2d weights (Cout, Cin, k, k): encoder convs and decoder post-upsample convs
    conv_defs = {
        "l1": (4, 2, 4), "l2": (4, 4, 4), "l3": (8, 4, 4), "l4": (8, 8, 4),
        "l5": (16, 8, 2),
        "d5": (8, 16, 1), "d4": (8, 8, 3), "d3": (4, 8, 3), "d2": (4, 4, 3),
    }
    for name, (co, ci, k) in conv_defs.items():
        p[f"{name}_w"] = nrm((co, ci, k, k))
        p[f"{name}_b"] = nrm((co,))                      # unused when BN follows (cancelled)
        p[f"{name}_g"] = jnp.ones((co,), jnp.float32)    # BN gamma (torch default init)
        p[f"{name}_be"] = jnp.zeros((co,), jnp.float32)  # BN beta  (torch default init)
    # dlayer1: ConvTranspose2d(4, 2, 4, 2, 1) — torch weight layout (Cin, Cout, kh, kw)
    p["d1_w"] = nrm((4, 2, 4, 4))
    p["d1_b"] = nrm((2,))
    return p


# ----------------------------------------------------------------------------
if __name__ == "__main__":
    root = jax.random.PRNGKey(0)
    k_x, k_p = jax.random.split(root)

    # Batch 4 keeps the packed lane dimension (N*W) at 128 for input and output
    # (lane-dense stores); 32x32 spatial reaches the 1x1 bottleneck the module implies.
    x = jax.random.normal(k_x, (4, 2, 32, 32), jnp.float32)
    params = init_params(k_p)

    fwd = jax.jit(autoencoder_forward)
    y = jax.block_until_ready(fwd(x, params))

    assert y.shape == (4, 2, 32, 32), y.shape
    assert y.dtype == jnp.float32
    assert bool(jnp.all(jnp.isfinite(y)))
    print("KERNEL_OK")
</pallas_src>

<mosaic_0001>
module attributes {stable_mosaic.version = 11 : i64} {
  func.func @_fused_autoencoder_kernel(%arg0: i32, %arg1: memref<64x128xf32, #tpu.memory_space<vmem>>, %arg2: memref<368x256xf32, #tpu.memory_space<vmem>>, %arg3: memref<1408x128xf32, #tpu.memory_space<vmem>>, %arg4: memref<240x64xf32, #tpu.memory_space<vmem>>, %arg5: memref<64x18xf32, #tpu.memory_space<vmem>>, %arg6: memref<64x128xf32, #tpu.memory_space<vmem>>, %arg7: memref<256x128xf32, #tpu.memory_space<vmem>>) attributes {dimension_semantics = [#tpu.dimension_semantics<arbitrary>], iteration_bounds = array<i64: 1>, scalar_prefetch = 0 : i64, scratch_operands = 1 : i64, tpu.core_type = #tpu.core_type<tc>, window_params = [{pipeline_mode = #tpu.pipeline_mode<synchronous>, transform_indices = @transform_0, window_bounds = array<i64: 64, 128>}, {pipeline_mode = #tpu.pipeline_mode<synchronous>, transform_indices = @transform_1, window_bounds = array<i64: 368, 256>}, {pipeline_mode = #tpu.pipeline_mode<synchronous>, transform_indices = @transform_2, window_bounds = array<i64: 1408, 128>}, {pipeline_mode = #tpu.pipeline_mode<synchronous>, transform_indices = @transform_3, window_bounds = array<i64: 240, 64>}, {pipeline_mode = #tpu.pipeline_mode<synchronous>, transform_indices = @transform_4, window_bounds = array<i64: 64, 18>}, {pipeline_mode = #tpu.pipeline_mode<synchronous>, transform_indices = @transform_5, window_bounds = array<i64: 64, 128>}]} {
    %c0 = arith.constant 0 : index
    %c0_0 = arith.constant 0 : index
    %0 = vector.load %arg1[%c0, %c0_0] : memref<64x128xf32, #tpu.memory_space<vmem>>, vector<64x128xf32>
    %c0_1 = arith.constant 0 : index
    %c0_2 = arith.constant 0 : index
    %1 = vector.load %arg3[%c0_1, %c0_2] : memref<1408x128xf32, #tpu.memory_space<vmem>>, vector<128x64xf32>
    %cst = arith.constant dense<0.000000e+00> : vector<64x64xf32>
    %2 = tpu.matmul %0, %1, %cst {dimension_numbers = #tpu.dot_dimension_numbers<[1], [0], [0], [1], [0, 0, 1, 1], [], []>} : vector<64x128xf32>, vector<128x64xf32>, vector<64x64xf32> -> vector<64x64xf32>
    %c0_3 = arith.constant 0 : index
    %c0_4 = arith.constant 0 : index
    %3 = vector.load %arg7[%c0_3, %c0_4] : memref<256x128xf32, #tpu.memory_space<vmem>>, vector<64x64xf32>
    tpu.vector_store %arg7[%c0_3, %c0_4], %2 {strides = array<i32>} : memref<256x128xf32, #tpu.memory_space<vmem>>, vector<64x64xf32>,
    %c128 = arith.constant 128 : index
    %c0_5 = arith.constant 0 : index
    %4 = vector.load %arg3[%c128, %c0_5] : memref<1408x128xf32, #tpu.memory_space<vmem>>, vector<128x64xf32>
    %cst_6 = arith.constant dense<0.000000e+00> : vector<64x64xf32>
    %5 = tpu.matmul %0, %4, %cst_6 {dimension_numbers = #tpu.dot_dimension_numbers<[1], [0], [0], [1], [0, 0, 1, 1], [], []>} : vector<64x128xf32>, vector<128x64xf32>, vector<64x64xf32> -> vector<64x64xf32>
    %c64 = arith.constant 64 : index
    %c0_7 = arith.constant 0 : index
    %6 = vector.load %arg7[%c64, %c0_7] : memref<256x128xf32, #tpu.memory_space<vmem>>, vector<64x64xf32>
    tpu.vector_store %arg7[%c64, %c0_7], %5 {strides = array<i32>} : memref<256x128xf32, #tpu.memory_space<vmem>>, vector<64x64xf32>,
    %c256 = arith.constant 256 : index
    %c0_8 = arith.constant 0 : index
    %7 = vector.load %arg3[%c256, %c0_8] : memref<1408x128xf32, #tpu.memory_space<vmem>>, vector<128x64xf32>
    %cst_9 = arith.constant dense<0.000000e+00> : vector<64x64xf32>
    %8 = tpu.matmul %0, %7, %cst_9 {dimension_numbers = #tpu.dot_dimension_numbers<[1], [0], [0], [1], [0, 0, 1, 1], [], []>} : vector<64x128xf32>, vector<128x64xf32>, vector<64x64xf32> -> vector<64x64xf32>
    %c128_10 = arith.constant 128 : index
    %c0_11 = arith.constant 0 : index
    %9 = vector.load %arg7[%c128_10, %c0_11] : memref<256x128xf32, #tpu.memory_space<vmem>>, vector<64x64xf32>
    tpu.vector_store %arg7[%c128_10, %c0_11], %8 {strides = array<i32>} : memref<256x128xf32, #tpu.memory_space<vmem>>, vector<64x64xf32>,
    %c384 = arith.constant 384 : index
    %c0_12 = arith.constant 0 : index
    %10 = vector.load %arg3[%c384, %c0_12] : memref<1408x128xf32, #tpu.memory_space<vmem>>, vector<128x64xf32>
    %cst_13 = arith.constant dense<0.000000e+00> : vector<64x64xf32>
    %11 = tpu.matmul %0, %10, %cst_13 {dimension_numbers = #tpu.dot_dimension_numbers<[1], [0], [0], [1], [0, 0, 1, 1], [], []>} : vector<64x128xf32>, vector<128x64xf32>, vector<64x64xf32> -> vector<64x64xf32>
    %c192 = arith.constant 192 : index
    %c0_14 = arith.constant 0 : index
    %12 = vector.load %arg7[%c192, %c0_14] : memref<256x128xf32, #tpu.memory_space<vmem>>, vector<64x64xf32>
    tpu.vector_store %arg7[%c192, %c0_14], %11 {strides = array<i32>} : memref<256x128xf32, #tpu.memory_space<vmem>>, vector<64x64xf32>,
    %c0_15 = arith.constant 0 : index
    %c0_16 = arith.constant 0 : index
    %13 = vector.load %arg7[%c0_15, %c0_16] : memref<256x128xf32, #tpu.memory_space<vmem>>, vector<256x64xf32>
    %c0_17 = arith.constant 0 : index
    %c0_18 = arith.constant 0 : index
    %14 = vector.load %arg2[%c0_17, %c0_18] : memref<368x256xf32, #tpu.memory_space<vmem>>, vector<64x256xf32>
    %cst_19 = arith.constant dense<0.000000e+00> : vector<64x64xf32>
    %15 = tpu.matmul %14, %13, %cst_19 {dimension_numbers = #tpu.dot_dimension_numbers<[1], [0], [0], [1], [0, 0, 1, 1], [], []>} : vector<64x256xf32>, vector<256x64xf32>, vector<64x64xf32> -> vector<64x64xf32>
    %c0_20 = arith.constant 0 : index
    %c0_21 = arith.constant 0 : index
    %16 = vector.load %arg5[%c0_20, %c0_21] : memref<64x18xf32, #tpu.memory_space<vmem>>, vector<64x1xf32>
    %17 = vector.broadcast %16 : vector<64x1xf32> to vector<64x64xf32>
    %18 = arith.addf %15, %17 : vector<64x64xf32>
    %cst_22 = arith.constant 0.000000e+00 : f32
    %19 = vector.broadcast %cst_22 : f32 to vector<64x64xf32>
    %20 = arith.cmpf ogt, %18, %19 : vector<64x64xf32>
    %cst_23 = arith.constant 2.000000e-01 : f32
    %21 = vector.broadcast %cst_23 : f32 to vector<64x64xf32>
    %22 = arith.mulf %21, %18 : vector<64x64xf32>
    %23 = arith.select %20, %18, %22 : vector<64x64xi1>, vector<64x64xf32>
    %c512 = arith.constant 512 : index
    %c0_24 = arith.constant 0 : index
    %24 = vector.load %arg3[%c512, %c0_24] : memref<1408x128xf32, #tpu.memory_space<vmem>>, vector<64x32xf32>
    %cst_25 = arith.constant dense<0.000000e+00> : vector<64x32xf32>
    %25 = tpu.matmul %23, %24, %cst_25 {dimension_numbers = #tpu.dot_dimension_numbers<[1], [0], [0], [1], [0, 0, 1, 1], [], []>} : vector<64x64xf32>, vector<64x32xf32>, vector<64x32xf32> -> vector<64x32xf32>
    %c0_26 = arith.constant 0 : index
    %c0_27 = arith.constant 0 : index
    %26 = vector.load %arg7[%c0_26, %c0_27] : memref<256x128xf32, #tpu.memory_space<vmem>>, vector<64x32xf32>
    tpu.vector_store %arg7[%c0_26, %c0_27], %25 {strides = array<i32>} : memref<256x128xf32, #tpu.memory_space<vmem>>, vector<64x32xf32>,
    %c576 = arith.constant 576 : index
    %c0_28 = arith.constant 0 : index
    %27 = vector.load %arg3[%c576, %c0_28] : memref<1408x128xf32, #tpu.memory_space<vmem>>, vector<64x32xf32>
    %cst_29 = arith.constant dense<0.000000e+00> : vector<64x32xf32>
    %28 = tpu.matmul %23, %27, %cst_29 {dimension_numbers = #tpu.dot_dimension_numbers<[1], [0], [0], [1], [0, 0, 1, 1], [], []>} : vector<64x64xf32>, vector<64x32xf32>, vector<64x32xf32> -> vector<64x32xf32>
    %c64_30 = arith.constant 64 : index
    %c0_31 = arith.constant 0 : index
    %29 = vector.load %arg7[%c64_30, %c0_31] : memref<256x128xf32, #tpu.memory_space<vmem>>, vector<64x32xf32>
    tpu.vector_store %arg7[%c64_30, %c0_31], %28 {strides = array<i32>} : memref<256x128xf32, #tpu.memory_space<vmem>>, vector<64x32xf32>,
    %c640 = arith.constant 640 : index
    %c0_32 = arith.constant 0 : index
    %30 = vector.load %arg3[%c640, %c0_32] : memref<1408x128xf32, #tpu.memory_space<vmem>>, vector<64x32xf32>
    %cst_33 = arith.constant dense<0.000000e+00> : vector<64x32xf32>
    %31 = tpu.matmul %23, %30, %cst_33 {dimension_numbers = #tpu.dot_dimension_numbers<[1], [0], [0], [1], [0, 0, 1, 1], [], []>} : vector<64x64xf32>, vector<64x32xf32>, vector<64x32xf32> -> vector<64x32xf32>
    %c128_34 = arith.constant 128 : index
    %c0_35 = arith.constant 0 : index
    %32 = vector.load %arg7[%c128_34, %c0_35] : memref<256x128xf32, #tpu.memory_space<vmem>>, vector<64x32xf32>
    tpu.vector_store %arg7[%c128_34, %c0_35], %31 {strides = array<i32>} : memref<256x128xf32, #tpu.memory_space<vmem>>, vector<64x32xf32>,
    %c704 = arith.constant 704 : index
    %c0_36 = arith.constant 0 : index
    %33 = vector.load %arg3[%c704, %c0_36] : memref<1408x128xf32, #tpu.memory_space<vmem>>, vector<64x32xf32>
    %cst_37 = arith.constant dense<0.000000e+00> : vector<64x32xf32>
    %34 = tpu.matmul %23, %33, %cst_37 {dimension_numbers = #tpu.dot_dimension_numbers<[1], [0], [0], [1], [0, 0, 1, 1], [], []>} : vector<64x64xf32>, vector<64x32xf32>, vector<64x32xf32> -> vector<64x32xf32>
    %c192_38 = arith.constant 192 : index
    %c0_39 = arith.constant 0 : index
    %35 = vector.load %arg7[%c192_38, %c0_39] : memref<256x128xf32, #tpu.memory_space<vmem>>, vector<64x32xf32>
    tpu.vector_store %arg7[%c192_38, %c0_39], %34 {strides = array<i32>} : memref<256x128xf32, #tpu.memory_space<vmem>>, vector<64x32xf32>,
    %c0_40 = arith.constant 0 : index
    %c0_41 = arith.constant 0 : index
    %36 = vector.load %arg7[%c0_40, %c0_41] : memref<256x128xf32, #tpu.memory_space<vmem>>, vector<256x32xf32>
    %c64_42 = arith.constant 64 : index
    %c0_43 = arith.constant 0 : index
    %37 = vector.load %arg2[%c64_42, %c0_43] : memref<368x256xf32, #tpu.memory_space<vmem>>, vector<32x256xf32>
    %cst_44 = arith.constant dense<0.000000e+00> : vector<32x32xf32>
    %38 = tpu.matmul %37, %36, %cst_44 {dimension_numbers = #tpu.dot_dimension_numbers<[1], [0], [0], [1], [0, 0, 1, 1], [], []>} : vector<32x256xf32>, vector<256x32xf32>, vector<32x32xf32> -> vector<32x32xf32>
    %c0_45 = arith.constant 0 : index
    %c0_46 = arith.constant 0 : index
    %39 = vector.load %arg4[%c0_45, %c0_46] : memref<240x64xf32, #tpu.memory_space<vmem>>, vector<32x32xf32>
    %cst_47 = arith.constant dense<0.000000e+00> : vector<32xf32>
    %40 = vector.multi_reduction <add>, %38, %cst_47 [1] : vector<32x32xf32> to vector<32xf32>
    %41 = vector.shape_cast %40 : vector<32xf32> to vector<32x1xf32>
    %42 = arith.mulf %38, %38 : vector<32x32xf32>
    %cst_48 = arith.constant dense<0.000000e+00> : vector<32xf32>
    %43 = vector.multi_reduction <add>, %42, %cst_48 [1] : vector<32x32xf32> to vector<32xf32>
    %44 = vector.shape_cast %43 : vector<32xf32> to vector<32x1xf32>
    %45 = tpu.concatenate %41, %44 in 1 : vector<32x1xf32>, vector<32x1xf32> -> vector<32x2xf32>
    %cst_49 = arith.constant dense<0.000000e+00> : vector<32x2xf32>
    %46 = tpu.matmul %39, %45, %cst_49 {dimension_numbers = #tpu.dot_dimension_numbers<[1], [0], [0], [1], [0, 0, 1, 1], [], []>} : vector<32x32xf32>, vector<32x2xf32>, vector<32x2xf32> -> vector<32x2xf32>
    %47 = vector.extract_strided_slice %46 {offsets = [0, 0], sizes = [32, 1], strides = [1, 1]} : vector<32x2xf32> to vector<32x1xf32>
    %48 = vector.extract_strided_slice %46 {offsets = [0, 1], sizes = [32, 1], strides = [1, 1]} : vector<32x2xf32> to vector<32x1xf32>
    %49 = arith.mulf %47, %47 : vector<32x1xf32>
    %50 = arith.subf %48, %49 : vector<32x1xf32>
    %cst_50 = arith.constant 0.000000e+00 : f32
    %51 = vector.broadcast %cst_50 : f32 to vector<32x1xf32>
    %52 = arith.maximumf %50, %51 : vector<32x1xf32>
    %c0_51 = arith.constant 0 : index
    %c1 = arith.constant 1 : index
    %53 = vector.load %arg5[%c0_51, %c1] : memref<64x18xf32, #tpu.memory_space<vmem>>, vector<32x1xf32>
    %c0_52 = arith.constant 0 : index
    %c2 = arith.constant 2 : index
    %54 = vector.load %arg5[%c0_52, %c2] : memref<64x18xf32, #tpu.memory_space<vmem>>, vector<32x1xf32>
    %55 = vector.broadcast %47 : vector<32x1xf32> to vector<32x32xf32>
    %56 = arith.subf %38, %55 : vector<32x32xf32>
    %cst_53 = arith.constant 9.99999974E-6 : f32
    %57 = vector.broadcast %cst_53 : f32 to vector<32x1xf32>
    %58 = arith.addf %52, %57 : vector<32x1xf32>
    %59 = math.rsqrt %58 : vector<32x1xf32>
    %60 = arith.mulf %53, %59 : vector<32x1xf32>
    %61 = vector.broadcast %60 : vector<32x1xf32> to vector<32x32xf32>
    %62 = arith.mulf %56, %61 : vector<32x32xf32>
    %63 = vector.broadcast %54 : vector<32x1xf32> to vector<32x32xf32>
    %64 = arith.addf %62, %63 : vector<32x32xf32>
    %cst_54 = arith.constant 0.000000e+00 : f32
    %65 = vector.broadcast %cst_54 : f32 to vector<32x32xf32>
    %66 = arith.cmpf ogt, %64, %65 : vector<32x32xf32>
    %cst_55 = arith.constant 2.000000e-01 : f32
    %67 = vector.broadcast %cst_55 : f32 to vector<32x32xf32>
    %68 = arith.mulf %67, %64 : vector<32x32xf32>
    %69 = arith.select %66, %64, %68 : vector<32x32xi1>, vector<32x32xf32>
    %c768 = arith.constant 768 : index
    %c0_56 = arith.constant 0 : index
    %70 = vector.load %arg3[%c768, %c0_56] : memref<1408x128xf32, #tpu.memory_space<vmem>>, vector<32x16xf32>
    %cst_57 = arith.constant dense<0.000000e+00> : vector<32x16xf32>
    %71 = tpu.matmul %69, %70, %cst_57 {dimension_numbers = #tpu.dot_dimension_numbers<[1], [0], [0], [1], [0, 0, 1, 1], [], []>} : vector<32x32xf32>, vector<32x16xf32>, vector<32x16xf32> -> vector<32x16xf32>
    %c0_58 = arith.constant 0 : index
    %c0_59 = arith.constant 0 : index
    %72 = vector.load %arg7[%c0_58, %c0_59] : memref<256x128xf32, #tpu.memory_space<vmem>>, vector<32x16xf32>
    tpu.vector_store %arg7[%c0_58, %c0_59], %71 {strides = array<i32>} : memref<256x128xf32, #tpu.memory_space<vmem>>, vector<32x16xf32>,
    %c800 = arith.constant 800 : index
    %c0_60 = arith.constant 0 : index
    %73 = vector.load %arg3[%c800, %c0_60] : memref<1408x128xf32, #tpu.memory_space<vmem>>, vector<32x16xf32>
    %cst_61 = arith.constant dense<0.000000e+00> : vector<32x16xf32>
    %74 = tpu.matmul %69, %73, %cst_61 {dimension_numbers = #tpu.dot_dimension_numbers<[1], [0], [0], [1], [0, 0, 1, 1], [], []>} : vector<32x32xf32>, vector<32x16xf32>, vector<32x16xf32> -> vector<32x16xf32>
    %c32 = arith.constant 32 : index
    %c0_62 = arith.constant 0 : index
    %75 = vector.load %arg7[%c32, %c0_62] : memref<256x128xf32, #tpu.memory_space<vmem>>, vector<32x16xf32>
    tpu.vector_store %arg7[%c32, %c0_62], %74 {strides = array<i32>} : memref<256x128xf32, #tpu.memory_space<vmem>>, vector<32x16xf32>,
    %c832 = arith.constant 832 : index
    %c0_63 = arith.constant 0 : index
    %76 = vector.load %arg3[%c832, %c0_63] : memref<1408x128xf32, #tpu.memory_space<vmem>>, vector<32x16xf32>
    %cst_64 = arith.constant dense<0.000000e+00> : vector<32x16xf32>
    %77 = tpu.matmul %69, %76, %cst_64 {dimension_numbers = #tpu.dot_dimension_numbers<[1], [0], [0], [1], [0, 0, 1, 1], [], []>} : vector<32x32xf32>, vector<32x16xf32>, vector<32x16xf32> -> vector<32x16xf32>
    %c64_65 = arith.constant 64 : index
    %c0_66 = arith.constant 0 : index
    %78 = vector.load %arg7[%c64_65, %c0_66] : memref<256x128xf32, #tpu.memory_space<vmem>>, vector<32x16xf32>
    tpu.vector_store %arg7[%c64_65, %c0_66], %77 {strides = array<i32>} : memref<256x128xf32, #tpu.memory_space<vmem>>, vector<32x16xf32>,
    %c864 = arith.constant 864 : index
    %c0_67 = arith.constant 0 : index
    %79 = vector.load %arg3[%c864, %c0_67] : memref<1408x128xf32, #tpu.memory_space<vmem>>, vector<32x16xf32>
    %cst_68 = arith.constant dense<0.000000e+00> : vector<32x16xf32>
    %80 = tpu.matmul %69, %79, %cst_68 {dimension_numbers = #tpu.dot_dimension_numbers<[1], [0], [0], [1], [0, 0, 1, 1], [], []>} : vector<32x32xf32>, vector<32x16xf32>, vector<32x16xf32> -> vector<32x16xf32>
    %c96 = arith.constant 96 : index
    %c0_69 = arith.constant 0 : index
    %81 = vector.load %arg7[%c96, %c0_69] : memref<256x128xf32, #tpu.memory_space<vmem>>, vector<32x16xf32>
    tpu.vector_store %arg7[%c96, %c0_69], %80 {strides = array<i32>} : memref<256x128xf32, #tpu.memory_space<vmem>>, vector<32x16xf32>,
    %c0_70 = arith.constant 0 : index
    %c0_71 = arith.constant 0 : index
    %82 = vector.load %arg7[%c0_70, %c0_71] : memref<256x128xf32, #tpu.memory_space<vmem>>, vector<128x16xf32>
    %c96_72 = arith.constant 96 : index
    %c0_73 = arith.constant 0 : index
    %83 = vector.load %arg2[%c96_72, %c0_73] : memref<368x256xf32, #tpu.memory_space<vmem>>, vector<32x128xf32>
    %cst_74 = arith.constant dense<0.000000e+00> : vector<32x16xf32>
    %84 = tpu.matmul %83, %82, %cst_74 {dimension_numbers = #tpu.dot_dimension_numbers<[1], [0], [0], [1], [0, 0, 1, 1], [], []>} : vector<32x128xf32>, vector<128x16xf32>, vector<32x16xf32> -> vector<32x16xf32>
    %c32_75 = arith.constant 32 : index
    %c0_76 = arith.constant 0 : index
    %85 = vector.load %arg4[%c32_75, %c0_76] : memref<240x64xf32, #tpu.memory_space<vmem>>, vector<32x32xf32>
    %cst_77 = arith.constant dense<0.000000e+00> : vector<32xf32>
    %86 = vector.multi_reduction <add>, %84, %cst_77 [1] : vector<32x16xf32> to vector<32xf32>
    %87 = vector.shape_cast %86 : vector<32xf32> to vector<32x1xf32>
    %88 = arith.mulf %84, %84 : vector<32x16xf32>
    %cst_78 = arith.constant dense<0.000000e+00> : vector<32xf32>
    %89 = vector.multi_reduction <add>, %88, %cst_78 [1] : vector<32x16xf32> to vector<32xf32>
    %90 = vector.shape_cast %89 : vector<32xf32> to vector<32x1xf32>
    %91 = tpu.concatenate %87, %90 in 1 : vector<32x1xf32>, vector<32x1xf32> -> vector<32x2xf32>
    %cst_79 = arith.constant dense<0.000000e+00> : vector<32x2xf32>
    %92 = tpu.matmul %85, %91, %cst_79 {dimension_numbers = #tpu.dot_dimension_numbers<[1], [0], [0], [1], [0, 0, 1, 1], [], []>} : vector<32x32xf32>, vector<32x2xf32>, vector<32x2xf32> -> vector<32x2xf32>
    %93 = vector.extract_strided_slice %92 {offsets = [0, 0], sizes = [32, 1], strides = [1, 1]} : vector<32x2xf32> to vector<32x1xf32>
    %94 = vector.extract_strided_slice %92 {offsets = [0, 1], sizes = [32, 1], strides = [1, 1]} : vector<32x2xf32> to vector<32x1xf32>
    %95 = arith.mulf %93, %93 : vector<32x1xf32>
    %96 = arith.subf %94, %95 : vector<32x1xf32>
    %cst_80 = arith.constant 0.000000e+00 : f32
    %97 = vector.broadcast %cst_80 : f32 to vector<32x1xf32>
    %98 = arith.maximumf %96, %97 : vector<32x1xf32>
    %c0_81 = arith.constant 0 : index
    %c3 = arith.constant 3 : index
    %99 = vector.load %arg5[%c0_81, %c3] : memref<64x18xf32, #tpu.memory_space<vmem>>, vector<32x1xf32>
    %c0_82 = arith.constant 0 : index
    %c4 = arith.constant 4 : index
    %100 = vector.load %arg5[%c0_82, %c4] : memref<64x18xf32, #tpu.memory_space<vmem>>, vector<32x1xf32>
    %101 = vector.broadcast %93 : vector<32x1xf32> to vector<32x16xf32>
    %102 = arith.subf %84, %101 : vector<32x16xf32>
    %cst_83 = arith.constant 9.99999974E-6 : f32
    %103 = vector.broadcast %cst_83 : f32 to vector<32x1xf32>
    %104 = arith.addf %98, %103 : vector<32x1xf32>
    %105 = math.rsqrt %104 : vector<32x1xf32>
    %106 = arith.mulf %99, %105 : vector<32x1xf32>
    %107 = vector.broadcast %106 : vector<32x1xf32> to vector<32x16xf32>
    %108 = arith.mulf %102, %107 : vector<32x16xf32>
    %109 = vector.broadcast %100 : vector<32x1xf32> to vector<32x16xf32>
    %110 = arith.addf %108, %109 : vector<32x16xf32>
    %cst_84 = arith.constant 0.000000e+00 : f32
    %111 = vector.broadcast %cst_84 : f32 to vector<32x16xf32>
    %112 = arith.cmpf ogt, %110, %111 : vector<32x16xf32>
    %cst_85 = arith.constant 2.000000e-01 : f32
    %113 = vector.broadcast %cst_85 : f32 to vector<32x16xf32>
    %114 = arith.mulf %113, %110 : vector<32x16xf32>
    %115 = arith.select %112, %110, %114 : vector<32x16xi1>, vector<32x16xf32>
    %c896 = arith.constant 896 : index
    %c0_86 = arith.constant 0 : index
    %116 = vector.load %arg3[%c896, %c0_86] : memref<1408x128xf32, #tpu.memory_space<vmem>>, vector<16x8xf32>
    %cst_87 = arith.constant dense<0.000000e+00> : vector<32x8xf32>
    %117 = tpu.matmul %115, %116, %cst_87 {dimension_numbers = #tpu.dot_dimension_numbers<[1], [0], [0], [1], [0, 0, 1, 1], [], []>} : vector<32x16xf32>, vector<16x8xf32>, vector<32x8xf32> -> vector<32x8xf32>
    %c0_88 = arith.constant 0 : index
    %c0_89 = arith.constant 0 : index
    %118 = vector.load %arg7[%c0_88, %c0_89] : memref<256x128xf32, #tpu.memory_space<vmem>>, vector<32x8xf32>
    tpu.vector_store %arg7[%c0_88, %c0_89], %117 {strides = array<i32>} : memref<256x128xf32, #tpu.memory_space<vmem>>, vector<32x8xf32>,
    %c912 = arith.constant 912 : index
    %c0_90 = arith.constant 0 : index
    %119 = vector.load %arg3[%c912, %c0_90] : memref<1408x128xf32, #tpu.memory_space<vmem>>, vector<16x8xf32>
    %cst_91 = arith.constant dense<0.000000e+00> : vector<32x8xf32>
    %120 = tpu.matmul %115, %119, %cst_91 {dimension_numbers = #tpu.dot_dimension_numbers<[1], [0], [0], [1], [0, 0, 1, 1], [], []>} : vector<32x16xf32>, vector<16x8xf32>, vector<32x8xf32> -> vector<32x8xf32>
    %c32_92 = arith.constant 32 : index
    %c0_93 = arith.constant 0 : index
    %121 = vector.load %arg7[%c32_92, %c0_93] : memref<256x128xf32, #tpu.memory_space<vmem>>, vector<32x8xf32>
    tpu.vector_store %arg7[%c32_92, %c0_93], %120 {strides = array<i32>} : memref<256x128xf32, #tpu.memory_space<vmem>>, vector<32x8xf32>,
    %c928 = arith.constant 928 : index
    %c0_94 = arith.constant 0 : index
    %122 = vector.load %arg3[%c928, %c0_94] : memref<1408x128xf32, #tpu.memory_space<vmem>>, vector<16x8xf32>
    %cst_95 = arith.constant dense<0.000000e+00> : vector<32x8xf32>
    %123 = tpu.matmul %115, %122, %cst_95 {dimension_numbers = #tpu.dot_dimension_numbers<[1], [0], [0], [1], [0, 0, 1, 1], [], []>} : vector<32x16xf32>, vector<16x8xf32>, vector<32x8xf32> -> vector<32x8xf32>
    %c64_96 = arith.constant 64 : index
    %c0_97 = arith.constant 0 : index
    %124 = vector.load %arg7[%c64_96, %c0_97] : memref<256x128xf32, #tpu.memory_space<vmem>>, vector<32x8xf32>
    tpu.vector_store %arg7[%c64_96, %c0_97], %123 {strides = array<i32>} : memref<256x128xf32, #tpu.memory_space<vmem>>, vector<32x8xf32>,
    %c944 = arith.constant 944 : index
    %c0_98 = arith.constant 0 : index
    %125 = vector.load %arg3[%c944, %c0_98] : memref<1408x128xf32, #tpu.memory_space<vmem>>, vector<16x8xf32>
    %cst_99 = arith.constant dense<0.000000e+00> : vector<32x8xf32>
    %126 = tpu.matmul %115, %125, %cst_99 {dimension_numbers = #tpu.dot_dimension_numbers<[1], [0], [0], [1], [0, 0, 1, 1], [], []>} : vector<32x16xf32>, vector<16x8xf32>, vector<32x8xf32> -> vector<32x8xf32>
    %c96_100 = arith.constant 96 : index
    %c0_101 = arith.constant 0 : index
    %127 = vector.load %arg7[%c96_100, %c0_101] : memref<256x128xf32, #tpu.memory_space<vmem>>, vector<32x8xf32>
    tpu.vector_store %arg7[%c96_100, %c0_101], %126 {strides = array<i32>} : memref<256x128xf32, #tpu.memory_space<vmem>>, vector<32x8xf32>,
    %c0_102 = arith.constant 0 : index
    %c0_103 = arith.constant 0 : index
    %128 = vector.load %arg7[%c0_102, %c0_103] : memref<256x128xf32, #tpu.memory_space<vmem>>, vector<128x8xf32>
    %c128_104 = arith.constant 128 : index
    %c0_105 = arith.constant 0 : index
    %129 = vector.load %arg2[%c128_104, %c0_105] : memref<368x256xf32, #tpu.memory_space<vmem>>, vector<16x128xf32>
    %cst_106 = arith.constant dense<0.000000e+00> : vector<16x8xf32>
    %130 = tpu.matmul %129, %128, %cst_106 {dimension_numbers = #tpu.dot_dimension_numbers<[1], [0], [0], [1], [0, 0, 1, 1], [], []>} : vector<16x128xf32>, vector<128x8xf32>, vector<16x8xf32> -> vector<16x8xf32>
    %c64_107 = arith.constant 64 : index
    %c0_108 = arith.constant 0 : index
    %131 = vector.load %arg4[%c64_107, %c0_108] : memref<240x64xf32, #tpu.memory_space<vmem>>, vector<16x16xf32>
    %cst_109 = arith.constant dense<0.000000e+00> : vector<16xf32>
    %132 = vector.multi_reduction <add>, %130, %cst_109 [1] : vector<16x8xf32> to vector<16xf32>
    %133 = vector.shape_cast %132 : vector<16xf32> to vector<16x1xf32>
    %134 = arith.mulf %130, %130 : vector<16x8xf32>
    %cst_110 = arith.constant dense<0.000000e+00> : vector<16xf32>
    %135 = vector.multi_reduction <add>, %134, %cst_110 [1] : vector<16x8xf32> to vector<16xf32>
    %136 = vector.shape_cast %135 : vector<16xf32> to vector<16x1xf32>
    %137 = tpu.concatenate %133, %136 in 1 : vector<16x1xf32>, vector<16x1xf32> -> vector<16x2xf32>
    %cst_111 = arith.constant dense<0.000000e+00> : vector<16x2xf32>
    %138 = tpu.matmul %131, %137, %cst_111 {dimension_numbers = #tpu.dot_dimension_numbers<[1], [0], [0], [1], [0, 0, 1, 1], [], []>} : vector<16x16xf32>, vector<16x2xf32>, vector<16x2xf32> -> vector<16x2xf32>
    %139 = vector.extract_strided_slice %138 {offsets = [0, 0], sizes = [16, 1], strides = [1, 1]} : vector<16x2xf32> to vector<16x1xf32>
    %140 = vector.extract_strided_slice %138 {offsets = [0, 1], sizes = [16, 1], strides = [1, 1]} : vector<16x2xf32> to vector<16x1xf32>
    %141 = arith.mulf %139, %139 : vector<16x1xf32>
    %142 = arith.subf %140, %141 : vector<16x1xf32>
    %cst_112 = arith.constant 0.000000e+00 : f32
    %143 = vector.broadcast %cst_112 : f32 to vector<16x1xf32>
    %144 = arith.maximumf %142, %143 : vector<16x1xf32>
    %c0_113 = arith.constant 0 : index
    %c5 = arith.constant 5 : index
    %145 = vector.load %arg5[%c0_113, %c5] : memref<64x18xf32, #tpu.memory_space<vmem>>, vector<16x1xf32>
    %c0_114 = arith.constant 0 : index
    %c6 = arith.constant 6 : index
    %146 = vector.load %arg5[%c0_114, %c6] : memref<64x18xf32, #tpu.memory_space<vmem>>, vector<16x1xf32>
    %147 = vector.broadcast %139 : vector<16x1xf32> to vector<16x8xf32>
    %148 = arith.subf %130, %147 : vector<16x8xf32>
    %cst_115 = arith.constant 9.99999974E-6 : f32
    %149 = vector.broadcast %cst_115 : f32 to vector<16x1xf32>
    %150 = arith.addf %144, %149 : vector<16x1xf32>
    %151 = math.rsqrt %150 : vector<16x1xf32>
    %152 = arith.mulf %145, %151 : vector<16x1xf32>
    %153 = vector.broadcast %152 : vector<16x1xf32> to vector<16x8xf32>
    %154 = arith.mulf %148, %153 : vector<16x8xf32>
    %155 = vector.broadcast %146 : vector<16x1xf32> to vector<16x8xf32>
    %156 = arith.addf %154, %155 : vector<16x8xf32>
    %cst_116 = arith.constant 0.000000e+00 : f32
    %157 = vector.broadcast %cst_116 : f32 to vector<16x8xf32>
    %158 = arith.cmpf ogt, %156, %157 : vector<16x8xf32>
    %cst_117 = arith.constant 2.000000e-01 : f32
    %159 = vector.broadcast %cst_117 : f32 to vector<16x8xf32>
    %160 = arith.mulf %159, %156 : vector<16x8xf32>
    %161 = arith.select %158, %156, %160 : vector<16x8xi1>, vector<16x8xf32>
    %c960 = arith.constant 960 : index
    %c0_118 = arith.constant 0 : index
    %162 = vector.load %arg3[%c960, %c0_118] : memref<1408x128xf32, #tpu.memory_space<vmem>>, vector<8x4xf32>
    %cst_119 = arith.constant dense<0.000000e+00> : vector<16x4xf32>
    %163 = tpu.matmul %161, %162, %cst_119 {dimension_numbers = #tpu.dot_dimension_numbers<[1], [0], [0], [1], [0, 0, 1, 1], [], []>} : vector<16x8xf32>, vector<8x4xf32>, vector<16x4xf32> -> vector<16x4xf32>
    %c0_120 = arith.constant 0 : index
    %c0_121 = arith.constant 0 : index
    %164 = vector.load %arg7[%c0_120, %c0_121] : memref<256x128xf32, #tpu.memory_space<vmem>>, vector<16x4xf32>
    tpu.vector_store %arg7[%c0_120, %c0_121], %163 {strides = array<i32>} : memref<256x128xf32, #tpu.memory_space<vmem>>, vector<16x4xf32>,
    %c968 = arith.constant 968 : index
    %c0_122 = arith.constant 0 : index
    %165 = vector.load %arg3[%c968, %c0_122] : memref<1408x128xf32, #tpu.memory_space<vmem>>, vector<8x4xf32>
    %cst_123 = arith.constant dense<0.000000e+00> : vector<16x4xf32>
    %166 = tpu.matmul %161, %165, %cst_123 {dimension_numbers = #tpu.dot_dimension_numbers<[1], [0], [0], [1], [0, 0, 1, 1], [], []>} : vector<16x8xf32>, vector<8x4xf32>, vector<16x4xf32> -> vector<16x4xf32>
    %c16 = arith.constant 16 : index
    %c0_124 = arith.constant 0 : index
    %167 = vector.load %arg7[%c16, %c0_124] : memref<256x128xf32, #tpu.memory_space<vmem>>, vector<16x4xf32>
    tpu.vector_store %arg7[%c16, %c0_124], %166 {strides = array<i32>} : memref<256x128xf32, #tpu.memory_space<vmem>>, vector<16x4xf32>,
    %c0_125 = arith.constant 0 : index
    %c0_126 = arith.constant 0 : index
    %168 = vector.load %arg7[%c0_125, %c0_126] : memref<256x128xf32, #tpu.memory_space<vmem>>, vector<32x4xf32>
    %c144 = arith.constant 144 : index
    %c0_127 = arith.constant 0 : index
    %169 = vector.load %arg2[%c144, %c0_127] : memref<368x256xf32, #tpu.memory_space<vmem>>, vector<16x32xf32>
    %cst_128 = arith.constant dense<0.000000e+00> : vector<16x4xf32>
    %170 = tpu.matmul %169, %168, %cst_128 {dimension_numbers = #tpu.dot_dimension_numbers<[1], [0], [0], [1], [0, 0, 1, 1], [], []>} : vector<16x32xf32>, vector<32x4xf32>, vector<16x4xf32> -> vector<16x4xf32>
    %c80 = arith.constant 80 : index
    %c0_129 = arith.constant 0 : index
    %171 = vector.load %arg4[%c80, %c0_129] : memref<240x64xf32, #tpu.memory_space<vmem>>, vector<16x16xf32>
    %cst_130 = arith.constant dense<0.000000e+00> : vector<16xf32>
    %172 = vector.multi_reduction <add>, %170, %cst_130 [1] : vector<16x4xf32> to vector<16xf32>
    %173 = vector.shape_cast %172 : vector<16xf32> to vector<16x1xf32>
    %174 = arith.mulf %170, %170 : vector<16x4xf32>
    %cst_131 = arith.constant dense<0.000000e+00> : vector<16xf32>
    %175 = vector.multi_reduction <add>, %174, %cst_131 [1] : vector<16x4xf32> to vector<16xf32>
    %176 = vector.shape_cast %175 : vector<16xf32> to vector<16x1xf32>
    %177 = tpu.concatenate %173, %176 in 1 : vector<16x1xf32>, vector<16x1xf32> -> vector<16x2xf32>
    %cst_132 = arith.constant dense<0.000000e+00> : vector<16x2xf32>
    %178 = tpu.matmul %171, %177, %cst_132 {dimension_numbers = #tpu.dot_dimension_numbers<[1], [0], [0], [1], [0, 0, 1, 1], [], []>} : vector<16x16xf32>, vector<16x2xf32>, vector<16x2xf32> -> vector<16x2xf32>
    %179 = vector.extract_strided_slice %178 {offsets = [0, 0], sizes = [16, 1], strides = [1, 1]} : vector<16x2xf32> to vector<16x1xf32>
    %180 = vector.extract_strided_slice %178 {offsets = [0, 1], sizes = [16, 1], strides = [1, 1]} : vector<16x2xf32> to vector<16x1xf32>
    %181 = arith.mulf %179, %179 : vector<16x1xf32>
    %182 = arith.subf %180, %181 : vector<16x1xf32>
    %cst_133 = arith.constant 0.000000e+00 : f32
    %183 = vector.broadcast %cst_133 : f32 to vector<16x1xf32>
    %184 = arith.maximumf %182, %183 : vector<16x1xf32>
    %c0_134 = arith.constant 0 : index
    %c7 = arith.constant 7 : index
    %185 = vector.load %arg5[%c0_134, %c7] : memref<64x18xf32, #tpu.memory_space<vmem>>, vector<16x1xf32>
    %c0_135 = arith.constant 0 : index
    %c8 = arith.constant 8 : index
    %186 = vector.load %arg5[%c0_135, %c8] : memref<64x18xf32, #tpu.memory_space<vmem>>, vector<16x1xf32>
    %187 = vector.broadcast %179 : vector<16x1xf32> to vector<16x4xf32>
    %188 = arith.subf %170, %187 : vector<16x4xf32>
    %cst_136 = arith.constant 9.99999974E-6 : f32
    %189 = vector.broadcast %cst_136 : f32 to vector<16x1xf32>
    %190 = arith.addf %184, %189 : vector<16x1xf32>
    %191 = math.rsqrt %190 : vector<16x1xf32>
    %192 = arith.mulf %185, %191 : vector<16x1xf32>
    %193 = vector.broadcast %192 : vector<16x1xf32> to vector<16x4xf32>
    %194 = arith.mulf %188, %193 : vector<16x4xf32>
    %195 = vector.broadcast %186 : vector<16x1xf32> to vector<16x4xf32>
    %196 = arith.addf %194, %195 : vector<16x4xf32>
    %cst_137 = arith.constant 0.000000e+00 : f32
    %197 = vector.broadcast %cst_137 : f32 to vector<16x4xf32>
    %198 = arith.maximumf %196, %197 : vector<16x4xf32>
    %c976 = arith.constant 976 : index
    %c0_138 = arith.constant 0 : index
    %199 = vector.load %arg3[%c976, %c0_138] : memref<1408x128xf32, #tpu.memory_space<vmem>>, vector<4x8xf32>
    %cst_139 = arith.constant dense<0.000000e+00> : vector<16x8xf32>
    %200 = tpu.matmul %198, %199, %cst_139 {dimension_numbers = #tpu.dot_dimension_numbers<[1], [0], [0], [1], [0, 0, 1, 1], [], []>} : vector<16x4xf32>, vector<4x8xf32>, vector<16x8xf32> -> vector<16x8xf32>
    %c160 = arith.constant 160 : index
    %c0_140 = arith.constant 0 : index
    %201 = vector.load %arg2[%c160, %c0_140] : memref<368x256xf32, #tpu.memory_space<vmem>>, vector<16x16xf32>
    %cst_141 = arith.constant dense<0.000000e+00> : vector<16x8xf32>
    %202 = tpu.matmul %201, %200, %cst_141 {dimension_numbers = #tpu.dot_dimension_numbers<[1], [0], [0], [1], [0, 0, 1, 1], [], []>} : vector<16x16xf32>, vector<16x8xf32>, vector<16x8xf32> -> vector<16x8xf32>
    %c96_142 = arith.constant 96 : index
    %c0_143 = arith.constant 0 : index
    %203 = vector.load %arg4[%c96_142, %c0_143] : memref<240x64xf32, #tpu.memory_space<vmem>>, vector<16x16xf32>
    %cst_144 = arith.constant dense<0.000000e+00> : vector<16xf32>
    %204 = vector.multi_reduction <add>, %202, %cst_144 [1] : vector<16x8xf32> to vector<16xf32>
    %205 = vector.shape_cast %204 : vector<16xf32> to vector<16x1xf32>
    %206 = arith.mulf %202, %202 : vector<16x8xf32>
    %cst_145 = arith.constant dense<0.000000e+00> : vector<16xf32>
    %207 = vector.multi_reduction <add>, %206, %cst_145 [1] : vector<16x8xf32> to vector<16xf32>
    %208 = vector.shape_cast %207 : vector<16xf32> to vector<16x1xf32>
    %209 = tpu.concatenate %205, %208 in 1 : vector<16x1xf32>, vector<16x1xf32> -> vector<16x2xf32>
    %cst_146 = arith.constant dense<0.000000e+00> : vector<16x2xf32>
    %210 = tpu.matmul %203, %209, %cst_146 {dimension_numbers = #tpu.dot_dimension_numbers<[1], [0], [0], [1], [0, 0, 1, 1], [], []>} : vector<16x16xf32>, vector<16x2xf32>, vector<16x2xf32> -> vector<16x2xf32>
    %211 = vector.extract_strided_slice %210 {offsets = [0, 0], sizes = [16, 1], strides = [1, 1]} : vector<16x2xf32> to vector<16x1xf32>
    %212 = vector.extract_strided_slice %210 {offsets = [0, 1], sizes = [16, 1], strides = [1, 1]} : vector<16x2xf32> to vector<16x1xf32>
    %213 = arith.mulf %211, %211 : vector<16x1xf32>
    %214 = arith.subf %212, %213 : vector<16x1xf32>
    %cst_147 = arith.constant 0.000000e+00 : f32
    %215 = vector.broadcast %cst_147 : f32 to vector<16x1xf32>
    %216 = arith.maximumf %214, %215 : vector<16x1xf32>
    %c0_148 = arith.constant 0 : index
    %c9 = arith.constant 9 : index
    %217 = vector.load %arg5[%c0_148, %c9] : memref<64x18xf32, #tpu.memory_space<vmem>>, vector<16x1xf32>
    %c0_149 = arith.constant 0 : index
    %c10 = arith.constant 10 : index
    %218 = vector.load %arg5[%c0_149, %c10] : memref<64x18xf32, #tpu.memory_space<vmem>>, vector<16x1xf32>
    %219 = vector.broadcast %211 : vector<16x1xf32> to vector<16x8xf32>
    %220 = arith.subf %202, %219 : vector<16x8xf32>
    %cst_150 = arith.constant 9.99999974E-6 : f32
    %221 = vector.broadcast %cst_150 : f32 to vector<16x1xf32>
    %222 = arith.addf %216, %221 : vector<16x1xf32>
    %223 = math.rsqrt %222 : vector<16x1xf32>
    %224 = arith.mulf %217, %223 : vector<16x1xf32>
    %225 = vector.broadcast %224 : vector<16x1xf32> to vector<16x8xf32>
    %226 = arith.mulf %220, %225 : vector<16x8xf32>
    %227 = vector.broadcast %218 : vector<16x1xf32> to vector<16x8xf32>
    %228 = arith.addf %226, %227 : vector<16x8xf32>
    %cst_151 = arith.constant 0.000000e+00 : f32
    %229 = vector.broadcast %cst_151 : f32 to vector<16x8xf32>
    %230 = arith.maximumf %228, %229 : vector<16x8xf32>
    %c984 = arith.constant 984 : index
    %c0_152 = arith.constant 0 : index
    %231 = vector.load %arg3[%c984, %c0_152] : memref<1408x128xf32, #tpu.memory_space<vmem>>, vector<8x16xf32>
    %cst_153 = arith.constant dense<0.000000e+00> : vector<16x16xf32>
    %232 = tpu.matmul %230, %231, %cst_153 {dimension_numbers = #tpu.dot_dimension_numbers<[1], [0], [0], [1], [0, 0, 1, 1], [], []>} : vector<16x8xf32>, vector<8x16xf32>, vector<16x16xf32> -> vector<16x16xf32>
    %c0_154 = arith.constant 0 : index
    %c0_155 = arith.constant 0 : index
    %233 = vector.load %arg7[%c0_154, %c0_155] : memref<256x128xf32, #tpu.memory_space<vmem>>, vector<16x16xf32>
    tpu.vector_store %arg7[%c0_154, %c0_155], %232 {strides = array<i32>} : memref<256x128xf32, #tpu.memory_space<vmem>>, vector<16x16xf32>,
    %c992 = arith.constant 992 : index
    %c0_156 = arith.constant 0 : index
    %234 = vector.load %arg3[%c992, %c0_156] : memref<1408x128xf32, #tpu.memory_space<vmem>>, vector<8x16xf32>
    %cst_157 = arith.constant dense<0.000000e+00> : vector<16x16xf32>
    %235 = tpu.matmul %230, %234, %cst_157 {dimension_numbers = #tpu.dot_dimension_numbers<[1], [0], [0], [1], [0, 0, 1, 1], [], []>} : vector<16x8xf32>, vector<8x16xf32>, vector<16x16xf32> -> vector<16x16xf32>
    %c16_158 = arith.constant 16 : index
    %c0_159 = arith.constant 0 : index
    %236 = vector.load %arg7[%c16_158, %c0_159] : memref<256x128xf32, #tpu.memory_space<vmem>>, vector<16x16xf32>
    tpu.vector_store %arg7[%c16_158, %c0_159], %235 {strides = array<i32>} : memref<256x128xf32, #tpu.memory_space<vmem>>, vector<16x16xf32>,
    %c1000 = arith.constant 1000 : index
    %c0_160 = arith.constant 0 : index
    %237 = vector.load %arg3[%c1000, %c0_160] : memref<1408x128xf32, #tpu.memory_space<vmem>>, vector<8x16xf32>
    %cst_161 = arith.constant dense<0.000000e+00> : vector<16x16xf32>
    %238 = tpu.matmul %230, %237, %cst_161 {dimension_numbers = #tpu.dot_dimension_numbers<[1], [0], [0], [1], [0, 0, 1, 1], [], []>} : vector<16x8xf32>, vector<8x16xf32>, vector<16x16xf32> -> vector<16x16xf32>
    %c32_162 = arith.constant 32 : index
    %c0_163 = arith.constant 0 : index
    %239 = vector.load %arg7[%c32_162, %c0_163] : memref<256x128xf32, #tpu.memory_space<vmem>>, vector<16x16xf32>
    tpu.vector_store %arg7[%c32_162, %c0_163], %238 {strides = array<i32>} : memref<256x128xf32, #tpu.memory_space<vmem>>, vector<16x16xf32>,
    %c0_164 = arith.constant 0 : index
    %c0_165 = arith.constant 0 : index
    %240 = vector.load %arg7[%c0_164, %c0_165] : memref<256x128xf32, #tpu.memory_space<vmem>>, vector<48x16xf32>
    %c176 = arith.constant 176 : index
    %c0_166 = arith.constant 0 : index
    %241 = vector.load %arg2[%c176, %c0_166] : memref<368x256xf32, #tpu.memory_space<vmem>>, vector<32x48xf32>
    %cst_167 = arith.constant dense<0.000000e+00> : vector<32x16xf32>
    %242 = tpu.matmul %241, %240, %cst_167 {dimension_numbers = #tpu.dot_dimension_numbers<[1], [0], [0], [1], [0, 0, 1, 1], [], []>} : vector<32x48xf32>, vector<48x16xf32>, vector<32x16xf32> -> vector<32x16xf32>
    %c112 = arith.constant 112 : index
    %c0_168 = arith.constant 0 : index
    %243 = vector.load %arg4[%c112, %c0_168] : memref<240x64xf32, #tpu.memory_space<vmem>>, vector<32x32xf32>
    %cst_169 = arith.constant dense<0.000000e+00> : vector<32xf32>
    %244 = vector.multi_reduction <add>, %242, %cst_169 [1] : vector<32x16xf32> to vector<32xf32>
    %245 = vector.shape_cast %244 : vector<32xf32> to vector<32x1xf32>
    %246 = arith.mulf %242, %242 : vector<32x16xf32>
    %cst_170 = arith.constant dense<0.000000e+00> : vector<32xf32>
    %247 = vector.multi_reduction <add>, %246, %cst_170 [1] : vector<32x16xf32> to vector<32xf32>
    %248 = vector.shape_cast %247 : vector<32xf32> to vector<32x1xf32>
    %249 = tpu.concatenate %245, %248 in 1 : vector<32x1xf32>, vector<32x1xf32> -> vector<32x2xf32>
    %cst_171 = arith.constant dense<0.000000e+00> : vector<32x2xf32>
    %250 = tpu.matmul %243, %249, %cst_171 {dimension_numbers = #tpu.dot_dimension_numbers<[1], [0], [0], [1], [0, 0, 1, 1], [], []>} : vector<32x32xf32>, vector<32x2xf32>, vector<32x2xf32> -> vector<32x2xf32>
    %251 = vector.extract_strided_slice %250 {offsets = [0, 0], sizes = [32, 1], strides = [1, 1]} : vector<32x2xf32> to vector<32x1xf32>
    %252 = vector.extract_strided_slice %250 {offsets = [0, 1], sizes = [32, 1], strides = [1, 1]} : vector<32x2xf32> to vector<32x1xf32>
    %253 = arith.mulf %251, %251 : vector<32x1xf32>
    %254 = arith.subf %252, %253 : vector<32x1xf32>
    %cst_172 = arith.constant 0.000000e+00 : f32
    %255 = vector.broadcast %cst_172 : f32 to vector<32x1xf32>
    %256 = arith.maximumf %254, %255 : vector<32x1xf32>
    %c0_173 = arith.constant 0 : index
    %c11 = arith.constant 11 : index
    %257 = vector.load %arg5[%c0_173, %c11] : memref<64x18xf32, #tpu.memory_space<vmem>>, vector<32x1xf32>
    %c0_174 = arith.constant 0 : index
    %c12 = arith.constant 12 : index
    %258 = vector.load %arg5[%c0_174, %c12] : memref<64x18xf32, #tpu.memory_space<vmem>>, vector<32x1xf32>
    %259 = vector.broadcast %251 : vector<32x1xf32> to vector<32x16xf32>
    %260 = arith.subf %242, %259 : vector<32x16xf32>
    %cst_175 = arith.constant 9.99999974E-6 : f32
    %261 = vector.broadcast %cst_175 : f32 to vector<32x1xf32>
    %262 = arith.addf %256, %261 : vector<32x1xf32>
    %263 = math.rsqrt %262 : vector<32x1xf32>
    %264 = arith.mulf %257, %263 : vector<32x1xf32>
    %265 = vector.broadcast %264 : vector<32x1xf32> to vector<32x16xf32>
    %266 = arith.mulf %260, %265 : vector<32x16xf32>
    %267 = vector.broadcast %258 : vector<32x1xf32> to vector<32x16xf32>
    %268 = arith.addf %266, %267 : vector<32x16xf32>
    %cst_176 = arith.constant 0.000000e+00 : f32
    %269 = vector.broadcast %cst_176 : f32 to vector<32x16xf32>
    %270 = arith.maximumf %268, %269 : vector<32x16xf32>
    %c1008 = arith.constant 1008 : index
    %c0_177 = arith.constant 0 : index
    %271 = vector.load %arg3[%c1008, %c0_177] : memref<1408x128xf32, #tpu.memory_space<vmem>>, vector<16x32xf32>
    %cst_178 = arith.constant dense<0.000000e+00> : vector<32x32xf32>
    %272 = tpu.matmul %270, %271, %cst_178 {dimension_numbers = #tpu.dot_dimension_numbers<[1], [0], [0], [1], [0, 0, 1, 1], [], []>} : vector<32x16xf32>, vector<16x32xf32>, vector<32x32xf32> -> vector<32x32xf32>
    %c0_179 = arith.constant 0 : index
    %c0_180 = arith.constant 0 : index
    %273 = vector.load %arg7[%c0_179, %c0_180] : memref<256x128xf32, #tpu.memory_space<vmem>>, vector<32x32xf32>
    tpu.vector_store %arg7[%c0_179, %c0_180], %272 {strides = array<i32>} : memref<256x128xf32, #tpu.memory_space<vmem>>, vector<32x32xf32>,
    %c1024 = arith.constant 1024 : index
    %c0_181 = arith.constant 0 : index
    %274 = vector.load %arg3[%c1024, %c0_181] : memref<1408x128xf32, #tpu.memory_space<vmem>>, vector<16x32xf32>
    %cst_182 = arith.constant dense<0.000000e+00> : vector<32x32xf32>
    %275 = tpu.matmul %270, %274, %cst_182 {dimension_numbers = #tpu.dot_dimension_numbers<[1], [0], [0], [1], [0, 0, 1, 1], [], []>} : vector<32x16xf32>, vector<16x32xf32>, vector<32x32xf32> -> vector<32x32xf32>
    %c32_183 = arith.constant 32 : index
    %c0_184 = arith.constant 0 : index
    %276 = vector.load %arg7[%c32_183, %c0_184] : memref<256x128xf32, #tpu.memory_space<vmem>>, vector<32x32xf32>
    tpu.vector_store %arg7[%c32_183, %c0_184], %275 {strides = array<i32>} : memref<256x128xf32, #tpu.memory_space<vmem>>, vector<32x32xf32>,
    %c1040 = arith.constant 1040 : index
    %c0_185 = arith.constant 0 : index
    %277 = vector.load %arg3[%c1040, %c0_185] : memref<1408x128xf32, #tpu.memory_space<vmem>>, vector<16x32xf32>
    %cst_186 = arith.constant dense<0.000000e+00> : vector<32x32xf32>
    %278 = tpu.matmul %270, %277, %cst_186 {dimension_numbers = #tpu.dot_dimension_numbers<[1], [0], [0], [1], [0, 0, 1, 1], [], []>} : vector<32x16xf32>, vector<16x32xf32>, vector<32x32xf32> -> vector<32x32xf32>
    %c64_187 = arith.constant 64 : index
    %c0_188 = arith.constant 0 : index
    %279 = vector.load %arg7[%c64_187, %c0_188] : memref<256x128xf32, #tpu.memory_space<vmem>>, vector<32x32xf32>
    tpu.vector_store %arg7[%c64_187, %c0_188], %278 {strides = array<i32>} : memref<256x128xf32, #tpu.memory_space<vmem>>, vector<32x32xf32>,
    %c0_189 = arith.constant 0 : index
    %c0_190 = arith.constant 0 : index
    %280 = vector.load %arg7[%c0_189, %c0_190] : memref<256x128xf32, #tpu.memory_space<vmem>>, vector<96x32xf32>
    %c208 = arith.constant 208 : index
    %c0_191 = arith.constant 0 : index
    %281 = vector.load %arg2[%c208, %c0_191] : memref<368x256xf32, #tpu.memory_space<vmem>>, vector<32x96xf32>
    %cst_192 = arith.constant dense<0.000000e+00> : vector<32x32xf32>
    %282 = tpu.matmul %281, %280, %cst_192 {dimension_numbers = #tpu.dot_dimension_numbers<[1], [0], [0], [1], [0, 0, 1, 1], [], []>} : vector<32x96xf32>, vector<96x32xf32>, vector<32x32xf32> -> vector<32x32xf32>
    %c144_193 = arith.constant 144 : index
    %c0_194 = arith.constant 0 : index
    %283 = vector.load %arg4[%c144_193, %c0_194] : memref<240x64xf32, #tpu.memory_space<vmem>>, vector<32x32xf32>
    %cst_195 = arith.constant dense<0.000000e+00> : vector<32xf32>
    %284 = vector.multi_reduction <add>, %282, %cst_195 [1] : vector<32x32xf32> to vector<32xf32>
    %285 = vector.shape_cast %284 : vector<32xf32> to vector<32x1xf32>
    %286 = arith.mulf %282, %282 : vector<32x32xf32>
    %cst_196 = arith.constant dense<0.000000e+00> : vector<32xf32>
    %287 = vector.multi_reduction <add>, %286, %cst_196 [1] : vector<32x32xf32> to vector<32xf32>
    %288 = vector.shape_cast %287 : vector<32xf32> to vector<32x1xf32>
    %289 = tpu.concatenate %285, %288 in 1 : vector<32x1xf32>, vector<32x1xf32> -> vector<32x2xf32>
    %cst_197 = arith.constant dense<0.000000e+00> : vector<32x2xf32>
    %290 = tpu.matmul %283, %289, %cst_197 {dimension_numbers = #tpu.dot_dimension_numbers<[1], [0], [0], [1], [0, 0, 1, 1], [], []>} : vector<32x32xf32>, vector<32x2xf32>, vector<32x2xf32> -> vector<32x2xf32>
    %291 = vector.extract_strided_slice %290 {offsets = [0, 0], sizes = [32, 1], strides = [1, 1]} : vector<32x2xf32> to vector<32x1xf32>
    %292 = vector.extract_strided_slice %290 {offsets = [0, 1], sizes = [32, 1], strides = [1, 1]} : vector<32x2xf32> to vector<32x1xf32>
    %293 = arith.mulf %291, %291 : vector<32x1xf32>
    %294 = arith.subf %292, %293 : vector<32x1xf32>
    %cst_198 = arith.constant 0.000000e+00 : f32
    %295 = vector.broadcast %cst_198 : f32 to vector<32x1xf32>
    %296 = arith.maximumf %294, %295 : vector<32x1xf32>
    %c0_199 = arith.constant 0 : index
    %c13 = arith.constant 13 : index
    %297 = vector.load %arg5[%c0_199, %c13] : memref<64x18xf32, #tpu.memory_space<vmem>>, vector<32x1xf32>
    %c0_200 = arith.constant 0 : index
    %c14 = arith.constant 14 : index
    %298 = vector.load %arg5[%c0_200, %c14] : memref<64x18xf32, #tpu.memory_space<vmem>>, vector<32x1xf32>
    %299 = vector.broadcast %291 : vector<32x1xf32> to vector<32x32xf32>
    %300 = arith.subf %282, %299 : vector<32x32xf32>
    %cst_201 = arith.constant 9.99999974E-6 : f32
    %301 = vector.broadcast %cst_201 : f32 to vector<32x1xf32>
    %302 = arith.addf %296, %301 : vector<32x1xf32>
    %303 = math.rsqrt %302 : vector<32x1xf32>
    %304 = arith.mulf %297, %303 : vector<32x1xf32>
    %305 = vector.broadcast %304 : vector<32x1xf32> to vector<32x32xf32>
    %306 = arith.mulf %300, %305 : vector<32x32xf32>
    %307 = vector.broadcast %298 : vector<32x1xf32> to vector<32x32xf32>
    %308 = arith.addf %306, %307 : vector<32x32xf32>
    %cst_202 = arith.constant 0.000000e+00 : f32
    %309 = vector.broadcast %cst_202 : f32 to vector<32x32xf32>
    %310 = arith.maximumf %308, %309 : vector<32x32xf32>
    %c1056 = arith.constant 1056 : index
    %c0_203 = arith.constant 0 : index
    %311 = vector.load %arg3[%c1056, %c0_203] : memref<1408x128xf32, #tpu.memory_space<vmem>>, vector<32x64xf32>
    %cst_204 = arith.constant dense<0.000000e+00> : vector<32x64xf32>
    %312 = tpu.matmul %310, %311, %cst_204 {dimension_numbers = #tpu.dot_dimension_numbers<[1], [0], [0], [1], [0, 0, 1, 1], [], []>} : vector<32x32xf32>, vector<32x64xf32>, vector<32x64xf32> -> vector<32x64xf32>
    %c0_205 = arith.constant 0 : index
    %c0_206 = arith.constant 0 : index
    %313 = vector.load %arg7[%c0_205, %c0_206] : memref<256x128xf32, #tpu.memory_space<vmem>>, vector<32x64xf32>
    tpu.vector_store %arg7[%c0_205, %c0_206], %312 {strides = array<i32>} : memref<256x128xf32, #tpu.memory_space<vmem>>, vector<32x64xf32>,
    %c1088 = arith.constant 1088 : index
    %c0_207 = arith.constant 0 : index
    %314 = vector.load %arg3[%c1088, %c0_207] : memref<1408x128xf32, #tpu.memory_space<vmem>>, vector<32x64xf32>
    %cst_208 = arith.constant dense<0.000000e+00> : vector<32x64xf32>
    %315 = tpu.matmul %310, %314, %cst_208 {dimension_numbers = #tpu.dot_dimension_numbers<[1], [0], [0], [1], [0, 0, 1, 1], [], []>} : vector<32x32xf32>, vector<32x64xf32>, vector<32x64xf32> -> vector<32x64xf32>
    %c32_209 = arith.constant 32 : index
    %c0_210 = arith.constant 0 : index
    %316 = vector.load %arg7[%c32_209, %c0_210] : memref<256x128xf32, #tpu.memory_space<vmem>>, vector<32x64xf32>
    tpu.vector_store %arg7[%c32_209, %c0_210], %315 {strides = array<i32>} : memref<256x128xf32, #tpu.memory_space<vmem>>, vector<32x64xf32>,
    %c1120 = arith.constant 1120 : index
    %c0_211 = arith.constant 0 : index
    %317 = vector.load %arg3[%c1120, %c0_211] : memref<1408x128xf32, #tpu.memory_space<vmem>>, vector<32x64xf32>
    %cst_212 = arith.constant dense<0.000000e+00> : vector<32x64xf32>
    %318 = tpu.matmul %310, %317, %cst_212 {dimension_numbers = #tpu.dot_dimension_numbers<[1], [0], [0], [1], [0, 0, 1, 1], [], []>} : vector<32x32xf32>, vector<32x64xf32>, vector<32x64xf32> -> vector<32x64xf32>
    %c64_213 = arith.constant 64 : index
    %c0_214 = arith.constant 0 : index
    %319 = vector.load %arg7[%c64_213, %c0_214] : memref<256x128xf32, #tpu.memory_space<vmem>>, vector<32x64xf32>
    tpu.vector_store %arg7[%c64_213, %c0_214], %318 {strides = array<i32>} : memref<256x128xf32, #tpu.memory_space<vmem>>, vector<32x64xf32>,
    %c0_215 = arith.constant 0 : index
    %c0_216 = arith.constant 0 : index
    %320 = vector.load %arg7[%c0_215, %c0_216] : memref<256x128xf32, #tpu.memory_space<vmem>>, vector<96x64xf32>
    %c240 = arith.constant 240 : index
    %c0_217 = arith.constant 0 : index
    %321 = vector.load %arg2[%c240, %c0_217] : memref<368x256xf32, #tpu.memory_space<vmem>>, vector<64x96xf32>
    %cst_218 = arith.constant dense<0.000000e+00> : vector<64x64xf32>
    %322 = tpu.matmul %321, %320, %cst_218 {dimension_numbers = #tpu.dot_dimension_numbers<[1], [0], [0], [1], [0, 0, 1, 1], [], []>} : vector<64x96xf32>, vector<96x64xf32>, vector<64x64xf32> -> vector<64x64xf32>
    %c176_219 = arith.constant 176 : index
    %c0_220 = arith.constant 0 : index
    %323 = vector.load %arg4[%c176_219, %c0_220] : memref<240x64xf32, #tpu.memory_space<vmem>>, vector<64x64xf32>
    %cst_221 = arith.constant dense<0.000000e+00> : vector<64xf32>
    %324 = vector.multi_reduction <add>, %322, %cst_221 [1] : vector<64x64xf32> to vector<64xf32>
    %325 = vector.shape_cast %324 : vector<64xf32> to vector<64x1xf32>
    %326 = arith.mulf %322, %322 : vector<64x64xf32>
    %cst_222 = arith.constant dense<0.000000e+00> : vector<64xf32>
    %327 = vector.multi_reduction <add>, %326, %cst_222 [1] : vector<64x64xf32> to vector<64xf32>
    %328 = vector.shape_cast %327 : vector<64xf32> to vector<64x1xf32>
    %329 = tpu.concatenate %325, %328 in 1 : vector<64x1xf32>, vector<64x1xf32> -> vector<64x2xf32>
    %cst_223 = arith.constant dense<0.000000e+00> : vector<64x2xf32>
    %330 = tpu.matmul %323, %329, %cst_223 {dimension_numbers = #tpu.dot_dimension_numbers<[1], [0], [0], [1], [0, 0, 1, 1], [], []>} : vector<64x64xf32>, vector<64x2xf32>, vector<64x2xf32> -> vector<64x2xf32>
    %331 = vector.extract_strided_slice %330 {offsets = [0, 0], sizes = [64, 1], strides = [1, 1]} : vector<64x2xf32> to vector<64x1xf32>
    %332 = vector.extract_strided_slice %330 {offsets = [0, 1], sizes = [64, 1], strides = [1, 1]} : vector<64x2xf32> to vector<64x1xf32>
    %333 = arith.mulf %331, %331 : vector<64x1xf32>
    %334 = arith.subf %332, %333 : vector<64x1xf32>
    %cst_224 = arith.constant 0.000000e+00 : f32
    %335 = vector.broadcast %cst_224 : f32 to vector<64x1xf32>
    %336 = arith.maximumf %334, %335 : vector<64x1xf32>
    %c0_225 = arith.constant 0 : index
    %c15 = arith.constant 15 : index
    %337 = vector.load %arg5[%c0_225, %c15] : memref<64x18xf32, #tpu.memory_space<vmem>>, vector<64x1xf32>
    %c0_226 = arith.constant 0 : index
    %c16_227 = arith.constant 16 : index
    %338 = vector.load %arg5[%c0_226, %c16_227] : memref<64x18xf32, #tpu.memory_space<vmem>>, vector<64x1xf32>
    %339 = vector.broadcast %331 : vector<64x1xf32> to vector<64x64xf32>
    %340 = arith.subf %322, %339 : vector<64x64xf32>
    %cst_228 = arith.constant 9.99999974E-6 : f32
    %341 = vector.broadcast %cst_228 : f32 to vector<64x1xf32>
    %342 = arith.addf %336, %341 : vector<64x1xf32>
    %343 = math.rsqrt %342 : vector<64x1xf32>
    %344 = arith.mulf %337, %343 : vector<64x1xf32>
    %345 = vector.broadcast %344 : vector<64x1xf32> to vector<64x64xf32>
    %346 = arith.mulf %340, %345 : vector<64x64xf32>
    %347 = vector.broadcast %338 : vector<64x1xf32> to vector<64x64xf32>
    %348 = arith.addf %346, %347 : vector<64x64xf32>
    %cst_229 = arith.constant 0.000000e+00 : f32
    %349 = vector.broadcast %cst_229 : f32 to vector<64x64xf32>
    %350 = arith.maximumf %348, %349 : vector<64x64xf32>
    %c1152 = arith.constant 1152 : index
    %c0_230 = arith.constant 0 : index
    %351 = vector.load %arg3[%c1152, %c0_230] : memref<1408x128xf32, #tpu.memory_space<vmem>>, vector<64x128xf32>
    %cst_231 = arith.constant dense<0.000000e+00> : vector<64x128xf32>
    %352 = tpu.matmul %350, %351, %cst_231 {dimension_numbers = #tpu.dot_dimension_numbers<[1], [0], [0], [1], [0, 0, 1, 1], [], []>} : vector<64x64xf32>, vector<64x128xf32>, vector<64x128xf32> -> vector<64x128xf32>
    %c0_232 = arith.constant 0 : index
    %c0_233 = arith.constant 0 : index
    %353 = vector.load %arg7[%c0_232, %c0_233] : memref<256x128xf32, #tpu.memory_space<vmem>>, vector<64x128xf32>
    tpu.vector_store %arg7[%c0_232, %c0_233], %352 {strides = array<i32>} : memref<256x128xf32, #tpu.memory_space<vmem>>, vector<64x128xf32>,
    %c1216 = arith.constant 1216 : index
    %c0_234 = arith.constant 0 : index
    %354 = vector.load %arg3[%c1216, %c0_234] : memref<1408x128xf32, #tpu.memory_space<vmem>>, vector<64x128xf32>
    %cst_235 = arith.constant dense<0.000000e+00> : vector<64x128xf32>
    %355 = tpu.matmul %350, %354, %cst_235 {dimension_numbers = #tpu.dot_dimension_numbers<[1], [0], [0], [1], [0, 0, 1, 1], [], []>} : vector<64x64xf32>, vector<64x128xf32>, vector<64x128xf32> -> vector<64x128xf32>
    %c64_236 = arith.constant 64 : index
    %c0_237 = arith.constant 0 : index
    %356 = vector.load %arg7[%c64_236, %c0_237] : memref<256x128xf32, #tpu.memory_space<vmem>>, vector<64x128xf32>
    tpu.vector_store %arg7[%c64_236, %c0_237], %355 {strides = array<i32>} : memref<256x128xf32, #tpu.memory_space<vmem>>, vector<64x128xf32>,
    %c1280 = arith.constant 1280 : index
    %c0_238 = arith.constant 0 : index
    %357 = vector.load %arg3[%c1280, %c0_238] : memref<1408x128xf32, #tpu.memory_space<vmem>>, vector<64x128xf32>
    %cst_239 = arith.constant dense<0.000000e+00> : vector<64x128xf32>
    %358 = tpu.matmul %350, %357, %cst_239 {dimension_numbers = #tpu.dot_dimension_numbers<[1], [0], [0], [1], [0, 0, 1, 1], [], []>} : vector<64x64xf32>, vector<64x128xf32>, vector<64x128xf32> -> vector<64x128xf32>
    %c128_240 = arith.constant 128 : index
    %c0_241 = arith.constant 0 : index
    %359 = vector.load %arg7[%c128_240, %c0_241] : memref<256x128xf32, #tpu.memory_space<vmem>>, vector<64x128xf32>
    tpu.vector_store %arg7[%c128_240, %c0_241], %358 {strides = array<i32>} : memref<256x128xf32, #tpu.memory_space<vmem>>, vector<64x128xf32>,
    %c1344 = arith.constant 1344 : index
    %c0_242 = arith.constant 0 : index
    %360 = vector.load %arg3[%c1344, %c0_242] : memref<1408x128xf32, #tpu.memory_space<vmem>>, vector<64x128xf32>
    %cst_243 = arith.constant dense<0.000000e+00> : vector<64x128xf32>
    %361 = tpu.matmul %350, %360, %cst_243 {dimension_numbers = #tpu.dot_dimension_numbers<[1], [0], [0], [1], [0, 0, 1, 1], [], []>} : vector<64x64xf32>, vector<64x128xf32>, vector<64x128xf32> -> vector<64x128xf32>
    %c192_244 = arith.constant 192 : index
    %c0_245 = arith.constant 0 : index
    %362 = vector.load %arg7[%c192_244, %c0_245] : memref<256x128xf32, #tpu.memory_space<vmem>>, vector<64x128xf32>
    tpu.vector_store %arg7[%c192_244, %c0_245], %361 {strides = array<i32>} : memref<256x128xf32, #tpu.memory_space<vmem>>, vector<64x128xf32>,
    %c0_246 = arith.constant 0 : index
    %c0_247 = arith.constant 0 : index
    %363 = vector.load %arg7[%c0_246, %c0_247] : memref<256x128xf32, #tpu.memory_space<vmem>>, vector<256x128xf32>
    %c304 = arith.constant 304 : index
    %c0_248 = arith.constant 0 : index
    %364 = vector.load %arg2[%c304, %c0_248] : memref<368x256xf32, #tpu.memory_space<vmem>>, vector<64x256xf32>
    %cst_249 = arith.constant dense<0.000000e+00> : vector<64x128xf32>
    %365 = tpu.matmul %364, %363, %cst_249 {dimension_numbers = #tpu.dot_dimension_numbers<[1], [0], [0], [1], [0, 0, 1, 1], [], []>} : vector<64x256xf32>, vector<256x128xf32>, vector<64x128xf32> -> vector<64x128xf32>
    %c0_250 = arith.constant 0 : index
    %c17 = arith.constant 17 : index
    %366 = vector.load %arg5[%c0_250, %c17] : memref<64x18xf32, #tpu.memory_space<vmem>>, vector<64x1xf32>
    %367 = vector.broadcast %366 : vector<64x1xf32> to vector<64x128xf32>
    %368 = arith.addf %365, %367 : vector<64x128xf32>
    %c0_251 = arith.constant 0 : index
    %c0_252 = arith.constant 0 : index
    %369 = vector.load %arg6[%c0_251, %c0_252] : memref<64x128xf32, #tpu.memory_space<vmem>>, vector<64x128xf32>
    tpu.vector_store %arg6[%c0_251, %c0_252], %368 {strides = array<i32>} : memref<64x128xf32, #tpu.memory_space<vmem>>, vector<64x128xf32>,
    return
  }
  func.func @transform_0(%arg0: i32) -> (i32, i32) {
    %c0_i32 = arith.constant 0 : i32
    %c0_i32_0 = arith.constant 0 : i32
    %c0_i32_1 = arith.constant 0 : i32
    return %c0_i32, %c0_i32_0 : i32, i32
  }
  func.func @transform_1(%arg0: i32) -> (i32, i32) {
    %c0_i32 = arith.constant 0 : i32
    %c0_i32_0 = arith.constant 0 : i32
    %c0_i32_1 = arith.constant 0 : i32
    return %c0_i32, %c0_i32_0 : i32, i32
  }
  func.func @transform_2(%arg0: i32) -> (i32, i32) {
    %c0_i32 = arith.constant 0 : i32
    %c0_i32_0 = arith.constant 0 : i32
    %c0_i32_1 = arith.constant 0 : i32
    return %c0_i32, %c0_i32_0 : i32, i32
  }
  func.func @transform_3(%arg0: i32) -> (i32, i32) {
    %c0_i32 = arith.constant 0 : i32
    %c0_i32_0 = arith.constant 0 : i32
    %c0_i32_1 = arith.constant 0 : i32
    return %c0_i32, %c0_i32_0 : i32, i32
  }
  func.func @transform_4(%arg0: i32) -> (i32, i32) {
    %c0_i32 = arith.constant 0 : i32
    %c0_i32_0 = arith.constant 0 : i32
    %c0_i32_1 = arith.constant 0 : i32
    return %c0_i32, %c0_i32_0 : i32, i32
  }
  func.func @transform_5(%arg0: i32) -> (i32, i32) {
    %c0_i32 = arith.constant 0 : i32
    %c0_i32_0 = arith.constant 0 : i32
    %c0_i32_1 = arith.constant 0 : i32
    return %c0_i32, %c0_i32_0 : i32, i32
  }
}

</mosaic_0001>

<llo_original>
// kernel: autoencoder_forward.1
$region0: #{autoencoder_forward.1}
  #allocation0 [shape = 'u32[]', space=smem, size = 0x4, offset = 0x4, fixed_abs, tag = 'smem constant byte address 0x4 - core index']
  #allocation1 [shape = 'u32[144,128]{1,0:T(1,128)}', space=vmem, size = 0x12000, scoped, tag = 'internal scratch']
  #allocation2 [shape = 'f32[256,128]{1,0:T(8,128)}', space=vmem, size = 0x20000, scoped, tag = 'scratch operand']
  %s0 = inlined_call_operand.vmem [shape: f32[64,128], index: 0, kind: input, shape index: {}]
  %s1 = inlined_call_operand.vmem [shape: f32[368,256], index: 1, kind: input, shape index: {}]
  %s2 = inlined_call_operand.vmem [shape: f32[1408,128], index: 2, kind: input, shape index: {}]
  %s3 = inlined_call_operand.vmem [shape: f32[240,64], index: 3, kind: input, shape index: {}]
  %s4 = inlined_call_operand.vmem [shape: f32[64,18], index: 4, kind: input, shape index: {}]
  %s5 = inlined_call_operand.vmem [shape: f32[64,128], index: 5, kind: output, shape index: {}]
  %s6 = sld [smem:[#allocation0]]
  $region30: #{autoencoder_forward.1} parent=0
    _
  %s8 = ssub.s32 1, %s6
  %s9 = scalar_select 0, %s8, %s6
  // Predicated region
  $region2: #{autoencoder_forward.1} parent=0 // pred_check
    _
  $region3: #{autoencoder_forward.1} parent=0 // pred_check_branch
    %11 = sbr.rel (0) target = $region5
  $region4: #{autoencoder_forward.1} parent=0 // pred_region
    _
  $region5: #{autoencoder_forward.1} parent=0 // pred_fallthru
    _
  // Predicated region
  $region6: #{autoencoder_forward.1} parent=0 // pred_check
    _
  $region7: #{autoencoder_forward.1} parent=0 // pred_check_branch
    %13 = sbr.rel (0) target = $region9
  $region8: #{autoencoder_forward.1} parent=0 // pred_region
    _
  $region9: #{autoencoder_forward.1} parent=0 // pred_fallthru
    _
  // Predicated region
  $region10: #{autoencoder_forward.1} parent=0 // pred_check
    _
  $region11: #{autoencoder_forward.1} parent=0 // pred_check_branch
    %15 = sbr.rel (0) target = $region13
  $region12: #{autoencoder_forward.1} parent=0 // pred_region
    _
  $region13: #{autoencoder_forward.1} parent=0 // pred_fallthru
    _
  // Predicated region
  $region14: #{autoencoder_forward.1} parent=0 // pred_check
    _
  $region15: #{autoencoder_forward.1} parent=0 // pred_check_branch
    %17 = sbr.rel (0) target = $region17
  $region16: #{autoencoder_forward.1} parent=0 // pred_region
    _
  $region17: #{autoencoder_forward.1} parent=0 // pred_fallthru
    _
  // Predicated region
  $region18: #{autoencoder_forward.1} parent=0 // pred_check
    _
  $region19: #{autoencoder_forward.1} parent=0 // pred_check_branch
    %19 = sbr.rel (0) target = $region21
  $region20: #{autoencoder_forward.1} parent=0 // pred_region
    _
  $region21: #{autoencoder_forward.1} parent=0 // pred_fallthru
    _
  %v20 = vld [vmem:[%s0] sm:$0xff]
  %v21 = vld [vmem:[%s0 + $0x8] sm:$0xff]
  %v22 = vld [vmem:[%s0 + $0x10] sm:$0xff]
  %v23 = vld [vmem:[%s0 + $0x18] sm:$0xff]
  %v24 = vld [vmem:[%s0 + $0x20] sm:$0xff]
  %v25 = vld [vmem:[%s0 + $0x28] sm:$0xff]
  %v26 = vld [vmem:[%s0 + $0x30] sm:$0xff]
  %v27 = vld [vmem:[%s0 + $0x38] sm:$0xff]
  %v28 = vld [vmem:[%s2] sm:$0xff]
  %v29 = vld [vmem:[%s2 + $0x8] sm:$0xff]
  %v30 = vld [vmem:[%s2 + $0x10] sm:$0xff]
  %v31 = vld [vmem:[%s2 + $0x18] sm:$0xff]
  %v32 = vld [vmem:[%s2 + $0x20] sm:$0xff]
  %v33 = vld [vmem:[%s2 + $0x28] sm:$0xff]
  %v34 = vld [vmem:[%s2 + $0x30] sm:$0xff]
  %v35 = vld [vmem:[%s2 + $0x38] sm:$0xff]
  %v36 = vld [vmem:[%s2 + $0x40] sm:$0xff]
  %v37 = vld [vmem:[%s2 + $0x48] sm:$0xff]
  %v38 = vld [vmem:[%s2 + $0x50] sm:$0xff]
  %v39 = vld [vmem:[%s2 + $0x58] sm:$0xff]
  %v40 = vld [vmem:[%s2 + $0x60] sm:$0xff]
  %v41 = vld [vmem:[%s2 + $0x68] sm:$0xff]
  %v42 = vld [vmem:[%s2 + $0x70] sm:$0xff]
  %v43 = vld [vmem:[%s2 + $0x78] sm:$0xff]
  %44 = vmatprep.subr.mxu0 0.0
  %45 = vmatpush1.msra.mxu0 %v43
  %46 = vmatprep.subr.mxu0 0.0
  %47 = vmatpush1.msra.mxu0 %v42
  %48 = vmatprep.subr.mxu0 0.0
  %49 = vmatpush1.msra.mxu0 %v41
  %50 = vmatprep.subr.mxu0 0.0
  %51 = vmatpush1.msra.mxu0 %v40
  %52 = vmatprep.subr.mxu0 0.0
  %53 = vmatpush1.msra.mxu0 %v39
  %54 = vmatprep.subr.mxu0 0.0
  %55 = vmatpush1.msra.mxu0 %v38
  %56 = vmatprep.subr.mxu0 0.0
  %57 = vmatpush1.msra.mxu0 %v37
  %58 = vmatprep.subr.mxu0 0.0
  %59 = vmatpush1.msra.mxu0 %v36
  %60 = vmatprep.subr.mxu0 0.0
  %61 = vmatpush1.msra.mxu0 %v35
  %62 = vmatprep.subr.mxu0 0.0
  %63 = vmatpush1.msra.mxu0 %v34
  %64 = vmatprep.subr.mxu0 0.0
  %65 = vmatpush1.msra.mxu0 %v33
  %66 = vmatprep.subr.mxu0 0.0
  %67 = vmatpush1.msra.mxu0 %v32
  %68 = vmatprep.subr.mxu0 0.0
  %69 = vmatpush1.msra.mxu0 %v31
  %70 = vmatprep.subr.mxu0 0.0
  %71 = vmatpush1.msra.mxu0 %v30
  %72 = vmatprep.subr.mxu0 0.0
  %73 = vmatpush1.msra.mxu0 %v29
  %74 = vmatprep.subr.mxu0 0.0
  %75 = vmatpush1.msra.mxu0 %v28
  %76 = vmatprep.subr.mxu0 0.0
  %77 = vmatpush2.msra.mxu0 0.0
  %78 = vmatprep.subr.mxu0 0.0
  %79 = vmatpush2.msra.mxu0 0.0
  %80 = vmatprep.subr.mxu0 0.0
  %81 = vmatpush2.msra.mxu0 0.0
  %82 = vmatprep.subr.mxu0 0.0
  %83 = vmatpush2.msra.mxu0 0.0
  %84 = vmatprep.subr.mxu0 0.0
  %85 = vmatpush2.msra.mxu0 0.0
  %86 = vmatprep.subr.mxu0 0.0
  %87 = vmatpush2.msra.mxu0 0.0
  %88 = vmatprep.subr.mxu0 0.0
  %89 = vmatpush2.msra.mxu0 0.0
  %90 = vmatprep.subr.mxu0 0.0
  %91 = vmatpush2.msra.mxu0 0.0
  %92 = vmatprep.subr.mxu0 0.0
  %93 = vmatpush2.msra.mxu0 0.0
  %94 = vmatprep.subr.mxu0 0.0
  %95 = vmatpush2.msra.mxu0 0.0
  %96 = vmatprep.subr.mxu0 0.0
  %97 = vmatpush2.msra.mxu0 0.0
  %98 = vmatprep.subr.mxu0 0.0
  %99 = vmatpush2.msra.mxu0 0.0
  %100 = vmatprep.subr.mxu0 0.0
  %101 = vmatpush2.msra.mxu0 0.0
  %102 = vmatprep.subr.mxu0 0.0
  %103 = vmatpush2.msra.mxu0 0.0
  %104 = vmatprep.subr.mxu0 0.0
  %105 = vmatpush2.msra.mxu0 0.0
  %106 = vmatprep.subr.mxu0 0.0
  %107 = vmatpush2.msra.mxu0 0.0
  %108 = vmatprep.mubr.f32.mxu0 0.0
  %109 = vmatmul.mubr.f32.gmra.mxu0 %v20
  %v110 = vpop.f32.mrf.mxu0
  %v111 = vadd.f32 0.0, %v110
  %v112 = vpop.f32.mrf.mxu0
  %113 = vmatprep.mubr.f32.mxu0 0.0
  %114 = vmatmul.mubr.f32.gmra.mxu0 %v21
  %v115 = vpop.f32.mrf.mxu0
  %v116 = vadd.f32 0.0, %v115
  %v117 = vpop.f32.mrf.mxu0
  %118 = vmatprep.mubr.f32.mxu0 0.0
  %119 = vmatmul.mubr.f32.gmra.mxu0 %v22
  %v120 = vpop.f32.mrf.mxu0
  %v121 = vadd.f32 0.0, %v120
  %v122 = vpop.f32.mrf.mxu0
  %123 = vmatprep.mubr.f32.mxu0 0.0
  %124 = vmatmul.mubr.f32.gmra.mxu0 %v23
  %v125 = vpop.f32.mrf.mxu0
  %v126 = vadd.f32 0.0, %v125
  %v127 = vpop.f32.mrf.mxu0
  %128 = vmatprep.mubr.f32.mxu0 0.0
  %129 = vmatmul.mubr.f32.gmra.mxu0 %v24
  %v130 = vpop.f32.mrf.mxu0
  %v131 = vadd.f32 0.0, %v130
  %v132 = vpop.f32.mrf.mxu0
  %133 = vmatprep.mubr.f32.mxu0 0.0
  %134 = vmatmul.mubr.f32.gmra.mxu0 %v25
  %v135 = vpop.f32.mrf.mxu0
  %v136 = vadd.f32 0.0, %v135
  %v137 = vpop.f32.mrf.mxu0
  %138 = vmatprep.mubr.f32.mxu0 0.0
  %139 = vmatmul.mubr.f32.gmra.mxu0 %v26
  %v140 = vpop.f32.mrf.mxu0
  %v141 = vadd.f32 0.0, %v140
  %v142 = vpop.f32.mrf.mxu0
  %143 = vmatprep.mubr.f32.mxu0 0.0
  %144 = vmatmul.mubr.f32.gmra.mxu0 %v27
  %v145 = vpop.f32.mrf.mxu0
  %v146 = vadd.f32 0.0, %v145
  %v147 = vpop.f32.mrf.mxu0
  %148 = vdwg.mxu0
  %vm149 = vcmask 523264
  %150 = vst.msk [vmem:[#allocation2] sm:$0xff] %vm149, %v111
  %151 = vst.msk [vmem:[#allocation2 + $0x8] sm:$0xff] %vm149, %v116
  %152 = vst.msk [vmem:[#allocation2 + $0x10] sm:$0xff] %vm149, %v121
  %153 = vst.msk [vmem:[#allocation2 + $0x18] sm:$0xff] %vm149, %v126
  %154 = vst.msk [vmem:[#allocation2 + $0x20] sm:$0xff] %vm149, %v131
  %155 = vst.msk [vmem:[#allocation2 + $0x28] sm:$0xff] %vm149, %v136
  %156 = vst.msk [vmem:[#allocation2 + $0x30] sm:$0xff] %vm149, %v141
  %157 = vst.msk [vmem:[#allocation2 + $0x38] sm:$0xff] %vm149, %v146
  %v158 = vld [vmem:[%s2 + $0x80] sm:$0xff]
  %v159 = vld [vmem:[%s2 + $0x88] sm:$0xff]
  %v160 = vld [vmem:[%s2 + $0x90] sm:$0xff]
  %v161 = vld [vmem:[%s2 + $0x98] sm:$0xff]
  %v162 = vld [vmem:[%s2 + $0xa0] sm:$0xff]
  %v163 = vld [vmem:[%s2 + $0xa8] sm:$0xff]
  %v164 = vld [vmem:[%s2 + $0xb0] sm:$0xff]
  %v165 = vld [vmem:[%s2 + $0xb8] sm:$0xff]
  %v166 = vld [vmem:[%s2 + $0xc0] sm:$0xff]
  %v167 = vld [vmem:[%s2 + $0xc8] sm:$0xff]
  %v168 = vld [vmem:[%s2 + $0xd0] sm:$0xff]
  %v169 = vld [vmem:[%s2 + $0xd8] sm:$0xff]
  %v170 = vld [vmem:[%s2 + $0xe0] sm:$0xff]
  %v171 = vld [vmem:[%s2 + $0xe8] sm:$0xff]
  %v172 = vld [vmem:[%s2 + $0xf0] sm:$0xff]
  %v173 = vld [vmem:[%s2 + $0xf8] sm:$0xff]
  %174 = vmatprep.subr.mxu0 0.0
  %175 = vmatpush1.msra.mxu0 %v173
  %176 = vmatprep.subr.mxu0 0.0
  %177 = vmatpush1.msra.mxu0 %v172
  %178 = vmatprep.subr.mxu0 0.0
  %179 = vmatpush1.msra.mxu0 %v171
  %180 = vmatprep.subr.mxu0 0.0
  %181 = vmatpush1.msra.mxu0 %v170
  %182 = vmatprep.subr.mxu0 0.0
  %183 = vmatpush1.msra.mxu0 %v169
  %184 = vmatprep.subr.mxu0 0.0
  %185 = vmatpush1.msra.mxu0 %v168
  %186 = vmatprep.subr.mxu0 0.0
  %187 = vmatpush1.msra.mxu0 %v167
  %188 = vmatprep.subr.mxu0 0.0
  %189 = vmatpush1.msra.mxu0 %v166
  %190 = vmatprep.subr.mxu0 0.0
  %191 = vmatpush1.msra.mxu0 %v165
  %192 = vmatprep.subr.mxu0 0.0
  %193 = vmatpush1.msra.mxu0 %v164
  %194 = vmatprep.subr.mxu0 0.0
  %195 = vmatpush1.msra.mxu0 %v163
  %196 = vmatprep.subr.mxu0 0.0
  %197 = vmatpush1.msra.mxu0 %v162
  %198 = vmatprep.subr.mxu0 0.0
  %199 = vmatpush1.msra.mxu0 %v161
  %200 = vmatprep.subr.mxu0 0.0
  %201 = vmatpush1.msra.mxu0 %v160
  %202 = vmatprep.subr.mxu0 0.0
  %203 = vmatpush1.msra.mxu0 %v159
  %204 = vmatprep.subr.mxu0 0.0
  %205 = vmatpush1.msra.mxu0 %v158
  %206 = vmatprep.subr.mxu0 0.0
  %207 = vmatpush2.msra.mxu0 0.0
  %208 = vmatprep.subr.mxu0 0.0
  %209 = vmatpush2.msra.mxu0 0.0
  %210 = vmatprep.subr.mxu0 0.0
  %211 = vmatpush2.msra.mxu0 0.0
  %212 = vmatprep.subr.mxu0 0.0
  %213 = vmatpush2.msra.mxu0 0.0
  %214 = vmatprep.subr.mxu0 0.0
  %215 = vmatpush2.msra.mxu0 0.0
  %216 = vmatprep.subr.mxu0 0.0
  %217 = vmatpush2.msra.mxu0 0.0
  %218 = vmatprep.subr.mxu0 0.0
  %219 = vmatpush2.msra.mxu0 0.0
  %220 = vmatprep.subr.mxu0 0.0
  %221 = vmatpush2.msra.mxu0 0.0
  %222 = vmatprep.subr.mxu0 0.0
  %223 = vmatpush2.msra.mxu0 0.0
  %224 = vmatprep.subr.mxu0 0.0
  %225 = vmatpush2.msra.mxu0 0.0
  %226 = vmatprep.subr.mxu0 0.0
  %227 = vmatpush2.msra.mxu0 0.0
  %228 = vmatprep.subr.mxu0 0.0
  %229 = vmatpush2.msra.mxu0 0.0
  %230 = vmatprep.subr.mxu0 0.0
  %231 = vmatpush2.msra.mxu0 0.0
  %232 = vmatprep.subr.mxu0 0.0
  %233 = vmatpush2.msra.mxu0 0.0
  %234 = vmatprep.subr.mxu0 0.0
  %235 = vmatpush2.msra.mxu0 0.0
  %236 = vmatprep.subr.mxu0 0.0
  %237 = vmatpush2.msra.mxu0 0.0
  %238 = vmatprep.mubr.f32.mxu0 0.0
  %239 = vmatmul.mubr.f32.gmra.mxu0 %v20
  %v240 = vpop.f32.mrf.mxu0
  %v241 = vadd.f32 0.0, %v240
  %v242 = vpop.f32.mrf.mxu0
  %243 = vmatprep.mubr.f32.mxu0 0.0
  %244 = vmatmul.mubr.f32.gmra.mxu0 %v21
  %v245 = vpop.f32.mrf.mxu0
  %v246 = vadd.f32 0.0, %v245
  %v247 = vpop.f32.mrf.mxu0
  %248 = vmatprep.mubr.f32.mxu0 0.0
  %249 = vmatmul.mubr.f32.gmra.mxu0 %v22
  %v250 = vpop.f32.mrf.mxu0
  %v251 = vadd.f32 0.0, %v250
  %v252 = vpop.f32.mrf.mxu0
  %253 = vmatprep.mubr.f32.mxu0 0.0
  %254 = vmatmul.mubr.f32.gmra.mxu0 %v23
  %v255 = vpop.f32.mrf.mxu0
  %v256 = vadd.f32 0.0, %v255
  %v257 = vpop.f32.mrf.mxu0
  %258 = vmatprep.mubr.f32.mxu0 0.0
  %259 = vmatmul.mubr.f32.gmra.mxu0 %v24
  %v260 = vpop.f32.mrf.mxu0
  %v261 = vadd.f32 0.0, %v260
  %v262 = vpop.f32.mrf.mxu0
  %263 = vmatprep.mubr.f32.mxu0 0.0
  %264 = vmatmul.mubr.f32.gmra.mxu0 %v25
  %v265 = vpop.f32.mrf.mxu0
  %v266 = vadd.f32 0.0, %v265
  %v267 = vpop.f32.mrf.mxu0
  %268 = vmatprep.mubr.f32.mxu0 0.0
  %269 = vmatmul.mubr.f32.gmra.mxu0 %v26
  %v270 = vpop.f32.mrf.mxu0
  %v271 = vadd.f32 0.0, %v270
  %v272 = vpop.f32.mrf.mxu0
  %273 = vmatprep.mubr.f32.mxu0 0.0
  %274 = vmatmul.mubr.f32.gmra.mxu0 %v27
  %v275 = vpop.f32.mrf.mxu0
  %v276 = vadd.f32 0.0, %v275
  %v277 = vpop.f32.mrf.mxu0
  %278 = vdwg.mxu0
  %279 = vst.msk [vmem:[#allocation2 + $0x40] sm:$0xff] %vm149, %v241
  %280 = vst.msk [vmem:[#allocation2 + $0x48] sm:$0xff] %vm149, %v246
  %281 = vst.msk [vmem:[#allocation2 + $0x50] sm:$0xff] %vm149, %v251
  %282 = vst.msk [vmem:[#allocation2 + $0x58] sm:$0xff] %vm149, %v256
  %283 = vst.msk [vmem:[#allocation2 + $0x60] sm:$0xff] %vm149, %v261
  %284 = vst.msk [vmem:[#allocation2 + $0x68] sm:$0xff] %vm149, %v266
  %285 = vst.msk [vmem:[#allocation2 + $0x70] sm:$0xff] %vm149, %v271
  %286 = vst.msk [vmem:[#allocation2 + $0x78] sm:$0xff] %vm149, %v276
  %v287 = vld [vmem:[%s2 + $0x100] sm:$0xff]
  %v288 = vld [vmem:[%s2 + $0x108] sm:$0xff]
  %v289 = vld [vmem:[%s2 + $0x110] sm:$0xff]
  %v290 = vld [vmem:[%s2 + $0x118] sm:$0xff]
  %v291 = vld [vmem:[%s2 + $0x120] sm:$0xff]
  %v292 = vld [vmem:[%s2 + $0x128] sm:$0xff]
  %v293 = vld [vmem:[%s2 + $0x130] sm:$0xff]
  %v294 = vld [vmem:[%s2 + $0x138] sm:$0xff]
  %v295 = vld [vmem:[%s2 + $0x140] sm:$0xff]
  %v296 = vld [vmem:[%s2 + $0x148] sm:$0xff]
  %v297 = vld [vmem:[%s2 + $0x150] sm:$0xff]
  %v298 = vld [vmem:[%s2 + $0x158] sm:$0xff]
  %v299 = vld [vmem:[%s2 + $0x160] sm:$0xff]
  %v300 = vld [vmem:[%s2 + $0x168] sm:$0xff]
  %v301 = vld [vmem:[%s2 + $0x170] sm:$0xff]
  %v302 = vld [vmem:[%s2 + $0x178] sm:$0xff]
  %303 = vmatprep.subr.mxu0 0.0
  %304 = vmatpush1.msra.mxu0 %v302
  %305 = vmatprep.subr.mxu0 0.0
  %306 = vmatpush1.msra.mxu0 %v301
  %307 = vmatprep.subr.mxu0 0.0
  %308 = vmatpush1.msra.mxu0 %v300
  %309 = vmatprep.subr.mxu0 0.0
  %310 = vmatpush1.msra.mxu0 %v299
  %311 = vmatprep.subr.mxu0 0.0
  %312 = vmatpush1.msra.mxu0 %v298
  %313 = vmatprep.subr.mxu0 0.0
  %314 = vmatpush1.msra.mxu0 %v297
  %315 = vmatprep.subr.mxu0 0.0
  %316 = vmatpush1.msra.mxu0 %v296
  %317 = vmatprep.subr.mxu0 0.0
  %318 = vmatpush1.msra.mxu0 %v295
  %319 = vmatprep.subr.mxu0 0.0
  %320 = vmatpush1.msra.mxu0 %v294
  %321 = vmatprep.subr.mxu0 0.0
  %322 = vmatpush1.msra.mxu0 %v293
  %323 = vmatprep.subr.mxu0 0.0
  %324 = vmatpush1.msra.mxu0 %v292
  %325 = vmatprep.subr.mxu0 0.0
  %326 = vmatpush1.msra.mxu0 %v291
  %327 = vmatprep.subr.mxu0 0.0
  %328 = vmatpush1.msra.mxu0 %v290
  %329 = vmatprep.subr.mxu0 0.0
  %330 = vmatpush1.msra.mxu0 %v289
  %331 = vmatprep.subr.mxu0 0.0
  %332 = vmatpush1.msra.mxu0 %v288
  %333 = vmatprep.subr.mxu0 0.0
  %334 = vmatpush1.msra.mxu0 %v287
  %335 = vmatprep.subr.mxu0 0.0
  %336 = vmatpush2.msra.mxu0 0.0
  %337 = vmatprep.subr.mxu0 0.0
  %338 = vmatpush2.msra.mxu0 0.0
  %339 = vmatprep.subr.mxu0 0.0
  %340 = vmatpush2.msra.mxu0 0.0
  %341 = vmatprep.subr.mxu0 0.0
  %342 = vmatpush2.msra.mxu0 0.0
  %343 = vmatprep.subr.mxu0 0.0
  %344 = vmatpush2.msra.mxu0 0.0
  %345 = vmatprep.subr.mxu0 0.0
  %346 = vmatpush2.msra.mxu0 0.0
  %347 = vmatprep.subr.mxu0 0.0
  %348 = vmatpush2.msra.mxu0 0.0
  %349 = vmatprep.subr.mxu0 0.0
  %350 = vmatpush2.msra.mxu0 0.0
  %351 = vmatprep.subr.mxu0 0.0
  %352 = vmatpush2.msra.mxu0 0.0
  %353 = vmatprep.subr.mxu0 0.0
  %354 = vmatpush2.msra.mxu0 0.0
  %355 = vmatprep.subr.mxu0 0.0
  %356 = vmatpush2.msra.mxu0 0.0
  %357 = vmatprep.subr.mxu0 0.0
  %358 = vmatpush2.msra.mxu0 0.0
  %359 = vmatprep.subr.mxu0 0.0
  %360 = vmatpush2.msra.mxu0 0.0
  %361 = vmatprep.subr.mxu0 0.0
  %362 = vmatpush2.msra.mxu0 0.0
  %363 = vmatprep.subr.mxu0 0.0
  %364 = vmatpush2.msra.mxu0 0.0
  %365 = vmatprep.subr.mxu0 0.0
  %366 = vmatpush2.msra.mxu0 0.0
  %367 = vmatprep.mubr.f32.mxu0 0.0
  %368 = vmatmul.mubr.f32.gmra.mxu0 %v20
  %v369 = vpop.f32.mrf.mxu0
  %v370 = vadd.f32 0.0, %v369
  %v371 = vpop.f32.mrf.mxu0
  %372 = vmatprep.mubr.f32.mxu0 0.0
  %373 = vmatmul.mubr.f32.gmra.mxu0 %v21
  %v374 = vpop.f32.mrf.mxu0
  %v375 = vadd.f32 0.0, %v374
  %v376 = vpop.f32.mrf.mxu0
  %377 = vmatprep.mubr.f32.mxu0 0.0
  %378 = vmatmul.mubr.f32.gmra.mxu0 %v22
  %v379 = vpop.f32.mrf.mxu0
  %v380 = vadd.f32 0.0, %v379
  %v381 = vpop.f32.mrf.mxu0
  %382 = vmatprep.mubr.f32.mxu0 0.0
  %383 = vmatmul.mubr.f32.gmra.mxu0 %v23
  %v384 = vpop.f32.mrf.mxu0
  %v385 = vadd.f32 0.0, %v384
  %v386 = vpop.f32.mrf.mxu0
  %387 = vmatprep.mubr.f32.mxu0 0.0
  %388 = vmatmul.mubr.f32.gmra.mxu0 %v24
  %v389 = vpop.f32.mrf.mxu0
  %v390 = vadd.f32 0.0, %v389
  %v391 = vpop.f32.mrf.mxu0
  %392 = vmatprep.mubr.f32.mxu0 0.0
  %393 = vmatmul.mubr.f32.gmra.mxu0 %v25
  %v394 = vpop.f32.mrf.mxu0
  %v395 = vadd.f32 0.0, %v394
  %v396 = vpop.f32.mrf.mxu0
  %397 = vmatprep.mubr.f32.mxu0 0.0
  %398 = vmatmul.mubr.f32.gmra.mxu0 %v26
  %v399 = vpop.f32.mrf.mxu0
  %v400 = vadd.f32 0.0, %v399
  %v401 = vpop.f32.mrf.mxu0
  %402 = vmatprep.mubr.f32.mxu0 0.0
  %403 = vmatmul.mubr.f32.gmra.mxu0 %v27
  %v404 = vpop.f32.mrf.mxu0
  %v405 = vadd.f32 0.0, %v404
  %v406 = vpop.f32.mrf.mxu0
  %407 = vdwg.mxu0
  %408 = vst.msk [vmem:[#allocation2 + $0x80] sm:$0xff] %vm149, %v370
  %409 = vst.msk [vmem:[#allocation2 + $0x88] sm:$0xff] %vm149, %v375
  %410 = vst.msk [vmem:[#allocation2 + $0x90] sm:$0xff] %vm149, %v380
  %411 = vst.msk [vmem:[#allocation2 + $0x98] sm:$0xff] %vm149, %v385
  %412 = vst.msk [vmem:[#allocation2 + $0xa0] sm:$0xff] %vm149, %v390
  %413 = vst.msk [vmem:[#allocation2 + $0xa8] sm:$0xff] %vm149, %v395
  %414 = vst.msk [vmem:[#allocation2 + $0xb0] sm:$0xff] %vm149, %v400
  %415 = vst.msk [vmem:[#allocation2 + $0xb8] sm:$0xff] %vm149, %v405
  %v416 = vld [vmem:[%s2 + $0x180] sm:$0xff]
  %v417 = vld [vmem:[%s2 + $0x188] sm:$0xff]
  %v418 = vld [vmem:[%s2 + $0x190] sm:$0xff]
  %v419 = vld [vmem:[%s2 + $0x198] sm:$0xff]
  %v420 = vld [vmem:[%s2 + $0x1a0] sm:$0xff]
  %v421 = vld [vmem:[%s2 + $0x1a8] sm:$0xff]
  %v422 = vld [vmem:[%s2 + $0x1b0] sm:$0xff]
  %v423 = vld [vmem:[%s2 + $0x1b8] sm:$0xff]
  %v424 = vld [vmem:[%s2 + $0x1c0] sm:$0xff]
  %v425 = vld [vmem:[%s2 + $0x1c8] sm:$0xff]
  %v426 = vld [vmem:[%s2 + $0x1d0] sm:$0xff]
  %v427 = vld [vmem:[%s2 + $0x1d8] sm:$0xff]
  %v428 = vld [vmem:[%s2 + $0x1e0] sm:$0xff]
  %v429 = vld [vmem:[%s2 + $0x1e8] sm:$0xff]
  %v430 = vld [vmem:[%s2 + $0x1f0] sm:$0xff]
  %v431 = vld [vmem:[%s2 + $0x1f8] sm:$0xff]
  %432 = vmatprep.subr.mxu0 0.0
  %433 = vmatpush1.msra.mxu0 %v431
  %434 = vmatprep.subr.mxu0 0.0
  %435 = vmatpush1.msra.mxu0 %v430
  %436 = vmatprep.subr.mxu0 0.0
  %437 = vmatpush1.msra.mxu0 %v429
  %438 = vmatprep.subr.mxu0 0.0
  %439 = vmatpush1.msra.mxu0 %v428
  %440 = vmatprep.subr.mxu0 0.0
  %441 = vmatpush1.msra.mxu0 %v427
  %442 = vmatprep.subr.mxu0 0.0
  %443 = vmatpush1.msra.mxu0 %v426
  %444 = vmatprep.subr.mxu0 0.0
  %445 = vmatpush1.msra.mxu0 %v425
  %446 = vmatprep.subr.mxu0 0.0
  %447 = vmatpush1.msra.mxu0 %v424
  %448 = vmatprep.subr.mxu0 0.0
  %449 = vmatpush1.msra.mxu0 %v423
  %450 = vmatprep.subr.mxu0 0.0
  %451 = vmatpush1.msra.mxu0 %v422
  %452 = vmatprep.subr.mxu0 0.0
  %453 = vmatpush1.msra.mxu0 %v421
  %454 = vmatprep.subr.mxu0 0.0
  %455 = vmatpush1.msra.mxu0 %v420
  %456 = vmatprep.subr.mxu0 0.0
  %457 = vmatpush1.msra.mxu0 %v419
  %458 = vmatprep.subr.mxu0 0.0
  %459 = vmatpush1.msra.mxu0 %v418
  %460 = vmatprep.subr.mxu0 0.0
  %461 = vmatpush1.msra.mxu0 %v417
  %462 = vmatprep.subr.mxu0 0.0
  %463 = vmatpush1.msra.mxu0 %v416
  %464 = vmatprep.subr.mxu0 0.0
  %465 = vmatpush2.msra.mxu0 0.0
  %466 = vmatprep.subr.mxu0 0.0
  %467 = vmatpush2.msra.mxu0 0.0
  %468 = vmatprep.subr.mxu0 0.0
  %469 = vmatpush2.msra.mxu0 0.0
  %470 = vmatprep.subr.mxu0 0.0
  %471 = vmatpush2.msra.mxu0 0.0
  %472 = vmatprep.subr.mxu0 0.0
  %473 = vmatpush2.msra.mxu0 0.0
  %474 = vmatprep.subr.mxu0 0.0
  %475 = vmatpush2.msra.mxu0 0.0
  %476 = vmatprep.subr.mxu0 0.0
  %477 = vmatpush2.msra.mxu0 0.0
  %478 = vmatprep.subr.mxu0 0.0
  %479 = vmatpush2.msra.mxu0 0.0
  %480 = vmatprep.subr.mxu0 0.0
  %481 = vmatpush2.msra.mxu0 0.0
  %482 = vmatprep.subr.mxu0 0.0
  %483 = vmatpush2.msra.mxu0 0.0
  %484 = vmatprep.subr.mxu0 0.0
  %485 = vmatpush2.msra.mxu0 0.0
  %486 = vmatprep.subr.mxu0 0.0
  %487 = vmatpush2.msra.mxu0 0.0
  %488 = vmatprep.subr.mxu0 0.0
  %489 = vmatpush2.msra.mxu0 0.0
  %490 = vmatprep.subr.mxu0 0.0
  %491 = vmatpush2.msra.mxu0 0.0
  %492 = vmatprep.subr.mxu0 0.0
  %493 = vmatpush2.msra.mxu0 0.0
  %494 = vmatprep.subr.mxu0 0.0
  %495 = vmatpush2.msra.mxu0 0.0
  %496 = vmatprep.mubr.f32.mxu0 0.0
  %497 = vmatmul.mubr.f32.gmra.mxu0 %v20
  %v498 = vpop.f32.mrf.mxu0
  %v499 = vadd.f32 0.0, %v498
  %v500 = vpop.f32.mrf.mxu0
  %501 = vmatprep.mubr.f32.mxu0 0.0
  %502 = vmatmul.mubr.f32.gmra.mxu0 %v21
  %v503 = vpop.f32.mrf.mxu0
  %v504 = vadd.f32 0.0, %v503
  %v505 = vpop.f32.mrf.mxu0
  %506 = vmatprep.mubr.f32.mxu0 0.0
  %507 = vmatmul.mubr.f32.gmra.mxu0 %v22
  %v508 = vpop.f32.mrf.mxu0
  %v509 = vadd.f32 0.0, %v508
  %v510 = vpop.f32.mrf.mxu0
  %511 = vmatprep.mubr.f32.mxu0 0.0
  %512 = vmatmul.mubr.f32.gmra.mxu0 %v23
  %v513 = vpop.f32.mrf.mxu0
  %v514 = vadd.f32 0.0, %v513
  %v515 = vpop.f32.mrf.mxu0
  %516 = vmatprep.mubr.f32.mxu0 0.0
  %517 = vmatmul.mubr.f32.gmra.mxu0 %v24
  %v518 = vpop.f32.mrf.mxu0
  %v519 = vadd.f32 0.0, %v518
  %v520 = vpop.f32.mrf.mxu0
  %521 = vmatprep.mubr.f32.mxu0 0.0
  %522 = vmatmul.mubr.f32.gmra.mxu0 %v25
  %v523 = vpop.f32.mrf.mxu0
  %v524 = vadd.f32 0.0, %v523
  %v525 = vpop.f32.mrf.mxu0
  %526 = vmatprep.mubr.f32.mxu0 0.0
  %527 = vmatmul.mubr.f32.gmra.mxu0 %v26
  %v528 = vpop.f32.mrf.mxu0
  %v529 = vadd.f32 0.0, %v528
  %v530 = vpop.f32.mrf.mxu0
  %531 = vmatprep.mubr.f32.mxu0 0.0
  %532 = vmatmul.mubr.f32.gmra.mxu0 %v27
  %v533 = vpop.f32.mrf.mxu0
  %v534 = vadd.f32 0.0, %v533
  %v535 = vpop.f32.mrf.mxu0
  %536 = vdwg.mxu0
  %537 = vst.msk [vmem:[#allocation2 + $0xc0] sm:$0xff] %vm149, %v499
  %538 = vst.msk [vmem:[#allocation2 + $0xc8] sm:$0xff] %vm149, %v504
  %539 = vst.msk [vmem:[#allocation2 + $0xd0] sm:$0xff] %vm149, %v509
  %540 = vst.msk [vmem:[#allocation2 + $0xd8] sm:$0xff] %vm149, %v514
  %541 = vst.msk [vmem:[#allocation2 + $0xe0] sm:$0xff] %vm149, %v519
  %542 = vst.msk [vmem:[#allocation2 + $0xe8] sm:$0xff] %vm149, %v524
  %543 = vst.msk [vmem:[#allocation2 + $0xf0] sm:$0xff] %vm149, %v529
  %544 = vst.msk [vmem:[#allocation2 + $0xf8] sm:$0xff] %vm149, %v534
  %v545 = vld [vmem:[#allocation2] sm:$0xff]
  %v546 = vld [vmem:[#allocation2 + $0x8] sm:$0xff]
  %v547 = vld [vmem:[#allocation2 + $0x10] sm:$0xff]
  %v548 = vld [vmem:[#allocation2 + $0x18] sm:$0xff]
  %v549 = vld [vmem:[#allocation2 + $0x20] sm:$0xff]
  %v550 = vld [vmem:[#allocation2 + $0x28] sm:$0xff]
  %v551 = vld [vmem:[#allocation2 + $0x30] sm:$0xff]
  %v552 = vld [vmem:[#allocation2 + $0x38] sm:$0xff]
  %v553 = vld [vmem:[#allocation2 + $0x40] sm:$0xff]
  %v554 = vld [vmem:[#allocation2 + $0x48] sm:$0xff]
  %v555 = vld [vmem:[#allocation2 + $0x50] sm:$0xff]
  %v556 = vld [vmem:[#allocation2 + $0x58] sm:$0xff]
  %v557 = vld [vmem:[#allocation2 + $0x60] sm:$0xff]
  %v558 = vld [vmem:[#allocation2 + $0x68] sm:$0xff]
  %v559 = vld [vmem:[#allocation2 + $0x70] sm:$0xff]
  %v560 = vld [vmem:[#allocation2 + $0x78] sm:$0xff]
  %v561 = vld [vmem:[#allocation2 + $0x80] sm:$0xff]
  %v562 = vld [vmem:[#allocation2 + $0x88] sm:$0xff]
  %v563 = vld [vmem:[#allocation2 + $0x90] sm:$0xff]
  %v564 = vld [vmem:[#allocation2 + $0x98] sm:$0xff]
  %v565 = vld [vmem:[#allocation2 + $0xa0] sm:$0xff]
  %v566 = vld [vmem:[#allocation2 + $0xa8] sm:$0xff]
  %v567 = vld [vmem:[#allocation2 + $0xb0] sm:$0xff]
  %v568 = vld [vmem:[#allocation2 + $0xb8] sm:$0xff]
  %v569 = vld [vmem:[#allocation2 + $0xc0] sm:$0xff]
  %v570 = vld [vmem:[#allocation2 + $0xc8] sm:$0xff]
  %v571 = vld [vmem:[#allocation2 + $0xd0] sm:$0xff]
  %v572 = vld [vmem:[#allocation2 + $0xd8] sm:$0xff]
  %v573 = vld [vmem:[#allocation2 + $0xe0] sm:$0xff]
  %v574 = vld [vmem:[#allocation2 + $0xe8] sm:$0xff]
  %v575 = vld [vmem:[#allocation2 + $0xf0] sm:$0xff]
  %v576 = vld [vmem:[#allocation2 + $0xf8] sm:$0xff]
  %v577 = vld [vmem:[%s1] sm:$0xff]
  %v578 = vld [vmem:[%s1 + $0x8] sm:$0xff]
  %v579 = vld [vmem:[%s1 + $0x10] sm:$0xff]
  %v580 = vld [vmem:[%s1 + $0x18] sm:$0xff]
  %v581 = vld [vmem:[%s1 + $0x20] sm:$0xff]
  %v582 = vld [vmem:[%s1 + $0x28] sm:$0xff]
  %v583 = vld [vmem:[%s1 + $0x30] sm:$0xff]
  %v584 = vld [vmem:[%s1 + $0x38] sm:$0xff]
  %v585 = vld [vmem:[%s1 + $0x40] sm:$0xff]
  %v586 = vld [vmem:[%s1 + $0x48] sm:$0xff]
  %v587 = vld [vmem:[%s1 + $0x50] sm:$0xff]
  %v588 = vld [vmem:[%s1 + $0x58] sm:$0xff]
  %v589 = vld [vmem:[%s1 + $0x60] sm:$0xff]
  %v590 = vld [vmem:[%s1 + $0x68] sm:$0xff]
  %v591 = vld [vmem:[%s1 + $0x70] sm:$0xff]
  %v592 = vld [vmem:[%s1 + $0x78] sm:$0xff]
  %v593 = vld [vmem:[%s4] sm:$0xff]
  %v594 = vld [vmem:[%s4 + $0x8] sm:$0xff]
  %v595 = vld [vmem:[%s4 + $0x10] sm:$0xff]
  %v596 = vld [vmem:[%s4 + $0x18] sm:$0xff]
  %v597 = vld [vmem:[%s4 + $0x20] sm:$0xff]
  %v598 = vld [vmem:[%s4 + $0x28] sm:$0xff]
  %v599 = vld [vmem:[%s4 + $0x30] sm:$0xff]
  %v600 = vld [vmem:[%s4 + $0x38] sm:$0xff]
  %602 = vset.pattern.permute.xlu0 0
  %603 = vperm.xlu0 %602, %v593
  %v604 = vpop.permute.xlu0 %603
  %607 = vset.pattern.permute.xlu0 0
  %608 = vperm.xlu0 %607, %v594
  %v609 = vpop.permute.xlu0 %608
  %612 = vset.pattern.permute.xlu0 0
  %613 = vperm.xlu0 %612, %v595
  %v614 = vpop.permute.xlu0 %613
  %617 = vset.pattern.permute.xlu0 0
  %618 = vperm.xlu0 %617, %v596
  %v619 = vpop.permute.xlu0 %618
  %622 = vset.pattern.permute.xlu0 0
  %623 = vperm.xlu0 %622, %v597
  %v624 = vpop.permute.xlu0 %623
  %627 = vset.pattern.permute.xlu0 0
  %628 = vperm.xlu0 %627, %v598
  %v629 = vpop.permute.xlu0 %628
  %632 = vset.pattern.permute.xlu0 0
  %633 = vperm.xlu0 %632, %v599
  %v634 = vpop.permute.xlu0 %633
  %637 = vset.pattern.permute.xlu0 0
  %638 = vperm.xlu0 %637, %v600
  %v639 = vpop.permute.xlu0 %638
  %641 = vmatprep.subr.mxu0 0.0
  %642 = vmatpush1.msra.mxu0 %v560
  %643 = vmatprep.subr.mxu0 0.0
  %644 = vmatpush1.msra.mxu0 %v559
  %645 = vmatprep.subr.mxu0 0.0
  %646 = vmatpush1.msra.mxu0 %v558
  %647 = vmatprep.subr.mxu0 0.0
  %648 = vmatpush1.msra.mxu0 %v557
  %649 = vmatprep.subr.mxu0 0.0
  %650 = vmatpush1.msra.mxu0 %v556
  %651 = vmatprep.subr.mxu0 0.0
  %652 = vmatpush1.msra.mxu0 %v555
  %653 = vmatprep.subr.mxu0 0.0
  %654 = vmatpush1.msra.mxu0 %v554
  %655 = vmatprep.subr.mxu0 0.0
  %656 = vmatpush1.msra.mxu0 %v553
  %657 = vmatprep.subr.mxu0 0.0
  %658 = vmatpush1.msra.mxu0 %v552
  %659 = vmatprep.subr.mxu0 0.0
  %660 = vmatpush1.msra.mxu0 %v551
  %661 = vmatprep.subr.mxu0 0.0
  %662 = vmatpush1.msra.mxu0 %v550
  %663 = vmatprep.subr.mxu0 0.0
  %664 = vmatpush1.msra.mxu0 %v549
  %665 = vmatprep.subr.mxu0 0.0
  %666 = vmatpush1.msra.mxu0 %v548
  %667 = vmatprep.subr.mxu0 0.0
  %668 = vmatpush1.msra.mxu0 %v547
  %669 = vmatprep.subr.mxu0 0.0
  %670 = vmatpush1.msra.mxu0 %v546
  %671 = vmatprep.subr.mxu0 0.0
  %672 = vmatpush1.msra.mxu0 %v545
  %673 = vmatprep.subr.mxu0 0.0
  %674 = vmatpush2.msra.mxu0 %v576
  %675 = vmatprep.subr.mxu0 0.0
  %676 = vmatpush2.msra.mxu0 %v575
  %677 = vmatprep.subr.mxu0 0.0
  %678 = vmatpush2.msra.mxu0 %v574
  %679 = vmatprep.subr.mxu0 0.0
  %680 = vmatpush2.msra.mxu0 %v573
  %681 = vmatprep.subr.mxu0 0.0
  %682 = vmatpush2.msra.mxu0 %v572
  %683 = vmatprep.subr.mxu0 0.0
  %684 = vmatpush2.msra.mxu0 %v571
  %685 = vmatprep.subr.mxu0 0.0
  %686 = vmatpush2.msra.mxu0 %v570
  %687 = vmatprep.subr.mxu0 0.0
  %688 = vmatpush2.msra.mxu0 %v569
  %689 = vmatprep.subr.mxu0 0.0
  %690 = vmatpush2.msra.mxu0 %v568
  %691 = vmatprep.subr.mxu0 0.0
  %692 = vmatpush2.msra.mxu0 %v567
  %693 = vmatprep.subr.mxu0 0.0
  %694 = vmatpush2.msra.mxu0 %v566
  %695 = vmatprep.subr.mxu0 0.0
  %696 = vmatpush2.msra.mxu0 %v565
  %697 = vmatprep.subr.mxu0 0.0
  %698 = vmatpush2.msra.mxu0 %v564
  %699 = vmatprep.subr.mxu0 0.0
  %700 = vmatpush2.msra.mxu0 %v563
  %701 = vmatprep.subr.mxu0 0.0
  %702 = vmatpush2.msra.mxu0 %v562
  %703 = vmatprep.subr.mxu0 0.0
  %704 = vmatpush2.msra.mxu0 %v561
  %705 = vmatprep.mubr.f32.mxu0 %v578
  %706 = vmatmul.mubr.f32.gmra.mxu0 %v577
  %v707 = vpop.f32.mrf.mxu0
  %v708 = vadd.f32 %v604, %v707
  %v709 = vpop.f32.mrf.mxu0
  %710 = vmatprep.mubr.f32.mxu0 %v580
  %711 = vmatmul.mubr.f32.gmra.mxu0 %v579
  %v712 = vpop.f32.mrf.mxu0
  %v713 = vadd.f32 %v609, %v712
  %v714 = vpop.f32.mrf.mxu0
  %715 = vmatprep.mubr.f32.mxu0 %v582
  %716 = vmatmul.mubr.f32.gmra.mxu0 %v581
  %v717 = vpop.f32.mrf.mxu0
  %v718 = vadd.f32 %v614, %v717
  %v719 = vpop.f32.mrf.mxu0
  %720 = vmatprep.mubr.f32.mxu0 %v584
  %721 = vmatmul.mubr.f32.gmra.mxu0 %v583
  %v722 = vpop.f32.mrf.mxu0
  %v723 = vadd.f32 %v619, %v722
  %v724 = vpop.f32.mrf.mxu0
  %725 = vmatprep.mubr.f32.mxu0 %v586
  %726 = vmatmul.mubr.f32.gmra.mxu0 %v585
  %v727 = vpop.f32.mrf.mxu0
  %v728 = vadd.f32 %v624, %v727
  %v729 = vpop.f32.mrf.mxu0
  %730 = vmatprep.mubr.f32.mxu0 %v588
  %731 = vmatmul.mubr.f32.gmra.mxu0 %v587
  %v732 = vpop.f32.mrf.mxu0
  %v733 = vadd.f32 %v629, %v732
  %v734 = vpop.f32.mrf.mxu0
  %735 = vmatprep.mubr.f32.mxu0 %v590
  %736 = vmatmul.mubr.f32.gmra.mxu0 %v589
  %v737 = vpop.f32.mrf.mxu0
  %v738 = vadd.f32 %v634, %v737
  %v739 = vpop.f32.mrf.mxu0
  %740 = vmatprep.mubr.f32.mxu0 %v592
  %741 = vmatmul.mubr.f32.gmra.mxu0 %v591
  %v742 = vpop.f32.mrf.mxu0
  %v743 = vadd.f32 %v639, %v742
  %v744 = vpop.f32.mrf.mxu0
  %745 = vdwg.mxu0
  %vm746 = vcmp.gt.f32.partialorder %v708, 0.0
  %vm747 = vcmp.gt.f32.partialorder %v713, 0.0
  %vm748 = vcmp.gt.f32.partialorder %v718, 0.0
  %vm749 = vcmp.gt.f32.partialorder %v723, 0.0
  %vm750 = vcmp.gt.f32.partialorder %v728, 0.0
  %vm751 = vcmp.gt.f32.partialorder %v733, 0.0
  %vm752 = vcmp.gt.f32.partialorder %v738, 0.0
  %vm753 = vcmp.gt.f32.partialorder %v743, 0.0
  %v754 = vmul.f32 %v708, 0.2
  %v755 = vmul.f32 %v713, 0.2
  %v756 = vmul.f32 %v718, 0.2
  %v757 = vmul.f32 %v723, 0.2
  %v758 = vmul.f32 %v728, 0.2
  %v759 = vmul.f32 %v733, 0.2
  %v760 = vmul.f32 %v738, 0.2
  %v761 = vmul.f32 %v743, 0.2
  %v762 = vsel %vm746, %v708, %v754
  %v763 = vsel %vm747, %v713, %v755
  %v764 = vsel %vm748, %v718, %v756
  %v765 = vsel %vm749, %v723, %v757
  %v766 = vsel %vm750, %v728, %v758
  %v767 = vsel %vm751, %v733, %v759
  %v768 = vsel %vm752, %v738, %v760
  %v769 = vsel %vm753, %v743, %v761
  %v770 = vld [vmem:[%s2 + $0x200] sm:$0xff]
  %v771 = vld [vmem:[%s2 + $0x208] sm:$0xff]
  %v772 = vld [vmem:[%s2 + $0x210] sm:$0xff]
  %v773 = vld [vmem:[%s2 + $0x218] sm:$0xff]
  %v774 = vld [vmem:[%s2 + $0x220] sm:$0xff]
  %v775 = vld [vmem:[%s2 + $0x228] sm:$0xff]
  %v776 = vld [vmem:[%s2 + $0x230] sm:$0xff]
  %v777 = vld [vmem:[%s2 + $0x238] sm:$0xff]
  %v779 = vsel %vm149, %v762, 0
  %v782 = vsel %vm149, %v763, 0
  %v785 = vsel %vm149, %v764, 0
  %v788 = vsel %vm149, %v765, 0
  %v791 = vsel %vm149, %v766, 0
  %v794 = vsel %vm149, %v767, 0
  %v797 = vsel %vm149, %v768, 0
  %v800 = vsel %vm149, %v769, 0
  %802 = vmatprep.subr.mxu0 0.0
  %803 = vmatpush1.msra.mxu0 0.0
  %804 = vmatprep.subr.mxu0 0.0
  %805 = vmatpush1.msra.mxu0 0.0
  %806 = vmatprep.subr.mxu0 0.0
  %807 = vmatpush1.msra.mxu0 0.0
  %808 = vmatprep.subr.mxu0 0.0
  %809 = vmatpush1.msra.mxu0 0.0
  %810 = vmatprep.subr.mxu0 0.0
  %811 = vmatpush1.msra.mxu0 0.0
  %812 = vmatprep.subr.mxu0 0.0
  %813 = vmatpush1.msra.mxu0 0.0
  %814 = vmatprep.subr.mxu0 0.0
  %815 = vmatpush1.msra.mxu0 0.0
  %816 = vmatprep.subr.mxu0 0.0
  %817 = vmatpush1.msra.mxu0 0.0
  %818 = vmatprep.subr.mxu0 0.0
  %819 = vmatpush1.msra.mxu0 %v777
  %820 = vmatprep.subr.mxu0 0.0
  %821 = vmatpush1.msra.mxu0 %v776
  %822 = vmatprep.subr.mxu0 0.0
  %823 = vmatpush1.msra.mxu0 %v775
  %824 = vmatprep.subr.mxu0 0.0
  %825 = vmatpush1.msra.mxu0 %v774
  %826 = vmatprep.subr.mxu0 0.0
  %827 = vmatpush1.msra.mxu0 %v773
  %828 = vmatprep.subr.mxu0 0.0
  %829 = vmatpush1.msra.mxu0 %v772
  %830 = vmatprep.subr.mxu0 0.0
  %831 = vmatpush1.msra.mxu0 %v771
  %832 = vmatprep.subr.mxu0 0.0
  %833 = vmatpush1.msra.mxu0 %v770
  %834 = vmatprep.subr.mxu0 0.0
  %835 = vmatpush2.msra.mxu0 0.0
  %836 = vmatprep.subr.mxu0 0.0
  %837 = vmatpush2.msra.mxu0 0.0
  %838 = vmatprep.subr.mxu0 0.0
  %839 = vmatpush2.msra.mxu0 0.0
  %840 = vmatprep.subr.mxu0 0.0
  %841 = vmatpush2.msra.mxu0 0.0
  %842 = vmatprep.subr.mxu0 0.0
  %843 = vmatpush2.msra.mxu0 0.0
  %844 = vmatprep.subr.mxu0 0.0
  %845 = vmatpush2.msra.mxu0 0.0
  %846 = vmatprep.subr.mxu0 0.0
  %847 = vmatpush2.msra.mxu0 0.0
  %848 = vmatprep.subr.mxu0 0.0
  %849 = vmatpush2.msra.mxu0 0.0
  %850 = vmatprep.subr.mxu0 0.0
  %851 = vmatpush2.msra.mxu0 0.0
  %852 = vmatprep.subr.mxu0 0.0
  %853 = vmatpush2.msra.mxu0 0.0
  %854 = vmatprep.subr.mxu0 0.0
  %855 = vmatpush2.msra.mxu0 0.0
  %856 = vmatprep.subr.mxu0 0.0
  %857 = vmatpush2.msra.mxu0 0.0
  %858 = vmatprep.subr.mxu0 0.0
  %859 = vmatpush2.msra.mxu0 0.0
  %860 = vmatprep.subr.mxu0 0.0
  %861 = vmatpush2.msra.mxu0 0.0
  %862 = vmatprep.subr.mxu0 0.0
  %863 = vmatpush2.msra.mxu0 0.0
  %864 = vmatprep.subr.mxu0 0.0
  %865 = vmatpush2.msra.mxu0 0.0
  %866 = vmatprep.mubr.f32.mxu0 0.0
  %867 = vmatmul.mubr.f32.gmra.mxu0 %v779
  %v868 = vpop.f32.mrf.mxu0
  %v869 = vadd.f32 0.0, %v868
  %v870 = vpop.f32.mrf.mxu0
  %871 = vmatprep.mubr.f32.mxu0 0.0
  %872 = vmatmul.mubr.f32.gmra.mxu0 %v782
  %v873 = vpop.f32.mrf.mxu0
  %v874 = vadd.f32 0.0, %v873
  %v875 = vpop.f32.mrf.mxu0
  %876 = vmatprep.mubr.f32.mxu0 0.0
  %877 = vmatmul.mubr.f32.gmra.mxu0 %v785
  %v878 = vpop.f32.mrf.mxu0
  %v879 = vadd.f32 0.0, %v878
  %v880 = vpop.f32.mrf.mxu0
  %881 = vmatprep.mubr.f32.mxu0 0.0
  %882 = vmatmul.mubr.f32.gmra.mxu0 %v788
  %v883 = vpop.f32.mrf.mxu0
  %v884 = vadd.f32 0.0, %v883
  %v885 = vpop.f32.mrf.mxu0
  %886 = vmatprep.mubr.f32.mxu0 0.0
  %887 = vmatmul.mubr.f32.gmra.mxu0 %v791
  %v888 = vpop.f32.mrf.mxu0
  %v889 = vadd.f32 0.0, %v888
  %v890 = vpop.f32.mrf.mxu0
  %891 = vmatprep.mubr.f32.mxu0 0.0
  %892 = vmatmul.mubr.f32.gmra.mxu0 %v794
  %v893 = vpop.f32.mrf.mxu0
  %v894 = vadd.f32 0.0, %v893
  %v895 = vpop.f32.mrf.mxu0
  %896 = vmatprep.mubr.f32.mxu0 0.0
  %897 = vmatmul.mubr.f32.gmra.mxu0 %v797
  %v898 = vpop.f32.mrf.mxu0
  %v899 = vadd.f32 0.0, %v898
  %v900 = vpop.f32.mrf.mxu0
  %901 = vmatprep.mubr.f32.mxu0 0.0
  %902 = vmatmul.mubr.f32.gmra.mxu0 %v800
  %v903 = vpop.f32.mrf.mxu0
  %v904 = vadd.f32 0.0, %v903
  %v905 = vpop.f32.mrf.mxu0
  %906 = vdwg.mxu0
  %vm907 = vcmask 261120
  %908 = vst.msk [vmem:[#allocation2] sm:$0xff] %vm907, %v869
  %909 = vst.msk [vmem:[#allocation2 + $0x8] sm:$0xff] %vm907, %v874
  %910 = vst.msk [vmem:[#allocation2 + $0x10] sm:$0xff] %vm907, %v879
  %911 = vst.msk [vmem:[#allocation2 + $0x18] sm:$0xff] %vm907, %v884
  %912 = vst.msk [vmem:[#allocation2 + $0x20] sm:$0xff] %vm907, %v889
  %913 = vst.msk [vmem:[#allocation2 + $0x28] sm:$0xff] %vm907, %v894
  %914 = vst.msk [vmem:[#allocation2 + $0x30] sm:$0xff] %vm907, %v899
  %915 = vst.msk [vmem:[#allocation2 + $0x38] sm:$0xff] %vm907, %v904
  %v916 = vld [vmem:[%s2 + $0x240] sm:$0xff]
  %v917 = vld [vmem:[%s2 + $0x248] sm:$0xff]
  %v918 = vld [vmem:[%s2 + $0x250] sm:$0xff]
  %v919 = vld [vmem:[%s2 + $0x258] sm:$0xff]
  %v920 = vld [vmem:[%s2 + $0x260] sm:$0xff]
  %v921 = vld [vmem:[%s2 + $0x268] sm:$0xff]
  %v922 = vld [vmem:[%s2 + $0x270] sm:$0xff]
  %v923 = vld [vmem:[%s2 + $0x278] sm:$0xff]
  %924 = vmatprep.subr.mxu0 0.0
  %925 = vmatpush1.msra.mxu0 0.0
  %926 = vmatprep.subr.mxu0 0.0
  %927 = vmatpush1.msra.mxu0 0.0
  %928 = vmatprep.subr.mxu0 0.0
  %929 = vmatpush1.msra.mxu0 0.0
  %930 = vmatprep.subr.mxu0 0.0
  %931 = vmatpush1.msra.mxu0 0.0
  %932 = vmatprep.subr.mxu0 0.0
  %933 = vmatpush1.msra.mxu0 0.0
  %934 = vmatprep.subr.mxu0 0.0
  %935 = vmatpush1.msra.mxu0 0.0
  %936 = vmatprep.subr.mxu0 0.0
  %937 = vmatpush1.msra.mxu0 0.0
  %938 = vmatprep.subr.mxu0 0.0
  %939 = vmatpush1.msra.mxu0 0.0
  %940 = vmatprep.subr.mxu0 0.0
  %941 = vmatpush1.msra.mxu0 %v923
  %942 = vmatprep.subr.mxu0 0.0
  %943 = vmatpush1.msra.mxu0 %v922
  %944 = vmatprep.subr.mxu0 0.0
  %945 = vmatpush1.msra.mxu0 %v921
  %946 = vmatprep.subr.mxu0 0.0
  %947 = vmatpush1.msra.mxu0 %v920
  %948 = vmatprep.subr.mxu0 0.0
  %949 = vmatpush1.msra.mxu0 %v919
  %950 = vmatprep.subr.mxu0 0.0
  %951 = vmatpush1.msra.mxu0 %v918
  %952 = vmatprep.subr.mxu0 0.0
  %953 = vmatpush1.msra.mxu0 %v917
  %954 = vmatprep.subr.mxu0 0.0
  %955 = vmatpush1.msra.mxu0 %v916
  %956 = vmatprep.subr.mxu0 0.0
  %957 = vmatpush2.msra.mxu0 0.0
  %958 = vmatprep.subr.mxu0 0.0
  %959 = vmatpush2.msra.mxu0 0.0
  %960 = vmatprep.subr.mxu0 0.0
  %961 = vmatpush2.msra.mxu0 0.0
  %962 = vmatprep.subr.mxu0 0.0
  %963 = vmatpush2.msra.mxu0 0.0
  %964 = vmatprep.subr.mxu0 0.0
  %965 = vmatpush2.msra.mxu0 0.0
  %966 = vmatprep.subr.mxu0 0.0
  %967 = vmatpush2.msra.mxu0 0.0
  %968 = vmatprep.subr.mxu0 0.0
  %969 = vmatpush2.msra.mxu0 0.0
  %970 = vmatprep.subr.mxu0 0.0
  %971 = vmatpush2.msra.mxu0 0.0
  %972 = vmatprep.subr.mxu0 0.0
  %973 = vmatpush2.msra.mxu0 0.0
  %974 = vmatprep.subr.mxu0 0.0
  %975 = vmatpush2.msra.mxu0 0.0
  %976 = vmatprep.subr.mxu0 0.0
  %977 = vmatpush2.msra.mxu0 0.0
  %978 = vmatprep.subr.mxu0 0.0
  %979 = vmatpush2.msra.mxu0 0.0
  %980 = vmatprep.subr.mxu0 0.0
  %981 = vmatpush2.msra.mxu0 0.0
  %982 = vmatprep.subr.mxu0 0.0
  %983 = vmatpush2.msra.mxu0 0.0
  %984 = vmatprep.subr.mxu0 0.0
  %985 = vmatpush2.msra.mxu0 0.0
  %986 = vmatprep.subr.mxu0 0.0
  %987 = vmatpush2.msra.mxu0 0.0
  %988 = vmatprep.mubr.f32.mxu0 0.0
  %989 = vmatmul.mubr.f32.gmra.mxu0 %v779
  %v990 = vpop.f32.mrf.mxu0
  %v991 = vadd.f32 0.0, %v990
  %v992 = vpop.f32.mrf.mxu0
  %993 = vmatprep.mubr.f32.mxu0 0.0
  %994 = vmatmul.mubr.f32.gmra.mxu0 %v782
  %v995 = vpop.f32.mrf.mxu0
  %v996 = vadd.f32 0.0, %v995
  %v997 = vpop.f32.mrf.mxu0
  %998 = vmatprep.mubr.f32.mxu0 0.0
  %999 = vmatmul.mubr.f32.gmra.mxu0 %v785
  %v1000 = vpop.f32.mrf.mxu0
  %v1001 = vadd.f32 0.0, %v1000
  %v1002 = vpop.f32.mrf.mxu0
  %1003 = vmatprep.mubr.f32.mxu0 0.0
  %1004 = vmatmul.mubr.f32.gmra.mxu0 %v788
  %v1005 = vpop.f32.mrf.mxu0
  %v1006 = vadd.f32 0.0, %v1005
  %v1007 = vpop.f32.mrf.mxu0
  %1008 = vmatprep.mubr.f32.mxu0 0.0
  %1009 = vmatmul.mubr.f32.gmra.mxu0 %v791
  %v1010 = vpop.f32.mrf.mxu0
  %v1011 = vadd.f32 0.0, %v1010
  %v1012 = vpop.f32.mrf.mxu0
  %1013 = vmatprep.mubr.f32.mxu0 0.0
  %1014 = vmatmul.mubr.f32.gmra.mxu0 %v794
  %v1015 = vpop.f32.mrf.mxu0
  %v1016 = vadd.f32 0.0, %v1015
  %v1017 = vpop.f32.mrf.mxu0
  %1018 = vmatprep.mubr.f32.mxu0 0.0
  %1019 = vmatmul.mubr.f32.gmra.mxu0 %v797
  %v1020 = vpop.f32.mrf.mxu0
  %v1021 = vadd.f32 0.0, %v1020
  %v1022 = vpop.f32.mrf.mxu0
  %1023 = vmatprep.mubr.f32.mxu0 0.0
  %1024 = vmatmul.mubr.f32.gmra.mxu0 %v800
  %v1025 = vpop.f32.mrf.mxu0
  %v1026 = vadd.f32 0.0, %v1025
  %v1027 = vpop.f32.mrf.mxu0
  %1028 = vdwg.mxu0
  %1029 = vst.msk [vmem:[#allocation2 + $0x40] sm:$0xff] %vm907, %v991
  %1030 = vst.msk [vmem:[#allocation2 + $0x48] sm:$0xff] %vm907, %v996
  %1031 = vst.msk [vmem:[#allocation2 + $0x50] sm:$0xff] %vm907, %v1001
  %1032 = vst.msk [vmem:[#allocation2 + $0x58] sm:$0xff] %vm907, %v1006
  %1033 = vst.msk [vmem:[#allocation2 + $0x60] sm:$0xff] %vm907, %v1011
  %1034 = vst.msk [vmem:[#allocation2 + $0x68] sm:$0xff] %vm907, %v1016
  %1035 = vst.msk [vmem:[#allocation2 + $0x70] sm:$0xff] %vm907, %v1021
  %1036 = vst.msk [vmem:[#allocation2 + $0x78] sm:$0xff] %vm907, %v1026
  %v1037 = vld [vmem:[%s2 + $0x280] sm:$0xff]
  %v1038 = vld [vmem:[%s2 + $0x288] sm:$0xff]
  %v1039 = vld [vmem:[%s2 + $0x290] sm:$0xff]
  %v1040 = vld [vmem:[%s2 + $0x298] sm:$0xff]
  %v1041 = vld [vmem:[%s2 + $0x2a0] sm:$0xff]
  %v1042 = vld [vmem:[%s2 + $0x2a8] sm:$0xff]
  %v1043 = vld [vmem:[%s2 + $0x2b0] sm:$0xff]
  %v1044 = vld [vmem:[%s2 + $0x2b8] sm:$0xff]
  %1045 = vmatprep.subr.mxu0 0.0
  %1046 = vmatpush1.msra.mxu0 0.0
  %1047 = vmatprep.subr.mxu0 0.0
  %1048 = vmatpush1.msra.mxu0 0.0
  %1049 = vmatprep.subr.mxu0 0.0
  %1050 = vmatpush1.msra.mxu0 0.0
  %1051 = vmatprep.subr.mxu0 0.0
  %1052 = vmatpush1.msra.mxu0 0.0
  %1053 = vmatprep.subr.mxu0 0.0
  %1054 = vmatpush1.msra.mxu0 0.0
  %1055 = vmatprep.subr.mxu0 0.0
  %1056 = vmatpush1.msra.mxu0 0.0
  %1057 = vmatprep.subr.mxu0 0.0
  %1058 = vmatpush1.msra.mxu0 0.0
  %1059 = vmatprep.subr.mxu0 0.0
  %1060 = vmatpush1.msra.mxu0 0.0
  %1061 = vmatprep.subr.mxu0 0.0
  %1062 = vmatpush1.msra.mxu0 %v1044
  %1063 = vmatprep.subr.mxu0 0.0
  %1064 = vmatpush1.msra.mxu0 %v1043
  %1065 = vmatprep.subr.mxu0 0.0
  %1066 = vmatpush1.msra.mxu0 %v1042
  %1067 = vmatprep.subr.mxu0 0.0
  %1068 = vmatpush1.msra.mxu0 %v1041
  %1069 = vmatprep.subr.mxu0 0.0
  %1070 = vmatpush1.msra.mxu0 %v1040
  %1071 = vmatprep.subr.mxu0 0.0
  %1072 = vmatpush1.msra.mxu0 %v1039
  %1073 = vmatprep.subr.mxu0 0.0
  %1074 = vmatpush1.msra.mxu0 %v1038
  %1075 = vmatprep.subr.mxu0 0.0
  %1076 = vmatpush1.msra.mxu0 %v1037
  %1077 = vmatprep.subr.mxu0 0.0
  %1078 = vmatpush2.msra.mxu0 0.0
  %1079 = vmatprep.subr.mxu0 0.0
  %1080 = vmatpush2.msra.mxu0 0.0
  %1081 = vmatprep.subr.mxu0 0.0
  %1082 = vmatpush2.msra.mxu0 0.0
  %1083 = vmatprep.subr.mxu0 0.0
  %1084 = vmatpush2.msra.mxu0 0.0
  %1085 = vmatprep.subr.mxu0 0.0
  %1086 = vmatpush2.msra.mxu0 0.0
  %1087 = vmatprep.subr.mxu0 0.0
  %1088 = vmatpush2.msra.mxu0 0.0
  %1089 = vmatprep.subr.mxu0 0.0
  %1090 = vmatpush2.msra.mxu0 0.0
  %1091 = vmatprep.subr.mxu0 0.0
  %1092 = vmatpush2.msra.mxu0 0.0
  %1093 = vmatprep.subr.mxu0 0.0
  %1094 = vmatpush2.msra.mxu0 0.0
  %1095 = vmatprep.subr.mxu0 0.0
  %1096 = vmatpush2.msra.mxu0 0.0
  %1097 = vmatprep.subr.mxu0 0.0
  %1098 = vmatpush2.msra.mxu0 0.0
  %1099 = vmatprep.subr.mxu0 0.0
  %1100 = vmatpush2.msra.mxu0 0.0
  %1101 = vmatprep.subr.mxu0 0.0
  %1102 = vmatpush2.msra.mxu0 0.0
  %1103 = vmatprep.subr.mxu0 0.0
  %1104 = vmatpush2.msra.mxu0 0.0
  %1105 = vmatprep.subr.mxu0 0.0
  %1106 = vmatpush2.msra.mxu0 0.0
  %1107 = vmatprep.subr.mxu0 0.0
  %1108 = vmatpush2.msra.mxu0 0.0
  %1109 = vmatprep.mubr.f32.mxu0 0.0
  %1110 = vmatmul.mubr.f32.gmra.mxu0 %v779
  %v1111 = vpop.f32.mrf.mxu0
  %v1112 = vadd.f32 0.0, %v1111
  %v1113 = vpop.f32.mrf.mxu0
  %1114 = vmatprep.mubr.f32.mxu0 0.0
  %1115 = vmatmul.mubr.f32.gmra.mxu0 %v782
  %v1116 = vpop.f32.mrf.mxu0
  %v1117 = vadd.f32 0.0, %v1116
  %v1118 = vpop.f32.mrf.mxu0
  %1119 = vmatprep.mubr.f32.mxu0 0.0
  %1120 = vmatmul.mubr.f32.gmra.mxu0 %v785
  %v1121 = vpop.f32.mrf.mxu0
  %v1122 = vadd.f32 0.0, %v1121
  %v1123 = vpop.f32.mrf.mxu0
  %1124 = vmatprep.mubr.f32.mxu0 0.0
  %1125 = vmatmul.mubr.f32.gmra.mxu0 %v788
  %v1126 = vpop.f32.mrf.mxu0
  %v1127 = vadd.f32 0.0, %v1126
  %v1128 = vpop.f32.mrf.mxu0
  %1129 = vmatprep.mubr.f32.mxu0 0.0
  %1130 = vmatmul.mubr.f32.gmra.mxu0 %v791
  %v1131 = vpop.f32.mrf.mxu0
  %v1132 = vadd.f32 0.0, %v1131
  %v1133 = vpop.f32.mrf.mxu0
  %1134 = vmatprep.mubr.f32.mxu0 0.0
  %1135 = vmatmul.mubr.f32.gmra.mxu0 %v794
  %v1136 = vpop.f32.mrf.mxu0
  %v1137 = vadd.f32 0.0, %v1136
  %v1138 = vpop.f32.mrf.mxu0
  %1139 = vmatprep.mubr.f32.mxu0 0.0
  %1140 = vmatmul.mubr.f32.gmra.mxu0 %v797
  %v1141 = vpop.f32.mrf.mxu0
  %v1142 = vadd.f32 0.0, %v1141
  %v1143 = vpop.f32.mrf.mxu0
  %1144 = vmatprep.mubr.f32.mxu0 0.0
  %1145 = vmatmul.mubr.f32.gmra.mxu0 %v800
  %v1146 = vpop.f32.mrf.mxu0
  %v1147 = vadd.f32 0.0, %v1146
  %v1148 = vpop.f32.mrf.mxu0
  %1149 = vdwg.mxu0
  %1150 = vst.msk [vmem:[#allocation2 + $0x80] sm:$0xff] %vm907, %v1112
  %1151 = vst.msk [vmem:[#allocation2 + $0x88] sm:$0xff] %vm907, %v1117
  %1152 = vst.msk [vmem:[#allocation2 + $0x90] sm:$0xff] %vm907, %v1122
  %1153 = vst.msk [vmem:[#allocation2 + $0x98] sm:$0xff] %vm907, %v1127
  %1154 = vst.msk [vmem:[#allocation2 + $0xa0] sm:$0xff] %vm907, %v1132
  %1155 = vst.msk [vmem:[#allocation2 + $0xa8] sm:$0xff] %vm907, %v1137
  %1156 = vst.msk [vmem:[#allocation2 + $0xb0] sm:$0xff] %vm907, %v1142
  %1157 = vst.msk [vmem:[#allocation2 + $0xb8] sm:$0xff] %vm907, %v1147
  %v1158 = vld [vmem:[%s2 + $0x2c0] sm:$0xff]
  %v1159 = vld [vmem:[%s2 + $0x2c8] sm:$0xff]
  %v1160 = vld [vmem:[%s2 + $0x2d0] sm:$0xff]
  %v1161 = vld [vmem:[%s2 + $0x2d8] sm:$0xff]
  %v1162 = vld [vmem:[%s2 + $0x2e0] sm:$0xff]
  %v1163 = vld [vmem:[%s2 + $0x2e8] sm:$0xff]
  %v1164 = vld [vmem:[%s2 + $0x2f0] sm:$0xff]
  %v1165 = vld [vmem:[%s2 + $0x2f8] sm:$0xff]
  %1166 = vmatprep.subr.mxu0 0.0
  %1167 = vmatpush1.msra.mxu0 0.0
  %1168 = vmatprep.subr.mxu0 0.0
  %1169 = vmatpush1.msra.mxu0 0.0
  %1170 = vmatprep.subr.mxu0 0.0
  %1171 = vmatpush1.msra.mxu0 0.0
  %1172 = vmatprep.subr.mxu0 0.0
  %1173 = vmatpush1.msra.mxu0 0.0
  %1174 = vmatprep.subr.mxu0 0.0
  %1175 = vmatpush1.msra.mxu0 0.0
  %1176 = vmatprep.subr.mxu0 0.0
  %1177 = vmatpush1.msra.mxu0 0.0
  %1178 = vmatprep.subr.mxu0 0.0
  %1179 = vmatpush1.msra.mxu0 0.0
  %1180 = vmatprep.subr.mxu0 0.0
  %1181 = vmatpush1.msra.mxu0 0.0
  %1182 = vmatprep.subr.mxu0 0.0
  %1183 = vmatpush1.msra.mxu0 %v1165
  %1184 = vmatprep.subr.mxu0 0.0
  %1185 = vmatpush1.msra.mxu0 %v1164
  %1186 = vmatprep.subr.mxu0 0.0
  %1187 = vmatpush1.msra.mxu0 %v1163
  %1188 = vmatprep.subr.mxu0 0.0
  %1189 = vmatpush1.msra.mxu0 %v1162
  %1190 = vmatprep.subr.mxu0 0.0
  %1191 = vmatpush1.msra.mxu0 %v1161
  %1192 = vmatprep.subr.mxu0 0.0
  %1193 = vmatpush1.msra.mxu0 %v1160
  %1194 = vmatprep.subr.mxu0 0.0
  %1195 = vmatpush1.msra.mxu0 %v1159
  %1196 = vmatprep.subr.mxu0 0.0
  %1197 = vmatpush1.msra.mxu0 %v1158
  %1198 = vmatprep.subr.mxu0 0.0
  %1199 = vmatpush2.msra.mxu0 0.0
  %1200 = vmatprep.subr.mxu0 0.0
  %1201 = vmatpush2.msra.mxu0 0.0
  %1202 = vmatprep.subr.mxu0 0.0
  %1203 = vmatpush2.msra.mxu0 0.0
  %1204 = vmatprep.subr.mxu0 0.0
  %1205 = vmatpush2.msra.mxu0 0.0
  %1206 = vmatprep.subr.mxu0 0.0
  %1207 = vmatpush2.msra.mxu0 0.0
  %1208 = vmatprep.subr.mxu0 0.0
  %1209 = vmatpush2.msra.mxu0 0.0
  %1210 = vmatprep.subr.mxu0 0.0
  %1211 = vmatpush2.msra.mxu0 0.0
  %1212 = vmatprep.subr.mxu0 0.0
  %1213 = vmatpush2.msra.mxu0 0.0
  %1214 = vmatprep.subr.mxu0 0.0
  %1215 = vmatpush2.msra.mxu0 0.0
  %1216 = vmatprep.subr.mxu0 0.0
  %1217 = vmatpush2.msra.mxu0 0.0
  %1218 = vmatprep.subr.mxu0 0.0
  %1219 = vmatpush2.msra.mxu0 0.0
  %1220 = vmatprep.subr.mxu0 0.0
  %1221 = vmatpush2.msra.mxu0 0.0
  %1222 = vmatprep.subr.mxu0 0.0
  %1223 = vmatpush2.msra.mxu0 0.0
  %1224 = vmatprep.subr.mxu0 0.0
  %1225 = vmatpush2.msra.mxu0 0.0
  %1226 = vmatprep.subr.mxu0 0.0
  %1227 = vmatpush2.msra.mxu0 0.0
  %1228 = vmatprep.subr.mxu0 0.0
  %1229 = vmatpush2.msra.mxu0 0.0
  %1230 = vmatprep.mubr.f32.mxu0 0.0
  %1231 = vmatmul.mubr.f32.gmra.mxu0 %v779
  %v1232 = vpop.f32.mrf.mxu0
  %v1233 = vadd.f32 0.0, %v1232
  %v1234 = vpop.f32.mrf.mxu0
  %1235 = vmatprep.mubr.f32.mxu0 0.0
  %1236 = vmatmul.mubr.f32.gmra.mxu0 %v782
  %v1237 = vpop.f32.mrf.mxu0
  %v1238 = vadd.f32 0.0, %v1237
  %v1239 = vpop.f32.mrf.mxu0
  %1240 = vmatprep.mubr.f32.mxu0 0.0
  %1241 = vmatmul.mubr.f32.gmra.mxu0 %v785
  %v1242 = vpop.f32.mrf.mxu0
  %v1243 = vadd.f32 0.0, %v1242
  %v1244 = vpop.f32.mrf.mxu0
  %1245 = vmatprep.mubr.f32.mxu0 0.0
  %1246 = vmatmul.mubr.f32.gmra.mxu0 %v788
  %v1247 = vpop.f32.mrf.mxu0
  %v1248 = vadd.f32 0.0, %v1247
  %v1249 = vpop.f32.mrf.mxu0
  %1250 = vmatprep.mubr.f32.mxu0 0.0
  %1251 = vmatmul.mubr.f32.gmra.mxu0 %v791
  %v1252 = vpop.f32.mrf.mxu0
  %v1253 = vadd.f32 0.0, %v1252
  %v1254 = vpop.f32.mrf.mxu0
  %1255 = vmatprep.mubr.f32.mxu0 0.0
  %1256 = vmatmul.mubr.f32.gmra.mxu0 %v794
  %v1257 = vpop.f32.mrf.mxu0
  %v1258 = vadd.f32 0.0, %v1257
  %v1259 = vpop.f32.mrf.mxu0
  %1260 = vmatprep.mubr.f32.mxu0 0.0
  %1261 = vmatmul.mubr.f32.gmra.mxu0 %v797
  %v1262 = vpop.f32.mrf.mxu0
  %v1263 = vadd.f32 0.0, %v1262
  %v1264 = vpop.f32.mrf.mxu0
  %1265 = vmatprep.mubr.f32.mxu0 0.0
  %1266 = vmatmul.mubr.f32.gmra.mxu0 %v800
  %v1267 = vpop.f32.mrf.mxu0
  %v1268 = vadd.f32 0.0, %v1267
  %v1269 = vpop.f32.mrf.mxu0
  %1270 = vdwg.mxu0
  %1271 = vst.msk [vmem:[#allocation2 + $0xc0] sm:$0xff] %vm907, %v1233
  %1272 = vst.msk [vmem:[#allocation2 + $0xc8] sm:$0xff] %vm907, %v1238
  %1273 = vst.msk [vmem:[#allocation2 + $0xd0] sm:$0xff] %vm907, %v1243
  %1274 = vst.msk [vmem:[#allocation2 + $0xd8] sm:$0xff] %vm907, %v1248
  %1275 = vst.msk [vmem:[#allocation2 + $0xe0] sm:$0xff] %vm907, %v1253
  %1276 = vst.msk [vmem:[#allocation2 + $0xe8] sm:$0xff] %vm907, %v1258
  %1277 = vst.msk [vmem:[#allocation2 + $0xf0] sm:$0xff] %vm907, %v1263
  %1278 = vst.msk [vmem:[#allocation2 + $0xf8] sm:$0xff] %vm907, %v1268
  %v1279 = vld [vmem:[#allocation2] sm:$0xff]
  %v1280 = vld [vmem:[#allocation2 + $0x8] sm:$0xff]
  %v1281 = vld [vmem:[#allocation2 + $0x10] sm:$0xff]
  %v1282 = vld [vmem:[#allocation2 + $0x18] sm:$0xff]
  %v1283 = vld [vmem:[#allocation2 + $0x20] sm:$0xff]
  %v1284 = vld [vmem:[#allocation2 + $0x28] sm:$0xff]
  %v1285 = vld [vmem:[#allocation2 + $0x30] sm:$0xff]
  %v1286 = vld [vmem:[#allocation2 + $0x38] sm:$0xff]
  %v1287 = vld [vmem:[#allocation2 + $0x40] sm:$0xff]
  %v1288 = vld [vmem:[#allocation2 + $0x48] sm:$0xff]
  %v1289 = vld [vmem:[#allocation2 + $0x50] sm:$0xff]
  %v1290 = vld [vmem:[#allocation2 + $0x58] sm:$0xff]
  %v1291 = vld [vmem:[#allocation2 + $0x60] sm:$0xff]
  %v1292 = vld [vmem:[#allocation2 + $0x68] sm:$0xff]
  %v1293 = vld [vmem:[#allocation2 + $0x70] sm:$0xff]
  %v1294 = vld [vmem:[#allocation2 + $0x78] sm:$0xff]
  %v1295 = vld [vmem:[#allocation2 + $0x80] sm:$0xff]
  %v1296 = vld [vmem:[#allocation2 + $0x88] sm:$0xff]
  %v1297 = vld [vmem:[#allocation2 + $0x90] sm:$0xff]
  %v1298 = vld [vmem:[#allocation2 + $0x98] sm:$0xff]
  %v1299 = vld [vmem:[#allocation2 + $0xa0] sm:$0xff]
  %v1300 = vld [vmem:[#allocation2 + $0xa8] sm:$0xff]
  %v1301 = vld [vmem:[#allocation2 + $0xb0] sm:$0xff]
  %v1302 = vld [vmem:[#allocation2 + $0xb8] sm:$0xff]
  %v1303 = vld [vmem:[#allocation2 + $0xc0] sm:$0xff]
  %v1304 = vld [vmem:[#allocation2 + $0xc8] sm:$0xff]
  %v1305 = vld [vmem:[#allocation2 + $0xd0] sm:$0xff]
  %v1306 = vld [vmem:[#allocation2 + $0xd8] sm:$0xff]
  %v1307 = vld [vmem:[#allocation2 + $0xe0] sm:$0xff]
  %v1308 = vld [vmem:[#allocation2 + $0xe8] sm:$0xff]
  %v1309 = vld [vmem:[#allocation2 + $0xf0] sm:$0xff]
  %v1310 = vld [vmem:[#allocation2 + $0xf8] sm:$0xff]
  %v1311 = vld [vmem:[%s1 + $0x80] sm:$0xff]
  %v1312 = vld [vmem:[%s1 + $0x88] sm:$0xff]
  %v1313 = vld [vmem:[%s1 + $0x90] sm:$0xff]
  %v1314 = vld [vmem:[%s1 + $0x98] sm:$0xff]
  %v1315 = vld [vmem:[%s1 + $0xa0] sm:$0xff]
  %v1316 = vld [vmem:[%s1 + $0xa8] sm:$0xff]
  %v1317 = vld [vmem:[%s1 + $0xb0] sm:$0xff]
  %v1318 = vld [vmem:[%s1 + $0xb8] sm:$0xff]
  %1319 = vmatprep.subr.mxu0 0.0
  %1320 = vmatpush1.msra.mxu0 %v1294
  %1321 = vmatprep.subr.mxu0 0.0
  %1322 = vmatpush1.msra.mxu0 %v1293
  %1323 = vmatprep.subr.mxu0 0.0
  %1324 = vmatpush1.msra.mxu0 %v1292
  %1325 = vmatprep.subr.mxu0 0.0
  %1326 = vmatpush1.msra.mxu0 %v1291
  %1327 = vmatprep.subr.mxu0 0.0
  %1328 = vmatpush1.msra.mxu0 %v1290
  %1329 = vmatprep.subr.mxu0 0.0
  %1330 = vmatpush1.msra.mxu0 %v1289
  %1331 = vmatprep.subr.mxu0 0.0
  %1332 = vmatpush1.msra.mxu0 %v1288
  %1333 = vmatprep.subr.mxu0 0.0
  %1334 = vmatpush1.msra.mxu0 %v1287
  %1335 = vmatprep.subr.mxu0 0.0
  %1336 = vmatpush1.msra.mxu0 %v1286
  %1337 = vmatprep.subr.mxu0 0.0
  %1338 = vmatpush1.msra.mxu0 %v1285
  %1339 = vmatprep.subr.mxu0 0.0
  %1340 = vmatpush1.msra.mxu0 %v1284
  %1341 = vmatprep.subr.mxu0 0.0
  %1342 = vmatpush1.msra.mxu0 %v1283
  %1343 = vmatprep.subr.mxu0 0.0
  %1344 = vmatpush1.msra.mxu0 %v1282
  %1345 = vmatprep.subr.mxu0 0.0
  %1346 = vmatpush1.msra.mxu0 %v1281
  %1347 = vmatprep.subr.mxu0 0.0
  %1348 = vmatpush1.msra.mxu0 %v1280
  %1349 = vmatprep.subr.mxu0 0.0
  %1350 = vmatpush1.msra.mxu0 %v1279
  %1351 = vmatprep.subr.mxu0 0.0
  %1352 = vmatpush2.msra.mxu0 %v1310
  %1353 = vmatprep.subr.mxu0 0.0
  %1354 = vmatpush2.msra.mxu0 %v1309
  %1355 = vmatprep.subr.mxu0 0.0
  %1356 = vmatpush2.msra.mxu0 %v1308
  %1357 = vmatprep.subr.mxu0 0.0
  %1358 = vmatpush2.msra.mxu0 %v1307
  %1359 = vmatprep.subr.mxu0 0.0
  %1360 = vmatpush2.msra.mxu0 %v1306
  %1361 = vmatprep.subr.mxu0 0.0
  %1362 = vmatpush2.msra.mxu0 %v1305
  %1363 = vmatprep.subr.mxu0 0.0
  %1364 = vmatpush2.msra.mxu0 %v1304
  %1365 = vmatprep.subr.mxu0 0.0
  %1366 = vmatpush2.msra.mxu0 %v1303
  %1367 = vmatprep.subr.mxu0 0.0
  %1368 = vmatpush2.msra.mxu0 %v1302
  %1369 = vmatprep.subr.mxu0 0.0
  %1370 = vmatpush2.msra.mxu0 %v1301
  %1371 = vmatprep.subr.mxu0 0.0
  %1372 = vmatpush2.msra.mxu0 %v1300
  %1373 = vmatprep.subr.mxu0 0.0
  %1374 = vmatpush2.msra.mxu0 %v1299
  %1375 = vmatprep.subr.mxu0 0.0
  %1376 = vmatpush2.msra.mxu0 %v1298
  %1377 = vmatprep.subr.mxu0 0.0
  %1378 = vmatpush2.msra.mxu0 %v1297
  %1379 = vmatprep.subr.mxu0 0.0
  %1380 = vmatpush2.msra.mxu0 %v1296
  %1381 = vmatprep.subr.mxu0 0.0
  %1382 = vmatpush2.msra.mxu0 %v1295
  %1383 = vmatprep.mubr.f32.mxu0 %v1312
  %1384 = vmatmul.mubr.f32.gmra.mxu0 %v1311
  %v1385 = vpop.f32.mrf.mxu0
  %v1386 = vadd.f32 0.0, %v1385
  %v1387 = vpop.f32.mrf.mxu0
  %1388 = vmatprep.mubr.f32.mxu0 %v1314
  %1389 = vmatmul.mubr.f32.gmra.mxu0 %v1313
  %v1390 = vpop.f32.mrf.mxu0
  %v1391 = vadd.f32 0.0, %v1390
  %v1392 = vpop.f32.mrf.mxu0
  %1393 = vmatprep.mubr.f32.mxu0 %v1316
  %1394 = vmatmul.mubr.f32.gmra.mxu0 %v1315
  %v1395 = vpop.f32.mrf.mxu0
  %v1396 = vadd.f32 0.0, %v1395
  %v1397 = vpop.f32.mrf.mxu0
  %1398 = vmatprep.mubr.f32.mxu0 %v1318
  %1399 = vmatmul.mubr.f32.gmra.mxu0 %v1317
  %v1400 = vpop.f32.mrf.mxu0
  %v1401 = vadd.f32 0.0, %v1400
  %v1402 = vpop.f32.mrf.mxu0
  %1403 = vdwg.mxu0
  %v1404 = vld [vmem:[%s3] sm:$0xff]
  %v1405 = vld [vmem:[%s3 + $0x8] sm:$0xff]
  %v1406 = vld [vmem:[%s3 + $0x10] sm:$0xff]
  %v1407 = vld [vmem:[%s3 + $0x18] sm:$0xff]
  %v1408 = vsel %vm907, %v1386, 0.0
  %1409 = vadd.xlane.f32.xlu0 %v1408
  %v1410 = vpop.xlane.xlu0 %1409
  %v1411 = vsel %vm907, %v1391, 0.0
  %1412 = vadd.xlane.f32.xlu0 %v1411
  %v1413 = vpop.xlane.xlu0 %1412
  %v1414 = vsel %vm907, %v1396, 0.0
  %1415 = vadd.xlane.f32.xlu0 %v1414
  %v1416 = vpop.xlane.xlu0 %1415
  %v1417 = vsel %vm907, %v1401, 0.0
  %1418 = vadd.xlane.f32.xlu0 %v1417
  %v1419 = vpop.xlane.xlu0 %1418
  %v1420 = vmul.f32 %v1386, %v1386
  %v1421 = vmul.f32 %v1391, %v1391
  %v1422 = vmul.f32 %v1396, %v1396
  %v1423 = vmul.f32 %v1401, %v1401
  %v1424 = vsel %vm907, %v1420, 0.0
  %1425 = vadd.xlane.f32.xlu0 %v1424
  %v1426 = vpop.xlane.xlu0 %1425
  %v1427 = vsel %vm907, %v1421, 0.0
  %1428 = vadd.xlane.f32.xlu0 %v1427
  %v1429 = vpop.xlane.xlu0 %1428
  %v1430 = vsel %vm907, %v1422, 0.0
  %1431 = vadd.xlane.f32.xlu0 %v1430
  %v1432 = vpop.xlane.xlu0 %1431
  %v1433 = vsel %vm907, %v1423, 0.0
  %1434 = vadd.xlane.f32.xlu0 %v1433
  %v1435 = vpop.xlane.xlu0 %1434
  %vm1436 = vcmask 7168
  %v1437 = vsel %vm1436, %v1410, %v1426
  %v1438 = vsel %vm1436, %v1413, %v1429
  %v1439 = vsel %vm1436, %v1416, %v1432
  %v1440 = vsel %vm1436, %v1419, %v1435
  %v1442 = vsel %vm907, %v1404, 0
  %v1445 = vsel %vm907, %v1405, 0
  %v1448 = vsel %vm907, %v1406, 0
  %v1451 = vsel %vm907, %v1407, 0
  %1453 = vmatprep.subr.mxu0 0.0
  %1454 = vmatpush1.msra.mxu0 0.0
  %1455 = vmatprep.subr.mxu0 0.0
  %1456 = vmatpush1.msra.mxu0 0.0
  %1457 = vmatprep.subr.mxu0 0.0
  %1458 = vmatpush1.msra.mxu0 0.0
  %1459 = vmatprep.subr.mxu0 0.0
  %1460 = vmatpush1.msra.mxu0 0.0
  %1461 = vmatprep.subr.mxu0 0.0
  %1462 = vmatpush1.msra.mxu0 0.0
  %1463 = vmatprep.subr.mxu0 0.0
  %1464 = vmatpush1.msra.mxu0 0.0
  %1465 = vmatprep.subr.mxu0 0.0
  %1466 = vmatpush1.msra.mxu0 0.0
  %1467 = vmatprep.subr.mxu0 0.0
  %1468 = vmatpush1.msra.mxu0 0.0
  %1469 = vmatprep.subr.mxu0 0.0
  %1470 = vmatpush1.msra.mxu0 0.0
  %1471 = vmatprep.subr.mxu0 0.0
  %1472 = vmatpush1.msra.mxu0 0.0
  %1473 = vmatprep.subr.mxu0 0.0
  %1474 = vmatpush1.msra.mxu0 0.0
  %1475 = vmatprep.subr.mxu0 0.0
  %1476 = vmatpush1.msra.mxu0 0.0
  %1477 = vmatprep.subr.mxu0 0.0
  %1478 = vmatpush1.msra.mxu0 %v1440
  %1479 = vmatprep.subr.mxu0 0.0
  %1480 = vmatpush1.msra.mxu0 %v1439
  %1481 = vmatprep.subr.mxu0 0.0
  %1482 = vmatpush1.msra.mxu0 %v1438
  %1483 = vmatprep.subr.mxu0 0.0
  %1484 = vmatpush1.msra.mxu0 %v1437
  %1485 = vmatprep.subr.mxu0 0.0
  %1486 = vmatpush2.msra.mxu0 0.0
  %1487 = vmatprep.subr.mxu0 0.0
  %1488 = vmatpush2.msra.mxu0 0.0
  %1489 = vmatprep.subr.mxu0 0.0
  %1490 = vmatpush2.msra.mxu0 0.0
  %1491 = vmatprep.subr.mxu0 0.0
  %1492 = vmatpush2.msra.mxu0 0.0
  %1493 = vmatprep.subr.mxu0 0.0
  %1494 = vmatpush2.msra.mxu0 0.0
  %1495 = vmatprep.subr.mxu0 0.0
  %1496 = vmatpush2.msra.mxu0 0.0
  %1497 = vmatprep.subr.mxu0 0.0
  %1498 = vmatpush2.msra.mxu0 0.0
  %1499 = vmatprep.subr.mxu0 0.0
  %1500 = vmatpush2.msra.mxu0 0.0
  %1501 = vmatprep.subr.mxu0 0.0
  %1502 = vmatpush2.msra.mxu0 0.0
  %1503 = vmatprep.subr.mxu0 0.0
  %1504 = vmatpush2.msra.mxu0 0.0
  %1505 = vmatprep.subr.mxu0 0.0
  %1506 = vmatpush2.msra.mxu0 0.0
  %1507 = vmatprep.subr.mxu0 0.0
  %1508 = vmatpush2.msra.mxu0 0.0
  %1509 = vmatprep.subr.mxu0 0.0
  %1510 = vmatpush2.msra.mxu0 0.0
  %1511 = vmatprep.subr.mxu0 0.0
  %1512 = vmatpush2.msra.mxu0 0.0
  %1513 = vmatprep.subr.mxu0 0.0
  %1514 = vmatpush2.msra.mxu0 0.0
  %1515 = vmatprep.subr.mxu0 0.0
  %1516 = vmatpush2.msra.mxu0 0.0
  %1517 = vmatprep.mubr.f32.mxu0 0.0
  %1518 = vmatmul.mubr.f32.gmra.mxu0 %v1442
  %v1519 = vpop.f32.mrf.mxu0
  %v1520 = vadd.f32 0.0, %v1519
  %v1521 = vpop.f32.mrf.mxu0
  %1522 = vmatprep.mubr.f32.mxu0 0.0
  %1523 = vmatmul.mubr.f32.gmra.mxu0 %v1445
  %v1524 = vpop.f32.mrf.mxu0
  %v1525 = vadd.f32 0.0, %v1524
  %v1526 = vpop.f32.mrf.mxu0
  %1527 = vmatprep.mubr.f32.mxu0 0.0
  %1528 = vmatmul.mubr.f32.gmra.mxu0 %v1448
  %v1529 = vpop.f32.mrf.mxu0
  %v1530 = vadd.f32 0.0, %v1529
  %v1531 = vpop.f32.mrf.mxu0
  %1532 = vmatprep.mubr.f32.mxu0 0.0
  %1533 = vmatmul.mubr.f32.gmra.mxu0 %v1451
  %v1534 = vpop.f32.mrf.mxu0
  %v1535 = vadd.f32 0.0, %v1534
  %v1536 = vpop.f32.mrf.mxu0
  %1537 = vdwg.mxu0
  %v1538 = vmul.f32 %v1520, %v1520
  %v1539 = vmul.f32 %v1525, %v1525
  %v1540 = vmul.f32 %v1530, %v1530
  %v1541 = vmul.f32 %v1535, %v1535
  %1546 = vrot.lane.b32.xlu0 %v1538, 1
  %v1547 = vpop.permute.xlu0 %1546
  %1548 = vrot.lane.b32.xlu0 %v1539, 1
  %v1549 = vpop.permute.xlu0 %1548
  %1550 = vrot.lane.b32.xlu0 %v1540, 1
  %v1551 = vpop.permute.xlu0 %1550
  %1552 = vrot.lane.b32.xlu0 %v1541, 1
  %v1553 = vpop.permute.xlu0 %1552
  %v1558 = vsub.f32 %v1520, %v1547
  %v1559 = vsub.f32 %v1525, %v1549
  %v1560 = vsub.f32 %v1530, %v1551
  %v1561 = vsub.f32 %v1535, %v1553
  %v1562 = vmax.f32 %v1558, 0.0
  %v1563 = vmax.f32 %v1559, 0.0
  %v1564 = vmax.f32 %v1560, 0.0
  %v1565 = vmax.f32 %v1561, 0.0
  %v1566 = vld [vmem:[%s4] sm:$0xff]
  %v1567 = vld [vmem:[%s4 + $0x8] sm:$0xff]
  %v1568 = vld [vmem:[%s4 + $0x10] sm:$0xff]
  %v1569 = vld [vmem:[%s4 + $0x18] sm:$0xff]
  %1571 = vset.pattern.permute.xlu0 0
  %1572 = vperm.xlu0 %1571, %v1520
  %v1573 = vpop.permute.xlu0 %1572
  %1576 = vset.pattern.permute.xlu0 0
  %1577 = vperm.xlu0 %1576, %v1525
  %v1578 = vpop.permute.xlu0 %1577
  %1581 = vset.pattern.permute.xlu0 0
  %1582 = vperm.xlu0 %1581, %v1530
  %v1583 = vpop.permute.xlu0 %1582
  %1586 = vset.pattern.permute.xlu0 0
  %1587 = vperm.xlu0 %1586, %v1535
  %v1588 = vpop.permute.xlu0 %1587
  %v1590 = vsub.f32 %v1386, %v1573
  %v1591 = vsub.f32 %v1391, %v1578
  %v1592 = vsub.f32 %v1396, %v1583
  %v1593 = vsub.f32 %v1401, %v1588
  %v1594 = vadd.f32 %v1562, 1e-05
  %v1595 = vadd.f32 %v1563, 1e-05
  %v1596 = vadd.f32 %v1564, 1e-05
  %v1597 = vadd.f32 %v1565, 1e-05
  %v1598 = vrsqrt.pop %v1594
  %v1599 = vrsqrt.pop %v1595
  %v1600 = vrsqrt.pop %v1596
  %v1601 = vrsqrt.pop %v1597
  %v1602 = vmul.f32 %v1566, %v1598
  %v1603 = vmul.f32 %v1567, %v1599
  %v1604 = vmul.f32 %v1568, %v1600
  %v1605 = vmul.f32 %v1569, %v1601
  %1607 = vset.pattern.permute.xlu0 1
  %1608 = vperm.xlu0 %1607, %v1602
  %v1609 = vpop.permute.xlu0 %1608
  %1612 = vset.pattern.permute.xlu0 1
  %1613 = vperm.xlu0 %1612, %v1603
  %v1614 = vpop.permute.xlu0 %1613
  %1617 = vset.pattern.permute.xlu0 1
  %1618 = vperm.xlu0 %1617, %v1604
  %v1619 = vpop.permute.xlu0 %1618
  %1622 = vset.pattern.permute.xlu0 1
  %1623 = vperm.xlu0 %1622, %v1605
  %v1624 = vpop.permute.xlu0 %1623
  %v1626 = vmul.f32 %v1590, %v1609
  %v1627 = vmul.f32 %v1591, %v1614
  %v1628 = vmul.f32 %v1592, %v1619
  %v1629 = vmul.f32 %v1593, %v1624
  %1631 = vset.pattern.permute.xlu0 2
  %1632 = vperm.xlu0 %1631, %v1566
  %v1633 = vpop.permute.xlu0 %1632
  %1636 = vset.pattern.permute.xlu0 2
  %1637 = vperm.xlu0 %1636, %v1567
  %v1638 = vpop.permute.xlu0 %1637
  %1641 = vset.pattern.permute.xlu0 2
  %1642 = vperm.xlu0 %1641, %v1568
  %v1643 = vpop.permute.xlu0 %1642
  %1646 = vset.pattern.permute.xlu0 2
  %1647 = vperm.xlu0 %1646, %v1569
  %v1648 = vpop.permute.xlu0 %1647
  %v1650 = vadd.f32 %v1626, %v1633
  %v1651 = vadd.f32 %v1627, %v1638
  %v1652 = vadd.f32 %v1628, %v1643
  %v1653 = vadd.f32 %v1629, %v1648
  %vm1654 = vcmp.gt.f32.partialorder %v1650, 0.0
  %vm1655 = vcmp.gt.f32.partialorder %v1651, 0.0
  %vm1656 = vcmp.gt.f32.partialorder %v1652, 0.0
  %vm1657 = vcmp.gt.f32.partialorder %v1653, 0.0
  %v1658 = vmul.f32 %v1650, 0.2
  %v1659 = vmul.f32 %v1651, 0.2
  %v1660 = vmul.f32 %v1652, 0.2
  %v1661 = vmul.f32 %v1653, 0.2
  %v1662 = vsel %vm1654, %v1650, %v1658
  %v1663 = vsel %vm1655, %v1651, %v1659
  %v1664 = vsel %vm1656, %v1652, %v1660
  %v1665 = vsel %vm1657, %v1653, %v1661
  %v1666 = vld [vmem:[%s2 + $0x300] sm:$0xff]
  %v1667 = vld [vmem:[%s2 + $0x308] sm:$0xff]
  %v1668 = vld [vmem:[%s2 + $0x310] sm:$0xff]
  %v1669 = vld [vmem:[%s2 + $0x318] sm:$0xff]
  %v1671 = vsel %vm907, %v1662, 0
  %v1674 = vsel %vm907, %v1663, 0
  %v1677 = vsel %vm907, %v1664, 0
  %v1680 = vsel %vm907, %v1665, 0
  %1682 = vmatprep.subr.mxu0 0.0
  %1683 = vmatpush1.msra.mxu0 0.0
  %1684 = vmatprep.subr.mxu0 0.0
  %1685 = vmatpush1.msra.mxu0 0.0
  %1686 = vmatprep.subr.mxu0 0.0
  %1687 = vmatpush1.msra.mxu0 0.0
  %1688 = vmatprep.subr.mxu0 0.0
  %1689 = vmatpush1.msra.mxu0 0.0
  %1690 = vmatprep.subr.mxu0 0.0
  %1691 = vmatpush1.msra.mxu0 0.0
  %1692 = vmatprep.subr.mxu0 0.0
  %1693 = vmatpush1.msra.mxu0 0.0
  %1694 = vmatprep.subr.mxu0 0.0
  %1695 = vmatpush1.msra.mxu0 0.0
  %1696 = vmatprep.subr.mxu0 0.0
  %1697 = vmatpush1.msra.mxu0 0.0
  %1698 = vmatprep.subr.mxu0 0.0
  %1699 = vmatpush1.msra.mxu0 0.0
  %1700 = vmatprep.subr.mxu0 0.0
  %1701 = vmatpush1.msra.mxu0 0.0
  %1702 = vmatprep.subr.mxu0 0.0
  %1703 = vmatpush1.msra.mxu0 0.0
  %1704 = vmatprep.subr.mxu0 0.0
  %1705 = vmatpush1.msra.mxu0 0.0
  %1706 = vmatprep.subr.mxu0 0.0
  %1707 = vmatpush1.msra.mxu0 %v1669
  %1708 = vmatprep.subr.mxu0 0.0
  %1709 = vmatpush1.msra.mxu0 %v1668
  %1710 = vmatprep.subr.mxu0 0.0
  %1711 = vmatpush1.msra.mxu0 %v1667
  %1712 = vmatprep.subr.mxu0 0.0
  %1713 = vmatpush1.msra.mxu0 %v1666
  %1714 = vmatprep.subr.mxu0 0.0
  %1715 = vmatpush2.msra.mxu0 0.0
  %1716 = vmatprep.subr.mxu0 0.0
  %1717 = vmatpush2.msra.mxu0 0.0
  %1718 = vmatprep.subr.mxu0 0.0
  %1719 = vmatpush2.msra.mxu0 0.0
  %1720 = vmatprep.subr.mxu0 0.0
  %1721 = vmatpush2.msra.mxu0 0.0
  %1722 = vmatprep.subr.mxu0 0.0
  %1723 = vmatpush2.msra.mxu0 0.0
  %1724 = vmatprep.subr.mxu0 0.0
  %1725 = vmatpush2.msra.mxu0 0.0
  %1726 = vmatprep.subr.mxu0 0.0
  %1727 = vmatpush2.msra.mxu0 0.0
  %1728 = vmatprep.subr.mxu0 0.0
  %1729 = vmatpush2.msra.mxu0 0.0
  %1730 = vmatprep.subr.mxu0 0.0
  %1731 = vmatpush2.msra.mxu0 0.0
  %1732 = vmatprep.subr.mxu0 0.0
  %1733 = vmatpush2.msra.mxu0 0.0
  %1734 = vmatprep.subr.mxu0 0.0
  %1735 = vmatpush2.msra.mxu0 0.0
  %1736 = vmatprep.subr.mxu0 0.0
  %1737 = vmatpush2.msra.mxu0 0.0
  %1738 = vmatprep.subr.mxu0 0.0
  %1739 = vmatpush2.msra.mxu0 0.0
  %1740 = vmatprep.subr.mxu0 0.0
  %1741 = vmatpush2.msra.mxu0 0.0
  %1742 = vmatprep.subr.mxu0 0.0
  %1743 = vmatpush2.msra.mxu0 0.0
  %1744 = vmatprep.subr.mxu0 0.0
  %1745 = vmatpush2.msra.mxu0 0.0
  %1746 = vmatprep.mubr.f32.mxu0 0.0
  %1747 = vmatmul.mubr.f32.gmra.mxu0 %v1671
  %v1748 = vpop.f32.mrf.mxu0
  %v1749 = vadd.f32 0.0, %v1748
  %v1750 = vpop.f32.mrf.mxu0
  %1751 = vmatprep.mubr.f32.mxu0 0.0
  %1752 = vmatmul.mubr.f32.gmra.mxu0 %v1674
  %v1753 = vpop.f32.mrf.mxu0
  %v1754 = vadd.f32 0.0, %v1753
  %v1755 = vpop.f32.mrf.mxu0
  %1756 = vmatprep.mubr.f32.mxu0 0.0
  %1757 = vmatmul.mubr.f32.gmra.mxu0 %v1677
  %v1758 = vpop.f32.mrf.mxu0
  %v1759 = vadd.f32 0.0, %v1758
  %v1760 = vpop.f32.mrf.mxu0
  %1761 = vmatprep.mubr.f32.mxu0 0.0
  %1762 = vmatmul.mubr.f32.gmra.mxu0 %v1680
  %v1763 = vpop.f32.mrf.mxu0
  %v1764 = vadd.f32 0.0, %v1763
  %v1765 = vpop.f32.mrf.mxu0
  %1766 = vdwg.mxu0
  %vm1767 = vcmask 130048
  %1768 = vst.msk [vmem:[#allocation2] sm:$0xff] %vm1767, %v1749
  %1769 = vst.msk [vmem:[#allocation2 + $0x8] sm:$0xff] %vm1767, %v1754
  %1770 = vst.msk [vmem:[#allocation2 + $0x10] sm:$0xff] %vm1767, %v1759
  %1771 = vst.msk [vmem:[#allocation2 + $0x18] sm:$0xff] %vm1767, %v1764
  %v1772 = vld [vmem:[%s2 + $0x320] sm:$0xff]
  %v1773 = vld [vmem:[%s2 + $0x328] sm:$0xff]
  %v1774 = vld [vmem:[%s2 + $0x330] sm:$0xff]
  %v1775 = vld [vmem:[%s2 + $0x338] sm:$0xff]
  %1776 = vmatprep.subr.mxu0 0.0
  %1777 = vmatpush1.msra.mxu0 0.0
  %1778 = vmatprep.subr.mxu0 0.0
  %1779 = vmatpush1.msra.mxu0 0.0
  %1780 = vmatprep.subr.mxu0 0.0
  %1781 = vmatpush1.msra.mxu0 0.0
  %1782 = vmatprep.subr.mxu0 0.0
  %1783 = vmatpush1.msra.mxu0 0.0
  %1784 = vmatprep.subr.mxu0 0.0
  %1785 = vmatpush1.msra.mxu0 0.0
  %1786 = vmatprep.subr.mxu0 0.0
  %1787 = vmatpush1.msra.mxu0 0.0
  %1788 = vmatprep.subr.mxu0 0.0
  %1789 = vmatpush1.msra.mxu0 0.0
  %1790 = vmatprep.subr.mxu0 0.0
  %1791 = vmatpush1.msra.mxu0 0.0
  %1792 = vmatprep.subr.mxu0 0.0
  %1793 = vmatpush1.msra.mxu0 0.0
  %1794 = vmatprep.subr.mxu0 0.0
  %1795 = vmatpush1.msra.mxu0 0.0
  %1796 = vmatprep.subr.mxu0 0.0
  %1797 = vmatpush1.msra.mxu0 0.0
  %1798 = vmatprep.subr.mxu0 0.0
  %1799 = vmatpush1.msra.mxu0 0.0
  %1800 = vmatprep.subr.mxu0 0.0
  %1801 = vmatpush1.msra.mxu0 %v1775
  %1802 = vmatprep.subr.mxu0 0.0
  %1803 = vmatpush1.msra.mxu0 %v1774
  %1804 = vmatprep.subr.mxu0 0.0
  %1805 = vmatpush1.msra.mxu0 %v1773
  %1806 = vmatprep.subr.mxu0 0.0
  %1807 = vmatpush1.msra.mxu0 %v1772
  %1808 = vmatprep.subr.mxu0 0.0
  %1809 = vmatpush2.msra.mxu0 0.0
  %1810 = vmatprep.subr.mxu0 0.0
  %1811 = vmatpush2.msra.mxu0 0.0
  %1812 = vmatprep.subr.mxu0 0.0
  %1813 = vmatpush2.msra.mxu0 0.0
  %1814 = vmatprep.subr.mxu0 0.0
  %1815 = vmatpush2.msra.mxu0 0.0
  %1816 = vmatprep.subr.mxu0 0.0
  %1817 = vmatpush2.msra.mxu0 0.0
  %1818 = vmatprep.subr.mxu0 0.0
  %1819 = vmatpush2.msra.mxu0 0.0
  %1820 = vmatprep.subr.mxu0 0.0
  %1821 = vmatpush2.msra.mxu0 0.0
  %1822 = vmatprep.subr.mxu0 0.0
  %1823 = vmatpush2.msra.mxu0 0.0
  %1824 = vmatprep.subr.mxu0 0.0
  %1825 = vmatpush2.msra.mxu0 0.0
  %1826 = vmatprep.subr.mxu0 0.0
  %1827 = vmatpush2.msra.mxu0 0.0
  %1828 = vmatprep.subr.mxu0 0.0
  %1829 = vmatpush2.msra.mxu0 0.0
  %1830 = vmatprep.subr.mxu0 0.0
  %1831 = vmatpush2.msra.mxu0 0.0
  %1832 = vmatprep.subr.mxu0 0.0
  %1833 = vmatpush2.msra.mxu0 0.0
  %1834 = vmatprep.subr.mxu0 0.0
  %1835 = vmatpush2.msra.mxu0 0.0
  %1836 = vmatprep.subr.mxu0 0.0
  %1837 = vmatpush2.msra.mxu0 0.0
  %1838 = vmatprep.subr.mxu0 0.0
  %1839 = vmatpush2.msra.mxu0 0.0
  %1840 = vmatprep.mubr.f32.mxu0 0.0
  %1841 = vmatmul.mubr.f32.gmra.mxu0 %v1671
  %v1842 = vpop.f32.mrf.mxu0
  %v1843 = vadd.f32 0.0, %v1842
  %v1844 = vpop.f32.mrf.mxu0
  %1845 = vmatprep.mubr.f32.mxu0 0.0
  %1846 = vmatmul.mubr.f32.gmra.mxu0 %v1674
  %v1847 = vpop.f32.mrf.mxu0
  %v1848 = vadd.f32 0.0, %v1847
  %v1849 = vpop.f32.mrf.mxu0
  %1850 = vmatprep.mubr.f32.mxu0 0.0
  %1851 = vmatmul.mubr.f32.gmra.mxu0 %v1677
  %v1852 = vpop.f32.mrf.mxu0
  %v1853 = vadd.f32 0.0, %v1852
  %v1854 = vpop.f32.mrf.mxu0
  %1855 = vmatprep.mubr.f32.mxu0 0.0
  %1856 = vmatmul.mubr.f32.gmra.mxu0 %v1680
  %v1857 = vpop.f32.mrf.mxu0
  %v1858 = vadd.f32 0.0, %v1857
  %v1859 = vpop.f32.mrf.mxu0
  %1860 = vdwg.mxu0
  %1861 = vst.msk [vmem:[#allocation2 + $0x20] sm:$0xff] %vm1767, %v1843
  %1862 = vst.msk [vmem:[#allocation2 + $0x28] sm:$0xff] %vm1767, %v1848
  %1863 = vst.msk [vmem:[#allocation2 + $0x30] sm:$0xff] %vm1767, %v1853
  %1864 = vst.msk [vmem:[#allocation2 + $0x38] sm:$0xff] %vm1767, %v1858
  %v1865 = vld [vmem:[%s2 + $0x340] sm:$0xff]
  %v1866 = vld [vmem:[%s2 + $0x348] sm:$0xff]
  %v1867 = vld [vmem:[%s2 + $0x350] sm:$0xff]
  %v1868 = vld [vmem:[%s2 + $0x358] sm:$0xff]
  %1869 = vmatprep.subr.mxu0 0.0
  %1870 = vmatpush1.msra.mxu0 0.0
  %1871 = vmatprep.subr.mxu0 0.0
  %1872 = vmatpush1.msra.mxu0 0.0
  %1873 = vmatprep.subr.mxu0 0.0
  %1874 = vmatpush1.msra.mxu0 0.0
  %1875 = vmatprep.subr.mxu0 0.0
  %1876 = vmatpush1.msra.mxu0 0.0
  %1877 = vmatprep.subr.mxu0 0.0
  %1878 = vmatpush1.msra.mxu0 0.0
  %1879 = vmatprep.subr.mxu0 0.0
  %1880 = vmatpush1.msra.mxu0 0.0
  %1881 = vmatprep.subr.mxu0 0.0
  %1882 = vmatpush1.msra.mxu0 0.0
  %1883 = vmatprep.subr.mxu0 0.0
  %1884 = vmatpush1.msra.mxu0 0.0
  %1885 = vmatprep.subr.mxu0 0.0
  %1886 = vmatpush1.msra.mxu0 0.0
  %1887 = vmatprep.subr.mxu0 0.0
  %1888 = vmatpush1.msra.mxu0 0.0
  %1889 = vmatprep.subr.mxu0 0.0
  %1890 = vmatpush1.msra.mxu0 0.0
  %1891 = vmatprep.subr.mxu0 0.0
  %1892 = vmatpush1.msra.mxu0 0.0
  %1893 = vmatprep.subr.mxu0 0.0
  %1894 = vmatpush1.msra.mxu0 %v1868
  %1895 = vmatprep.subr.mxu0 0.0
  %1896 = vmatpush1.msra.mxu0 %v1867
  %1897 = vmatprep.subr.mxu0 0.0
  %1898 = vmatpush1.msra.mxu0 %v1866
  %1899 = vmatprep.subr.mxu0 0.0
  %1900 = vmatpush1.msra.mxu0 %v1865
  %1901 = vmatprep.subr.mxu0 0.0
  %1902 = vmatpush2.msra.mxu0 0.0
  %1903 = vmatprep.subr.mxu0 0.0
  %1904 = vmatpush2.msra.mxu0 0.0
  %1905 = vmatprep.subr.mxu0 0.0
  %1906 = vmatpush2.msra.mxu0 0.0
  %1907 = vmatprep.subr.mxu0 0.0
  %1908 = vmatpush2.msra.mxu0 0.0
  %1909 = vmatprep.subr.mxu0 0.0
  %1910 = vmatpush2.msra.mxu0 0.0
  %1911 = vmatprep.subr.mxu0 0.0
  %1912 = vmatpush2.msra.mxu0 0.0
  %1913 = vmatprep.subr.mxu0 0.0
  %1914 = vmatpush2.msra.mxu0 0.0
  %1915 = vmatprep.subr.mxu0 0.0
  %1916 = vmatpush2.msra.mxu0 0.0
  %1917 = vmatprep.subr.mxu0 0.0
  %1918 = vmatpush2.msra.mxu0 0.0
  %1919 = vmatprep.subr.mxu0 0.0
  %1920 = vmatpush2.msra.mxu0 0.0
  %1921 = vmatprep.subr.mxu0 0.0
  %1922 = vmatpush2.msra.mxu0 0.0
  %1923 = vmatprep.subr.mxu0 0.0
  %1924 = vmatpush2.msra.mxu0 0.0
  %1925 = vmatprep.subr.mxu0 0.0
  %1926 = vmatpush2.msra.mxu0 0.0
  %1927 = vmatprep.subr.mxu0 0.0
  %1928 = vmatpush2.msra.mxu0 0.0
  %1929 = vmatprep.subr.mxu0 0.0
  %1930 = vmatpush2.msra.mxu0 0.0
  %1931 = vmatprep.subr.mxu0 0.0
  %1932 = vmatpush2.msra.mxu0 0.0
  %1933 = vmatprep.mubr.f32.mxu0 0.0
  %1934 = vmatmul.mubr.f32.gmra.mxu0 %v1671
  %v1935 = vpop.f32.mrf.mxu0
  %v1936 = vadd.f32 0.0, %v1935
  %v1937 = vpop.f32.mrf.mxu0
  %1938 = vmatprep.mubr.f32.mxu0 0.0
  %1939 = vmatmul.mubr.f32.gmra.mxu0 %v1674
  %v1940 = vpop.f32.mrf.mxu0
  %v1941 = vadd.f32 0.0, %v1940
  %v1942 = vpop.f32.mrf.mxu0
  %1943 = vmatprep.mubr.f32.mxu0 0.0
  %1944 = vmatmul.mubr.f32.gmra.mxu0 %v1677
  %v1945 = vpop.f32.mrf.mxu0
  %v1946 = vadd.f32 0.0, %v1945
  %v1947 = vpop.f32.mrf.mxu0
  %1948 = vmatprep.mubr.f32.mxu0 0.0
  %1949 = vmatmul.mubr.f32.gmra.mxu0 %v1680
  %v1950 = vpop.f32.mrf.mxu0
  %v1951 = vadd.f32 0.0, %v1950
  %v1952 = vpop.f32.mrf.mxu0
  %1953 = vdwg.mxu0
  %1954 = vst.msk [vmem:[#allocation2 + $0x40] sm:$0xff] %vm1767, %v1936
  %1955 = vst.msk [vmem:[#allocation2 + $0x48] sm:$0xff] %vm1767, %v1941
  %1956 = vst.msk [vmem:[#allocation2 + $0x50] sm:$0xff] %vm1767, %v1946
  %1957 = vst.msk [vmem:[#allocation2 + $0x58] sm:$0xff] %vm1767, %v1951
  %v1958 = vld [vmem:[%s2 + $0x360] sm:$0xff]
  %v1959 = vld [vmem:[%s2 + $0x368] sm:$0xff]
  %v1960 = vld [vmem:[%s2 + $0x370] sm:$0xff]
  %v1961 = vld [vmem:[%s2 + $0x378] sm:$0xff]
  %1962 = vmatprep.subr.mxu0 0.0
  %1963 = vmatpush1.msra.mxu0 0.0
  %1964 = vmatprep.subr.mxu0 0.0
  %1965 = vmatpush1.msra.mxu0 0.0
  %1966 = vmatprep.subr.mxu0 0.0
  %1967 = vmatpush1.msra.mxu0 0.0
  %1968 = vmatprep.subr.mxu0 0.0
  %1969 = vmatpush1.msra.mxu0 0.0
  %1970 = vmatprep.subr.mxu0 0.0
  %1971 = vmatpush1.msra.mxu0 0.0
  %1972 = vmatprep.subr.mxu0 0.0
  %1973 = vmatpush1.msra.mxu0 0.0
  %1974 = vmatprep.subr.mxu0 0.0
  %1975 = vmatpush1.msra.mxu0 0.0
  %1976 = vmatprep.subr.mxu0 0.0
  %1977 = vmatpush1.msra.mxu0 0.0
  %1978 = vmatprep.subr.mxu0 0.0
  %1979 = vmatpush1.msra.mxu0 0.0
  %1980 = vmatprep.subr.mxu0 0.0
  %1981 = vmatpush1.msra.mxu0 0.0
  %1982 = vmatprep.subr.mxu0 0.0
  %1983 = vmatpush1.msra.mxu0 0.0
  %1984 = vmatprep.subr.mxu0 0.0
  %1985 = vmatpush1.msra.mxu0 0.0
  %1986 = vmatprep.subr.mxu0 0.0
  %1987 = vmatpush1.msra.mxu0 %v1961
  %1988 = vmatprep.subr.mxu0 0.0
  %1989 = vmatpush1.msra.mxu0 %v1960
  %1990 = vmatprep.subr.mxu0 0.0
  %1991 = vmatpush1.msra.mxu0 %v1959
  %1992 = vmatprep.subr.mxu0 0.0
  %1993 = vmatpush1.msra.mxu0 %v1958
  %1994 = vmatprep.subr.mxu0 0.0
  %1995 = vmatpush2.msra.mxu0 0.0
  %1996 = vmatprep.subr.mxu0 0.0
  %1997 = vmatpush2.msra.mxu0 0.0
  %1998 = vmatprep.subr.mxu0 0.0
  %1999 = vmatpush2.msra.mxu0 0.0
  %2000 = vmatprep.subr.mxu0 0.0
  %2001 = vmatpush2.msra.mxu0 0.0
  %2002 = vmatprep.subr.mxu0 0.0
  %2003 = vmatpush2.msra.mxu0 0.0
  %2004 = vmatprep.subr.mxu0 0.0
  %2005 = vmatpush2.msra.mxu0 0.0
  %2006 = vmatprep.subr.mxu0 0.0
  %2007 = vmatpush2.msra.mxu0 0.0
  %2008 = vmatprep.subr.mxu0 0.0
  %2009 = vmatpush2.msra.mxu0 0.0
  %2010 = vmatprep.subr.mxu0 0.0
  %2011 = vmatpush2.msra.mxu0 0.0
  %2012 = vmatprep.subr.mxu0 0.0
  %2013 = vmatpush2.msra.mxu0 0.0
  %2014 = vmatprep.subr.mxu0 0.0
  %2015 = vmatpush2.msra.mxu0 0.0
  %2016 = vmatprep.subr.mxu0 0.0
  %2017 = vmatpush2.msra.mxu0 0.0
  %2018 = vmatprep.subr.mxu0 0.0
  %2019 = vmatpush2.msra.mxu0 0.0
  %2020 = vmatprep.subr.mxu0 0.0
  %2021 = vmatpush2.msra.mxu0 0.0
  %2022 = vmatprep.subr.mxu0 0.0
  %2023 = vmatpush2.msra.mxu0 0.0
  %2024 = vmatprep.subr.mxu0 0.0
  %2025 = vmatpush2.msra.mxu0 0.0
  %2026 = vmatprep.mubr.f32.mxu0 0.0
  %2027 = vmatmul.mubr.f32.gmra.mxu0 %v1671
  %v2028 = vpop.f32.mrf.mxu0
  %v2029 = vadd.f32 0.0, %v2028
  %v2030 = vpop.f32.mrf.mxu0
  %2031 = vmatprep.mubr.f32.mxu0 0.0
  %2032 = vmatmul.mubr.f32.gmra.mxu0 %v1674
  %v2033 = vpop.f32.mrf.mxu0
  %v2034 = vadd.f32 0.0, %v2033
  %v2035 = vpop.f32.mrf.mxu0
  %2036 = vmatprep.mubr.f32.mxu0 0.0
  %2037 = vmatmul.mubr.f32.gmra.mxu0 %v1677
  %v2038 = vpop.f32.mrf.mxu0
  %v2039 = vadd.f32 0.0, %v2038
  %v2040 = vpop.f32.mrf.mxu0
  %2041 = vmatprep.mubr.f32.mxu0 0.0
  %2042 = vmatmul.mubr.f32.gmra.mxu0 %v1680
  %v2043 = vpop.f32.mrf.mxu0
  %v2044 = vadd.f32 0.0, %v2043
  %v2045 = vpop.f32.mrf.mxu0
  %2046 = vdwg.mxu0
  %2047 = vst.msk [vmem:[#allocation2 + $0x60] sm:$0xff] %vm1767, %v2029
  %2048 = vst.msk [vmem:[#allocation2 + $0x68] sm:$0xff] %vm1767, %v2034
  %2049 = vst.msk [vmem:[#allocation2 + $0x70] sm:$0xff] %vm1767, %v2039
  %2050 = vst.msk [vmem:[#allocation2 + $0x78] sm:$0xff] %vm1767, %v2044
  %v2051 = vld [vmem:[#allocation2] sm:$0xff]
  %v2052 = vld [vmem:[#allocation2 + $0x8] sm:$0xff]
  %v2053 = vld [vmem:[#allocation2 + $0x10] sm:$0xff]
  %v2054 = vld [vmem:[#allocation2 + $0x18] sm:$0xff]
  %v2055 = vld [vmem:[#allocation2 + $0x20] sm:$0xff]
  %v2056 = vld [vmem:[#allocation2 + $0x28] sm:$0xff]
  %v2057 = vld [vmem:[#allocation2 + $0x30] sm:$0xff]
  %v2058 = vld [vmem:[#allocation2 + $0x38] sm:$0xff]
  %v2059 = vld [vmem:[#allocation2 + $0x40] sm:$0xff]
  %v2060 = vld [vmem:[#allocation2 + $0x48] sm:$0xff]
  %v2061 = vld [vmem:[#allocation2 + $0x50] sm:$0xff]
  %v2062 = vld [vmem:[#allocation2 + $0x58] sm:$0xff]
  %v2063 = vld [vmem:[#allocation2 + $0x60] sm:$0xff]
  %v2064 = vld [vmem:[#allocation2 + $0x68] sm:$0xff]
  %v2065 = vld [vmem:[#allocation2 + $0x70] sm:$0xff]
  %v2066 = vld [vmem:[#allocation2 + $0x78] sm:$0xff]
  %v2067 = vld [vmem:[%s1 + $0xc0] sm:$0xff]
  %v2068 = vld [vmem:[%s1 + $0xd0] sm:$0xff]
  %v2069 = vld [vmem:[%s1 + $0xe0] sm:$0xff]
  %v2070 = vld [vmem:[%s1 + $0xf0] sm:$0xff]
  %2071 = vmatprep.subr.mxu0 0.0
  %2072 = vmatpush1.msra.mxu0 %v2066
  %2073 = vmatprep.subr.mxu0 0.0
  %2074 = vmatpush1.msra.mxu0 %v2065
  %2075 = vmatprep.subr.mxu0 0.0
  %2076 = vmatpush1.msra.mxu0 %v2064
  %2077 = vmatprep.subr.mxu0 0.0
  %2078 = vmatpush1.msra.mxu0 %v2063
  %2079 = vmatprep.subr.mxu0 0.0
  %2080 = vmatpush1.msra.mxu0 %v2062
  %2081 = vmatprep.subr.mxu0 0.0
  %2082 = vmatpush1.msra.mxu0 %v2061
  %2083 = vmatprep.subr.mxu0 0.0
  %2084 = vmatpush1.msra.mxu0 %v2060
  %2085 = vmatprep.subr.mxu0 0.0
  %2086 = vmatpush1.msra.mxu0 %v2059
  %2087 = vmatprep.subr.mxu0 0.0
  %2088 = vmatpush1.msra.mxu0 %v2058
  %2089 = vmatprep.subr.mxu0 0.0
  %2090 = vmatpush1.msra.mxu0 %v2057
  %2091 = vmatprep.subr.mxu0 0.0
  %2092 = vmatpush1.msra.mxu0 %v2056
  %2093 = vmatprep.subr.mxu0 0.0
  %2094 = vmatpush1.msra.mxu0 %v2055
  %2095 = vmatprep.subr.mxu0 0.0
  %2096 = vmatpush1.msra.mxu0 %v2054
  %2097 = vmatprep.subr.mxu0 0.0
  %2098 = vmatpush1.msra.mxu0 %v2053
  %2099 = vmatprep.subr.mxu0 0.0
  %2100 = vmatpush1.msra.mxu0 %v2052
  %2101 = vmatprep.subr.mxu0 0.0
  %2102 = vmatpush1.msra.mxu0 %v2051
  %2103 = vmatprep.subr.mxu0 0.0
  %2104 = vmatpush2.msra.mxu0 0.0
  %2105 = vmatprep.subr.mxu0 0.0
  %2106 = vmatpush2.msra.mxu0 0.0
  %2107 = vmatprep.subr.mxu0 0.0
  %2108 = vmatpush2.msra.mxu0 0.0
  %2109 = vmatprep.subr.mxu0 0.0
  %2110 = vmatpush2.msra.mxu0 0.0
  %2111 = vmatprep.subr.mxu0 0.0
  %2112 = vmatpush2.msra.mxu0 0.0
  %2113 = vmatprep.subr.mxu0 0.0
  %2114 = vmatpush2.msra.mxu0 0.0
  %2115 = vmatprep.subr.mxu0 0.0
  %2116 = vmatpush2.msra.mxu0 0.0
  %2117 = vmatprep.subr.mxu0 0.0
  %2118 = vmatpush2.msra.mxu0 0.0
  %2119 = vmatprep.subr.mxu0 0.0
  %2120 = vmatpush2.msra.mxu0 0.0
  %2121 = vmatprep.subr.mxu0 0.0
  %2122 = vmatpush2.msra.mxu0 0.0
  %2123 = vmatprep.subr.mxu0 0.0
  %2124 = vmatpush2.msra.mxu0 0.0
  %2125 = vmatprep.subr.mxu0 0.0
  %2126 = vmatpush2.msra.mxu0 0.0
  %2127 = vmatprep.subr.mxu0 0.0
  %2128 = vmatpush2.msra.mxu0 0.0
  %2129 = vmatprep.subr.mxu0 0.0
  %2130 = vmatpush2.msra.mxu0 0.0
  %2131 = vmatprep.subr.mxu0 0.0
  %2132 = vmatpush2.msra.mxu0 0.0
  %2133 = vmatprep.subr.mxu0 0.0
  %2134 = vmatpush2.msra.mxu0 0.0
  %2135 = vmatprep.mubr.f32.mxu0 0.0
  %2136 = vmatmul.mubr.f32.gmra.mxu0 %v2067
  %v2137 = vpop.f32.mrf.mxu0
  %v2138 = vadd.f32 0.0, %v2137
  %v2139 = vpop.f32.mrf.mxu0
  %2140 = vmatprep.mubr.f32.mxu0 0.0
  %2141 = vmatmul.mubr.f32.gmra.mxu0 %v2068
  %v2142 = vpop.f32.mrf.mxu0
  %v2143 = vadd.f32 0.0, %v2142
  %v2144 = vpop.f32.mrf.mxu0
  %2145 = vmatprep.mubr.f32.mxu0 0.0
  %2146 = vmatmul.mubr.f32.gmra.mxu0 %v2069
  %v2147 = vpop.f32.mrf.mxu0
  %v2148 = vadd.f32 0.0, %v2147
  %v2149 = vpop.f32.mrf.mxu0
  %2150 = vmatprep.mubr.f32.mxu0 0.0
  %2151 = vmatmul.mubr.f32.gmra.mxu0 %v2070
  %v2152 = vpop.f32.mrf.mxu0
  %v2153 = vadd.f32 0.0, %v2152
  %v2154 = vpop.f32.mrf.mxu0
  %2155 = vdwg.mxu0
  %v2156 = vld [vmem:[%s3 + $0x20] sm:$0xff]
  %v2157 = vld [vmem:[%s3 + $0x28] sm:$0xff]
  %v2158 = vld [vmem:[%s3 + $0x30] sm:$0xff]
  %v2159 = vld [vmem:[%s3 + $0x38] sm:$0xff]
  %v2160 = vsel %vm1767, %v2138, 0.0
  %2161 = vadd.xlane.f32.xlu0 %v2160
  %v2162 = vpop.xlane.xlu0 %2161
  %v2163 = vsel %vm1767, %v2143, 0.0
  %2164 = vadd.xlane.f32.xlu0 %v2163
  %v2165 = vpop.xlane.xlu0 %2164
  %v2166 = vsel %vm1767, %v2148, 0.0
  %2167 = vadd.xlane.f32.xlu0 %v2166
  %v2168 = vpop.xlane.xlu0 %2167
  %v2169 = vsel %vm1767, %v2153, 0.0
  %2170 = vadd.xlane.f32.xlu0 %v2169
  %v2171 = vpop.xlane.xlu0 %2170
  %v2172 = vmul.f32 %v2138, %v2138
  %v2173 = vmul.f32 %v2143, %v2143
  %v2174 = vmul.f32 %v2148, %v2148
  %v2175 = vmul.f32 %v2153, %v2153
  %v2176 = vsel %vm1767, %v2172, 0.0
  %2177 = vadd.xlane.f32.xlu0 %v2176
  %v2178 = vpop.xlane.xlu0 %2177
  %v2179 = vsel %vm1767, %v2173, 0.0
  %2180 = vadd.xlane.f32.xlu0 %v2179
  %v2181 = vpop.xlane.xlu0 %2180
  %v2182 = vsel %vm1767, %v2174, 0.0
  %2183 = vadd.xlane.f32.xlu0 %v2182
  %v2184 = vpop.xlane.xlu0 %2183
  %v2185 = vsel %vm1767, %v2175, 0.0
  %2186 = vadd.xlane.f32.xlu0 %v2185
  %v2187 = vpop.xlane.xlu0 %2186
  %v2188 = vsel %vm1436, %v2162, %v2178
  %v2189 = vsel %vm1436, %v2165, %v2181
  %v2190 = vsel %vm1436, %v2168, %v2184
  %v2191 = vsel %vm1436, %v2171, %v2187
  %v2193 = vsel %vm907, %v2156, 0
  %v2196 = vsel %vm907, %v2157, 0
  %v2199 = vsel %vm907, %v2158, 0
  %v2202 = vsel %vm907, %v2159, 0
  %2204 = vmatprep.subr.mxu0 0.0
  %2205 = vmatpush1.msra.mxu0 0.0
  %2206 = vmatprep.subr.mxu0 0.0
  %2207 = vmatpush1.msra.mxu0 0.0
  %2208 = vmatprep.subr.mxu0 0.0
  %2209 = vmatpush1.msra.mxu0 0.0
  %2210 = vmatprep.subr.mxu0 0.0
  %2211 = vmatpush1.msra.mxu0 0.0
  %2212 = vmatprep.subr.mxu0 0.0
  %2213 = vmatpush1.msra.mxu0 0.0
  %2214 = vmatprep.subr.mxu0 0.0
  %2215 = vmatpush1.msra.mxu0 0.0
  %2216 = vmatprep.subr.mxu0 0.0
  %2217 = vmatpush1.msra.mxu0 0.0
  %2218 = vmatprep.subr.mxu0 0.0
  %2219 = vmatpush1.msra.mxu0 0.0
  %2220 = vmatprep.subr.mxu0 0.0
  %2221 = vmatpush1.msra.mxu0 0.0
  %2222 = vmatprep.subr.mxu0 0.0
  %2223 = vmatpush1.msra.mxu0 0.0
  %2224 = vmatprep.subr.mxu0 0.0
  %2225 = vmatpush1.msra.mxu0 0.0
  %2226 = vmatprep.subr.mxu0 0.0
  %2227 = vmatpush1.msra.mxu0 0.0
  %2228 = vmatprep.subr.mxu0 0.0
  %2229 = vmatpush1.msra.mxu0 %v2191
  %2230 = vmatprep.subr.mxu0 0.0
  %2231 = vmatpush1.msra.mxu0 %v2190
  %2232 = vmatprep.subr.mxu0 0.0
  %2233 = vmatpush1.msra.mxu0 %v2189
  %2234 = vmatprep.subr.mxu0 0.0
  %2235 = vmatpush1.msra.mxu0 %v2188
  %2236 = vmatprep.subr.mxu0 0.0
  %2237 = vmatpush2.msra.mxu0 0.0
  %2238 = vmatprep.subr.mxu0 0.0
  %2239 = vmatpush2.msra.mxu0 0.0
  %2240 = vmatprep.subr.mxu0 0.0
  %2241 = vmatpush2.msra.mxu0 0.0
  %2242 = vmatprep.subr.mxu0 0.0
  %2243 = vmatpush2.msra.mxu0 0.0
  %2244 = vmatprep.subr.mxu0 0.0
  %2245 = vmatpush2.msra.mxu0 0.0
  %2246 = vmatprep.subr.mxu0 0.0
  %2247 = vmatpush2.msra.mxu0 0.0
  %2248 = vmatprep.subr.mxu0 0.0
  %2249 = vmatpush2.msra.mxu0 0.0
  %2250 = vmatprep.subr.mxu0 0.0
  %2251 = vmatpush2.msra.mxu0 0.0
  %2252 = vmatprep.subr.mxu0 0.0
  %2253 = vmatpush2.msra.mxu0 0.0
  %2254 = vmatprep.subr.mxu0 0.0
  %2255 = vmatpush2.msra.mxu0 0.0
  %2256 = vmatprep.subr.mxu0 0.0
  %2257 = vmatpush2.msra.mxu0 0.0
  %2258 = vmatprep.subr.mxu0 0.0
  %2259 = vmatpush2.msra.mxu0 0.0
  %2260 = vmatprep.subr.mxu0 0.0
  %2261 = vmatpush2.msra.mxu0 0.0
  %2262 = vmatprep.subr.mxu0 0.0
  %2263 = vmatpush2.msra.mxu0 0.0
  %2264 = vmatprep.subr.mxu0 0.0
  %2265 = vmatpush2.msra.mxu0 0.0
  %2266 = vmatprep.subr.mxu0 0.0
  %2267 = vmatpush2.msra.mxu0 0.0
  %2268 = vmatprep.mubr.f32.mxu0 0.0
  %2269 = vmatmul.mubr.f32.gmra.mxu0 %v2193
  %v2270 = vpop.f32.mrf.mxu0
  %v2271 = vadd.f32 0.0, %v2270
  %v2272 = vpop.f32.mrf.mxu0
  %2273 = vmatprep.mubr.f32.mxu0 0.0
  %2274 = vmatmul.mubr.f32.gmra.mxu0 %v2196
  %v2275 = vpop.f32.mrf.mxu0
  %v2276 = vadd.f32 0.0, %v2275
  %v2277 = vpop.f32.mrf.mxu0
  %2278 = vmatprep.mubr.f32.mxu0 0.0
  %2279 = vmatmul.mubr.f32.gmra.mxu0 %v2199
  %v2280 = vpop.f32.mrf.mxu0
  %v2281 = vadd.f32 0.0, %v2280
  %v2282 = vpop.f32.mrf.mxu0
  %2283 = vmatprep.mubr.f32.mxu0 0.0
  %2284 = vmatmul.mubr.f32.gmra.mxu0 %v2202
  %v2285 = vpop.f32.mrf.mxu0
  %v2286 = vadd.f32 0.0, %v2285
  %v2287 = vpop.f32.mrf.mxu0
  %2288 = vdwg.mxu0
  %v2289 = vmul.f32 %v2271, %v2271
  %v2290 = vmul.f32 %v2276, %v2276
  %v2291 = vmul.f32 %v2281, %v2281
  %v2292 = vmul.f32 %v2286, %v2286
  %2297 = vrot.lane.b32.xlu0 %v2289, 1
  %v2298 = vpop.permute.xlu0 %2297
  %2299 = vrot.lane.b32.xlu0 %v2290, 1
  %v2300 = vpop.permute.xlu0 %2299
  %2301 = vrot.lane.b32.xlu0 %v2291, 1
  %v2302 = vpop.permute.xlu0 %2301
  %2303 = vrot.lane.b32.xlu0 %v2292, 1
  %v2304 = vpop.permute.xlu0 %2303
  %v2309 = vsub.f32 %v2271, %v2298
  %v2310 = vsub.f32 %v2276, %v2300
  %v2311 = vsub.f32 %v2281, %v2302
  %v2312 = vsub.f32 %v2286, %v2304
  %v2313 = vmax.f32 %v2309, 0.0
  %v2314 = vmax.f32 %v2310, 0.0
  %v2315 = vmax.f32 %v2311, 0.0
  %v2316 = vmax.f32 %v2312, 0.0
  %v2317 = vld [vmem:[%s4] sm:$0xff]
  %v2318 = vld [vmem:[%s4 + $0x8] sm:$0xff]
  %v2319 = vld [vmem:[%s4 + $0x10] sm:$0xff]
  %v2320 = vld [vmem:[%s4 + $0x18] sm:$0xff]
  %2322 = vset.pattern.permute.xlu0 0
  %2323 = vperm.xlu0 %2322, %v2271
  %v2324 = vpop.permute.xlu0 %2323
  %2327 = vset.pattern.permute.xlu0 0
  %2328 = vperm.xlu0 %2327, %v2276
  %v2329 = vpop.permute.xlu0 %2328
  %2332 = vset.pattern.permute.xlu0 0
  %2333 = vperm.xlu0 %2332, %v2281
  %v2334 = vpop.permute.xlu0 %2333
  %2337 = vset.pattern.permute.xlu0 0
  %2338 = vperm.xlu0 %2337, %v2286
  %v2339 = vpop.permute.xlu0 %2338
  %v2341 = vsub.f32 %v2138, %v2324
  %v2342 = vsub.f32 %v2143, %v2329
  %v2343 = vsub.f32 %v2148, %v2334
  %v2344 = vsub.f32 %v2153, %v2339
  %v2345 = vadd.f32 %v2313, 1e-05
  %v2346 = vadd.f32 %v2314, 1e-05
  %v2347 = vadd.f32 %v2315, 1e-05
  %v2348 = vadd.f32 %v2316, 1e-05
  %v2349 = vrsqrt.pop %v2345
  %v2350 = vrsqrt.pop %v2346
  %v2351 = vrsqrt.pop %v2347
  %v2352 = vrsqrt.pop %v2348
  %2357 = vrot.lane.b32.xlu0 %v2349, 2
  %v2358 = vpop.permute.xlu0 %2357
  %2359 = vrot.lane.b32.xlu0 %v2350, 2
  %v2360 = vpop.permute.xlu0 %2359
  %2361 = vrot.lane.b32.xlu0 %v2351, 2
  %v2362 = vpop.permute.xlu0 %2361
  %2363 = vrot.lane.b32.xlu0 %v2352, 2
  %v2364 = vpop.permute.xlu0 %2363
  %v2369 = vmul.f32 %v2317, %v2358
  %v2370 = vmul.f32 %v2318, %v2360
  %v2371 = vmul.f32 %v2319, %v2362
  %v2372 = vmul.f32 %v2320, %v2364
  %2374 = vset.pattern.permute.xlu0 3
  %2375 = vperm.xlu0 %2374, %v2369
  %v2376 = vpop.permute.xlu0 %2375
  %2379 = vset.pattern.permute.xlu0 3
  %2380 = vperm.xlu0 %2379, %v2370
  %v2381 = vpop.permute.xlu0 %2380
  %2384 = vset.pattern.permute.xlu0 3
  %2385 = vperm.xlu0 %2384, %v2371
  %v2386 = vpop.permute.xlu0 %2385
  %2389 = vset.pattern.permute.xlu0 3
  %2390 = vperm.xlu0 %2389, %v2372
  %v2391 = vpop.permute.xlu0 %2390
  %v2393 = vmul.f32 %v2341, %v2376
  %v2394 = vmul.f32 %v2342, %v2381
  %v2395 = vmul.f32 %v2343, %v2386
  %v2396 = vmul.f32 %v2344, %v2391
  %2398 = vset.pattern.permute.xlu0 4
  %2399 = vperm.xlu0 %2398, %v2317
  %v2400 = vpop.permute.xlu0 %2399
  %2403 = vset.pattern.permute.xlu0 4
  %2404 = vperm.xlu0 %2403, %v2318
  %v2405 = vpop.permute.xlu0 %2404
  %2408 = vset.pattern.permute.xlu0 4
  %2409 = vperm.xlu0 %2408, %v2319
  %v2410 = vpop.permute.xlu0 %2409
  %2413 = vset.pattern.permute.xlu0 4
  %2414 = vperm.xlu0 %2413, %v2320
  %v2415 = vpop.permute.xlu0 %2414
  %v2417 = vadd.f32 %v2393, %v2400
  %v2418 = vadd.f32 %v2394, %v2405
  %v2419 = vadd.f32 %v2395, %v2410
  %v2420 = vadd.f32 %v2396, %v2415
  %vm2421 = vcmp.gt.f32.partialorder %v2417, 0.0
  %vm2422 = vcmp.gt.f32.partialorder %v2418, 0.0
  %vm2423 = vcmp.gt.f32.partialorder %v2419, 0.0
  %vm2424 = vcmp.gt.f32.partialorder %v2420, 0.0
  %v2425 = vmul.f32 %v2417, 0.2
  %v2426 = vmul.f32 %v2418, 0.2
  %v2427 = vmul.f32 %v2419, 0.2
  %v2428 = vmul.f32 %v2420, 0.2
  %v2429 = vsel %vm2421, %v2417, %v2425
  %v2430 = vsel %vm2422, %v2418, %v2426
  %v2431 = vsel %vm2423, %v2419, %v2427
  %v2432 = vsel %vm2424, %v2420, %v2428
  %v2433 = vld [vmem:[%s2 + $0x380] sm:$0xff]
  %v2434 = vld [vmem:[%s2 + $0x388] sm:$0xff]
  %v2436 = vsel %vm1767, %v2429, 0
  %v2439 = vsel %vm1767, %v2430, 0
  %v2442 = vsel %vm1767, %v2431, 0
  %v2445 = vsel %vm1767, %v2432, 0
  %2447 = vmatprep.subr.mxu0 0.0
  %2448 = vmatpush1.msra.mxu0 0.0
  %2449 = vmatprep.subr.mxu0 0.0
  %2450 = vmatpush1.msra.mxu0 0.0
  %2451 = vmatprep.subr.mxu0 0.0
  %2452 = vmatpush1.msra.mxu0 0.0
  %2453 = vmatprep.subr.mxu0 0.0
  %2454 = vmatpush1.msra.mxu0 0.0
  %2455 = vmatprep.subr.mxu0 0.0
  %2456 = vmatpush1.msra.mxu0 0.0
  %2457 = vmatprep.subr.mxu0 0.0
  %2458 = vmatpush1.msra.mxu0 0.0
  %2459 = vmatprep.subr.mxu0 0.0
  %2460 = vmatpush1.msra.mxu0 0.0
  %2461 = vmatprep.subr.mxu0 0.0
  %2462 = vmatpush1.msra.mxu0 0.0
  %2463 = vmatprep.subr.mxu0 0.0
  %2464 = vmatpush1.msra.mxu0 0.0
  %2465 = vmatprep.subr.mxu0 0.0
  %2466 = vmatpush1.msra.mxu0 0.0
  %2467 = vmatprep.subr.mxu0 0.0
  %2468 = vmatpush1.msra.mxu0 0.0
  %2469 = vmatprep.subr.mxu0 0.0
  %2470 = vmatpush1.msra.mxu0 0.0
  %2471 = vmatprep.subr.mxu0 0.0
  %2472 = vmatpush1.msra.mxu0 0.0
  %2473 = vmatprep.subr.mxu0 0.0
  %2474 = vmatpush1.msra.mxu0 0.0
  %2475 = vmatprep.subr.mxu0 0.0
  %2476 = vmatpush1.msra.mxu0 %v2434
  %2477 = vmatprep.subr.mxu0 0.0
  %2478 = vmatpush1.msra.mxu0 %v2433
  %2479 = vmatprep.subr.mxu0 0.0
  %2480 = vmatpush2.msra.mxu0 0.0
  %2481 = vmatprep.subr.mxu0 0.0
  %2482 = vmatpush2.msra.mxu0 0.0
  %2483 = vmatprep.subr.mxu0 0.0
  %2484 = vmatpush2.msra.mxu0 0.0
  %2485 = vmatprep.subr.mxu0 0.0
  %2486 = vmatpush2.msra.mxu0 0.0
  %2487 = vmatprep.subr.mxu0 0.0
  %2488 = vmatpush2.msra.mxu0 0.0
  %2489 = vmatprep.subr.mxu0 0.0
  %2490 = vmatpush2.msra.mxu0 0.0
  %2491 = vmatprep.subr.mxu0 0.0
  %2492 = vmatpush2.msra.mxu0 0.0
  %2493 = vmatprep.subr.mxu0 0.0
  %2494 = vmatpush2.msra.mxu0 0.0
  %2495 = vmatprep.subr.mxu0 0.0
  %2496 = vmatpush2.msra.mxu0 0.0
  %2497 = vmatprep.subr.mxu0 0.0
  %2498 = vmatpush2.msra.mxu0 0.0
  %2499 = vmatprep.subr.mxu0 0.0
  %2500 = vmatpush2.msra.mxu0 0.0
  %2501 = vmatprep.subr.mxu0 0.0
  %2502 = vmatpush2.msra.mxu0 0.0
  %2503 = vmatprep.subr.mxu0 0.0
  %2504 = vmatpush2.msra.mxu0 0.0
  %2505 = vmatprep.subr.mxu0 0.0
  %2506 = vmatpush2.msra.mxu0 0.0
  %2507 = vmatprep.subr.mxu0 0.0
  %2508 = vmatpush2.msra.mxu0 0.0
  %2509 = vmatprep.subr.mxu0 0.0
  %2510 = vmatpush2.msra.mxu0 0.0
  %2511 = vmatprep.mubr.f32.mxu0 0.0
  %2512 = vmatmul.mubr.f32.gmra.mxu0 %v2436
  %v2513 = vpop.f32.mrf.mxu0
  %v2514 = vadd.f32 0.0, %v2513
  %v2515 = vpop.f32.mrf.mxu0
  %2516 = vmatprep.mubr.f32.mxu0 0.0
  %2517 = vmatmul.mubr.f32.gmra.mxu0 %v2439
  %v2518 = vpop.f32.mrf.mxu0
  %v2519 = vadd.f32 0.0, %v2518
  %v2520 = vpop.f32.mrf.mxu0
  %2521 = vmatprep.mubr.f32.mxu0 0.0
  %2522 = vmatmul.mubr.f32.gmra.mxu0 %v2442
  %v2523 = vpop.f32.mrf.mxu0
  %v2524 = vadd.f32 0.0, %v2523
  %v2525 = vpop.f32.mrf.mxu0
  %2526 = vmatprep.mubr.f32.mxu0 0.0
  %2527 = vmatmul.mubr.f32.gmra.mxu0 %v2445
  %v2528 = vpop.f32.mrf.mxu0
  %v2529 = vadd.f32 0.0, %v2528
  %v2530 = vpop.f32.mrf.mxu0
  %2531 = vdwg.mxu0
  %vm2532 = vcmask 64512
  %2533 = vst.msk [vmem:[#allocation2] sm:$0xff] %vm2532, %v2514
  %2534 = vst.msk [vmem:[#allocation2 + $0x8] sm:$0xff] %vm2532, %v2519
  %2535 = vst.msk [vmem:[#allocation2 + $0x10] sm:$0xff] %vm2532, %v2524
  %2536 = vst.msk [vmem:[#allocation2 + $0x18] sm:$0xff] %vm2532, %v2529
  %v2537 = vld [vmem:[%s2 + $0x390] sm:$0xff]
  %v2538 = vld [vmem:[%s2 + $0x398] sm:$0xff]
  %2539 = vmatprep.subr.mxu0 0.0
  %2540 = vmatpush1.msra.mxu0 0.0
  %2541 = vmatprep.subr.mxu0 0.0
  %2542 = vmatpush1.msra.mxu0 0.0
  %2543 = vmatprep.subr.mxu0 0.0
  %2544 = vmatpush1.msra.mxu0 0.0
  %2545 = vmatprep.subr.mxu0 0.0
  %2546 = vmatpush1.msra.mxu0 0.0
  %2547 = vmatprep.subr.mxu0 0.0
  %2548 = vmatpush1.msra.mxu0 0.0
  %2549 = vmatprep.subr.mxu0 0.0
  %2550 = vmatpush1.msra.mxu0 0.0
  %2551 = vmatprep.subr.mxu0 0.0
  %2552 = vmatpush1.msra.mxu0 0.0
  %2553 = vmatprep.subr.mxu0 0.0
  %2554 = vmatpush1.msra.mxu0 0.0
  %2555 = vmatprep.subr.mxu0 0.0
  %2556 = vmatpush1.msra.mxu0 0.0
  %2557 = vmatprep.subr.mxu0 0.0
  %2558 = vmatpush1.msra.mxu0 0.0
  %2559 = vmatprep.subr.mxu0 0.0
  %2560 = vmatpush1.msra.mxu0 0.0
  %2561 = vmatprep.subr.mxu0 0.0
  %2562 = vmatpush1.msra.mxu0 0.0
  %2563 = vmatprep.subr.mxu0 0.0
  %2564 = vmatpush1.msra.mxu0 0.0
  %2565 = vmatprep.subr.mxu0 0.0
  %2566 = vmatpush1.msra.mxu0 0.0
  %2567 = vmatprep.subr.mxu0 0.0
  %2568 = vmatpush1.msra.mxu0 %v2538
  %2569 = vmatprep.subr.mxu0 0.0
  %2570 = vmatpush1.msra.mxu0 %v2537
  %2571 = vmatprep.subr.mxu0 0.0
  %2572 = vmatpush2.msra.mxu0 0.0
  %2573 = vmatprep.subr.mxu0 0.0
  %2574 = vmatpush2.msra.mxu0 0.0
  %2575 = vmatprep.subr.mxu0 0.0
  %2576 = vmatpush2.msra.mxu0 0.0
  %2577 = vmatprep.subr.mxu0 0.0
  %2578 = vmatpush2.msra.mxu0 0.0
  %2579 = vmatprep.subr.mxu0 0.0
  %2580 = vmatpush2.msra.mxu0 0.0
  %2581 = vmatprep.subr.mxu0 0.0
  %2582 = vmatpush2.msra.mxu0 0.0
  %2583 = vmatprep.subr.mxu0 0.0
  %2584 = vmatpush2.msra.mxu0 0.0
  %2585 = vmatprep.subr.mxu0 0.0
  %2586 = vmatpush2.msra.mxu0 0.0
  %2587 = vmatprep.subr.mxu0 0.0
  %2588 = vmatpush2.msra.mxu0 0.0
  %2589 = vmatprep.subr.mxu0 0.0
  %2590 = vmatpush2.msra.mxu0 0.0
  %2591 = vmatprep.subr.mxu0 0.0
  %2592 = vmatpush2.msra.mxu0 0.0
  %2593 = vmatprep.subr.mxu0 0.0
  %2594 = vmatpush2.msra.mxu0 0.0
  %2595 = vmatprep.subr.mxu0 0.0
  %2596 = vmatpush2.msra.mxu0 0.0
  %2597 = vmatprep.subr.mxu0 0.0
  %2598 = vmatpush2.msra.mxu0 0.0
  %2599 = vmatprep.subr.mxu0 0.0
  %2600 = vmatpush2.msra.mxu0 0.0
  %2601 = vmatprep.subr.mxu0 0.0
  %2602 = vmatpush2.msra.mxu0 0.0
  %2603 = vmatprep.mubr.f32.mxu0 0.0
  %2604 = vmatmul.mubr.f32.gmra.mxu0 %v2436
  %v2605 = vpop.f32.mrf.mxu0
  %v2606 = vadd.f32 0.0, %v2605
  %v2607 = vpop.f32.mrf.mxu0
  %2608 = vmatprep.mubr.f32.mxu0 0.0
  %2609 = vmatmul.mubr.f32.gmra.mxu0 %v2439
  %v2610 = vpop.f32.mrf.mxu0
  %v2611 = vadd.f32 0.0, %v2610
  %v2612 = vpop.f32.mrf.mxu0
  %2613 = vmatprep.mubr.f32.mxu0 0.0
  %2614 = vmatmul.mubr.f32.gmra.mxu0 %v2442
  %v2615 = vpop.f32.mrf.mxu0
  %v2616 = vadd.f32 0.0, %v2615
  %v2617 = vpop.f32.mrf.mxu0
  %2618 = vmatprep.mubr.f32.mxu0 0.0
  %2619 = vmatmul.mubr.f32.gmra.mxu0 %v2445
  %v2620 = vpop.f32.mrf.mxu0
  %v2621 = vadd.f32 0.0, %v2620
  %v2622 = vpop.f32.mrf.mxu0
  %2623 = vdwg.mxu0
  %2624 = vst.msk [vmem:[#allocation2 + $0x20] sm:$0xff] %vm2532, %v2606
  %2625 = vst.msk [vmem:[#allocation2 + $0x28] sm:$0xff] %vm2532, %v2611
  %2626 = vst.msk [vmem:[#allocation2 + $0x30] sm:$0xff] %vm2532, %v2616
  %2627 = vst.msk [vmem:[#allocation2 + $0x38] sm:$0xff] %vm2532, %v2621
  %v2628 = vld [vmem:[%s2 + $0x3a0] sm:$0xff]
  %v2629 = vld [vmem:[%s2 + $0x3a8] sm:$0xff]
  %2630 = vmatprep.subr.mxu0 0.0
  %2631 = vmatpush1.msra.mxu0 0.0
  %2632 = vmatprep.subr.mxu0 0.0
  %2633 = vmatpush1.msra.mxu0 0.0
  %2634 = vmatprep.subr.mxu0 0.0
  %2635 = vmatpush1.msra.mxu0 0.0
  %2636 = vmatprep.subr.mxu0 0.0
  %2637 = vmatpush1.msra.mxu0 0.0
  %2638 = vmatprep.subr.mxu0 0.0
  %2639 = vmatpush1.msra.mxu0 0.0
  %2640 = vmatprep.subr.mxu0 0.0
  %2641 = vmatpush1.msra.mxu0 0.0
  %2642 = vmatprep.subr.mxu0 0.0
  %2643 = vmatpush1.msra.mxu0 0.0
  %2644 = vmatprep.subr.mxu0 0.0
  %2645 = vmatpush1.msra.mxu0 0.0
  %2646 = vmatprep.subr.mxu0 0.0
  %2647 = vmatpush1.msra.mxu0 0.0
  %2648 = vmatprep.subr.mxu0 0.0
  %2649 = vmatpush1.msra.mxu0 0.0
  %2650 = vmatprep.subr.mxu0 0.0
  %2651 = vmatpush1.msra.mxu0 0.0
  %2652 = vmatprep.subr.mxu0 0.0
  %2653 = vmatpush1.msra.mxu0 0.0
  %2654 = vmatprep.subr.mxu0 0.0
  %2655 = vmatpush1.msra.mxu0 0.0
  %2656 = vmatprep.subr.mxu0 0.0
  %2657 = vmatpush1.msra.mxu0 0.0
  %2658 = vmatprep.subr.mxu0 0.0
  %2659 = vmatpush1.msra.mxu0 %v2629
  %2660 = vmatprep.subr.mxu0 0.0
  %2661 = vmatpush1.msra.mxu0 %v2628
  %2662 = vmatprep.subr.mxu0 0.0
  %2663 = vmatpush2.msra.mxu0 0.0
  %2664 = vmatprep.subr.mxu0 0.0
  %2665 = vmatpush2.msra.mxu0 0.0
  %2666 = vmatprep.subr.mxu0 0.0
  %2667 = vmatpush2.msra.mxu0 0.0
  %2668 = vmatprep.subr.mxu0 0.0
  %2669 = vmatpush2.msra.mxu0 0.0
  %2670 = vmatprep.subr.mxu0 0.0
  %2671 = vmatpush2.msra.mxu0 0.0
  %2672 = vmatprep.subr.mxu0 0.0
  %2673 = vmatpush2.msra.mxu0 0.0
  %2674 = vmatprep.subr.mxu0 0.0
  %2675 = vmatpush2.msra.mxu0 0.0
  %2676 = vmatprep.subr.mxu0 0.0
  %2677 = vmatpush2.msra.mxu0 0.0
  %2678 = vmatprep.subr.mxu0 0.0
  %2679 = vmatpush2.msra.mxu0 0.0
  %2680 = vmatprep.subr.mxu0 0.0
  %2681 = vmatpush2.msra.mxu0 0.0
  %2682 = vmatprep.subr.mxu0 0.0
  %2683 = vmatpush2.msra.mxu0 0.0
  %2684 = vmatprep.subr.mxu0 0.0
  %2685 = vmatpush2.msra.mxu0 0.0
  %2686 = vmatprep.subr.mxu0 0.0
  %2687 = vmatpush2.msra.mxu0 0.0
  %2688 = vmatprep.subr.mxu0 0.0
  %2689 = vmatpush2.msra.mxu0 0.0
  %2690 = vmatprep.subr.mxu0 0.0
  %2691 = vmatpush2.msra.mxu0 0.0
  %2692 = vmatprep.subr.mxu0 0.0
  %2693 = vmatpush2.msra.mxu0 0.0
  %2694 = vmatprep.mubr.f32.mxu0 0.0
  %2695 = vmatmul.mubr.f32.gmra.mxu0 %v2436
  %v2696 = vpop.f32.mrf.mxu0
  %v2697 = vadd.f32 0.0, %v2696
  %v2698 = vpop.f32.mrf.mxu0
  %2699 = vmatprep.mubr.f32.mxu0 0.0
  %2700 = vmatmul.mubr.f32.gmra.mxu0 %v2439
  %v2701 = vpop.f32.mrf.mxu0
  %v2702 = vadd.f32 0.0, %v2701
  %v2703 = vpop.f32.mrf.mxu0
  %2704 = vmatprep.mubr.f32.mxu0 0.0
  %2705 = vmatmul.mubr.f32.gmra.mxu0 %v2442
  %v2706 = vpop.f32.mrf.mxu0
  %v2707 = vadd.f32 0.0, %v2706
  %v2708 = vpop.f32.mrf.mxu0
  %2709 = vmatprep.mubr.f32.mxu0 0.0
  %2710 = vmatmul.mubr.f32.gmra.mxu0 %v2445
  %v2711 = vpop.f32.mrf.mxu0
  %v2712 = vadd.f32 0.0, %v2711
  %v2713 = vpop.f32.mrf.mxu0
  %2714 = vdwg.mxu0
  %2715 = vst.msk [vmem:[#allocation2 + $0x40] sm:$0xff] %vm2532, %v2697
  %2716 = vst.msk [vmem:[#allocation2 + $0x48] sm:$0xff] %vm2532, %v2702
  %2717 = vst.msk [vmem:[#allocation2 + $0x50] sm:$0xff] %vm2532, %v2707
  %2718 = vst.msk [vmem:[#allocation2 + $0x58] sm:$0xff] %vm2532, %v2712
  %v2719 = vld [vmem:[%s2 + $0x3b0] sm:$0xff]
  %v2720 = vld [vmem:[%s2 + $0x3b8] sm:$0xff]
  %2721 = vmatprep.subr.mxu0 0.0
  %2722 = vmatpush1.msra.mxu0 0.0
  %2723 = vmatprep.subr.mxu0 0.0
  %2724 = vmatpush1.msra.mxu0 0.0
  %2725 = vmatprep.subr.mxu0 0.0
  %2726 = vmatpush1.msra.mxu0 0.0
  %2727 = vmatprep.subr.mxu0 0.0
  %2728 = vmatpush1.msra.mxu0 0.0
  %2729 = vmatprep.subr.mxu0 0.0
  %2730 = vmatpush1.msra.mxu0 0.0
  %2731 = vmatprep.subr.mxu0 0.0
  %2732 = vmatpush1.msra.mxu0 0.0
  %2733 = vmatprep.subr.mxu0 0.0
  %2734 = vmatpush1.msra.mxu0 0.0
  %2735 = vmatprep.subr.mxu0 0.0
  %2736 = vmatpush1.msra.mxu0 0.0
  %2737 = vmatprep.subr.mxu0 0.0
  %2738 = vmatpush1.msra.mxu0 0.0
  %2739 = vmatprep.subr.mxu0 0.0
  %2740 = vmatpush1.msra.mxu0 0.0
  %2741 = vmatprep.subr.mxu0 0.0
  %2742 = vmatpush1.msra.mxu0 0.0
  %2743 = vmatprep.subr.mxu0 0.0
  %2744 = vmatpush1.msra.mxu0 0.0
  %2745 = vmatprep.subr.mxu0 0.0
  %2746 = vmatpush1.msra.mxu0 0.0
  %2747 = vmatprep.subr.mxu0 0.0
  %2748 = vmatpush1.msra.mxu0 0.0
  %2749 = vmatprep.subr.mxu0 0.0
  %2750 = vmatpush1.msra.mxu0 %v2720
  %2751 = vmatprep.subr.mxu0 0.0
  %2752 = vmatpush1.msra.mxu0 %v2719
  %2753 = vmatprep.subr.mxu0 0.0
  %2754 = vmatpush2.msra.mxu0 0.0
  %2755 = vmatprep.subr.mxu0 0.0
  %2756 = vmatpush2.msra.mxu0 0.0
  %2757 = vmatprep.subr.mxu0 0.0
  %2758 = vmatpush2.msra.mxu0 0.0
  %2759 = vmatprep.subr.mxu0 0.0
  %2760 = vmatpush2.msra.mxu0 0.0
  %2761 = vmatprep.subr.mxu0 0.0
  %2762 = vmatpush2.msra.mxu0 0.0
  %2763 = vmatprep.subr.mxu0 0.0
  %2764 = vmatpush2.msra.mxu0 0.0
  %2765 = vmatprep.subr.mxu0 0.0
  %2766 = vmatpush2.msra.mxu0 0.0
  %2767 = vmatprep.subr.mxu0 0.0
  %2768 = vmatpush2.msra.mxu0 0.0
  %2769 = vmatprep.subr.mxu0 0.0
  %2770 = vmatpush2.msra.mxu0 0.0
  %2771 = vmatprep.subr.mxu0 0.0
  %2772 = vmatpush2.msra.mxu0 0.0
  %2773 = vmatprep.subr.mxu0 0.0
  %2774 = vmatpush2.msra.mxu0 0.0
  %2775 = vmatprep.subr.mxu0 0.0
  %2776 = vmatpush2.msra.mxu0 0.0
  %2777 = vmatprep.subr.mxu0 0.0
  %2778 = vmatpush2.msra.mxu0 0.0
  %2779 = vmatprep.subr.mxu0 0.0
  %2780 = vmatpush2.msra.mxu0 0.0
  %2781 = vmatprep.subr.mxu0 0.0
  %2782 = vmatpush2.msra.mxu0 0.0
  %2783 = vmatprep.subr.mxu0 0.0
  %2784 = vmatpush2.msra.mxu0 0.0
  %2785 = vmatprep.mubr.f32.mxu0 0.0
  %2786 = vmatmul.mubr.f32.gmra.mxu0 %v2436
  %v2787 = vpop.f32.mrf.mxu0
  %v2788 = vadd.f32 0.0, %v2787
  %v2789 = vpop.f32.mrf.mxu0
  %2790 = vmatprep.mubr.f32.mxu0 0.0
  %2791 = vmatmul.mubr.f32.gmra.mxu0 %v2439
  %v2792 = vpop.f32.mrf.mxu0
  %v2793 = vadd.f32 0.0, %v2792
  %v2794 = vpop.f32.mrf.mxu0
  %2795 = vmatprep.mubr.f32.mxu0 0.0
  %2796 = vmatmul.mubr.f32.gmra.mxu0 %v2442
  %v2797 = vpop.f32.mrf.mxu0
  %v2798 = vadd.f32 0.0, %v2797
  %v2799 = vpop.f32.mrf.mxu0
  %2800 = vmatprep.mubr.f32.mxu0 0.0
  %2801 = vmatmul.mubr.f32.gmra.mxu0 %v2445
  %v2802 = vpop.f32.mrf.mxu0
  %v2803 = vadd.f32 0.0, %v2802
  %v2804 = vpop.f32.mrf.mxu0
  %2805 = vdwg.mxu0
  %2806 = vst.msk [vmem:[#allocation2 + $0x60] sm:$0xff] %vm2532, %v2788
  %2807 = vst.msk [vmem:[#allocation2 + $0x68] sm:$0xff] %vm2532, %v2793
  %2808 = vst.msk [vmem:[#allocation2 + $0x70] sm:$0xff] %vm2532, %v2798
  %2809 = vst.msk [vmem:[#allocation2 + $0x78] sm:$0xff] %vm2532, %v2803
  %v2810 = vld [vmem:[#allocation2] sm:$0xff]
  %v2811 = vld [vmem:[#allocation2 + $0x8] sm:$0xff]
  %v2812 = vld [vmem:[#allocation2 + $0x10] sm:$0xff]
  %v2813 = vld [vmem:[#allocation2 + $0x18] sm:$0xff]
  %v2814 = vld [vmem:[#allocation2 + $0x20] sm:$0xff]
  %v2815 = vld [vmem:[#allocation2 + $0x28] sm:$0xff]
  %v2816 = vld [vmem:[#allocation2 + $0x30] sm:$0xff]
  %v2817 = vld [vmem:[#allocation2 + $0x38] sm:$0xff]
  %v2818 = vld [vmem:[#allocation2 + $0x40] sm:$0xff]
  %v2819 = vld [vmem:[#allocation2 + $0x48] sm:$0xff]
  %v2820 = vld [vmem:[#allocation2 + $0x50] sm:$0xff]
  %v2821 = vld [vmem:[#allocation2 + $0x58] sm:$0xff]
  %v2822 = vld [vmem:[#allocation2 + $0x60] sm:$0xff]
  %v2823 = vld [vmem:[#allocation2 + $0x68] sm:$0xff]
  %v2824 = vld [vmem:[#allocation2 + $0x70] sm:$0xff]
  %v2825 = vld [vmem:[#allocation2 + $0x78] sm:$0xff]
  %v2826 = vld [vmem:[%s1 + $0x100] sm:$0xff]
  %v2827 = vld [vmem:[%s1 + $0x110] sm:$0xff]
  %2828 = vmatprep.subr.mxu0 0.0
  %2829 = vmatpush1.msra.mxu0 %v2825
  %2830 = vmatprep.subr.mxu0 0.0
  %2831 = vmatpush1.msra.mxu0 %v2824
  %2832 = vmatprep.subr.mxu0 0.0
  %2833 = vmatpush1.msra.mxu0 %v2823
  %2834 = vmatprep.subr.mxu0 0.0
  %2835 = vmatpush1.msra.mxu0 %v2822
  %2836 = vmatprep.subr.mxu0 0.0
  %2837 = vmatpush1.msra.mxu0 %v2821
  %2838 = vmatprep.subr.mxu0 0.0
  %2839 = vmatpush1.msra.mxu0 %v2820
  %2840 = vmatprep.subr.mxu0 0.0
  %2841 = vmatpush1.msra.mxu0 %v2819
  %2842 = vmatprep.subr.mxu0 0.0
  %2843 = vmatpush1.msra.mxu0 %v2818
  %2844 = vmatprep.subr.mxu0 0.0
  %2845 = vmatpush1.msra.mxu0 %v2817
  %2846 = vmatprep.subr.mxu0 0.0
  %2847 = vmatpush1.msra.mxu0 %v2816
  %2848 = vmatprep.subr.mxu0 0.0
  %2849 = vmatpush1.msra.mxu0 %v2815
  %2850 = vmatprep.subr.mxu0 0.0
  %2851 = vmatpush1.msra.mxu0 %v2814
  %2852 = vmatprep.subr.mxu0 0.0
  %2853 = vmatpush1.msra.mxu0 %v2813
  %2854 = vmatprep.subr.mxu0 0.0
  %2855 = vmatpush1.msra.mxu0 %v2812
  %2856 = vmatprep.subr.mxu0 0.0
  %2857 = vmatpush1.msra.mxu0 %v2811
  %2858 = vmatprep.subr.mxu0 0.0
  %2859 = vmatpush1.msra.mxu0 %v2810
  %2860 = vmatprep.subr.mxu0 0.0
  %2861 = vmatpush2.msra.mxu0 0.0
  %2862 = vmatprep.subr.mxu0 0.0
  %2863 = vmatpush2.msra.mxu0 0.0
  %2864 = vmatprep.subr.mxu0 0.0
  %2865 = vmatpush2.msra.mxu0 0.0
  %2866 = vmatprep.subr.mxu0 0.0
  %2867 = vmatpush2.msra.mxu0 0.0
  %2868 = vmatprep.subr.mxu0 0.0
  %2869 = vmatpush2.msra.mxu0 0.0
  %2870 = vmatprep.subr.mxu0 0.0
  %2871 = vmatpush2.msra.mxu0 0.0
  %2872 = vmatprep.subr.mxu0 0.0
  %2873 = vmatpush2.msra.mxu0 0.0
  %2874 = vmatprep.subr.mxu0 0.0
  %2875 = vmatpush2.msra.mxu0 0.0
  %2876 = vmatprep.subr.mxu0 0.0
  %2877 = vmatpush2.msra.mxu0 0.0
  %2878 = vmatprep.subr.mxu0 0.0
  %2879 = vmatpush2.msra.mxu0 0.0
  %2880 = vmatprep.subr.mxu0 0.0
  %2881 = vmatpush2.msra.mxu0 0.0
  %2882 = vmatprep.subr.mxu0 0.0
  %2883 = vmatpush2.msra.mxu0 0.0
  %2884 = vmatprep.subr.mxu0 0.0
  %2885 = vmatpush2.msra.mxu0 0.0
  %2886 = vmatprep.subr.mxu0 0.0
  %2887 = vmatpush2.msra.mxu0 0.0
  %2888 = vmatprep.subr.mxu0 0.0
  %2889 = vmatpush2.msra.mxu0 0.0
  %2890 = vmatprep.subr.mxu0 0.0
  %2891 = vmatpush2.msra.mxu0 0.0
  %2892 = vmatprep.mubr.f32.mxu0 0.0
  %2893 = vmatmul.mubr.f32.gmra.mxu0 %v2826
  %v2894 = vpop.f32.mrf.mxu0
  %v2895 = vadd.f32 0.0, %v2894
  %v2896 = vpop.f32.mrf.mxu0
  %2897 = vmatprep.mubr.f32.mxu0 0.0
  %2898 = vmatmul.mubr.f32.gmra.mxu0 %v2827
  %v2899 = vpop.f32.mrf.mxu0
  %v2900 = vadd.f32 0.0, %v2899
  %v2901 = vpop.f32.mrf.mxu0
  %2902 = vdwg.mxu0
  %v2903 = vld [vmem:[%s3 + $0x40] sm:$0xff]
  %v2904 = vld [vmem:[%s3 + $0x48] sm:$0xff]
  %v2905 = vsel %vm2532, %v2895, 0.0
  %2906 = vadd.xlane.f32.xlu0 %v2905
  %v2907 = vpop.xlane.xlu0 %2906
  %v2908 = vsel %vm2532, %v2900, 0.0
  %2909 = vadd.xlane.f32.xlu0 %v2908
  %v2910 = vpop.xlane.xlu0 %2909
  %v2911 = vmul.f32 %v2895, %v2895
  %v2912 = vmul.f32 %v2900, %v2900
  %v2913 = vsel %vm2532, %v2911, 0.0
  %2914 = vadd.xlane.f32.xlu0 %v2913
  %v2915 = vpop.xlane.xlu0 %2914
  %v2916 = vsel %vm2532, %v2912, 0.0
  %2917 = vadd.xlane.f32.xlu0 %v2916
  %v2918 = vpop.xlane.xlu0 %2917
  %v2919 = vsel %vm1436, %v2907, %v2915
  %v2920 = vsel %vm1436, %v2910, %v2918
  %v2922 = vsel %vm1767, %v2903, 0
  %v2925 = vsel %vm1767, %v2904, 0
  %2927 = vmatprep.subr.mxu0 0.0
  %2928 = vmatpush1.msra.mxu0 0.0
  %2929 = vmatprep.subr.mxu0 0.0
  %2930 = vmatpush1.msra.mxu0 0.0
  %2931 = vmatprep.subr.mxu0 0.0
  %2932 = vmatpush1.msra.mxu0 0.0
  %2933 = vmatprep.subr.mxu0 0.0
  %2934 = vmatpush1.msra.mxu0 0.0
  %2935 = vmatprep.subr.mxu0 0.0
  %2936 = vmatpush1.msra.mxu0 0.0
  %2937 = vmatprep.subr.mxu0 0.0
  %2938 = vmatpush1.msra.mxu0 0.0
  %2939 = vmatprep.subr.mxu0 0.0
  %2940 = vmatpush1.msra.mxu0 0.0
  %2941 = vmatprep.subr.mxu0 0.0
  %2942 = vmatpush1.msra.mxu0 0.0
  %2943 = vmatprep.subr.mxu0 0.0
  %2944 = vmatpush1.msra.mxu0 0.0
  %2945 = vmatprep.subr.mxu0 0.0
  %2946 = vmatpush1.msra.mxu0 0.0
  %2947 = vmatprep.subr.mxu0 0.0
  %2948 = vmatpush1.msra.mxu0 0.0
  %2949 = vmatprep.subr.mxu0 0.0
  %2950 = vmatpush1.msra.mxu0 0.0
  %2951 = vmatprep.subr.mxu0 0.0
  %2952 = vmatpush1.msra.mxu0 0.0
  %2953 = vmatprep.subr.mxu0 0.0
  %2954 = vmatpush1.msra.mxu0 0.0
  %2955 = vmatprep.subr.mxu0 0.0
  %2956 = vmatpush1.msra.mxu0 %v2920
  %2957 = vmatprep.subr.mxu0 0.0
  %2958 = vmatpush1.msra.mxu0 %v2919
  %2959 = vmatprep.subr.mxu0 0.0
  %2960 = vmatpush2.msra.mxu0 0.0
  %2961 = vmatprep.subr.mxu0 0.0
  %2962 = vmatpush2.msra.mxu0 0.0
  %2963 = vmatprep.subr.mxu0 0.0
  %2964 = vmatpush2.msra.mxu0 0.0
  %2965 = vmatprep.subr.mxu0 0.0
  %2966 = vmatpush2.msra.mxu0 0.0
  %2967 = vmatprep.subr.mxu0 0.0
  %2968 = vmatpush2.msra.mxu0 0.0
  %2969 = vmatprep.subr.mxu0 0.0
  %2970 = vmatpush2.msra.mxu0 0.0
  %2971 = vmatprep.subr.mxu0 0.0
  %2972 = vmatpush2.msra.mxu0 0.0
  %2973 = vmatprep.subr.mxu0 0.0
  %2974 = vmatpush2.msra.mxu0 0.0
  %2975 = vmatprep.subr.mxu0 0.0
  %2976 = vmatpush2.msra.mxu0 0.0
  %2977 = vmatprep.subr.mxu0 0.0
  %2978 = vmatpush2.msra.mxu0 0.0
  %2979 = vmatprep.subr.mxu0 0.0
  %2980 = vmatpush2.msra.mxu0 0.0
  %2981 = vmatprep.subr.mxu0 0.0
  %2982 = vmatpush2.msra.mxu0 0.0
  %2983 = vmatprep.subr.mxu0 0.0
  %2984 = vmatpush2.msra.mxu0 0.0
  %2985 = vmatprep.subr.mxu0 0.0
  %2986 = vmatpush2.msra.mxu0 0.0
  %2987 = vmatprep.subr.mxu0 0.0
  %2988 = vmatpush2.msra.mxu0 0.0
  %2989 = vmatprep.subr.mxu0 0.0
  %2990 = vmatpush2.msra.mxu0 0.0
  %2991 = vmatprep.mubr.f32.mxu0 0.0
  %2992 = vmatmul.mubr.f32.gmra.mxu0 %v2922
  %v2993 = vpop.f32.mrf.mxu0
  %v2994 = vadd.f32 0.0, %v2993
  %v2995 = vpop.f32.mrf.mxu0
  %2996 = vmatprep.mubr.f32.mxu0 0.0
  %2997 = vmatmul.mubr.f32.gmra.mxu0 %v2925
  %v2998 = vpop.f32.mrf.mxu0
  %v2999 = vadd.f32 0.0, %v2998
  %v3000 = vpop.f32.mrf.mxu0
  %3001 = vdwg.mxu0
  %v3002 = vmul.f32 %v2994, %v2994
  %v3003 = vmul.f32 %v2999, %v2999
  %3006 = vrot.lane.b32.xlu0 %v3002, 1
  %v3007 = vpop.permute.xlu0 %3006
  %3008 = vrot.lane.b32.xlu0 %v3003, 1
  %v3009 = vpop.permute.xlu0 %3008
  %v3012 = vsub.f32 %v2994, %v3007
  %v3013 = vsub.f32 %v2999, %v3009
  %v3014 = vmax.f32 %v3012, 0.0
  %v3015 = vmax.f32 %v3013, 0.0
  %v3016 = vld [vmem:[%s4] sm:$0xff]
  %v3017 = vld [vmem:[%s4 + $0x8] sm:$0xff]
  %3019 = vset.pattern.permute.xlu0 0
  %3020 = vperm.xlu0 %3019, %v2994
  %v3021 = vpop.permute.xlu0 %3020
  %3024 = vset.pattern.permute.xlu0 0
  %3025 = vperm.xlu0 %3024, %v2999
  %v3026 = vpop.permute.xlu0 %3025
  %v3028 = vsub.f32 %v2895, %v3021
  %v3029 = vsub.f32 %v2900, %v3026
  %v3030 = vadd.f32 %v3014, 1e-05
  %v3031 = vadd.f32 %v3015, 1e-05
  %v3032 = vrsqrt.pop %v3030
  %v3033 = vrsqrt.pop %v3031
  %3036 = vrot.lane.b32.xlu0 %v3032, 4
  %v3037 = vpop.permute.xlu0 %3036
  %3038 = vrot.lane.b32.xlu0 %v3033, 4
  %v3039 = vpop.permute.xlu0 %3038
  %v3042 = vmul.f32 %v3016, %v3037
  %v3043 = vmul.f32 %v3017, %v3039
  %3045 = vset.pattern.permute.xlu0 5
  %3046 = vperm.xlu0 %3045, %v3042
  %v3047 = vpop.permute.xlu0 %3046
  %3050 = vset.pattern.permute.xlu0 5
  %3051 = vperm.xlu0 %3050, %v3043
  %v3052 = vpop.permute.xlu0 %3051
  %v3054 = vmul.f32 %v3028, %v3047
  %v3055 = vmul.f32 %v3029, %v3052
  %3057 = vset.pattern.permute.xlu0 6
  %3058 = vperm.xlu0 %3057, %v3016
  %v3059 = vpop.permute.xlu0 %3058
  %3062 = vset.pattern.permute.xlu0 6
  %3063 = vperm.xlu0 %3062, %v3017
  %v3064 = vpop.permute.xlu0 %3063
  %v3066 = vadd.f32 %v3054, %v3059
  %v3067 = vadd.f32 %v3055, %v3064
  %vm3068 = vcmp.gt.f32.partialorder %v3066, 0.0
  %vm3069 = vcmp.gt.f32.partialorder %v3067, 0.0
  %v3070 = vmul.f32 %v3066, 0.2
  %v3071 = vmul.f32 %v3067, 0.2
  %v3072 = vsel %vm3068, %v3066, %v3070
  %v3073 = vsel %vm3069, %v3067, %v3071
  %v3074 = vld [vmem:[%s2 + $0x3c0] sm:$0xff]
  %v3076 = vsel %vm2532, %v3072, 0
  %v3079 = vsel %vm2532, %v3073, 0
  %3081 = vmatprep.subr.mxu0 0.0
  %3082 = vmatpush1.msra.mxu0 0.0
  %3083 = vmatprep.subr.mxu0 0.0
  %3084 = vmatpush1.msra.mxu0 0.0
  %3085 = vmatprep.subr.mxu0 0.0
  %3086 = vmatpush1.msra.mxu0 0.0
  %3087 = vmatprep.subr.mxu0 0.0
  %3088 = vmatpush1.msra.mxu0 0.0
  %3089 = vmatprep.subr.mxu0 0.0
  %3090 = vmatpush1.msra.mxu0 0.0
  %3091 = vmatprep.subr.mxu0 0.0
  %3092 = vmatpush1.msra.mxu0 0.0
  %3093 = vmatprep.subr.mxu0 0.0
  %3094 = vmatpush1.msra.mxu0 0.0
  %3095 = vmatprep.subr.mxu0 0.0
  %3096 = vmatpush1.msra.mxu0 0.0
  %3097 = vmatprep.subr.mxu0 0.0
  %3098 = vmatpush1.msra.mxu0 0.0
  %3099 = vmatprep.subr.mxu0 0.0
  %3100 = vmatpush1.msra.mxu0 0.0
  %3101 = vmatprep.subr.mxu0 0.0
  %3102 = vmatpush1.msra.mxu0 0.0
  %3103 = vmatprep.subr.mxu0 0.0
  %3104 = vmatpush1.msra.mxu0 0.0
  %3105 = vmatprep.subr.mxu0 0.0
  %3106 = vmatpush1.msra.mxu0 0.0
  %3107 = vmatprep.subr.mxu0 0.0
  %3108 = vmatpush1.msra.mxu0 0.0
  %3109 = vmatprep.subr.mxu0 0.0
  %3110 = vmatpush1.msra.mxu0 0.0
  %3111 = vmatprep.subr.mxu0 0.0
  %3112 = vmatpush1.msra.mxu0 %v3074
  %3113 = vmatprep.subr.mxu0 0.0
  %3114 = vmatpush2.msra.mxu0 0.0
  %3115 = vmatprep.subr.mxu0 0.0
  %3116 = vmatpush2.msra.mxu0 0.0
  %3117 = vmatprep.subr.mxu0 0.0
  %3118 = vmatpush2.msra.mxu0 0.0
  %3119 = vmatprep.subr.mxu0 0.0
  %3120 = vmatpush2.msra.mxu0 0.0
  %3121 = vmatprep.subr.mxu0 0.0
  %3122 = vmatpush2.msra.mxu0 0.0
  %3123 = vmatprep.subr.mxu0 0.0
  %3124 = vmatpush2.msra.mxu0 0.0
  %3125 = vmatprep.subr.mxu0 0.0
  %3126 = vmatpush2.msra.mxu0 0.0
  %3127 = vmatprep.subr.mxu0 0.0
  %3128 = vmatpush2.msra.mxu0 0.0
  %3129 = vmatprep.subr.mxu0 0.0
  %3130 = vmatpush2.msra.mxu0 0.0
  %3131 = vmatprep.subr.mxu0 0.0
  %3132 = vmatpush2.msra.mxu0 0.0
  %3133 = vmatprep.subr.mxu0 0.0
  %3134 = vmatpush2.msra.mxu0 0.0
  %3135 = vmatprep.subr.mxu0 0.0
  %3136 = vmatpush2.msra.mxu0 0.0
  %3137 = vmatprep.subr.mxu0 0.0
  %3138 = vmatpush2.msra.mxu0 0.0
  %3139 = vmatprep.subr.mxu0 0.0
  %3140 = vmatpush2.msra.mxu0 0.0
  %3141 = vmatprep.subr.mxu0 0.0
  %3142 = vmatpush2.msra.mxu0 0.0
  %3143 = vmatprep.subr.mxu0 0.0
  %3144 = vmatpush2.msra.mxu0 0.0
  %3145 = vmatprep.mubr.f32.mxu0 0.0
  %3146 = vmatmul.mubr.f32.gmra.mxu0 %v3076
  %v3147 = vpop.f32.mrf.mxu0
  %v3148 = vadd.f32 0.0, %v3147
  %v3149 = vpop.f32.mrf.mxu0
  %3150 = vmatprep.mubr.f32.mxu0 0.0
  %3151 = vmatmul.mubr.f32.gmra.mxu0 %v3079
  %v3152 = vpop.f32.mrf.mxu0
  %v3153 = vadd.f32 0.0, %v3152
  %v3154 = vpop.f32.mrf.mxu0
  %3155 = vdwg.mxu0
  %vm3156 = vcmask 31744
  %3157 = vst.msk [vmem:[#allocation2] sm:$0xff] %vm3156, %v3148
  %3158 = vst.msk [vmem:[#allocation2 + $0x8] sm:$0xff] %vm3156, %v3153
  %v3159 = vld [vmem:[%s2 + $0x3c8] sm:$0xff]
  %3160 = vmatprep.subr.mxu0 0.0
  %3161 = vmatpush1.msra.mxu0 0.0
  %3162 = vmatprep.subr.mxu0 0.0
  %3163 = vmatpush1.msra.mxu0 0.0
  %3164 = vmatprep.subr.mxu0 0.0
  %3165 = vmatpush1.msra.mxu0 0.0
  %3166 = vmatprep.subr.mxu0 0.0
  %3167 = vmatpush1.msra.mxu0 0.0
  %3168 = vmatprep.subr.mxu0 0.0
  %3169 = vmatpush1.msra.mxu0 0.0
  %3170 = vmatprep.subr.mxu0 0.0
  %3171 = vmatpush1.msra.mxu0 0.0
  %3172 = vmatprep.subr.mxu0 0.0
  %3173 = vmatpush1.msra.mxu0 0.0
  %3174 = vmatprep.subr.mxu0 0.0
  %3175 = vmatpush1.msra.mxu0 0.0
  %3176 = vmatprep.subr.mxu0 0.0
  %3177 = vmatpush1.msra.mxu0 0.0
  %3178 = vmatprep.subr.mxu0 0.0
  %3179 = vmatpush1.msra.mxu0 0.0
  %3180 = vmatprep.subr.mxu0 0.0
  %3181 = vmatpush1.msra.mxu0 0.0
  %3182 = vmatprep.subr.mxu0 0.0
  %3183 = vmatpush1.msra.mxu0 0.0
  %3184 = vmatprep.subr.mxu0 0.0
  %3185 = vmatpush1.msra.mxu0 0.0
  %3186 = vmatprep.subr.mxu0 0.0
  %3187 = vmatpush1.msra.mxu0 0.0
  %3188 = vmatprep.subr.mxu0 0.0
  %3189 = vmatpush1.msra.mxu0 0.0
  %3190 = vmatprep.subr.mxu0 0.0
  %3191 = vmatpush1.msra.mxu0 %v3159
  %3192 = vmatprep.subr.mxu0 0.0
  %3193 = vmatpush2.msra.mxu0 0.0
  %3194 = vmatprep.subr.mxu0 0.0
  %3195 = vmatpush2.msra.mxu0 0.0
  %3196 = vmatprep.subr.mxu0 0.0
  %3197 = vmatpush2.msra.mxu0 0.0
  %3198 = vmatprep.subr.mxu0 0.0
  %3199 = vmatpush2.msra.mxu0 0.0
  %3200 = vmatprep.subr.mxu0 0.0
  %3201 = vmatpush2.msra.mxu0 0.0
  %3202 = vmatprep.subr.mxu0 0.0
  %3203 = vmatpush2.msra.mxu0 0.0
  %3204 = vmatprep.subr.mxu0 0.0
  %3205 = vmatpush2.msra.mxu0 0.0
  %3206 = vmatprep.subr.mxu0 0.0
  %3207 = vmatpush2.msra.mxu0 0.0
  %3208 = vmatprep.subr.mxu0 0.0
  %3209 = vmatpush2.msra.mxu0 0.0
  %3210 = vmatprep.subr.mxu0 0.0
  %3211 = vmatpush2.msra.mxu0 0.0
  %3212 = vmatprep.subr.mxu0 0.0
  %3213 = vmatpush2.msra.mxu0 0.0
  %3214 = vmatprep.subr.mxu0 0.0
  %3215 = vmatpush2.msra.mxu0 0.0
  %3216 = vmatprep.subr.mxu0 0.0
  %3217 = vmatpush2.msra.mxu0 0.0
  %3218 = vmatprep.subr.mxu0 0.0
  %3219 = vmatpush2.msra.mxu0 0.0
  %3220 = vmatprep.subr.mxu0 0.0
  %3221 = vmatpush2.msra.mxu0 0.0
  %3222 = vmatprep.subr.mxu0 0.0
  %3223 = vmatpush2.msra.mxu0 0.0
  %3224 = vmatprep.mubr.f32.mxu0 0.0
  %3225 = vmatmul.mubr.f32.gmra.mxu0 %v3076
  %v3226 = vpop.f32.mrf.mxu0
  %v3227 = vadd.f32 0.0, %v3226
  %v3228 = vpop.f32.mrf.mxu0
  %3229 = vmatprep.mubr.f32.mxu0 0.0
  %3230 = vmatmul.mubr.f32.gmra.mxu0 %v3079
  %v3231 = vpop.f32.mrf.mxu0
  %v3232 = vadd.f32 0.0, %v3231
  %v3233 = vpop.f32.mrf.mxu0
  %3234 = vdwg.mxu0
  %3235 = vst.msk [vmem:[#allocation2 + $0x10] sm:$0xff] %vm3156, %v3227
  %3236 = vst.msk [vmem:[#allocation2 + $0x18] sm:$0xff] %vm3156, %v3232
  %v3237 = vld [vmem:[#allocation2] sm:$0xff]
  %v3238 = vld [vmem:[#allocation2 + $0x8] sm:$0xff]
  %v3239 = vld [vmem:[#allocation2 + $0x10] sm:$0xff]
  %v3240 = vld [vmem:[#allocation2 + $0x18] sm:$0xff]
  %v3241 = vld [vmem:[%s1 + $0x120] sm:$0xff]
  %v3242 = vld [vmem:[%s1 + $0x130] sm:$0xff]
  %v3244 = vsel %vm907, %v3241, 0
  %v3247 = vsel %vm907, %v3242, 0
  %3249 = vmatprep.subr.mxu0 0.0
  %3250 = vmatpush1.msra.mxu0 0.0
  %3251 = vmatprep.subr.mxu0 0.0
  %3252 = vmatpush1.msra.mxu0 0.0
  %3253 = vmatprep.subr.mxu0 0.0
  %3254 = vmatpush1.msra.mxu0 0.0
  %3255 = vmatprep.subr.mxu0 0.0
  %3256 = vmatpush1.msra.mxu0 0.0
  %3257 = vmatprep.subr.mxu0 0.0
  %3258 = vmatpush1.msra.mxu0 0.0
  %3259 = vmatprep.subr.mxu0 0.0
  %3260 = vmatpush1.msra.mxu0 0.0
  %3261 = vmatprep.subr.mxu0 0.0
  %3262 = vmatpush1.msra.mxu0 0.0
  %3263 = vmatprep.subr.mxu0 0.0
  %3264 = vmatpush1.msra.mxu0 0.0
  %3265 = vmatprep.subr.mxu0 0.0
  %3266 = vmatpush1.msra.mxu0 0.0
  %3267 = vmatprep.subr.mxu0 0.0
  %3268 = vmatpush1.msra.mxu0 0.0
  %3269 = vmatprep.subr.mxu0 0.0
  %3270 = vmatpush1.msra.mxu0 0.0
  %3271 = vmatprep.subr.mxu0 0.0
  %3272 = vmatpush1.msra.mxu0 0.0
  %3273 = vmatprep.subr.mxu0 0.0
  %3274 = vmatpush1.msra.mxu0 %v3240
  %3275 = vmatprep.subr.mxu0 0.0
  %3276 = vmatpush1.msra.mxu0 %v3239
  %3277 = vmatprep.subr.mxu0 0.0
  %3278 = vmatpush1.msra.mxu0 %v3238
  %3279 = vmatprep.subr.mxu0 0.0
  %3280 = vmatpush1.msra.mxu0 %v3237
  %3281 = vmatprep.subr.mxu0 0.0
  %3282 = vmatpush2.msra.mxu0 0.0
  %3283 = vmatprep.subr.mxu0 0.0
  %3284 = vmatpush2.msra.mxu0 0.0
  %3285 = vmatprep.subr.mxu0 0.0
  %3286 = vmatpush2.msra.mxu0 0.0
  %3287 = vmatprep.subr.mxu0 0.0
  %3288 = vmatpush2.msra.mxu0 0.0
  %3289 = vmatprep.subr.mxu0 0.0
  %3290 = vmatpush2.msra.mxu0 0.0
  %3291 = vmatprep.subr.mxu0 0.0
  %3292 = vmatpush2.msra.mxu0 0.0
  %3293 = vmatprep.subr.mxu0 0.0
  %3294 = vmatpush2.msra.mxu0 0.0
  %3295 = vmatprep.subr.mxu0 0.0
  %3296 = vmatpush2.msra.mxu0 0.0
  %3297 = vmatprep.subr.mxu0 0.0
  %3298 = vmatpush2.msra.mxu0 0.0
  %3299 = vmatprep.subr.mxu0 0.0
  %3300 = vmatpush2.msra.mxu0 0.0
  %3301 = vmatprep.subr.mxu0 0.0
  %3302 = vmatpush2.msra.mxu0 0.0
  %3303 = vmatprep.subr.mxu0 0.0
  %3304 = vmatpush2.msra.mxu0 0.0
  %3305 = vmatprep.subr.mxu0 0.0
  %3306 = vmatpush2.msra.mxu0 0.0
  %3307 = vmatprep.subr.mxu0 0.0
  %3308 = vmatpush2.msra.mxu0 0.0
  %3309 = vmatprep.subr.mxu0 0.0
  %3310 = vmatpush2.msra.mxu0 0.0
  %3311 = vmatprep.subr.mxu0 0.0
  %3312 = vmatpush2.msra.mxu0 0.0
  %3313 = vmatprep.mubr.f32.mxu0 0.0
  %3314 = vmatmul.mubr.f32.gmra.mxu0 %v3244
  %v3315 = vpop.f32.mrf.mxu0
  %v3316 = vadd.f32 0.0, %v3315
  %v3317 = vpop.f32.mrf.mxu0
  %3318 = vmatprep.mubr.f32.mxu0 0.0
  %3319 = vmatmul.mubr.f32.gmra.mxu0 %v3247
  %v3320 = vpop.f32.mrf.mxu0
  %v3321 = vadd.f32 0.0, %v3320
  %v3322 = vpop.f32.mrf.mxu0
  %3323 = vdwg.mxu0
  %v3324 = vld [vmem:[%s3 + $0x50] sm:$0xff]
  %v3325 = vld [vmem:[%s3 + $0x58] sm:$0xff]
  %v3326 = vsel %vm3156, %v3316, 0.0
  %3327 = vadd.xlane.f32.xlu0 %v3326
  %v3328 = vpop.xlane.xlu0 %3327
  %v3329 = vsel %vm3156, %v3321, 0.0
  %3330 = vadd.xlane.f32.xlu0 %v3329
  %v3331 = vpop.xlane.xlu0 %3330
  %v3332 = vmul.f32 %v3316, %v3316
  %v3333 = vmul.f32 %v3321, %v3321
  %v3334 = vsel %vm3156, %v3332, 0.0
  %3335 = vadd.xlane.f32.xlu0 %v3334
  %v3336 = vpop.xlane.xlu0 %3335
  %v3337 = vsel %vm3156, %v3333, 0.0
  %3338 = vadd.xlane.f32.xlu0 %v3337
  %v3339 = vpop.xlane.xlu0 %3338
  %v3340 = vsel %vm1436, %v3328, %v3336
  %v3341 = vsel %vm1436, %v3331, %v3339
  %v3343 = vsel %vm1767, %v3324, 0
  %v3346 = vsel %vm1767, %v3325, 0
  %3348 = vmatprep.subr.mxu0 0.0
  %3349 = vmatpush1.msra.mxu0 0.0
  %3350 = vmatprep.subr.mxu0 0.0
  %3351 = vmatpush1.msra.mxu0 0.0
  %3352 = vmatprep.subr.mxu0 0.0
  %3353 = vmatpush1.msra.mxu0 0.0
  %3354 = vmatprep.subr.mxu0 0.0
  %3355 = vmatpush1.msra.mxu0 0.0
  %3356 = vmatprep.subr.mxu0 0.0
  %3357 = vmatpush1.msra.mxu0 0.0
  %3358 = vmatprep.subr.mxu0 0.0
  %3359 = vmatpush1.msra.mxu0 0.0
  %3360 = vmatprep.subr.mxu0 0.0
  %3361 = vmatpush1.msra.mxu0 0.0
  %3362 = vmatprep.subr.mxu0 0.0
  %3363 = vmatpush1.msra.mxu0 0.0
  %3364 = vmatprep.subr.mxu0 0.0
  %3365 = vmatpush1.msra.mxu0 0.0
  %3366 = vmatprep.subr.mxu0 0.0
  %3367 = vmatpush1.msra.mxu0 0.0
  %3368 = vmatprep.subr.mxu0 0.0
  %3369 = vmatpush1.msra.mxu0 0.0
  %3370 = vmatprep.subr.mxu0 0.0
  %3371 = vmatpush1.msra.mxu0 0.0
  %3372 = vmatprep.subr.mxu0 0.0
  %3373 = vmatpush1.msra.mxu0 0.0
  %3374 = vmatprep.subr.mxu0 0.0
  %3375 = vmatpush1.msra.mxu0 0.0
  %3376 = vmatprep.subr.mxu0 0.0
  %3377 = vmatpush1.msra.mxu0 %v3341
  %3378 = vmatprep.subr.mxu0 0.0
  %3379 = vmatpush1.msra.mxu0 %v3340
  %3380 = vmatprep.subr.mxu0 0.0
  %3381 = vmatpush2.msra.mxu0 0.0
  %3382 = vmatprep.subr.mxu0 0.0
  %3383 = vmatpush2.msra.mxu0 0.0
  %3384 = vmatprep.subr.mxu0 0.0
  %3385 = vmatpush2.msra.mxu0 0.0
  %3386 = vmatprep.subr.mxu0 0.0
  %3387 = vmatpush2.msra.mxu0 0.0
  %3388 = vmatprep.subr.mxu0 0.0
  %3389 = vmatpush2.msra.mxu0 0.0
  %3390 = vmatprep.subr.mxu0 0.0
  %3391 = vmatpush2.msra.mxu0 0.0
  %3392 = vmatprep.subr.mxu0 0.0
  %3393 = vmatpush2.msra.mxu0 0.0
  %3394 = vmatprep.subr.mxu0 0.0
  %3395 = vmatpush2.msra.mxu0 0.0
  %3396 = vmatprep.subr.mxu0 0.0
  %3397 = vmatpush2.msra.mxu0 0.0
  %3398 = vmatprep.subr.mxu0 0.0
  %3399 = vmatpush2.msra.mxu0 0.0
  %3400 = vmatprep.subr.mxu0 0.0
  %3401 = vmatpush2.msra.mxu0 0.0
  %3402 = vmatprep.subr.mxu0 0.0
  %3403 = vmatpush2.msra.mxu0 0.0
  %3404 = vmatprep.subr.mxu0 0.0
  %3405 = vmatpush2.msra.mxu0 0.0
  %3406 = vmatprep.subr.mxu0 0.0
  %3407 = vmatpush2.msra.mxu0 0.0
  %3408 = vmatprep.subr.mxu0 0.0
  %3409 = vmatpush2.msra.mxu0 0.0
  %3410 = vmatprep.subr.mxu0 0.0
  %3411 = vmatpush2.msra.mxu0 0.0
  %3412 = vmatprep.mubr.f32.mxu0 0.0
  %3413 = vmatmul.mubr.f32.gmra.mxu0 %v3343
  %v3414 = vpop.f32.mrf.mxu0
  %v3415 = vadd.f32 0.0, %v3414
  %v3416 = vpop.f32.mrf.mxu0
  %3417 = vmatprep.mubr.f32.mxu0 0.0
  %3418 = vmatmul.mubr.f32.gmra.mxu0 %v3346
  %v3419 = vpop.f32.mrf.mxu0
  %v3420 = vadd.f32 0.0, %v3419
  %v3421 = vpop.f32.mrf.mxu0
  %3422 = vdwg.mxu0
  %v3423 = vmul.f32 %v3415, %v3415
  %v3424 = vmul.f32 %v3420, %v3420
  %3427 = vrot.lane.b32.xlu0 %v3423, 1
  %v3428 = vpop.permute.xlu0 %3427
  %3429 = vrot.lane.b32.xlu0 %v3424, 1
  %v3430 = vpop.permute.xlu0 %3429
  %v3433 = vsub.f32 %v3415, %v3428
  %v3434 = vsub.f32 %v3420, %v3430
  %v3435 = vmax.f32 %v3433, 0.0
  %v3436 = vmax.f32 %v3434, 0.0
  %v3437 = vld [vmem:[%s4] sm:$0xff]
  %v3438 = vld [vmem:[%s4 + $0x8] sm:$0xff]
  %3440 = vset.pattern.permute.xlu0 0
  %3441 = vperm.xlu0 %3440, %v3415
  %v3442 = vpop.permute.xlu0 %3441
  %3445 = vset.pattern.permute.xlu0 0
  %3446 = vperm.xlu0 %3445, %v3420
  %v3447 = vpop.permute.xlu0 %3446
  %v3449 = vsub.f32 %v3316, %v3442
  %v3450 = vsub.f32 %v3321, %v3447
  %v3451 = vadd.f32 %v3435, 1e-05
  %v3452 = vadd.f32 %v3436, 1e-05
  %v3453 = vrsqrt.pop %v3451
  %v3454 = vrsqrt.pop %v3452
  %3457 = vrot.lane.b32.xlu0 %v3453, 6
  %v3458 = vpop.permute.xlu0 %3457
  %3459 = vrot.lane.b32.xlu0 %v3454, 6
  %v3460 = vpop.permute.xlu0 %3459
  %v3463 = vmul.f32 %v3437, %v3458
  %v3464 = vmul.f32 %v3438, %v3460
  %3466 = vset.pattern.permute.xlu0 7
  %3467 = vperm.xlu0 %3466, %v3463
  %v3468 = vpop.permute.xlu0 %3467
  %3471 = vset.pattern.permute.xlu0 7
  %3472 = vperm.xlu0 %3471, %v3464
  %v3473 = vpop.permute.xlu0 %3472
  %v3475 = vmul.f32 %v3449, %v3468
  %v3476 = vmul.f32 %v3450, %v3473
  %3478 = vset.pattern.permute.xlu0 8
  %3479 = vperm.xlu0 %3478, %v3437
  %v3480 = vpop.permute.xlu0 %3479
  %3483 = vset.pattern.permute.xlu0 8
  %3484 = vperm.xlu0 %3483, %v3438
  %v3485 = vpop.permute.xlu0 %3484
  %v3487 = vadd.f32 %v3475, %v3480
  %v3488 = vadd.f32 %v3476, %v3485
  %v3489 = vmax.f32 %v3487, 0.0
  %v3490 = vmax.f32 %v3488, 0.0
  %v3491 = vld [vmem:[%s2 + $0x3d0] sm:$0xf]
  %v3493 = vsel %vm3156, %v3489, 0
  %v3496 = vsel %vm3156, %v3490, 0
  %vm3498 = vcmask 1043456
  %v3500 = vsel %vm3498, %v3491, 0
  %3502 = vmatprep.subr.mxu0 0.0
  %3503 = vmatpush1.msra.mxu0 0.0
  %3504 = vmatprep.subr.mxu0 0.0
  %3505 = vmatpush1.msra.mxu0 0.0
  %3506 = vmatprep.subr.mxu0 0.0
  %3507 = vmatpush1.msra.mxu0 0.0
  %3508 = vmatprep.subr.mxu0 0.0
  %3509 = vmatpush1.msra.mxu0 0.0
  %3510 = vmatprep.subr.mxu0 0.0
  %3511 = vmatpush1.msra.mxu0 0.0
  %3512 = vmatprep.subr.mxu0 0.0
  %3513 = vmatpush1.msra.mxu0 0.0
  %3514 = vmatprep.subr.mxu0 0.0
  %3515 = vmatpush1.msra.mxu0 0.0
  %3516 = vmatprep.subr.mxu0 0.0
  %3517 = vmatpush1.msra.mxu0 0.0
  %3518 = vmatprep.subr.mxu0 0.0
  %3519 = vmatpush1.msra.mxu0 0.0
  %3520 = vmatprep.subr.mxu0 0.0
  %3521 = vmatpush1.msra.mxu0 0.0
  %3522 = vmatprep.subr.mxu0 0.0
  %3523 = vmatpush1.msra.mxu0 0.0
  %3524 = vmatprep.subr.mxu0 0.0
  %3525 = vmatpush1.msra.mxu0 0.0
  %3526 = vmatprep.subr.mxu0 0.0
  %3527 = vmatpush1.msra.mxu0 0.0
  %3528 = vmatprep.subr.mxu0 0.0
  %3529 = vmatpush1.msra.mxu0 0.0
  %3530 = vmatprep.subr.mxu0 0.0
  %3531 = vmatpush1.msra.mxu0 0.0
  %3532 = vmatprep.subr.mxu0 0.0
  %3533 = vmatpush1.msra.mxu0 %v3500
  %3534 = vmatprep.subr.mxu0 0.0
  %3535 = vmatpush2.msra.mxu0 0.0
  %3536 = vmatprep.subr.mxu0 0.0
  %3537 = vmatpush2.msra.mxu0 0.0
  %3538 = vmatprep.subr.mxu0 0.0
  %3539 = vmatpush2.msra.mxu0 0.0
  %3540 = vmatprep.subr.mxu0 0.0
  %3541 = vmatpush2.msra.mxu0 0.0
  %3542 = vmatprep.subr.mxu0 0.0
  %3543 = vmatpush2.msra.mxu0 0.0
  %3544 = vmatprep.subr.mxu0 0.0
  %3545 = vmatpush2.msra.mxu0 0.0
  %3546 = vmatprep.subr.mxu0 0.0
  %3547 = vmatpush2.msra.mxu0 0.0
  %3548 = vmatprep.subr.mxu0 0.0
  %3549 = vmatpush2.msra.mxu0 0.0
  %3550 = vmatprep.subr.mxu0 0.0
  %3551 = vmatpush2.msra.mxu0 0.0
  %3552 = vmatprep.subr.mxu0 0.0
  %3553 = vmatpush2.msra.mxu0 0.0
  %3554 = vmatprep.subr.mxu0 0.0
  %3555 = vmatpush2.msra.mxu0 0.0
  %3556 = vmatprep.subr.mxu0 0.0
  %3557 = vmatpush2.msra.mxu0 0.0
  %3558 = vmatprep.subr.mxu0 0.0
  %3559 = vmatpush2.msra.mxu0 0.0
  %3560 = vmatprep.subr.mxu0 0.0
  %3561 = vmatpush2.msra.mxu0 0.0
  %3562 = vmatprep.subr.mxu0 0.0
  %3563 = vmatpush2.msra.mxu0 0.0
  %3564 = vmatprep.subr.mxu0 0.0
  %3565 = vmatpush2.msra.mxu0 0.0
  %3566 = vmatprep.mubr.f32.mxu0 0.0
  %3567 = vmatmul.mubr.f32.gmra.mxu0 %v3493
  %v3568 = vpop.f32.mrf.mxu0
  %v3569 = vadd.f32 0.0, %v3568
  %v3570 = vpop.f32.mrf.mxu0
  %3571 = vmatprep.mubr.f32.mxu0 0.0
  %3572 = vmatmul.mubr.f32.gmra.mxu0 %v3496
  %v3573 = vpop.f32.mrf.mxu0
  %v3574 = vadd.f32 0.0, %v3573
  %v3575 = vpop.f32.mrf.mxu0
  %3576 = vdwg.mxu0
  %v3577 = vld [vmem:[%s1 + $0x140] sm:$0xff]
  %v3578 = vld [vmem:[%s1 + $0x150] sm:$0xff]
  %v3580 = vsel %vm1767, %v3577, 0
  %v3583 = vsel %vm1767, %v3578, 0
  %3585 = vmatprep.subr.mxu0 0.0
  %3586 = vmatpush1.msra.mxu0 0.0
  %3587 = vmatprep.subr.mxu0 0.0
  %3588 = vmatpush1.msra.mxu0 0.0
  %3589 = vmatprep.subr.mxu0 0.0
  %3590 = vmatpush1.msra.mxu0 0.0
  %3591 = vmatprep.subr.mxu0 0.0
  %3592 = vmatpush1.msra.mxu0 0.0
  %3593 = vmatprep.subr.mxu0 0.0
  %3594 = vmatpush1.msra.mxu0 0.0
  %3595 = vmatprep.subr.mxu0 0.0
  %3596 = vmatpush1.msra.mxu0 0.0
  %3597 = vmatprep.subr.mxu0 0.0
  %3598 = vmatpush1.msra.mxu0 0.0
  %3599 = vmatprep.subr.mxu0 0.0
  %3600 = vmatpush1.msra.mxu0 0.0
  %3601 = vmatprep.subr.mxu0 0.0
  %3602 = vmatpush1.msra.mxu0 0.0
  %3603 = vmatprep.subr.mxu0 0.0
  %3604 = vmatpush1.msra.mxu0 0.0
  %3605 = vmatprep.subr.mxu0 0.0
  %3606 = vmatpush1.msra.mxu0 0.0
  %3607 = vmatprep.subr.mxu0 0.0
  %3608 = vmatpush1.msra.mxu0 0.0
  %3609 = vmatprep.subr.mxu0 0.0
  %3610 = vmatpush1.msra.mxu0 0.0
  %3611 = vmatprep.subr.mxu0 0.0
  %3612 = vmatpush1.msra.mxu0 0.0
  %3613 = vmatprep.subr.mxu0 0.0
  %3614 = vmatpush1.msra.mxu0 %v3574
  %3615 = vmatprep.subr.mxu0 0.0
  %3616 = vmatpush1.msra.mxu0 %v3569
  %3617 = vmatprep.subr.mxu0 0.0
  %3618 = vmatpush2.msra.mxu0 0.0
  %3619 = vmatprep.subr.mxu0 0.0
  %3620 = vmatpush2.msra.mxu0 0.0
  %3621 = vmatprep.subr.mxu0 0.0
  %3622 = vmatpush2.msra.mxu0 0.0
  %3623 = vmatprep.subr.mxu0 0.0
  %3624 = vmatpush2.msra.mxu0 0.0
  %3625 = vmatprep.subr.mxu0 0.0
  %3626 = vmatpush2.msra.mxu0 0.0
  %3627 = vmatprep.subr.mxu0 0.0
  %3628 = vmatpush2.msra.mxu0 0.0
  %3629 = vmatprep.subr.mxu0 0.0
  %3630 = vmatpush2.msra.mxu0 0.0
  %3631 = vmatprep.subr.mxu0 0.0
  %3632 = vmatpush2.msra.mxu0 0.0
  %3633 = vmatprep.subr.mxu0 0.0
  %3634 = vmatpush2.msra.mxu0 0.0
  %3635 = vmatprep.subr.mxu0 0.0
  %3636 = vmatpush2.msra.mxu0 0.0
  %3637 = vmatprep.subr.mxu0 0.0
  %3638 = vmatpush2.msra.mxu0 0.0
  %3639 = vmatprep.subr.mxu0 0.0
  %3640 = vmatpush2.msra.mxu0 0.0
  %3641 = vmatprep.subr.mxu0 0.0
  %3642 = vmatpush2.msra.mxu0 0.0
  %3643 = vmatprep.subr.mxu0 0.0
  %3644 = vmatpush2.msra.mxu0 0.0
  %3645 = vmatprep.subr.mxu0 0.0
  %3646 = vmatpush2.msra.mxu0 0.0
  %3647 = vmatprep.subr.mxu0 0.0
  %3648 = vmatpush2.msra.mxu0 0.0
  %3649 = vmatprep.mubr.f32.mxu0 0.0
  %3650 = vmatmul.mubr.f32.gmra.mxu0 %v3580
  %v3651 = vpop.f32.mrf.mxu0
  %v3652 = vadd.f32 0.0, %v3651
  %v3653 = vpop.f32.mrf.mxu0
  %3654 = vmatprep.mubr.f32.mxu0 0.0
  %3655 = vmatmul.mubr.f32.gmra.mxu0 %v3583
  %v3656 = vpop.f32.mrf.mxu0
  %v3657 = vadd.f32 0.0, %v3656
  %v3658 = vpop.f32.mrf.mxu0
  %3659 = vdwg.mxu0
  %v3660 = vld [vmem:[%s3 + $0x60] sm:$0xff]
  %v3661 = vld [vmem:[%s3 + $0x68] sm:$0xff]
  %v3662 = vsel %vm2532, %v3652, 0.0
  %3663 = vadd.xlane.f32.xlu0 %v3662
  %v3664 = vpop.xlane.xlu0 %3663
  %v3665 = vsel %vm2532, %v3657, 0.0
  %3666 = vadd.xlane.f32.xlu0 %v3665
  %v3667 = vpop.xlane.xlu0 %3666
  %v3668 = vmul.f32 %v3652, %v3652
  %v3669 = vmul.f32 %v3657, %v3657
  %v3670 = vsel %vm2532, %v3668, 0.0
  %3671 = vadd.xlane.f32.xlu0 %v3670
  %v3672 = vpop.xlane.xlu0 %3671
  %v3673 = vsel %vm2532, %v3669, 0.0
  %3674 = vadd.xlane.f32.xlu0 %v3673
  %v3675 = vpop.xlane.xlu0 %3674
  %v3676 = vsel %vm1436, %v3664, %v3672
  %v3677 = vsel %vm1436, %v3667, %v3675
  %v3679 = vsel %vm1767, %v3660, 0
  %v3682 = vsel %vm1767, %v3661, 0
  %3684 = vmatprep.subr.mxu0 0.0
  %3685 = vmatpush1.msra.mxu0 0.0
  %3686 = vmatprep.subr.mxu0 0.0
  %3687 = vmatpush1.msra.mxu0 0.0
  %3688 = vmatprep.subr.mxu0 0.0
  %3689 = vmatpush1.msra.mxu0 0.0
  %3690 = vmatprep.subr.mxu0 0.0
  %3691 = vmatpush1.msra.mxu0 0.0
  %3692 = vmatprep.subr.mxu0 0.0
  %3693 = vmatpush1.msra.mxu0 0.0
  %3694 = vmatprep.subr.mxu0 0.0
  %3695 = vmatpush1.msra.mxu0 0.0
  %3696 = vmatprep.subr.mxu0 0.0
  %3697 = vmatpush1.msra.mxu0 0.0
  %3698 = vmatprep.subr.mxu0 0.0
  %3699 = vmatpush1.msra.mxu0 0.0
  %3700 = vmatprep.subr.mxu0 0.0
  %3701 = vmatpush1.msra.mxu0 0.0
  %3702 = vmatprep.subr.mxu0 0.0
  %3703 = vmatpush1.msra.mxu0 0.0
  %3704 = vmatprep.subr.mxu0 0.0
  %3705 = vmatpush1.msra.mxu0 0.0
  %3706 = vmatprep.subr.mxu0 0.0
  %3707 = vmatpush1.msra.mxu0 0.0
  %3708 = vmatprep.subr.mxu0 0.0
  %3709 = vmatpush1.msra.mxu0 0.0
  %3710 = vmatprep.subr.mxu0 0.0
  %3711 = vmatpush1.msra.mxu0 0.0
  %3712 = vmatprep.subr.mxu0 0.0
  %3713 = vmatpush1.msra.mxu0 %v3677
  %3714 = vmatprep.subr.mxu0 0.0
  %3715 = vmatpush1.msra.mxu0 %v3676
  %3716 = vmatprep.subr.mxu0 0.0
  %3717 = vmatpush2.msra.mxu0 0.0
  %3718 = vmatprep.subr.mxu0 0.0
  %3719 = vmatpush2.msra.mxu0 0.0
  %3720 = vmatprep.subr.mxu0 0.0
  %3721 = vmatpush2.msra.mxu0 0.0
  %3722 = vmatprep.subr.mxu0 0.0
  %3723 = vmatpush2.msra.mxu0 0.0
  %3724 = vmatprep.subr.mxu0 0.0
  %3725 = vmatpush2.msra.mxu0 0.0
  %3726 = vmatprep.subr.mxu0 0.0
  %3727 = vmatpush2.msra.mxu0 0.0
  %3728 = vmatprep.subr.mxu0 0.0
  %3729 = vmatpush2.msra.mxu0 0.0
  %3730 = vmatprep.subr.mxu0 0.0
  %3731 = vmatpush2.msra.mxu0 0.0
  %3732 = vmatprep.subr.mxu0 0.0
  %3733 = vmatpush2.msra.mxu0 0.0
  %3734 = vmatprep.subr.mxu0 0.0
  %3735 = vmatpush2.msra.mxu0 0.0
  %3736 = vmatprep.subr.mxu0 0.0
  %3737 = vmatpush2.msra.mxu0 0.0
  %3738 = vmatprep.subr.mxu0 0.0
  %3739 = vmatpush2.msra.mxu0 0.0
  %3740 = vmatprep.subr.mxu0 0.0
  %3741 = vmatpush2.msra.mxu0 0.0
  %3742 = vmatprep.subr.mxu0 0.0
  %3743 = vmatpush2.msra.mxu0 0.0
  %3744 = vmatprep.subr.mxu0 0.0
  %3745 = vmatpush2.msra.mxu0 0.0
  %3746 = vmatprep.subr.mxu0 0.0
  %3747 = vmatpush2.msra.mxu0 0.0
  %3748 = vmatprep.mubr.f32.mxu0 0.0
  %3749 = vmatmul.mubr.f32.gmra.mxu0 %v3679
  %v3750 = vpop.f32.mrf.mxu0
  %v3751 = vadd.f32 0.0, %v3750
  %v3752 = vpop.f32.mrf.mxu0
  %3753 = vmatprep.mubr.f32.mxu0 0.0
  %3754 = vmatmul.mubr.f32.gmra.mxu0 %v3682
  %v3755 = vpop.f32.mrf.mxu0
  %v3756 = vadd.f32 0.0, %v3755
  %v3757 = vpop.f32.mrf.mxu0
  %3758 = vdwg.mxu0
  %v3759 = vmul.f32 %v3751, %v3751
  %v3760 = vmul.f32 %v3756, %v3756
  %3763 = vrot.lane.b32.xlu0 %v3759, 1
  %v3764 = vpop.permute.xlu0 %3763
  %3765 = vrot.lane.b32.xlu0 %v3760, 1
  %v3766 = vpop.permute.xlu0 %3765
  %v3769 = vsub.f32 %v3751, %v3764
  %v3770 = vsub.f32 %v3756, %v3766
  %v3771 = vmax.f32 %v3769, 0.0
  %v3772 = vmax.f32 %v3770, 0.0
  %3774 = vset.pattern.permute.xlu0 0
  %3775 = vperm.xlu0 %3774, %v3751
  %v3776 = vpop.permute.xlu0 %3775
  %3779 = vset.pattern.permute.xlu0 0
  %3780 = vperm.xlu0 %3779, %v3756
  %v3781 = vpop.permute.xlu0 %3780
  %v3783 = vsub.f32 %v3652, %v3776
  %v3784 = vsub.f32 %v3657, %v3781
  %v3785 = vadd.f32 %v3771, 1e-05
  %v3786 = vadd.f32 %v3772, 1e-05
  %v3787 = vrsqrt.pop %v3785
  %v3788 = vrsqrt.pop %v3786
  %3791 = vrot.lane.b32.xlu0 %v3787, 8
  %v3792 = vpop.permute.xlu0 %3791
  %3793 = vrot.lane.b32.xlu0 %v3788, 8
  %v3794 = vpop.permute.xlu0 %3793
  %v3797 = vmul.f32 %v3437, %v3792
  %v3798 = vmul.f32 %v3438, %v3794
  %3800 = vset.pattern.permute.xlu0 9
  %3801 = vperm.xlu0 %3800, %v3797
  %v3802 = vpop.permute.xlu0 %3801
  %3805 = vset.pattern.permute.xlu0 9
  %3806 = vperm.xlu0 %3805, %v3798
  %v3807 = vpop.permute.xlu0 %3806
  %v3809 = vmul.f32 %v3783, %v3802
  %v3810 = vmul.f32 %v3784, %v3807
  %3811 = vset.pattern.permute.xlu0 10
  %3812 = vperm.xlu0 %3811, %v3437
  %v3813 = vpop.permute.xlu0 %3812
  %3815 = vset.pattern.permute.xlu0 10
  %3816 = vperm.xlu0 %3815, %v3438
  %v3817 = vpop.permute.xlu0 %3816
  %v3819 = vadd.f32 %v3809, %v3813
  %v3820 = vadd.f32 %v3810, %v3817
  %v3821 = vmax.f32 %v3819, 0.0
  %v3822 = vmax.f32 %v3820, 0.0
  %v3823 = vld [vmem:[%s2 + $0x3d8] sm:$0xff]
  %v3825 = vsel %vm2532, %v3821, 0
  %v3828 = vsel %vm2532, %v3822, 0
  %3830 = vmatprep.subr.mxu0 0.0
  %3831 = vmatpush1.msra.mxu0 0.0
  %3832 = vmatprep.subr.mxu0 0.0
  %3833 = vmatpush1.msra.mxu0 0.0
  %3834 = vmatprep.subr.mxu0 0.0
  %3835 = vmatpush1.msra.mxu0 0.0
  %3836 = vmatprep.subr.mxu0 0.0
  %3837 = vmatpush1.msra.mxu0 0.0
  %3838 = vmatprep.subr.mxu0 0.0
  %3839 = vmatpush1.msra.mxu0 0.0
  %3840 = vmatprep.subr.mxu0 0.0
  %3841 = vmatpush1.msra.mxu0 0.0
  %3842 = vmatprep.subr.mxu0 0.0
  %3843 = vmatpush1.msra.mxu0 0.0
  %3844 = vmatprep.subr.mxu0 0.0
  %3845 = vmatpush1.msra.mxu0 0.0
  %3846 = vmatprep.subr.mxu0 0.0
  %3847 = vmatpush1.msra.mxu0 0.0
  %3848 = vmatprep.subr.mxu0 0.0
  %3849 = vmatpush1.msra.mxu0 0.0
  %3850 = vmatprep.subr.mxu0 0.0
  %3851 = vmatpush1.msra.mxu0 0.0
  %3852 = vmatprep.subr.mxu0 0.0
  %3853 = vmatpush1.msra.mxu0 0.0
  %3854 = vmatprep.subr.mxu0 0.0
  %3855 = vmatpush1.msra.mxu0 0.0
  %3856 = vmatprep.subr.mxu0 0.0
  %3857 = vmatpush1.msra.mxu0 0.0
  %3858 = vmatprep.subr.mxu0 0.0
  %3859 = vmatpush1.msra.mxu0 0.0
  %3860 = vmatprep.subr.mxu0 0.0
  %3861 = vmatpush1.msra.mxu0 %v3823
  %3862 = vmatprep.subr.mxu0 0.0
  %3863 = vmatpush2.msra.mxu0 0.0
  %3864 = vmatprep.subr.mxu0 0.0
  %3865 = vmatpush2.msra.mxu0 0.0
  %3866 = vmatprep.subr.mxu0 0.0
  %3867 = vmatpush2.msra.mxu0 0.0
  %3868 = vmatprep.subr.mxu0 0.0
  %3869 = vmatpush2.msra.mxu0 0.0
  %3870 = vmatprep.subr.mxu0 0.0
  %3871 = vmatpush2.msra.mxu0 0.0
  %3872 = vmatprep.subr.mxu0 0.0
  %3873 = vmatpush2.msra.mxu0 0.0
  %3874 = vmatprep.subr.mxu0 0.0
  %3875 = vmatpush2.msra.mxu0 0.0
  %3876 = vmatprep.subr.mxu0 0.0
  %3877 = vmatpush2.msra.mxu0 0.0
  %3878 = vmatprep.subr.mxu0 0.0
  %3879 = vmatpush2.msra.mxu0 0.0
  %3880 = vmatprep.subr.mxu0 0.0
  %3881 = vmatpush2.msra.mxu0 0.0
  %3882 = vmatprep.subr.mxu0 0.0
  %3883 = vmatpush2.msra.mxu0 0.0
  %3884 = vmatprep.subr.mxu0 0.0
  %3885 = vmatpush2.msra.mxu0 0.0
  %3886 = vmatprep.subr.mxu0 0.0
  %3887 = vmatpush2.msra.mxu0 0.0
  %3888 = vmatprep.subr.mxu0 0.0
  %3889 = vmatpush2.msra.mxu0 0.0
  %3890 = vmatprep.subr.mxu0 0.0
  %3891 = vmatpush2.msra.mxu0 0.0
  %3892 = vmatprep.subr.mxu0 0.0
  %3893 = vmatpush2.msra.mxu0 0.0
  %3894 = vmatprep.mubr.f32.mxu0 0.0
  %3895 = vmatmul.mubr.f32.gmra.mxu0 %v3825
  %v3896 = vpop.f32.mrf.mxu0
  %v3897 = vadd.f32 0.0, %v3896
  %v3898 = vpop.f32.mrf.mxu0
  %3899 = vmatprep.mubr.f32.mxu0 0.0
  %3900 = vmatmul.mubr.f32.gmra.mxu0 %v3828
  %v3901 = vpop.f32.mrf.mxu0
  %v3902 = vadd.f32 0.0, %v3901
  %v3903 = vpop.f32.mrf.mxu0
  %3904 = vdwg.mxu0
  %3905 = vst.msk [vmem:[#allocation2] sm:$0xff] %vm1767, %v3897
  %3906 = vst.msk [vmem:[#allocation2 + $0x8] sm:$0xff] %vm1767, %v3902
  %v3907 = vld [vmem:[%s2 + $0x3e0] sm:$0xff]
  %3908 = vmatprep.subr.mxu0 0.0
  %3909 = vmatpush1.msra.mxu0 0.0
  %3910 = vmatprep.subr.mxu0 0.0
  %3911 = vmatpush1.msra.mxu0 0.0
  %3912 = vmatprep.subr.mxu0 0.0
  %3913 = vmatpush1.msra.mxu0 0.0
  %3914 = vmatprep.subr.mxu0 0.0
  %3915 = vmatpush1.msra.mxu0 0.0
  %3916 = vmatprep.subr.mxu0 0.0
  %3917 = vmatpush1.msra.mxu0 0.0
  %3918 = vmatprep.subr.mxu0 0.0
  %3919 = vmatpush1.msra.mxu0 0.0
  %3920 = vmatprep.subr.mxu0 0.0
  %3921 = vmatpush1.msra.mxu0 0.0
  %3922 = vmatprep.subr.mxu0 0.0
  %3923 = vmatpush1.msra.mxu0 0.0
  %3924 = vmatprep.subr.mxu0 0.0
  %3925 = vmatpush1.msra.mxu0 0.0
  %3926 = vmatprep.subr.mxu0 0.0
  %3927 = vmatpush1.msra.mxu0 0.0
  %3928 = vmatprep.subr.mxu0 0.0
  %3929 = vmatpush1.msra.mxu0 0.0
  %3930 = vmatprep.subr.mxu0 0.0
  %3931 = vmatpush1.msra.mxu0 0.0
  %3932 = vmatprep.subr.mxu0 0.0
  %3933 = vmatpush1.msra.mxu0 0.0
  %3934 = vmatprep.subr.mxu0 0.0
  %3935 = vmatpush1.msra.mxu0 0.0
  %3936 = vmatprep.subr.mxu0 0.0
  %3937 = vmatpush1.msra.mxu0 0.0
  %3938 = vmatprep.subr.mxu0 0.0
  %3939 = vmatpush1.msra.mxu0 %v3907
  %3940 = vmatprep.subr.mxu0 0.0
  %3941 = vmatpush2.msra.mxu0 0.0
  %3942 = vmatprep.subr.mxu0 0.0
  %3943 = vmatpush2.msra.mxu0 0.0
  %3944 = vmatprep.subr.mxu0 0.0
  %3945 = vmatpush2.msra.mxu0 0.0
  %3946 = vmatprep.subr.mxu0 0.0
  %3947 = vmatpush2.msra.mxu0 0.0
  %3948 = vmatprep.subr.mxu0 0.0
  %3949 = vmatpush2.msra.mxu0 0.0
  %3950 = vmatprep.subr.mxu0 0.0
  %3951 = vmatpush2.msra.mxu0 0.0
  %3952 = vmatprep.subr.mxu0 0.0
  %3953 = vmatpush2.msra.mxu0 0.0
  %3954 = vmatprep.subr.mxu0 0.0
  %3955 = vmatpush2.msra.mxu0 0.0
  %3956 = vmatprep.subr.mxu0 0.0
  %3957 = vmatpush2.msra.mxu0 0.0
  %3958 = vmatprep.subr.mxu0 0.0
  %3959 = vmatpush2.msra.mxu0 0.0
  %3960 = vmatprep.subr.mxu0 0.0
  %3961 = vmatpush2.msra.mxu0 0.0
  %3962 = vmatprep.subr.mxu0 0.0
  %3963 = vmatpush2.msra.mxu0 0.0
  %3964 = vmatprep.subr.mxu0 0.0
  %3965 = vmatpush2.msra.mxu0 0.0
  %3966 = vmatprep.subr.mxu0 0.0
  %3967 = vmatpush2.msra.mxu0 0.0
  %3968 = vmatprep.subr.mxu0 0.0
  %3969 = vmatpush2.msra.mxu0 0.0
  %3970 = vmatprep.subr.mxu0 0.0
  %3971 = vmatpush2.msra.mxu0 0.0
  %3972 = vmatprep.mubr.f32.mxu0 0.0
  %3973 = vmatmul.mubr.f32.gmra.mxu0 %v3825
  %v3974 = vpop.f32.mrf.mxu0
  %v3975 = vadd.f32 0.0, %v3974
  %v3976 = vpop.f32.mrf.mxu0
  %3977 = vmatprep.mubr.f32.mxu0 0.0
  %3978 = vmatmul.mubr.f32.gmra.mxu0 %v3828
  %v3979 = vpop.f32.mrf.mxu0
  %v3980 = vadd.f32 0.0, %v3979
  %v3981 = vpop.f32.mrf.mxu0
  %3982 = vdwg.mxu0
  %3983 = vst.msk [vmem:[#allocation2 + $0x10] sm:$0xff] %vm1767, %v3975
  %3984 = vst.msk [vmem:[#allocation2 + $0x18] sm:$0xff] %vm1767, %v3980
  %v3985 = vld [vmem:[%s2 + $0x3e8] sm:$0xff]
  %3986 = vmatprep.subr.mxu0 0.0
  %3987 = vmatpush1.msra.mxu0 0.0
  %3988 = vmatprep.subr.mxu0 0.0
  %3989 = vmatpush1.msra.mxu0 0.0
  %3990 = vmatprep.subr.mxu0 0.0
  %3991 = vmatpush1.msra.mxu0 0.0
  %3992 = vmatprep.subr.mxu0 0.0
  %3993 = vmatpush1.msra.mxu0 0.0
  %3994 = vmatprep.subr.mxu0 0.0
  %3995 = vmatpush1.msra.mxu0 0.0
  %3996 = vmatprep.subr.mxu0 0.0
  %3997 = vmatpush1.msra.mxu0 0.0
  %3998 = vmatprep.subr.mxu0 0.0
  %3999 = vmatpush1.msra.mxu0 0.0
  %4000 = vmatprep.subr.mxu0 0.0
  %4001 = vmatpush1.msra.mxu0 0.0
  %4002 = vmatprep.subr.mxu0 0.0
  %4003 = vmatpush1.msra.mxu0 0.0
  %4004 = vmatprep.subr.mxu0 0.0
  %4005 = vmatpush1.msra.mxu0 0.0
  %4006 = vmatprep.subr.mxu0 0.0
  %4007 = vmatpush1.msra.mxu0 0.0
  %4008 = vmatprep.subr.mxu0 0.0
  %4009 = vmatpush1.msra.mxu0 0.0
  %4010 = vmatprep.subr.mxu0 0.0
  %4011 = vmatpush1.msra.mxu0 0.0
  %4012 = vmatprep.subr.mxu0 0.0
  %4013 = vmatpush1.msra.mxu0 0.0
  %4014 = vmatprep.subr.mxu0 0.0
  %4015 = vmatpush1.msra.mxu0 0.0
  %4016 = vmatprep.subr.mxu0 0.0
  %4017 = vmatpush1.msra.mxu0 %v3985
  %4018 = vmatprep.subr.mxu0 0.0
  %4019 = vmatpush2.msra.mxu0 0.0
  %4020 = vmatprep.subr.mxu0 0.0
  %4021 = vmatpush2.msra.mxu0 0.0
  %4022 = vmatprep.subr.mxu0 0.0
  %4023 = vmatpush2.msra.mxu0 0.0
  %4024 = vmatprep.subr.mxu0 0.0
  %4025 = vmatpush2.msra.mxu0 0.0
  %4026 = vmatprep.subr.mxu0 0.0
  %4027 = vmatpush2.msra.mxu0 0.0
  %4028 = vmatprep.subr.mxu0 0.0
  %4029 = vmatpush2.msra.mxu0 0.0
  %4030 = vmatprep.subr.mxu0 0.0
  %4031 = vmatpush2.msra.mxu0 0.0
  %4032 = vmatprep.subr.mxu0 0.0
  %4033 = vmatpush2.msra.mxu0 0.0
  %4034 = vmatprep.subr.mxu0 0.0
  %4035 = vmatpush2.msra.mxu0 0.0
  %4036 = vmatprep.subr.mxu0 0.0
  %4037 = vmatpush2.msra.mxu0 0.0
  %4038 = vmatprep.subr.mxu0 0.0
  %4039 = vmatpush2.msra.mxu0 0.0
  %4040 = vmatprep.subr.mxu0 0.0
  %4041 = vmatpush2.msra.mxu0 0.0
  %4042 = vmatprep.subr.mxu0 0.0
  %4043 = vmatpush2.msra.mxu0 0.0
  %4044 = vmatprep.subr.mxu0 0.0
  %4045 = vmatpush2.msra.mxu0 0.0
  %4046 = vmatprep.subr.mxu0 0.0
  %4047 = vmatpush2.msra.mxu0 0.0
  %4048 = vmatprep.subr.mxu0 0.0
  %4049 = vmatpush2.msra.mxu0 0.0
  %4050 = vmatprep.mubr.f32.mxu0 0.0
  %4051 = vmatmul.mubr.f32.gmra.mxu0 %v3825
  %v4052 = vpop.f32.mrf.mxu0
  %v4053 = vadd.f32 0.0, %v4052
  %v4054 = vpop.f32.mrf.mxu0
  %4055 = vmatprep.mubr.f32.mxu0 0.0
  %4056 = vmatmul.mubr.f32.gmra.mxu0 %v3828
  %v4057 = vpop.f32.mrf.mxu0
  %v4058 = vadd.f32 0.0, %v4057
  %v4059 = vpop.f32.mrf.mxu0
  %4060 = vdwg.mxu0
  %4061 = vst.msk [vmem:[#allocation2 + $0x20] sm:$0xff] %vm1767, %v4053
  %4062 = vst.msk [vmem:[#allocation2 + $0x28] sm:$0xff] %vm1767, %v4058
  %v4063 = vld [vmem:[#allocation2] sm:$0xff]
  %v4064 = vld [vmem:[#allocation2 + $0x8] sm:$0xff]
  %v4065 = vld [vmem:[#allocation2 + $0x10] sm:$0xff]
  %v4066 = vld [vmem:[#allocation2 + $0x18] sm:$0xff]
  %v4067 = vld [vmem:[#allocation2 + $0x20] sm:$0xff]
  %v4068 = vld [vmem:[#allocation2 + $0x28] sm:$0xff]
  %v4069 = vld [vmem:[%s1 + $0x160] sm:$0xff]
  %v4070 = vld [vmem:[%s1 + $0x170] sm:$0xff]
  %v4071 = vld [vmem:[%s1 + $0x180] sm:$0xff]
  %v4072 = vld [vmem:[%s1 + $0x190] sm:$0xff]
  %vm4073 = vcmask 392192
  %v4075 = vsel %vm4073, %v4069, 0
  %v4078 = vsel %vm4073, %v4070, 0
  %v4081 = vsel %vm4073, %v4071, 0
  %v4084 = vsel %vm4073, %v4072, 0
  %4086 = vmatprep.subr.mxu0 0.0
  %4087 = vmatpush1.msra.mxu0 0.0
  %4088 = vmatprep.subr.mxu0 0.0
  %4089 = vmatpush1.msra.mxu0 0.0
  %4090 = vmatprep.subr.mxu0 0.0
  %4091 = vmatpush1.msra.mxu0 0.0
  %4092 = vmatprep.subr.mxu0 0.0
  %4093 = vmatpush1.msra.mxu0 0.0
  %4094 = vmatprep.subr.mxu0 0.0
  %4095 = vmatpush1.msra.mxu0 0.0
  %4096 = vmatprep.subr.mxu0 0.0
  %4097 = vmatpush1.msra.mxu0 0.0
  %4098 = vmatprep.subr.mxu0 0.0
  %4099 = vmatpush1.msra.mxu0 0.0
  %4100 = vmatprep.subr.mxu0 0.0
  %4101 = vmatpush1.msra.mxu0 0.0
  %4102 = vmatprep.subr.mxu0 0.0
  %4103 = vmatpush1.msra.mxu0 0.0
  %4104 = vmatprep.subr.mxu0 0.0
  %4105 = vmatpush1.msra.mxu0 0.0
  %4106 = vmatprep.subr.mxu0 0.0
  %4107 = vmatpush1.msra.mxu0 %v4068
  %4108 = vmatprep.subr.mxu0 0.0
  %4109 = vmatpush1.msra.mxu0 %v4067
  %4110 = vmatprep.subr.mxu0 0.0
  %4111 = vmatpush1.msra.mxu0 %v4066
  %4112 = vmatprep.subr.mxu0 0.0
  %4113 = vmatpush1.msra.mxu0 %v4065
  %4114 = vmatprep.subr.mxu0 0.0
  %4115 = vmatpush1.msra.mxu0 %v4064
  %4116 = vmatprep.subr.mxu0 0.0
  %4117 = vmatpush1.msra.mxu0 %v4063
  %4118 = vmatprep.subr.mxu0 0.0
  %4119 = vmatpush2.msra.mxu0 0.0
  %4120 = vmatprep.subr.mxu0 0.0
  %4121 = vmatpush2.msra.mxu0 0.0
  %4122 = vmatprep.subr.mxu0 0.0
  %4123 = vmatpush2.msra.mxu0 0.0
  %4124 = vmatprep.subr.mxu0 0.0
  %4125 = vmatpush2.msra.mxu0 0.0
  %4126 = vmatprep.subr.mxu0 0.0
  %4127 = vmatpush2.msra.mxu0 0.0
  %4128 = vmatprep.subr.mxu0 0.0
  %4129 = vmatpush2.msra.mxu0 0.0
  %4130 = vmatprep.subr.mxu0 0.0
  %4131 = vmatpush2.msra.mxu0 0.0
  %4132 = vmatprep.subr.mxu0 0.0
  %4133 = vmatpush2.msra.mxu0 0.0
  %4134 = vmatprep.subr.mxu0 0.0
  %4135 = vmatpush2.msra.mxu0 0.0
  %4136 = vmatprep.subr.mxu0 0.0
  %4137 = vmatpush2.msra.mxu0 0.0
  %4138 = vmatprep.subr.mxu0 0.0
  %4139 = vmatpush2.msra.mxu0 0.0
  %4140 = vmatprep.subr.mxu0 0.0
  %4141 = vmatpush2.msra.mxu0 0.0
  %4142 = vmatprep.subr.mxu0 0.0
  %4143 = vmatpush2.msra.mxu0 0.0
  %4144 = vmatprep.subr.mxu0 0.0
  %4145 = vmatpush2.msra.mxu0 0.0
  %4146 = vmatprep.subr.mxu0 0.0
  %4147 = vmatpush2.msra.mxu0 0.0
  %4148 = vmatprep.subr.mxu0 0.0
  %4149 = vmatpush2.msra.mxu0 0.0
  %4150 = vmatprep.mubr.f32.mxu0 0.0
  %4151 = vmatmul.mubr.f32.gmra.mxu0 %v4075
  %v4152 = vpop.f32.mrf.mxu0
  %v4153 = vadd.f32 0.0, %v4152
  %v4154 = vpop.f32.mrf.mxu0
  %4155 = vmatprep.mubr.f32.mxu0 0.0
  %4156 = vmatmul.mubr.f32.gmra.mxu0 %v4078
  %v4157 = vpop.f32.mrf.mxu0
  %v4158 = vadd.f32 0.0, %v4157
  %v4159 = vpop.f32.mrf.mxu0
  %4160 = vmatprep.mubr.f32.mxu0 0.0
  %4161 = vmatmul.mubr.f32.gmra.mxu0 %v4081
  %v4162 = vpop.f32.mrf.mxu0
  %v4163 = vadd.f32 0.0, %v4162
  %v4164 = vpop.f32.mrf.mxu0
  %4165 = vmatprep.mubr.f32.mxu0 0.0
  %4166 = vmatmul.mubr.f32.gmra.mxu0 %v4084
  %v4167 = vpop.f32.mrf.mxu0
  %v4168 = vadd.f32 0.0, %v4167
  %v4169 = vpop.f32.mrf.mxu0
  %4170 = vdwg.mxu0
  %v4171 = vld [vmem:[%s3 + $0x70] sm:$0xff]
  %v4172 = vld [vmem:[%s3 + $0x78] sm:$0xff]
  %v4173 = vld [vmem:[%s3 + $0x80] sm:$0xff]
  %v4174 = vld [vmem:[%s3 + $0x88] sm:$0xff]
  %v4175 = vsel %vm1767, %v4153, 0.0
  %4176 = vadd.xlane.f32.xlu0 %v4175
  %v4177 = vpop.xlane.xlu0 %4176
  %v4178 = vsel %vm1767, %v4158, 0.0
  %4179 = vadd.xlane.f32.xlu0 %v4178
  %v4180 = vpop.xlane.xlu0 %4179
  %v4181 = vsel %vm1767, %v4163, 0.0
  %4182 = vadd.xlane.f32.xlu0 %v4181
  %v4183 = vpop.xlane.xlu0 %4182
  %v4184 = vsel %vm1767, %v4168, 0.0
  %4185 = vadd.xlane.f32.xlu0 %v4184
  %v4186 = vpop.xlane.xlu0 %4185
  %v4187 = vmul.f32 %v4153, %v4153
  %v4188 = vmul.f32 %v4158, %v4158
  %v4189 = vmul.f32 %v4163, %v4163
  %v4190 = vmul.f32 %v4168, %v4168
  %v4191 = vsel %vm1767, %v4187, 0.0
  %4192 = vadd.xlane.f32.xlu0 %v4191
  %v4193 = vpop.xlane.xlu0 %4192
  %v4194 = vsel %vm1767, %v4188, 0.0
  %4195 = vadd.xlane.f32.xlu0 %v4194
  %v4196 = vpop.xlane.xlu0 %4195
  %v4197 = vsel %vm1767, %v4189, 0.0
  %4198 = vadd.xlane.f32.xlu0 %v4197
  %v4199 = vpop.xlane.xlu0 %4198
  %v4200 = vsel %vm1767, %v4190, 0.0
  %4201 = vadd.xlane.f32.xlu0 %v4200
  %v4202 = vpop.xlane.xlu0 %4201
  %v4203 = vsel %vm1436, %v4177, %v4193
  %v4204 = vsel %vm1436, %v4180, %v4196
  %v4205 = vsel %vm1436, %v4183, %v4199
  %v4206 = vsel %vm1436, %v4186, %v4202
  %v4208 = vsel %vm907, %v4171, 0
  %v4211 = vsel %vm907, %v4172, 0
  %v4214 = vsel %vm907, %v4173, 0
  %v4217 = vsel %vm907, %v4174, 0
  %4219 = vmatprep.subr.mxu0 0.0
  %4220 = vmatpush1.msra.mxu0 0.0
  %4221 = vmatprep.subr.mxu0 0.0
  %4222 = vmatpush1.msra.mxu0 0.0
  %4223 = vmatprep.subr.mxu0 0.0
  %4224 = vmatpush1.msra.mxu0 0.0
  %4225 = vmatprep.subr.mxu0 0.0
  %4226 = vmatpush1.msra.mxu0 0.0
  %4227 = vmatprep.subr.mxu0 0.0
  %4228 = vmatpush1.msra.mxu0 0.0
  %4229 = vmatprep.subr.mxu0 0.0
  %4230 = vmatpush1.msra.mxu0 0.0
  %4231 = vmatprep.subr.mxu0 0.0
  %4232 = vmatpush1.msra.mxu0 0.0
  %4233 = vmatprep.subr.mxu0 0.0
  %4234 = vmatpush1.msra.mxu0 0.0
  %4235 = vmatprep.subr.mxu0 0.0
  %4236 = vmatpush1.msra.mxu0 0.0
  %4237 = vmatprep.subr.mxu0 0.0
  %4238 = vmatpush1.msra.mxu0 0.0
  %4239 = vmatprep.subr.mxu0 0.0
  %4240 = vmatpush1.msra.mxu0 0.0
  %4241 = vmatprep.subr.mxu0 0.0
  %4242 = vmatpush1.msra.mxu0 0.0
  %4243 = vmatprep.subr.mxu0 0.0
  %4244 = vmatpush1.msra.mxu0 %v4206
  %4245 = vmatprep.subr.mxu0 0.0
  %4246 = vmatpush1.msra.mxu0 %v4205
  %4247 = vmatprep.subr.mxu0 0.0
  %4248 = vmatpush1.msra.mxu0 %v4204
  %4249 = vmatprep.subr.mxu0 0.0
  %4250 = vmatpush1.msra.mxu0 %v4203
  %4251 = vmatprep.subr.mxu0 0.0
  %4252 = vmatpush2.msra.mxu0 0.0
  %4253 = vmatprep.subr.mxu0 0.0
  %4254 = vmatpush2.msra.mxu0 0.0
  %4255 = vmatprep.subr.mxu0 0.0
  %4256 = vmatpush2.msra.mxu0 0.0
  %4257 = vmatprep.subr.mxu0 0.0
  %4258 = vmatpush2.msra.mxu0 0.0
  %4259 = vmatprep.subr.mxu0 0.0
  %4260 = vmatpush2.msra.mxu0 0.0
  %4261 = vmatprep.subr.mxu0 0.0
  %4262 = vmatpush2.msra.mxu0 0.0
  %4263 = vmatprep.subr.mxu0 0.0
  %4264 = vmatpush2.msra.mxu0 0.0
  %4265 = vmatprep.subr.mxu0 0.0
  %4266 = vmatpush2.msra.mxu0 0.0
  %4267 = vmatprep.subr.mxu0 0.0
  %4268 = vmatpush2.msra.mxu0 0.0
  %4269 = vmatprep.subr.mxu0 0.0
  %4270 = vmatpush2.msra.mxu0 0.0
  %4271 = vmatprep.subr.mxu0 0.0
  %4272 = vmatpush2.msra.mxu0 0.0
  %4273 = vmatprep.subr.mxu0 0.0
  %4274 = vmatpush2.msra.mxu0 0.0
  %4275 = vmatprep.subr.mxu0 0.0
  %4276 = vmatpush2.msra.mxu0 0.0
  %4277 = vmatprep.subr.mxu0 0.0
  %4278 = vmatpush2.msra.mxu0 0.0
  %4279 = vmatprep.subr.mxu0 0.0
  %4280 = vmatpush2.msra.mxu0 0.0
  %4281 = vmatprep.subr.mxu0 0.0
  %4282 = vmatpush2.msra.mxu0 0.0
  %4283 = vmatprep.mubr.f32.mxu0 0.0
  %4284 = vmatmul.mubr.f32.gmra.mxu0 %v4208
  %v4285 = vpop.f32.mrf.mxu0
  %v4286 = vadd.f32 0.0, %v4285
  %v4287 = vpop.f32.mrf.mxu0
  %4288 = vmatprep.mubr.f32.mxu0 0.0
  %4289 = vmatmul.mubr.f32.gmra.mxu0 %v4211
  %v4290 = vpop.f32.mrf.mxu0
  %v4291 = vadd.f32 0.0, %v4290
  %v4292 = vpop.f32.mrf.mxu0
  %4293 = vmatprep.mubr.f32.mxu0 0.0
  %4294 = vmatmul.mubr.f32.gmra.mxu0 %v4214
  %v4295 = vpop.f32.mrf.mxu0
  %v4296 = vadd.f32 0.0, %v4295
  %v4297 = vpop.f32.mrf.mxu0
  %4298 = vmatprep.mubr.f32.mxu0 0.0
  %4299 = vmatmul.mubr.f32.gmra.mxu0 %v4217
  %v4300 = vpop.f32.mrf.mxu0
  %v4301 = vadd.f32 0.0, %v4300
  %v4302 = vpop.f32.mrf.mxu0
  %4303 = vdwg.mxu0
  %v4304 = vmul.f32 %v4286, %v4286
  %v4305 = vmul.f32 %v4291, %v4291
  %v4306 = vmul.f32 %v4296, %v4296
  %v4307 = vmul.f32 %v4301, %v4301
  %4312 = vrot.lane.b32.xlu0 %v4304, 1
  %v4313 = vpop.permute.xlu0 %4312
  %4314 = vrot.lane.b32.xlu0 %v4305, 1
  %v4315 = vpop.permute.xlu0 %4314
  %4316 = vrot.lane.b32.xlu0 %v4306, 1
  %v4317 = vpop.permute.xlu0 %4316
  %4318 = vrot.lane.b32.xlu0 %v4307, 1
  %v4319 = vpop.permute.xlu0 %4318
  %v4324 = vsub.f32 %v4286, %v4313
  %v4325 = vsub.f32 %v4291, %v4315
  %v4326 = vsub.f32 %v4296, %v4317
  %v4327 = vsub.f32 %v4301, %v4319
  %v4328 = vmax.f32 %v4324, 0.0
  %v4329 = vmax.f32 %v4325, 0.0
  %v4330 = vmax.f32 %v4326, 0.0
  %v4331 = vmax.f32 %v4327, 0.0
  %v4332 = vld [vmem:[%s4] sm:$0xff]
  %v4333 = vld [vmem:[%s4 + $0x8] sm:$0xff]
  %v4334 = vld [vmem:[%s4 + $0x10] sm:$0xff]
  %v4335 = vld [vmem:[%s4 + $0x18] sm:$0xff]
  %4337 = vset.pattern.permute.xlu0 0
  %4338 = vperm.xlu0 %4337, %v4286
  %v4339 = vpop.permute.xlu0 %4338
  %4342 = vset.pattern.permute.xlu0 0
  %4343 = vperm.xlu0 %4342, %v4291
  %v4344 = vpop.permute.xlu0 %4343
  %4347 = vset.pattern.permute.xlu0 0
  %4348 = vperm.xlu0 %4347, %v4296
  %v4349 = vpop.permute.xlu0 %4348
  %4352 = vset.pattern.permute.xlu0 0
  %4353 = vperm.xlu0 %4352, %v4301
  %v4354 = vpop.permute.xlu0 %4353
  %v4356 = vsub.f32 %v4153, %v4339
  %v4357 = vsub.f32 %v4158, %v4344
  %v4358 = vsub.f32 %v4163, %v4349
  %v4359 = vsub.f32 %v4168, %v4354
  %v4360 = vadd.f32 %v4328, 1e-05
  %v4361 = vadd.f32 %v4329, 1e-05
  %v4362 = vadd.f32 %v4330, 1e-05
  %v4363 = vadd.f32 %v4331, 1e-05
  %v4364 = vrsqrt.pop %v4360
  %v4365 = vrsqrt.pop %v4361
  %v4366 = vrsqrt.pop %v4362
  %v4367 = vrsqrt.pop %v4363
  %4372 = vrot.lane.b32.xlu0 %v4364, 10
  %v4373 = vpop.permute.xlu0 %4372
  %4374 = vrot.lane.b32.xlu0 %v4365, 10
  %v4375 = vpop.permute.xlu0 %4374
  %4376 = vrot.lane.b32.xlu0 %v4366, 10
  %v4377 = vpop.permute.xlu0 %4376
  %4378 = vrot.lane.b32.xlu0 %v4367, 10
  %v4379 = vpop.permute.xlu0 %4378
  %v4384 = vmul.f32 %v4332, %v4373
  %v4385 = vmul.f32 %v4333, %v4375
  %v4386 = vmul.f32 %v4334, %v4377
  %v4387 = vmul.f32 %v4335, %v4379
  %4389 = vset.pattern.permute.xlu0 11
  %4390 = vperm.xlu0 %4389, %v4384
  %v4391 = vpop.permute.xlu0 %4390
  %4394 = vset.pattern.permute.xlu0 11
  %4395 = vperm.xlu0 %4394, %v4385
  %v4396 = vpop.permute.xlu0 %4395
  %4399 = vset.pattern.permute.xlu0 11
  %4400 = vperm.xlu0 %4399, %v4386
  %v4401 = vpop.permute.xlu0 %4400
  %4404 = vset.pattern.permute.xlu0 11
  %4405 = vperm.xlu0 %4404, %v4387
  %v4406 = vpop.permute.xlu0 %4405
  %v4408 = vmul.f32 %v4356, %v4391
  %v4409 = vmul.f32 %v4357, %v4396
  %v4410 = vmul.f32 %v4358, %v4401
  %v4411 = vmul.f32 %v4359, %v4406
  %4413 = vset.pattern.permute.xlu0 12
  %4414 = vperm.xlu0 %4413, %v4332
  %v4415 = vpop.permute.xlu0 %4414
  %4418 = vset.pattern.permute.xlu0 12
  %4419 = vperm.xlu0 %4418, %v4333
  %v4420 = vpop.permute.xlu0 %4419
  %4423 = vset.pattern.permute.xlu0 12
  %4424 = vperm.xlu0 %4423, %v4334
  %v4425 = vpop.permute.xlu0 %4424
  %4428 = vset.pattern.permute.xlu0 12
  %4429 = vperm.xlu0 %4428, %v4335
  %v4430 = vpop.permute.xlu0 %4429
  %v4432 = vadd.f32 %v4408, %v4415
  %v4433 = vadd.f32 %v4409, %v4420
  %v4434 = vadd.f32 %v4410, %v4425
  %v4435 = vadd.f32 %v4411, %v4430
  %v4436 = vmax.f32 %v4432, 0.0
  %v4437 = vmax.f32 %v4433, 0.0
  %v4438 = vmax.f32 %v4434, 0.0
  %v4439 = vmax.f32 %v4435, 0.0
  %v4440 = vld [vmem:[%s2 + $0x3f0] sm:$0xff]
  %v4441 = vld [vmem:[%s2 + $0x3f8] sm:$0xff]
  %v4443 = vsel %vm1767, %v4436, 0
  %v4446 = vsel %vm1767, %v4437, 0
  %v4449 = vsel %vm1767, %v4438, 0
  %v4452 = vsel %vm1767, %v4439, 0
  %4454 = vmatprep.subr.mxu0 0.0
  %4455 = vmatpush1.msra.mxu0 0.0
  %4456 = vmatprep.subr.mxu0 0.0
  %4457 = vmatpush1.msra.mxu0 0.0
  %4458 = vmatprep.subr.mxu0 0.0
  %4459 = vmatpush1.msra.mxu0 0.0
  %4460 = vmatprep.subr.mxu0 0.0
  %4461 = vmatpush1.msra.mxu0 0.0
  %4462 = vmatprep.subr.mxu0 0.0
  %4463 = vmatpush1.msra.mxu0 0.0
  %4464 = vmatprep.subr.mxu0 0.0
  %4465 = vmatpush1.msra.mxu0 0.0
  %4466 = vmatprep.subr.mxu0 0.0
  %4467 = vmatpush1.msra.mxu0 0.0
  %4468 = vmatprep.subr.mxu0 0.0
  %4469 = vmatpush1.msra.mxu0 0.0
  %4470 = vmatprep.subr.mxu0 0.0
  %4471 = vmatpush1.msra.mxu0 0.0
  %4472 = vmatprep.subr.mxu0 0.0
  %4473 = vmatpush1.msra.mxu0 0.0
  %4474 = vmatprep.subr.mxu0 0.0
  %4475 = vmatpush1.msra.mxu0 0.0
  %4476 = vmatprep.subr.mxu0 0.0
  %4477 = vmatpush1.msra.mxu0 0.0
  %4478 = vmatprep.subr.mxu0 0.0
  %4479 = vmatpush1.msra.mxu0 0.0
  %4480 = vmatprep.subr.mxu0 0.0
  %4481 = vmatpush1.msra.mxu0 0.0
  %4482 = vmatprep.subr.mxu0 0.0
  %4483 = vmatpush1.msra.mxu0 %v4441
  %4484 = vmatprep.subr.mxu0 0.0
  %4485 = vmatpush1.msra.mxu0 %v4440
  %4486 = vmatprep.subr.mxu0 0.0
  %4487 = vmatpush2.msra.mxu0 0.0
  %4488 = vmatprep.subr.mxu0 0.0
  %4489 = vmatpush2.msra.mxu0 0.0
  %4490 = vmatprep.subr.mxu0 0.0
  %4491 = vmatpush2.msra.mxu0 0.0
  %4492 = vmatprep.subr.mxu0 0.0
  %4493 = vmatpush2.msra.mxu0 0.0
  %4494 = vmatprep.subr.mxu0 0.0
  %4495 = vmatpush2.msra.mxu0 0.0
  %4496 = vmatprep.subr.mxu0 0.0
  %4497 = vmatpush2.msra.mxu0 0.0
  %4498 = vmatprep.subr.mxu0 0.0
  %4499 = vmatpush2.msra.mxu0 0.0
  %4500 = vmatprep.subr.mxu0 0.0
  %4501 = vmatpush2.msra.mxu0 0.0
  %4502 = vmatprep.subr.mxu0 0.0
  %4503 = vmatpush2.msra.mxu0 0.0
  %4504 = vmatprep.subr.mxu0 0.0
  %4505 = vmatpush2.msra.mxu0 0.0
  %4506 = vmatprep.subr.mxu0 0.0
  %4507 = vmatpush2.msra.mxu0 0.0
  %4508 = vmatprep.subr.mxu0 0.0
  %4509 = vmatpush2.msra.mxu0 0.0
  %4510 = vmatprep.subr.mxu0 0.0
  %4511 = vmatpush2.msra.mxu0 0.0
  %4512 = vmatprep.subr.mxu0 0.0
  %4513 = vmatpush2.msra.mxu0 0.0
  %4514 = vmatprep.subr.mxu0 0.0
  %4515 = vmatpush2.msra.mxu0 0.0
  %4516 = vmatprep.subr.mxu0 0.0
  %4517 = vmatpush2.msra.mxu0 0.0
  %4518 = vmatprep.mubr.f32.mxu0 0.0
  %4519 = vmatmul.mubr.f32.gmra.mxu0 %v4443
  %v4520 = vpop.f32.mrf.mxu0
  %v4521 = vadd.f32 0.0, %v4520
  %v4522 = vpop.f32.mrf.mxu0
  %4523 = vmatprep.mubr.f32.mxu0 0.0
  %4524 = vmatmul.mubr.f32.gmra.mxu0 %v4446
  %v4525 = vpop.f32.mrf.mxu0
  %v4526 = vadd.f32 0.0, %v4525
  %v4527 = vpop.f32.mrf.mxu0
  %4528 = vmatprep.mubr.f32.mxu0 0.0
  %4529 = vmatmul.mubr.f32.gmra.mxu0 %v4449
  %v4530 = vpop.f32.mrf.mxu0
  %v4531 = vadd.f32 0.0, %v4530
  %v4532 = vpop.f32.mrf.mxu0
  %4533 = vmatprep.mubr.f32.mxu0 0.0
  %4534 = vmatmul.mubr.f32.gmra.mxu0 %v4452
  %v4535 = vpop.f32.mrf.mxu0
  %v4536 = vadd.f32 0.0, %v4535
  %v4537 = vpop.f32.mrf.mxu0
  %4538 = vdwg.mxu0
  %4539 = vst.msk [vmem:[#allocation2] sm:$0xff] %vm907, %v4521
  %4540 = vst.msk [vmem:[#allocation2 + $0x8] sm:$0xff] %vm907, %v4526
  %4541 = vst.msk [vmem:[#allocation2 + $0x10] sm:$0xff] %vm907, %v4531
  %4542 = vst.msk [vmem:[#allocation2 + $0x18] sm:$0xff] %vm907, %v4536
  %v4543 = vld [vmem:[%s2 + $0x400] sm:$0xff]
  %v4544 = vld [vmem:[%s2 + $0x408] sm:$0xff]
  %4545 = vmatprep.subr.mxu0 0.0
  %4546 = vmatpush1.msra.mxu0 0.0
  %4547 = vmatprep.subr.mxu0 0.0
  %4548 = vmatpush1.msra.mxu0 0.0
  %4549 = vmatprep.subr.mxu0 0.0
  %4550 = vmatpush1.msra.mxu0 0.0
  %4551 = vmatprep.subr.mxu0 0.0
  %4552 = vmatpush1.msra.mxu0 0.0
  %4553 = vmatprep.subr.mxu0 0.0
  %4554 = vmatpush1.msra.mxu0 0.0
  %4555 = vmatprep.subr.mxu0 0.0
  %4556 = vmatpush1.msra.mxu0 0.0
  %4557 = vmatprep.subr.mxu0 0.0
  %4558 = vmatpush1.msra.mxu0 0.0
  %4559 = vmatprep.subr.mxu0 0.0
  %4560 = vmatpush1.msra.mxu0 0.0
  %4561 = vmatprep.subr.mxu0 0.0
  %4562 = vmatpush1.msra.mxu0 0.0
  %4563 = vmatprep.subr.mxu0 0.0
  %4564 = vmatpush1.msra.mxu0 0.0
  %4565 = vmatprep.subr.mxu0 0.0
  %4566 = vmatpush1.msra.mxu0 0.0
  %4567 = vmatprep.subr.mxu0 0.0
  %4568 = vmatpush1.msra.mxu0 0.0
  %4569 = vmatprep.subr.mxu0 0.0
  %4570 = vmatpush1.msra.mxu0 0.0
  %4571 = vmatprep.subr.mxu0 0.0
  %4572 = vmatpush1.msra.mxu0 0.0
  %4573 = vmatprep.subr.mxu0 0.0
  %4574 = vmatpush1.msra.mxu0 %v4544
  %4575 = vmatprep.subr.mxu0 0.0
  %4576 = vmatpush1.msra.mxu0 %v4543
  %4577 = vmatprep.subr.mxu0 0.0
  %4578 = vmatpush2.msra.mxu0 0.0
  %4579 = vmatprep.subr.mxu0 0.0
  %4580 = vmatpush2.msra.mxu0 0.0
  %4581 = vmatprep.subr.mxu0 0.0
  %4582 = vmatpush2.msra.mxu0 0.0
  %4583 = vmatprep.subr.mxu0 0.0
  %4584 = vmatpush2.msra.mxu0 0.0
  %4585 = vmatprep.subr.mxu0 0.0
  %4586 = vmatpush2.msra.mxu0 0.0
  %4587 = vmatprep.subr.mxu0 0.0
  %4588 = vmatpush2.msra.mxu0 0.0
  %4589 = vmatprep.subr.mxu0 0.0
  %4590 = vmatpush2.msra.mxu0 0.0
  %4591 = vmatprep.subr.mxu0 0.0
  %4592 = vmatpush2.msra.mxu0 0.0
  %4593 = vmatprep.subr.mxu0 0.0
  %4594 = vmatpush2.msra.mxu0 0.0
  %4595 = vmatprep.subr.mxu0 0.0
  %4596 = vmatpush2.msra.mxu0 0.0
  %4597 = vmatprep.subr.mxu0 0.0
  %4598 = vmatpush2.msra.mxu0 0.0
  %4599 = vmatprep.subr.mxu0 0.0
  %4600 = vmatpush2.msra.mxu0 0.0
  %4601 = vmatprep.subr.mxu0 0.0
  %4602 = vmatpush2.msra.mxu0 0.0
  %4603 = vmatprep.subr.mxu0 0.0
  %4604 = vmatpush2.msra.mxu0 0.0
  %4605 = vmatprep.subr.mxu0 0.0
  %4606 = vmatpush2.msra.mxu0 0.0
  %4607 = vmatprep.subr.mxu0 0.0
  %4608 = vmatpush2.msra.mxu0 0.0
  %4609 = vmatprep.mubr.f32.mxu0 0.0
  %4610 = vmatmul.mubr.f32.gmra.mxu0 %v4443
  %v4611 = vpop.f32.mrf.mxu0
  %v4612 = vadd.f32 0.0, %v4611
  %v4613 = vpop.f32.mrf.mxu0
  %4614 = vmatprep.mubr.f32.mxu0 0.0
  %4615 = vmatmul.mubr.f32.gmra.mxu0 %v4446
  %v4616 = vpop.f32.mrf.mxu0
  %v4617 = vadd.f32 0.0, %v4616
  %v4618 = vpop.f32.mrf.mxu0
  %4619 = vmatprep.mubr.f32.mxu0 0.0
  %4620 = vmatmul.mubr.f32.gmra.mxu0 %v4449
  %v4621 = vpop.f32.mrf.mxu0
  %v4622 = vadd.f32 0.0, %v4621
  %v4623 = vpop.f32.mrf.mxu0
  %4624 = vmatprep.mubr.f32.mxu0 0.0
  %4625 = vmatmul.mubr.f32.gmra.mxu0 %v4452
  %v4626 = vpop.f32.mrf.mxu0
  %v4627 = vadd.f32 0.0, %v4626
  %v4628 = vpop.f32.mrf.mxu0
  %4629 = vdwg.mxu0
  %4630 = vst.msk [vmem:[#allocation2 + $0x20] sm:$0xff] %vm907, %v4612
  %4631 = vst.msk [vmem:[#allocation2 + $0x28] sm:$0xff] %vm907, %v4617
  %4632 = vst.msk [vmem:[#allocation2 + $0x30] sm:$0xff] %vm907, %v4622
  %4633 = vst.msk [vmem:[#allocation2 + $0x38] sm:$0xff] %vm907, %v4627
  %v4634 = vld [vmem:[%s2 + $0x410] sm:$0xff]
  %v4635 = vld [vmem:[%s2 + $0x418] sm:$0xff]
  %4636 = vmatprep.subr.mxu0 0.0
  %4637 = vmatpush1.msra.mxu0 0.0
  %4638 = vmatprep.subr.mxu0 0.0
  %4639 = vmatpush1.msra.mxu0 0.0
  %4640 = vmatprep.subr.mxu0 0.0
  %4641 = vmatpush1.msra.mxu0 0.0
  %4642 = vmatprep.subr.mxu0 0.0
  %4643 = vmatpush1.msra.mxu0 0.0
  %4644 = vmatprep.subr.mxu0 0.0
  %4645 = vmatpush1.msra.mxu0 0.0
  %4646 = vmatprep.subr.mxu0 0.0
  %4647 = vmatpush1.msra.mxu0 0.0
  %4648 = vmatprep.subr.mxu0 0.0
  %4649 = vmatpush1.msra.mxu0 0.0
  %4650 = vmatprep.subr.mxu0 0.0
  %4651 = vmatpush1.msra.mxu0 0.0
  %4652 = vmatprep.subr.mxu0 0.0
  %4653 = vmatpush1.msra.mxu0 0.0
  %4654 = vmatprep.subr.mxu0 0.0
  %4655 = vmatpush1.msra.mxu0 0.0
  %4656 = vmatprep.subr.mxu0 0.0
  %4657 = vmatpush1.msra.mxu0 0.0
  %4658 = vmatprep.subr.mxu0 0.0
  %4659 = vmatpush1.msra.mxu0 0.0
  %4660 = vmatprep.subr.mxu0 0.0
  %4661 = vmatpush1.msra.mxu0 0.0
  %4662 = vmatprep.subr.mxu0 0.0
  %4663 = vmatpush1.msra.mxu0 0.0
  %4664 = vmatprep.subr.mxu0 0.0
  %4665 = vmatpush1.msra.mxu0 %v4635
  %4666 = vmatprep.subr.mxu0 0.0
  %4667 = vmatpush1.msra.mxu0 %v4634
  %4668 = vmatprep.subr.mxu0 0.0
  %4669 = vmatpush2.msra.mxu0 0.0
  %4670 = vmatprep.subr.mxu0 0.0
  %4671 = vmatpush2.msra.mxu0 0.0
  %4672 = vmatprep.subr.mxu0 0.0
  %4673 = vmatpush2.msra.mxu0 0.0
  %4674 = vmatprep.subr.mxu0 0.0
  %4675 = vmatpush2.msra.mxu0 0.0
  %4676 = vmatprep.subr.mxu0 0.0
  %4677 = vmatpush2.msra.mxu0 0.0
  %4678 = vmatprep.subr.mxu0 0.0
  %4679 = vmatpush2.msra.mxu0 0.0
  %4680 = vmatprep.subr.mxu0 0.0
  %4681 = vmatpush2.msra.mxu0 0.0
  %4682 = vmatprep.subr.mxu0 0.0
  %4683 = vmatpush2.msra.mxu0 0.0
  %4684 = vmatprep.subr.mxu0 0.0
  %4685 = vmatpush2.msra.mxu0 0.0
  %4686 = vmatprep.subr.mxu0 0.0
  %4687 = vmatpush2.msra.mxu0 0.0
  %4688 = vmatprep.subr.mxu0 0.0
  %4689 = vmatpush2.msra.mxu0 0.0
  %4690 = vmatprep.subr.mxu0 0.0
  %4691 = vmatpush2.msra.mxu0 0.0
  %4692 = vmatprep.subr.mxu0 0.0
  %4693 = vmatpush2.msra.mxu0 0.0
  %4694 = vmatprep.subr.mxu0 0.0
  %4695 = vmatpush2.msra.mxu0 0.0
  %4696 = vmatprep.subr.mxu0 0.0
  %4697 = vmatpush2.msra.mxu0 0.0
  %4698 = vmatprep.subr.mxu0 0.0
  %4699 = vmatpush2.msra.mxu0 0.0
  %4700 = vmatprep.mubr.f32.mxu0 0.0
  %4701 = vmatmul.mubr.f32.gmra.mxu0 %v4443
  %v4702 = vpop.f32.mrf.mxu0
  %v4703 = vadd.f32 0.0, %v4702
  %v4704 = vpop.f32.mrf.mxu0
  %4705 = vmatprep.mubr.f32.mxu0 0.0
  %4706 = vmatmul.mubr.f32.gmra.mxu0 %v4446
  %v4707 = vpop.f32.mrf.mxu0
  %v4708 = vadd.f32 0.0, %v4707
  %v4709 = vpop.f32.mrf.mxu0
  %4710 = vmatprep.mubr.f32.mxu0 0.0
  %4711 = vmatmul.mubr.f32.gmra.mxu0 %v4449
  %v4712 = vpop.f32.mrf.mxu0
  %v4713 = vadd.f32 0.0, %v4712
  %v4714 = vpop.f32.mrf.mxu0
  %4715 = vmatprep.mubr.f32.mxu0 0.0
  %4716 = vmatmul.mubr.f32.gmra.mxu0 %v4452
  %v4717 = vpop.f32.mrf.mxu0
  %v4718 = vadd.f32 0.0, %v4717
  %v4719 = vpop.f32.mrf.mxu0
  %4720 = vdwg.mxu0
  %4721 = vst.msk [vmem:[#allocation2 + $0x40] sm:$0xff] %vm907, %v4703
  %4722 = vst.msk [vmem:[#allocation2 + $0x48] sm:$0xff] %vm907, %v4708
  %4723 = vst.msk [vmem:[#allocation2 + $0x50] sm:$0xff] %vm907, %v4713
  %4724 = vst.msk [vmem:[#allocation2 + $0x58] sm:$0xff] %vm907, %v4718
  %v4725 = vld [vmem:[#allocation2] sm:$0xff]
  %v4726 = vld [vmem:[#allocation2 + $0x8] sm:$0xff]
  %v4727 = vld [vmem:[#allocation2 + $0x10] sm:$0xff]
  %v4728 = vld [vmem:[#allocation2 + $0x18] sm:$0xff]
  %v4729 = vld [vmem:[#allocation2 + $0x20] sm:$0xff]
  %v4730 = vld [vmem:[#allocation2 + $0x28] sm:$0xff]
  %v4731 = vld [vmem:[#allocation2 + $0x30] sm:$0xff]
  %v4732 = vld [vmem:[#allocation2 + $0x38] sm:$0xff]
  %v4733 = vld [vmem:[#allocation2 + $0x40] sm:$0xff]
  %v4734 = vld [vmem:[#allocation2 + $0x48] sm:$0xff]
  %v4735 = vld [vmem:[#allocation2 + $0x50] sm:$0xff]
  %v4736 = vld [vmem:[#allocation2 + $0x58] sm:$0xff]
  %v4737 = vld [vmem:[%s1 + $0x1a0] sm:$0xff]
  %v4738 = vld [vmem:[%s1 + $0x1b0] sm:$0xff]
  %v4739 = vld [vmem:[%s1 + $0x1c0] sm:$0xff]
  %v4740 = vld [vmem:[%s1 + $0x1d0] sm:$0xff]
  %vm4741 = vcmask 785408
  %v4743 = vsel %vm4741, %v4737, 0
  %v4746 = vsel %vm4741, %v4738, 0
  %v4749 = vsel %vm4741, %v4739, 0
  %v4752 = vsel %vm4741, %v4740, 0
  %4754 = vmatprep.subr.mxu0 0.0
  %4755 = vmatpush1.msra.mxu0 0.0
  %4756 = vmatprep.subr.mxu0 0.0
  %4757 = vmatpush1.msra.mxu0 0.0
  %4758 = vmatprep.subr.mxu0 0.0
  %4759 = vmatpush1.msra.mxu0 0.0
  %4760 = vmatprep.subr.mxu0 0.0
  %4761 = vmatpush1.msra.mxu0 0.0
  %4762 = vmatprep.subr.mxu0 0.0
  %4763 = vmatpush1.msra.mxu0 %v4736
  %4764 = vmatprep.subr.mxu0 0.0
  %4765 = vmatpush1.msra.mxu0 %v4735
  %4766 = vmatprep.subr.mxu0 0.0
  %4767 = vmatpush1.msra.mxu0 %v4734
  %4768 = vmatprep.subr.mxu0 0.0
  %4769 = vmatpush1.msra.mxu0 %v4733
  %4770 = vmatprep.subr.mxu0 0.0
  %4771 = vmatpush1.msra.mxu0 %v4732
  %4772 = vmatprep.subr.mxu0 0.0
  %4773 = vmatpush1.msra.mxu0 %v4731
  %4774 = vmatprep.subr.mxu0 0.0
  %4775 = vmatpush1.msra.mxu0 %v4730
  %4776 = vmatprep.subr.mxu0 0.0
  %4777 = vmatpush1.msra.mxu0 %v4729
  %4778 = vmatprep.subr.mxu0 0.0
  %4779 = vmatpush1.msra.mxu0 %v4728
  %4780 = vmatprep.subr.mxu0 0.0
  %4781 = vmatpush1.msra.mxu0 %v4727
  %4782 = vmatprep.subr.mxu0 0.0
  %4783 = vmatpush1.msra.mxu0 %v4726
  %4784 = vmatprep.subr.mxu0 0.0
  %4785 = vmatpush1.msra.mxu0 %v4725
  %4786 = vmatprep.subr.mxu0 0.0
  %4787 = vmatpush2.msra.mxu0 0.0
  %4788 = vmatprep.subr.mxu0 0.0
  %4789 = vmatpush2.msra.mxu0 0.0
  %4790 = vmatprep.subr.mxu0 0.0
  %4791 = vmatpush2.msra.mxu0 0.0
  %4792 = vmatprep.subr.mxu0 0.0
  %4793 = vmatpush2.msra.mxu0 0.0
  %4794 = vmatprep.subr.mxu0 0.0
  %4795 = vmatpush2.msra.mxu0 0.0
  %4796 = vmatprep.subr.mxu0 0.0
  %4797 = vmatpush2.msra.mxu0 0.0
  %4798 = vmatprep.subr.mxu0 0.0
  %4799 = vmatpush2.msra.mxu0 0.0
  %4800 = vmatprep.subr.mxu0 0.0
  %4801 = vmatpush2.msra.mxu0 0.0
  %4802 = vmatprep.subr.mxu0 0.0
  %4803 = vmatpush2.msra.mxu0 0.0
  %4804 = vmatprep.subr.mxu0 0.0
  %4805 = vmatpush2.msra.mxu0 0.0
  %4806 = vmatprep.subr.mxu0 0.0
  %4807 = vmatpush2.msra.mxu0 0.0
  %4808 = vmatprep.subr.mxu0 0.0
  %4809 = vmatpush2.msra.mxu0 0.0
  %4810 = vmatprep.subr.mxu0 0.0
  %4811 = vmatpush2.msra.mxu0 0.0
  %4812 = vmatprep.subr.mxu0 0.0
  %4813 = vmatpush2.msra.mxu0 0.0
  %4814 = vmatprep.subr.mxu0 0.0
  %4815 = vmatpush2.msra.mxu0 0.0
  %4816 = vmatprep.subr.mxu0 0.0
  %4817 = vmatpush2.msra.mxu0 0.0
  %4818 = vmatprep.mubr.f32.mxu0 0.0
  %4819 = vmatmul.mubr.f32.gmra.mxu0 %v4743
  %v4820 = vpop.f32.mrf.mxu0
  %v4821 = vadd.f32 0.0, %v4820
  %v4822 = vpop.f32.mrf.mxu0
  %4823 = vmatprep.mubr.f32.mxu0 0.0
  %4824 = vmatmul.mubr.f32.gmra.mxu0 %v4746
  %v4825 = vpop.f32.mrf.mxu0
  %v4826 = vadd.f32 0.0, %v4825
  %v4827 = vpop.f32.mrf.mxu0
  %4828 = vmatprep.mubr.f32.mxu0 0.0
  %4829 = vmatmul.mubr.f32.gmra.mxu0 %v4749
  %v4830 = vpop.f32.mrf.mxu0
  %v4831 = vadd.f32 0.0, %v4830
  %v4832 = vpop.f32.mrf.mxu0
  %4833 = vmatprep.mubr.f32.mxu0 0.0
  %4834 = vmatmul.mubr.f32.gmra.mxu0 %v4752
  %v4835 = vpop.f32.mrf.mxu0
  %v4836 = vadd.f32 0.0, %v4835
  %v4837 = vpop.f32.mrf.mxu0
  %4838 = vdwg.mxu0
  %v4839 = vld [vmem:[%s3 + $0x90] sm:$0xff]
  %v4840 = vld [vmem:[%s3 + $0x98] sm:$0xff]
  %v4841 = vld [vmem:[%s3 + $0xa0] sm:$0xff]
  %v4842 = vld [vmem:[%s3 + $0xa8] sm:$0xff]
  %v4843 = vsel %vm907, %v4821, 0.0
  %4844 = vadd.xlane.f32.xlu0 %v4843
  %v4845 = vpop.xlane.xlu0 %4844
  %v4846 = vsel %vm907, %v4826, 0.0
  %4847 = vadd.xlane.f32.xlu0 %v4846
  %v4848 = vpop.xlane.xlu0 %4847
  %v4849 = vsel %vm907, %v4831, 0.0
  %4850 = vadd.xlane.f32.xlu0 %v4849
  %v4851 = vpop.xlane.xlu0 %4850
  %v4852 = vsel %vm907, %v4836, 0.0
  %4853 = vadd.xlane.f32.xlu0 %v4852
  %v4854 = vpop.xlane.xlu0 %4853
  %v4855 = vmul.f32 %v4821, %v4821
  %v4856 = vmul.f32 %v4826, %v4826
  %v4857 = vmul.f32 %v4831, %v4831
  %v4858 = vmul.f32 %v4836, %v4836
  %v4859 = vsel %vm907, %v4855, 0.0
  %4860 = vadd.xlane.f32.xlu0 %v4859
  %v4861 = vpop.xlane.xlu0 %4860
  %v4862 = vsel %vm907, %v4856, 0.0
  %4863 = vadd.xlane.f32.xlu0 %v4862
  %v4864 = vpop.xlane.xlu0 %4863
  %v4865 = vsel %vm907, %v4857, 0.0
  %4866 = vadd.xlane.f32.xlu0 %v4865
  %v4867 = vpop.xlane.xlu0 %4866
  %v4868 = vsel %vm907, %v4858, 0.0
  %4869 = vadd.xlane.f32.xlu0 %v4868
  %v4870 = vpop.xlane.xlu0 %4869
  %v4871 = vsel %vm1436, %v4845, %v4861
  %v4872 = vsel %vm1436, %v4848, %v4864
  %v4873 = vsel %vm1436, %v4851, %v4867
  %v4874 = vsel %vm1436, %v4854, %v4870
  %v4876 = vsel %vm907, %v4839, 0
  %v4879 = vsel %vm907, %v4840, 0
  %v4882 = vsel %vm907, %v4841, 0
  %v4885 = vsel %vm907, %v4842, 0
  %4887 = vmatprep.subr.mxu0 0.0
  %4888 = vmatpush1.msra.mxu0 0.0
  %4889 = vmatprep.subr.mxu0 0.0
  %4890 = vmatpush1.msra.mxu0 0.0
  %4891 = vmatprep.subr.mxu0 0.0
  %4892 = vmatpush1.msra.mxu0 0.0
  %4893 = vmatprep.subr.mxu0 0.0
  %4894 = vmatpush1.msra.mxu0 0.0
  %4895 = vmatprep.subr.mxu0 0.0
  %4896 = vmatpush1.msra.mxu0 0.0
  %4897 = vmatprep.subr.mxu0 0.0
  %4898 = vmatpush1.msra.mxu0 0.0
  %4899 = vmatprep.subr.mxu0 0.0
  %4900 = vmatpush1.msra.mxu0 0.0
  %4901 = vmatprep.subr.mxu0 0.0
  %4902 = vmatpush1.msra.mxu0 0.0
  %4903 = vmatprep.subr.mxu0 0.0
  %4904 = vmatpush1.msra.mxu0 0.0
  %4905 = vmatprep.subr.mxu0 0.0
  %4906 = vmatpush1.msra.mxu0 0.0
  %4907 = vmatprep.subr.mxu0 0.0
  %4908 = vmatpush1.msra.mxu0 0.0
  %4909 = vmatprep.subr.mxu0 0.0
  %4910 = vmatpush1.msra.mxu0 0.0
  %4911 = vmatprep.subr.mxu0 0.0
  %4912 = vmatpush1.msra.mxu0 %v4874
  %4913 = vmatprep.subr.mxu0 0.0
  %4914 = vmatpush1.msra.mxu0 %v4873
  %4915 = vmatprep.subr.mxu0 0.0
  %4916 = vmatpush1.msra.mxu0 %v4872
  %4917 = vmatprep.subr.mxu0 0.0
  %4918 = vmatpush1.msra.mxu0 %v4871
  %4919 = vmatprep.subr.mxu0 0.0
  %4920 = vmatpush2.msra.mxu0 0.0
  %4921 = vmatprep.subr.mxu0 0.0
  %4922 = vmatpush2.msra.mxu0 0.0
  %4923 = vmatprep.subr.mxu0 0.0
  %4924 = vmatpush2.msra.mxu0 0.0
  %4925 = vmatprep.subr.mxu0 0.0
  %4926 = vmatpush2.msra.mxu0 0.0
  %4927 = vmatprep.subr.mxu0 0.0
  %4928 = vmatpush2.msra.mxu0 0.0
  %4929 = vmatprep.subr.mxu0 0.0
  %4930 = vmatpush2.msra.mxu0 0.0
  %4931 = vmatprep.subr.mxu0 0.0
  %4932 = vmatpush2.msra.mxu0 0.0
  %4933 = vmatprep.subr.mxu0 0.0
  %4934 = vmatpush2.msra.mxu0 0.0
  %4935 = vmatprep.subr.mxu0 0.0
  %4936 = vmatpush2.msra.mxu0 0.0
  %4937 = vmatprep.subr.mxu0 0.0
  %4938 = vmatpush2.msra.mxu0 0.0
  %4939 = vmatprep.subr.mxu0 0.0
  %4940 = vmatpush2.msra.mxu0 0.0
  %4941 = vmatprep.subr.mxu0 0.0
  %4942 = vmatpush2.msra.mxu0 0.0
  %4943 = vmatprep.subr.mxu0 0.0
  %4944 = vmatpush2.msra.mxu0 0.0
  %4945 = vmatprep.subr.mxu0 0.0
  %4946 = vmatpush2.msra.mxu0 0.0
  %4947 = vmatprep.subr.mxu0 0.0
  %4948 = vmatpush2.msra.mxu0 0.0
  %4949 = vmatprep.subr.mxu0 0.0
  %4950 = vmatpush2.msra.mxu0 0.0
  %4951 = vmatprep.mubr.f32.mxu0 0.0
  %4952 = vmatmul.mubr.f32.gmra.mxu0 %v4876
  %v4953 = vpop.f32.mrf.mxu0
  %v4954 = vadd.f32 0.0, %v4953
  %v4955 = vpop.f32.mrf.mxu0
  %4956 = vmatprep.mubr.f32.mxu0 0.0
  %4957 = vmatmul.mubr.f32.gmra.mxu0 %v4879
  %v4958 = vpop.f32.mrf.mxu0
  %v4959 = vadd.f32 0.0, %v4958
  %v4960 = vpop.f32.mrf.mxu0
  %4961 = vmatprep.mubr.f32.mxu0 0.0
  %4962 = vmatmul.mubr.f32.gmra.mxu0 %v4882
  %v4963 = vpop.f32.mrf.mxu0
  %v4964 = vadd.f32 0.0, %v4963
  %v4965 = vpop.f32.mrf.mxu0
  %4966 = vmatprep.mubr.f32.mxu0 0.0
  %4967 = vmatmul.mubr.f32.gmra.mxu0 %v4885
  %v4968 = vpop.f32.mrf.mxu0
  %v4969 = vadd.f32 0.0, %v4968
  %v4970 = vpop.f32.mrf.mxu0
  %4971 = vdwg.mxu0
  %v4972 = vmul.f32 %v4954, %v4954
  %v4973 = vmul.f32 %v4959, %v4959
  %v4974 = vmul.f32 %v4964, %v4964
  %v4975 = vmul.f32 %v4969, %v4969
  %4980 = vrot.lane.b32.xlu0 %v4972, 1
  %v4981 = vpop.permute.xlu0 %4980
  %4982 = vrot.lane.b32.xlu0 %v4973, 1
  %v4983 = vpop.permute.xlu0 %4982
  %4984 = vrot.lane.b32.xlu0 %v4974, 1
  %v4985 = vpop.permute.xlu0 %4984
  %4986 = vrot.lane.b32.xlu0 %v4975, 1
  %v4987 = vpop.permute.xlu0 %4986
  %v4992 = vsub.f32 %v4954, %v4981
  %v4993 = vsub.f32 %v4959, %v4983
  %v4994 = vsub.f32 %v4964, %v4985
  %v4995 = vsub.f32 %v4969, %v4987
  %v4996 = vmax.f32 %v4992, 0.0
  %v4997 = vmax.f32 %v4993, 0.0
  %v4998 = vmax.f32 %v4994, 0.0
  %v4999 = vmax.f32 %v4995, 0.0
  %v5000 = vld [vmem:[%s4] sm:$0xff]
  %v5001 = vld [vmem:[%s4 + $0x8] sm:$0xff]
  %v5002 = vld [vmem:[%s4 + $0x10] sm:$0xff]
  %v5003 = vld [vmem:[%s4 + $0x18] sm:$0xff]
  %5005 = vset.pattern.permute.xlu0 0
  %5006 = vperm.xlu0 %5005, %v4954
  %v5007 = vpop.permute.xlu0 %5006
  %5010 = vset.pattern.permute.xlu0 0
  %5011 = vperm.xlu0 %5010, %v4959
  %v5012 = vpop.permute.xlu0 %5011
  %5015 = vset.pattern.permute.xlu0 0
  %5016 = vperm.xlu0 %5015, %v4964
  %v5017 = vpop.permute.xlu0 %5016
  %5020 = vset.pattern.permute.xlu0 0
  %5021 = vperm.xlu0 %5020, %v4969
  %v5022 = vpop.permute.xlu0 %5021
  %v5024 = vsub.f32 %v4821, %v5007
  %v5025 = vsub.f32 %v4826, %v5012
  %v5026 = vsub.f32 %v4831, %v5017
  %v5027 = vsub.f32 %v4836, %v5022
  %v5028 = vadd.f32 %v4996, 1e-05
  %v5029 = vadd.f32 %v4997, 1e-05
  %v5030 = vadd.f32 %v4998, 1e-05
  %v5031 = vadd.f32 %v4999, 1e-05
  %v5032 = vrsqrt.pop %v5028
  %v5033 = vrsqrt.pop %v5029
  %v5034 = vrsqrt.pop %v5030
  %v5035 = vrsqrt.pop %v5031
  %5040 = vrot.lane.b32.xlu0 %v5032, 12
  %v5041 = vpop.permute.xlu0 %5040
  %5042 = vrot.lane.b32.xlu0 %v5033, 12
  %v5043 = vpop.permute.xlu0 %5042
  %5044 = vrot.lane.b32.xlu0 %v5034, 12
  %v5045 = vpop.permute.xlu0 %5044
  %5046 = vrot.lane.b32.xlu0 %v5035, 12
  %v5047 = vpop.permute.xlu0 %5046
  %v5052 = vmul.f32 %v5000, %v5041
  %v5053 = vmul.f32 %v5001, %v5043
  %v5054 = vmul.f32 %v5002, %v5045
  %v5055 = vmul.f32 %v5003, %v5047
  %5057 = vset.pattern.permute.xlu0 13
  %5058 = vperm.xlu0 %5057, %v5052
  %v5059 = vpop.permute.xlu0 %5058
  %5062 = vset.pattern.permute.xlu0 13
  %5063 = vperm.xlu0 %5062, %v5053
  %v5064 = vpop.permute.xlu0 %5063
  %5067 = vset.pattern.permute.xlu0 13
  %5068 = vperm.xlu0 %5067, %v5054
  %v5069 = vpop.permute.xlu0 %5068
  %5072 = vset.pattern.permute.xlu0 13
  %5073 = vperm.xlu0 %5072, %v5055
  %v5074 = vpop.permute.xlu0 %5073
  %v5076 = vmul.f32 %v5024, %v5059
  %v5077 = vmul.f32 %v5025, %v5064
  %v5078 = vmul.f32 %v5026, %v5069
  %v5079 = vmul.f32 %v5027, %v5074
  %5081 = vset.pattern.permute.xlu0 14
  %5082 = vperm.xlu0 %5081, %v5000
  %v5083 = vpop.permute.xlu0 %5082
  %5086 = vset.pattern.permute.xlu0 14
  %5087 = vperm.xlu0 %5086, %v5001
  %v5088 = vpop.permute.xlu0 %5087
  %5091 = vset.pattern.permute.xlu0 14
  %5092 = vperm.xlu0 %5091, %v5002
  %v5093 = vpop.permute.xlu0 %5092
  %5096 = vset.pattern.permute.xlu0 14
  %5097 = vperm.xlu0 %5096, %v5003
  %v5098 = vpop.permute.xlu0 %5097
  %v5100 = vadd.f32 %v5076, %v5083
  %v5101 = vadd.f32 %v5077, %v5088
  %v5102 = vadd.f32 %v5078, %v5093
  %v5103 = vadd.f32 %v5079, %v5098
  %v5104 = vmax.f32 %v5100, 0.0
  %v5105 = vmax.f32 %v5101, 0.0
  %v5106 = vmax.f32 %v5102, 0.0
  %v5107 = vmax.f32 %v5103, 0.0
  %v5108 = vld [vmem:[%s2 + $0x420] sm:$0xff]
  %v5109 = vld [vmem:[%s2 + $0x428] sm:$0xff]
  %v5110 = vld [vmem:[%s2 + $0x430] sm:$0xff]
  %v5111 = vld [vmem:[%s2 + $0x438] sm:$0xff]
  %v5113 = vsel %vm907, %v5104, 0
  %v5116 = vsel %vm907, %v5105, 0
  %v5119 = vsel %vm907, %v5106, 0
  %v5122 = vsel %vm907, %v5107, 0
  %5124 = vmatprep.subr.mxu0 0.0
  %5125 = vmatpush1.msra.mxu0 0.0
  %5126 = vmatprep.subr.mxu0 0.0
  %5127 = vmatpush1.msra.mxu0 0.0
  %5128 = vmatprep.subr.mxu0 0.0
  %5129 = vmatpush1.msra.mxu0 0.0
  %5130 = vmatprep.subr.mxu0 0.0
  %5131 = vmatpush1.msra.mxu0 0.0
  %5132 = vmatprep.subr.mxu0 0.0
  %5133 = vmatpush1.msra.mxu0 0.0
  %5134 = vmatprep.subr.mxu0 0.0
  %5135 = vmatpush1.msra.mxu0 0.0
  %5136 = vmatprep.subr.mxu0 0.0
  %5137 = vmatpush1.msra.mxu0 0.0
  %5138 = vmatprep.subr.mxu0 0.0
  %5139 = vmatpush1.msra.mxu0 0.0
  %5140 = vmatprep.subr.mxu0 0.0
  %5141 = vmatpush1.msra.mxu0 0.0
  %5142 = vmatprep.subr.mxu0 0.0
  %5143 = vmatpush1.msra.mxu0 0.0
  %5144 = vmatprep.subr.mxu0 0.0
  %5145 = vmatpush1.msra.mxu0 0.0
  %5146 = vmatprep.subr.mxu0 0.0
  %5147 = vmatpush1.msra.mxu0 0.0
  %5148 = vmatprep.subr.mxu0 0.0
  %5149 = vmatpush1.msra.mxu0 %v5111
  %5150 = vmatprep.subr.mxu0 0.0
  %5151 = vmatpush1.msra.mxu0 %v5110
  %5152 = vmatprep.subr.mxu0 0.0
  %5153 = vmatpush1.msra.mxu0 %v5109
  %5154 = vmatprep.subr.mxu0 0.0
  %5155 = vmatpush1.msra.mxu0 %v5108
  %5156 = vmatprep.subr.mxu0 0.0
  %5157 = vmatpush2.msra.mxu0 0.0
  %5158 = vmatprep.subr.mxu0 0.0
  %5159 = vmatpush2.msra.mxu0 0.0
  %5160 = vmatprep.subr.mxu0 0.0
  %5161 = vmatpush2.msra.mxu0 0.0
  %5162 = vmatprep.subr.mxu0 0.0
  %5163 = vmatpush2.msra.mxu0 0.0
  %5164 = vmatprep.subr.mxu0 0.0
  %5165 = vmatpush2.msra.mxu0 0.0
  %5166 = vmatprep.subr.mxu0 0.0
  %5167 = vmatpush2.msra.mxu0 0.0
  %5168 = vmatprep.subr.mxu0 0.0
  %5169 = vmatpush2.msra.mxu0 0.0
  %5170 = vmatprep.subr.mxu0 0.0
  %5171 = vmatpush2.msra.mxu0 0.0
  %5172 = vmatprep.subr.mxu0 0.0
  %5173 = vmatpush2.msra.mxu0 0.0
  %5174 = vmatprep.subr.mxu0 0.0
  %5175 = vmatpush2.msra.mxu0 0.0
  %5176 = vmatprep.subr.mxu0 0.0
  %5177 = vmatpush2.msra.mxu0 0.0
  %5178 = vmatprep.subr.mxu0 0.0
  %5179 = vmatpush2.msra.mxu0 0.0
  %5180 = vmatprep.subr.mxu0 0.0
  %5181 = vmatpush2.msra.mxu0 0.0
  %5182 = vmatprep.subr.mxu0 0.0
  %5183 = vmatpush2.msra.mxu0 0.0
  %5184 = vmatprep.subr.mxu0 0.0
  %5185 = vmatpush2.msra.mxu0 0.0
  %5186 = vmatprep.subr.mxu0 0.0
  %5187 = vmatpush2.msra.mxu0 0.0
  %5188 = vmatprep.mubr.f32.mxu0 0.0
  %5189 = vmatmul.mubr.f32.gmra.mxu0 %v5113
  %v5190 = vpop.f32.mrf.mxu0
  %v5191 = vadd.f32 0.0, %v5190
  %v5192 = vpop.f32.mrf.mxu0
  %5193 = vmatprep.mubr.f32.mxu0 0.0
  %5194 = vmatmul.mubr.f32.gmra.mxu0 %v5116
  %v5195 = vpop.f32.mrf.mxu0
  %v5196 = vadd.f32 0.0, %v5195
  %v5197 = vpop.f32.mrf.mxu0
  %5198 = vmatprep.mubr.f32.mxu0 0.0
  %5199 = vmatmul.mubr.f32.gmra.mxu0 %v5119
  %v5200 = vpop.f32.mrf.mxu0
  %v5201 = vadd.f32 0.0, %v5200
  %v5202 = vpop.f32.mrf.mxu0
  %5203 = vmatprep.mubr.f32.mxu0 0.0
  %5204 = vmatmul.mubr.f32.gmra.mxu0 %v5122
  %v5205 = vpop.f32.mrf.mxu0
  %v5206 = vadd.f32 0.0, %v5205
  %v5207 = vpop.f32.mrf.mxu0
  %5208 = vdwg.mxu0
  %5209 = vst.msk [vmem:[#allocation2] sm:$0xff] %vm149, %v5191
  %5210 = vst.msk [vmem:[#allocation2 + $0x8] sm:$0xff] %vm149, %v5196
  %5211 = vst.msk [vmem:[#allocation2 + $0x10] sm:$0xff] %vm149, %v5201
  %5212 = vst.msk [vmem:[#allocation2 + $0x18] sm:$0xff] %vm149, %v5206
  %v5213 = vld [vmem:[%s2 + $0x440] sm:$0xff]
  %v5214 = vld [vmem:[%s2 + $0x448] sm:$0xff]
  %v5215 = vld [vmem:[%s2 + $0x450] sm:$0xff]
  %v5216 = vld [vmem:[%s2 + $0x458] sm:$0xff]
  %5217 = vmatprep.subr.mxu0 0.0
  %5218 = vmatpush1.msra.mxu0 0.0
  %5219 = vmatprep.subr.mxu0 0.0
  %5220 = vmatpush1.msra.mxu0 0.0
  %5221 = vmatprep.subr.mxu0 0.0
  %5222 = vmatpush1.msra.mxu0 0.0
  %5223 = vmatprep.subr.mxu0 0.0
  %5224 = vmatpush1.msra.mxu0 0.0
  %5225 = vmatprep.subr.mxu0 0.0
  %5226 = vmatpush1.msra.mxu0 0.0
  %5227 = vmatprep.subr.mxu0 0.0
  %5228 = vmatpush1.msra.mxu0 0.0
  %5229 = vmatprep.subr.mxu0 0.0
  %5230 = vmatpush1.msra.mxu0 0.0
  %5231 = vmatprep.subr.mxu0 0.0
  %5232 = vmatpush1.msra.mxu0 0.0
  %5233 = vmatprep.subr.mxu0 0.0
  %5234 = vmatpush1.msra.mxu0 0.0
  %5235 = vmatprep.subr.mxu0 0.0
  %5236 = vmatpush1.msra.mxu0 0.0
  %5237 = vmatprep.subr.mxu0 0.0
  %5238 = vmatpush1.msra.mxu0 0.0
  %5239 = vmatprep.subr.mxu0 0.0
  %5240 = vmatpush1.msra.mxu0 0.0
  %5241 = vmatprep.subr.mxu0 0.0
  %5242 = vmatpush1.msra.mxu0 %v5216
  %5243 = vmatprep.subr.mxu0 0.0
  %5244 = vmatpush1.msra.mxu0 %v5215
  %5245 = vmatprep.subr.mxu0 0.0
  %5246 = vmatpush1.msra.mxu0 %v5214
  %5247 = vmatprep.subr.mxu0 0.0
  %5248 = vmatpush1.msra.mxu0 %v5213
  %5249 = vmatprep.subr.mxu0 0.0
  %5250 = vmatpush2.msra.mxu0 0.0
  %5251 = vmatprep.subr.mxu0 0.0
  %5252 = vmatpush2.msra.mxu0 0.0
  %5253 = vmatprep.subr.mxu0 0.0
  %5254 = vmatpush2.msra.mxu0 0.0
  %5255 = vmatprep.subr.mxu0 0.0
  %5256 = vmatpush2.msra.mxu0 0.0
  %5257 = vmatprep.subr.mxu0 0.0
  %5258 = vmatpush2.msra.mxu0 0.0
  %5259 = vmatprep.subr.mxu0 0.0
  %5260 = vmatpush2.msra.mxu0 0.0
  %5261 = vmatprep.subr.mxu0 0.0
  %5262 = vmatpush2.msra.mxu0 0.0
  %5263 = vmatprep.subr.mxu0 0.0
  %5264 = vmatpush2.msra.mxu0 0.0
  %5265 = vmatprep.subr.mxu0 0.0
  %5266 = vmatpush2.msra.mxu0 0.0
  %5267 = vmatprep.subr.mxu0 0.0
  %5268 = vmatpush2.msra.mxu0 0.0
  %5269 = vmatprep.subr.mxu0 0.0
  %5270 = vmatpush2.msra.mxu0 0.0
  %5271 = vmatprep.subr.mxu0 0.0
  %5272 = vmatpush2.msra.mxu0 0.0
  %5273 = vmatprep.subr.mxu0 0.0
  %5274 = vmatpush2.msra.mxu0 0.0
  %5275 = vmatprep.subr.mxu0 0.0
  %5276 = vmatpush2.msra.mxu0 0.0
  %5277 = vmatprep.subr.mxu0 0.0
  %5278 = vmatpush2.msra.mxu0 0.0
  %5279 = vmatprep.subr.mxu0 0.0
  %5280 = vmatpush2.msra.mxu0 0.0
  %5281 = vmatprep.mubr.f32.mxu0 0.0
  %5282 = vmatmul.mubr.f32.gmra.mxu0 %v5113
  %v5283 = vpop.f32.mrf.mxu0
  %v5284 = vadd.f32 0.0, %v5283
  %v5285 = vpop.f32.mrf.mxu0
  %5286 = vmatprep.mubr.f32.mxu0 0.0
  %5287 = vmatmul.mubr.f32.gmra.mxu0 %v5116
  %v5288 = vpop.f32.mrf.mxu0
  %v5289 = vadd.f32 0.0, %v5288
  %v5290 = vpop.f32.mrf.mxu0
  %5291 = vmatprep.mubr.f32.mxu0 0.0
  %5292 = vmatmul.mubr.f32.gmra.mxu0 %v5119
  %v5293 = vpop.f32.mrf.mxu0
  %v5294 = vadd.f32 0.0, %v5293
  %v5295 = vpop.f32.mrf.mxu0
  %5296 = vmatprep.mubr.f32.mxu0 0.0
  %5297 = vmatmul.mubr.f32.gmra.mxu0 %v5122
  %v5298 = vpop.f32.mrf.mxu0
  %v5299 = vadd.f32 0.0, %v5298
  %v5300 = vpop.f32.mrf.mxu0
  %5301 = vdwg.mxu0
  %5302 = vst.msk [vmem:[#allocation2 + $0x20] sm:$0xff] %vm149, %v5284
  %5303 = vst.msk [vmem:[#allocation2 + $0x28] sm:$0xff] %vm149, %v5289
  %5304 = vst.msk [vmem:[#allocation2 + $0x30] sm:$0xff] %vm149, %v5294
  %5305 = vst.msk [vmem:[#allocation2 + $0x38] sm:$0xff] %vm149, %v5299
  %v5306 = vld [vmem:[%s2 + $0x460] sm:$0xff]
  %v5307 = vld [vmem:[%s2 + $0x468] sm:$0xff]
  %v5308 = vld [vmem:[%s2 + $0x470] sm:$0xff]
  %v5309 = vld [vmem:[%s2 + $0x478] sm:$0xff]
  %5310 = vmatprep.subr.mxu0 0.0
  %5311 = vmatpush1.msra.mxu0 0.0
  %5312 = vmatprep.subr.mxu0 0.0
  %5313 = vmatpush1.msra.mxu0 0.0
  %5314 = vmatprep.subr.mxu0 0.0
  %5315 = vmatpush1.msra.mxu0 0.0
  %5316 = vmatprep.subr.mxu0 0.0
  %5317 = vmatpush1.msra.mxu0 0.0
  %5318 = vmatprep.subr.mxu0 0.0
  %5319 = vmatpush1.msra.mxu0 0.0
  %5320 = vmatprep.subr.mxu0 0.0
  %5321 = vmatpush1.msra.mxu0 0.0
  %5322 = vmatprep.subr.mxu0 0.0
  %5323 = vmatpush1.msra.mxu0 0.0
  %5324 = vmatprep.subr.mxu0 0.0
  %5325 = vmatpush1.msra.mxu0 0.0
  %5326 = vmatprep.subr.mxu0 0.0
  %5327 = vmatpush1.msra.mxu0 0.0
  %5328 = vmatprep.subr.mxu0 0.0
  %5329 = vmatpush1.msra.mxu0 0.0
  %5330 = vmatprep.subr.mxu0 0.0
  %5331 = vmatpush1.msra.mxu0 0.0
  %5332 = vmatprep.subr.mxu0 0.0
  %5333 = vmatpush1.msra.mxu0 0.0
  %5334 = vmatprep.subr.mxu0 0.0
  %5335 = vmatpush1.msra.mxu0 %v5309
  %5336 = vmatprep.subr.mxu0 0.0
  %5337 = vmatpush1.msra.mxu0 %v5308
  %5338 = vmatprep.subr.mxu0 0.0
  %5339 = vmatpush1.msra.mxu0 %v5307
  %5340 = vmatprep.subr.mxu0 0.0
  %5341 = vmatpush1.msra.mxu0 %v5306
  %5342 = vmatprep.subr.mxu0 0.0
  %5343 = vmatpush2.msra.mxu0 0.0
  %5344 = vmatprep.subr.mxu0 0.0
  %5345 = vmatpush2.msra.mxu0 0.0
  %5346 = vmatprep.subr.mxu0 0.0
  %5347 = vmatpush2.msra.mxu0 0.0
  %5348 = vmatprep.subr.mxu0 0.0
  %5349 = vmatpush2.msra.mxu0 0.0
  %5350 = vmatprep.subr.mxu0 0.0
  %5351 = vmatpush2.msra.mxu0 0.0
  %5352 = vmatprep.subr.mxu0 0.0
  %5353 = vmatpush2.msra.mxu0 0.0
  %5354 = vmatprep.subr.mxu0 0.0
  %5355 = vmatpush2.msra.mxu0 0.0
  %5356 = vmatprep.subr.mxu0 0.0
  %5357 = vmatpush2.msra.mxu0 0.0
  %5358 = vmatprep.subr.mxu0 0.0
  %5359 = vmatpush2.msra.mxu0 0.0
  %5360 = vmatprep.subr.mxu0 0.0
  %5361 = vmatpush2.msra.mxu0 0.0
  %5362 = vmatprep.subr.mxu0 0.0
  %5363 = vmatpush2.msra.mxu0 0.0
  %5364 = vmatprep.subr.mxu0 0.0
  %5365 = vmatpush2.msra.mxu0 0.0
  %5366 = vmatprep.subr.mxu0 0.0
  %5367 = vmatpush2.msra.mxu0 0.0
  %5368 = vmatprep.subr.mxu0 0.0
  %5369 = vmatpush2.msra.mxu0 0.0
  %5370 = vmatprep.subr.mxu0 0.0
  %5371 = vmatpush2.msra.mxu0 0.0
  %5372 = vmatprep.subr.mxu0 0.0
  %5373 = vmatpush2.msra.mxu0 0.0
  %5374 = vmatprep.mubr.f32.mxu0 0.0
  %5375 = vmatmul.mubr.f32.gmra.mxu0 %v5113
  %v5376 = vpop.f32.mrf.mxu0
  %v5377 = vadd.f32 0.0, %v5376
  %v5378 = vpop.f32.mrf.mxu0
  %5379 = vmatprep.mubr.f32.mxu0 0.0
  %5380 = vmatmul.mubr.f32.gmra.mxu0 %v5116
  %v5381 = vpop.f32.mrf.mxu0
  %v5382 = vadd.f32 0.0, %v5381
  %v5383 = vpop.f32.mrf.mxu0
  %5384 = vmatprep.mubr.f32.mxu0 0.0
  %5385 = vmatmul.mubr.f32.gmra.mxu0 %v5119
  %v5386 = vpop.f32.mrf.mxu0
  %v5387 = vadd.f32 0.0, %v5386
  %v5388 = vpop.f32.mrf.mxu0
  %5389 = vmatprep.mubr.f32.mxu0 0.0
  %5390 = vmatmul.mubr.f32.gmra.mxu0 %v5122
  %v5391 = vpop.f32.mrf.mxu0
  %v5392 = vadd.f32 0.0, %v5391
  %v5393 = vpop.f32.mrf.mxu0
  %5394 = vdwg.mxu0
  %5395 = vst.msk [vmem:[#allocation2 + $0x40] sm:$0xff] %vm149, %v5377
  %5396 = vst.msk [vmem:[#allocation2 + $0x48] sm:$0xff] %vm149, %v5382
  %5397 = vst.msk [vmem:[#allocation2 + $0x50] sm:$0xff] %vm149, %v5387
  %5398 = vst.msk [vmem:[#allocation2 + $0x58] sm:$0xff] %vm149, %v5392
  %v5399 = vld [vmem:[#allocation2] sm:$0xff]
  %v5400 = vld [vmem:[#allocation2 + $0x8] sm:$0xff]
  %v5401 = vld [vmem:[#allocation2 + $0x10] sm:$0xff]
  %v5402 = vld [vmem:[#allocation2 + $0x18] sm:$0xff]
  %v5403 = vld [vmem:[#allocation2 + $0x20] sm:$0xff]
  %v5404 = vld [vmem:[#allocation2 + $0x28] sm:$0xff]
  %v5405 = vld [vmem:[#allocation2 + $0x30] sm:$0xff]
  %v5406 = vld [vmem:[#allocation2 + $0x38] sm:$0xff]
  %v5407 = vld [vmem:[#allocation2 + $0x40] sm:$0xff]
  %v5408 = vld [vmem:[#allocation2 + $0x48] sm:$0xff]
  %v5409 = vld [vmem:[#allocation2 + $0x50] sm:$0xff]
  %v5410 = vld [vmem:[#allocation2 + $0x58] sm:$0xff]
  %v5411 = vld [vmem:[%s1 + $0x1e0] sm:$0xff]
  %v5412 = vld [vmem:[%s1 + $0x1f0] sm:$0xff]
  %v5413 = vld [vmem:[%s1 + $0x200] sm:$0xff]
  %v5414 = vld [vmem:[%s1 + $0x210] sm:$0xff]
  %v5415 = vld [vmem:[%s1 + $0x220] sm:$0xff]
  %v5416 = vld [vmem:[%s1 + $0x230] sm:$0xff]
  %v5417 = vld [vmem:[%s1 + $0x240] sm:$0xff]
  %v5418 = vld [vmem:[%s1 + $0x250] sm:$0xff]
  %v5420 = vsel %vm4741, %v5411, 0
  %v5423 = vsel %vm4741, %v5412, 0
  %v5426 = vsel %vm4741, %v5413, 0
  %v5429 = vsel %vm4741, %v5414, 0
  %v5432 = vsel %vm4741, %v5415, 0
  %v5435 = vsel %vm4741, %v5416, 0
  %v5438 = vsel %vm4741, %v5417, 0
  %v5441 = vsel %vm4741, %v5418, 0
  %5443 = vmatprep.subr.mxu0 0.0
  %5444 = vmatpush1.msra.mxu0 0.0
  %5445 = vmatprep.subr.mxu0 0.0
  %5446 = vmatpush1.msra.mxu0 0.0
  %5447 = vmatprep.subr.mxu0 0.0
  %5448 = vmatpush1.msra.mxu0 0.0
  %5449 = vmatprep.subr.mxu0 0.0
  %5450 = vmatpush1.msra.mxu0 0.0
  %5451 = vmatprep.subr.mxu0 0.0
  %5452 = vmatpush1.msra.mxu0 %v5410
  %5453 = vmatprep.subr.mxu0 0.0
  %5454 = vmatpush1.msra.mxu0 %v5409
  %5455 = vmatprep.subr.mxu0 0.0
  %5456 = vmatpush1.msra.mxu0 %v5408
  %5457 = vmatprep.subr.mxu0 0.0
  %5458 = vmatpush1.msra.mxu0 %v5407
  %5459 = vmatprep.subr.mxu0 0.0
  %5460 = vmatpush1.msra.mxu0 %v5406
  %5461 = vmatprep.subr.mxu0 0.0
  %5462 = vmatpush1.msra.mxu0 %v5405
  %5463 = vmatprep.subr.mxu0 0.0
  %5464 = vmatpush1.msra.mxu0 %v5404
  %5465 = vmatprep.subr.mxu0 0.0
  %5466 = vmatpush1.msra.mxu0 %v5403
  %5467 = vmatprep.subr.mxu0 0.0
  %5468 = vmatpush1.msra.mxu0 %v5402
  %5469 = vmatprep.subr.mxu0 0.0
  %5470 = vmatpush1.msra.mxu0 %v5401
  %5471 = vmatprep.subr.mxu0 0.0
  %5472 = vmatpush1.msra.mxu0 %v5400
  %5473 = vmatprep.subr.mxu0 0.0
  %5474 = vmatpush1.msra.mxu0 %v5399
  %5475 = vmatprep.subr.mxu0 0.0
  %5476 = vmatpush2.msra.mxu0 0.0
  %5477 = vmatprep.subr.mxu0 0.0
  %5478 = vmatpush2.msra.mxu0 0.0
  %5479 = vmatprep.subr.mxu0 0.0
  %5480 = vmatpush2.msra.mxu0 0.0
  %5481 = vmatprep.subr.mxu0 0.0
  %5482 = vmatpush2.msra.mxu0 0.0
  %5483 = vmatprep.subr.mxu0 0.0
  %5484 = vmatpush2.msra.mxu0 0.0
  %5485 = vmatprep.subr.mxu0 0.0
  %5486 = vmatpush2.msra.mxu0 0.0
  %5487 = vmatprep.subr.mxu0 0.0
  %5488 = vmatpush2.msra.mxu0 0.0
  %5489 = vmatprep.subr.mxu0 0.0
  %5490 = vmatpush2.msra.mxu0 0.0
  %5491 = vmatprep.subr.mxu0 0.0
  %5492 = vmatpush2.msra.mxu0 0.0
  %5493 = vmatprep.subr.mxu0 0.0
  %5494 = vmatpush2.msra.mxu0 0.0
  %5495 = vmatprep.subr.mxu0 0.0
  %5496 = vmatpush2.msra.mxu0 0.0
  %5497 = vmatprep.subr.mxu0 0.0
  %5498 = vmatpush2.msra.mxu0 0.0
  %5499 = vmatprep.subr.mxu0 0.0
  %5500 = vmatpush2.msra.mxu0 0.0
  %5501 = vmatprep.subr.mxu0 0.0
  %5502 = vmatpush2.msra.mxu0 0.0
  %5503 = vmatprep.subr.mxu0 0.0
  %5504 = vmatpush2.msra.mxu0 0.0
  %5505 = vmatprep.subr.mxu0 0.0
  %5506 = vmatpush2.msra.mxu0 0.0
  %5507 = vmatprep.mubr.f32.mxu0 0.0
  %5508 = vmatmul.mubr.f32.gmra.mxu0 %v5420
  %v5509 = vpop.f32.mrf.mxu0
  %v5510 = vadd.f32 0.0, %v5509
  %v5511 = vpop.f32.mrf.mxu0
  %5512 = vmatprep.mubr.f32.mxu0 0.0
  %5513 = vmatmul.mubr.f32.gmra.mxu0 %v5423
  %v5514 = vpop.f32.mrf.mxu0
  %v5515 = vadd.f32 0.0, %v5514
  %v5516 = vpop.f32.mrf.mxu0
  %5517 = vmatprep.mubr.f32.mxu0 0.0
  %5518 = vmatmul.mubr.f32.gmra.mxu0 %v5426
  %v5519 = vpop.f32.mrf.mxu0
  %v5520 = vadd.f32 0.0, %v5519
  %v5521 = vpop.f32.mrf.mxu0
  %5522 = vmatprep.mubr.f32.mxu0 0.0
  %5523 = vmatmul.mubr.f32.gmra.mxu0 %v5429
  %v5524 = vpop.f32.mrf.mxu0
  %v5525 = vadd.f32 0.0, %v5524
  %v5526 = vpop.f32.mrf.mxu0
  %5527 = vmatprep.mubr.f32.mxu0 0.0
  %5528 = vmatmul.mubr.f32.gmra.mxu0 %v5432
  %v5529 = vpop.f32.mrf.mxu0
  %v5530 = vadd.f32 0.0, %v5529
  %v5531 = vpop.f32.mrf.mxu0
  %5532 = vmatprep.mubr.f32.mxu0 0.0
  %5533 = vmatmul.mubr.f32.gmra.mxu0 %v5435
  %v5534 = vpop.f32.mrf.mxu0
  %v5535 = vadd.f32 0.0, %v5534
  %v5536 = vpop.f32.mrf.mxu0
  %5537 = vmatprep.mubr.f32.mxu0 0.0
  %5538 = vmatmul.mubr.f32.gmra.mxu0 %v5438
  %v5539 = vpop.f32.mrf.mxu0
  %v5540 = vadd.f32 0.0, %v5539
  %v5541 = vpop.f32.mrf.mxu0
  %5542 = vmatprep.mubr.f32.mxu0 0.0
  %5543 = vmatmul.mubr.f32.gmra.mxu0 %v5441
  %v5544 = vpop.f32.mrf.mxu0
  %v5545 = vadd.f32 0.0, %v5544
  %v5546 = vpop.f32.mrf.mxu0
  %5547 = vdwg.mxu0
  %v5548 = vld [vmem:[%s3 + $0xb0] sm:$0xff]
  %v5549 = vld [vmem:[%s3 + $0xb8] sm:$0xff]
  %v5550 = vld [vmem:[%s3 + $0xc0] sm:$0xff]
  %v5551 = vld [vmem:[%s3 + $0xc8] sm:$0xff]
  %v5552 = vld [vmem:[%s3 + $0xd0] sm:$0xff]
  %v5553 = vld [vmem:[%s3 + $0xd8] sm:$0xff]
  %v5554 = vld [vmem:[%s3 + $0xe0] sm:$0xff]
  %v5555 = vld [vmem:[%s3 + $0xe8] sm:$0xff]
  %v5556 = vsel %vm149, %v5510, 0.0
  %5557 = vadd.xlane.f32.xlu0 %v5556
  %v5558 = vpop.xlane.xlu0 %5557
  %v5559 = vsel %vm149, %v5515, 0.0
  %5560 = vadd.xlane.f32.xlu0 %v5559
  %v5561 = vpop.xlane.xlu0 %5560
  %v5562 = vsel %vm149, %v5520, 0.0
  %5563 = vadd.xlane.f32.xlu0 %v5562
  %v5564 = vpop.xlane.xlu0 %5563
  %v5565 = vsel %vm149, %v5525, 0.0
  %5566 = vadd.xlane.f32.xlu0 %v5565
  %v5567 = vpop.xlane.xlu0 %5566
  %v5568 = vsel %vm149, %v5530, 0.0
  %5569 = vadd.xlane.f32.xlu0 %v5568
  %v5570 = vpop.xlane.xlu0 %5569
  %v5571 = vsel %vm149, %v5535, 0.0
  %5572 = vadd.xlane.f32.xlu0 %v5571
  %v5573 = vpop.xlane.xlu0 %5572
  %v5574 = vsel %vm149, %v5540, 0.0
  %5575 = vadd.xlane.f32.xlu0 %v5574
  %v5576 = vpop.xlane.xlu0 %5575
  %v5577 = vsel %vm149, %v5545, 0.0
  %5578 = vadd.xlane.f32.xlu0 %v5577
  %v5579 = vpop.xlane.xlu0 %5578
  %v5580 = vmul.f32 %v5510, %v5510
  %v5581 = vmul.f32 %v5515, %v5515
  %v5582 = vmul.f32 %v5520, %v5520
  %v5583 = vmul.f32 %v5525, %v5525
  %v5584 = vmul.f32 %v5530, %v5530
  %v5585 = vmul.f32 %v5535, %v5535
  %v5586 = vmul.f32 %v5540, %v5540
  %v5587 = vmul.f32 %v5545, %v5545
  %v5588 = vsel %vm149, %v5580, 0.0
  %5589 = vadd.xlane.f32.xlu0 %v5588
  %v5590 = vpop.xlane.xlu0 %5589
  %v5591 = vsel %vm149, %v5581, 0.0
  %5592 = vadd.xlane.f32.xlu0 %v5591
  %v5593 = vpop.xlane.xlu0 %5592
  %v5594 = vsel %vm149, %v5582, 0.0
  %5595 = vadd.xlane.f32.xlu0 %v5594
  %v5596 = vpop.xlane.xlu0 %5595
  %v5597 = vsel %vm149, %v5583, 0.0
  %5598 = vadd.xlane.f32.xlu0 %v5597
  %v5599 = vpop.xlane.xlu0 %5598
  %v5600 = vsel %vm149, %v5584, 0.0
  %5601 = vadd.xlane.f32.xlu0 %v5600
  %v5602 = vpop.xlane.xlu0 %5601
  %v5603 = vsel %vm149, %v5585, 0.0
  %5604 = vadd.xlane.f32.xlu0 %v5603
  %v5605 = vpop.xlane.xlu0 %5604
  %v5606 = vsel %vm149, %v5586, 0.0
  %5607 = vadd.xlane.f32.xlu0 %v5606
  %v5608 = vpop.xlane.xlu0 %5607
  %v5609 = vsel %vm149, %v5587, 0.0
  %5610 = vadd.xlane.f32.xlu0 %v5609
  %v5611 = vpop.xlane.xlu0 %5610
  %v5612 = vsel %vm1436, %v5558, %v5590
  %v5613 = vsel %vm1436, %v5561, %v5593
  %v5614 = vsel %vm1436, %v5564, %v5596
  %v5615 = vsel %vm1436, %v5567, %v5599
  %v5616 = vsel %vm1436, %v5570, %v5602
  %v5617 = vsel %vm1436, %v5573, %v5605
  %v5618 = vsel %vm1436, %v5576, %v5608
  %v5619 = vsel %vm1436, %v5579, %v5611
  %v5621 = vsel %vm149, %v5548, 0
  %v5624 = vsel %vm149, %v5549, 0
  %v5627 = vsel %vm149, %v5550, 0
  %v5630 = vsel %vm149, %v5551, 0
  %v5633 = vsel %vm149, %v5552, 0
  %v5636 = vsel %vm149, %v5553, 0
  %v5639 = vsel %vm149, %v5554, 0
  %v5642 = vsel %vm149, %v5555, 0
  %5644 = vmatprep.subr.mxu0 0.0
  %5645 = vmatpush1.msra.mxu0 0.0
  %5646 = vmatprep.subr.mxu0 0.0
  %5647 = vmatpush1.msra.mxu0 0.0
  %5648 = vmatprep.subr.mxu0 0.0
  %5649 = vmatpush1.msra.mxu0 0.0
  %5650 = vmatprep.subr.mxu0 0.0
  %5651 = vmatpush1.msra.mxu0 0.0
  %5652 = vmatprep.subr.mxu0 0.0
  %5653 = vmatpush1.msra.mxu0 0.0
  %5654 = vmatprep.subr.mxu0 0.0
  %5655 = vmatpush1.msra.mxu0 0.0
  %5656 = vmatprep.subr.mxu0 0.0
  %5657 = vmatpush1.msra.mxu0 0.0
  %5658 = vmatprep.subr.mxu0 0.0
  %5659 = vmatpush1.msra.mxu0 0.0
  %5660 = vmatprep.subr.mxu0 0.0
  %5661 = vmatpush1.msra.mxu0 %v5619
  %5662 = vmatprep.subr.mxu0 0.0
  %5663 = vmatpush1.msra.mxu0 %v5618
  %5664 = vmatprep.subr.mxu0 0.0
  %5665 = vmatpush1.msra.mxu0 %v5617
  %5666 = vmatprep.subr.mxu0 0.0
  %5667 = vmatpush1.msra.mxu0 %v5616
  %5668 = vmatprep.subr.mxu0 0.0
  %5669 = vmatpush1.msra.mxu0 %v5615
  %5670 = vmatprep.subr.mxu0 0.0
  %5671 = vmatpush1.msra.mxu0 %v5614
  %5672 = vmatprep.subr.mxu0 0.0
  %5673 = vmatpush1.msra.mxu0 %v5613
  %5674 = vmatprep.subr.mxu0 0.0
  %5675 = vmatpush1.msra.mxu0 %v5612
  %5676 = vmatprep.subr.mxu0 0.0
  %5677 = vmatpush2.msra.mxu0 0.0
  %5678 = vmatprep.subr.mxu0 0.0
  %5679 = vmatpush2.msra.mxu0 0.0
  %5680 = vmatprep.subr.mxu0 0.0
  %5681 = vmatpush2.msra.mxu0 0.0
  %5682 = vmatprep.subr.mxu0 0.0
  %5683 = vmatpush2.msra.mxu0 0.0
  %5684 = vmatprep.subr.mxu0 0.0
  %5685 = vmatpush2.msra.mxu0 0.0
  %5686 = vmatprep.subr.mxu0 0.0
  %5687 = vmatpush2.msra.mxu0 0.0
  %5688 = vmatprep.subr.mxu0 0.0
  %5689 = vmatpush2.msra.mxu0 0.0
  %5690 = vmatprep.subr.mxu0 0.0
  %5691 = vmatpush2.msra.mxu0 0.0
  %5692 = vmatprep.subr.mxu0 0.0
  %5693 = vmatpush2.msra.mxu0 0.0
  %5694 = vmatprep.subr.mxu0 0.0
  %5695 = vmatpush2.msra.mxu0 0.0
  %5696 = vmatprep.subr.mxu0 0.0
  %5697 = vmatpush2.msra.mxu0 0.0
  %5698 = vmatprep.subr.mxu0 0.0
  %5699 = vmatpush2.msra.mxu0 0.0
  %5700 = vmatprep.subr.mxu0 0.0
  %5701 = vmatpush2.msra.mxu0 0.0
  %5702 = vmatprep.subr.mxu0 0.0
  %5703 = vmatpush2.msra.mxu0 0.0
  %5704 = vmatprep.subr.mxu0 0.0
  %5705 = vmatpush2.msra.mxu0 0.0
  %5706 = vmatprep.subr.mxu0 0.0
  %5707 = vmatpush2.msra.mxu0 0.0
  %5708 = vmatprep.mubr.f32.mxu0 0.0
  %5709 = vmatmul.mubr.f32.gmra.mxu0 %v5621
  %v5710 = vpop.f32.mrf.mxu0
  %v5711 = vadd.f32 0.0, %v5710
  %v5712 = vpop.f32.mrf.mxu0
  %5713 = vmatprep.mubr.f32.mxu0 0.0
  %5714 = vmatmul.mubr.f32.gmra.mxu0 %v5624
  %v5715 = vpop.f32.mrf.mxu0
  %v5716 = vadd.f32 0.0, %v5715
  %v5717 = vpop.f32.mrf.mxu0
  %5718 = vmatprep.mubr.f32.mxu0 0.0
  %5719 = vmatmul.mubr.f32.gmra.mxu0 %v5627
  %v5720 = vpop.f32.mrf.mxu0
  %v5721 = vadd.f32 0.0, %v5720
  %v5722 = vpop.f32.mrf.mxu0
  %5723 = vmatprep.mubr.f32.mxu0 0.0
  %5724 = vmatmul.mubr.f32.gmra.mxu0 %v5630
  %v5725 = vpop.f32.mrf.mxu0
  %v5726 = vadd.f32 0.0, %v5725
  %v5727 = vpop.f32.mrf.mxu0
  %5728 = vmatprep.mubr.f32.mxu0 0.0
  %5729 = vmatmul.mubr.f32.gmra.mxu0 %v5633
  %v5730 = vpop.f32.mrf.mxu0
  %v5731 = vadd.f32 0.0, %v5730
  %v5732 = vpop.f32.mrf.mxu0
  %5733 = vmatprep.mubr.f32.mxu0 0.0
  %5734 = vmatmul.mubr.f32.gmra.mxu0 %v5636
  %v5735 = vpop.f32.mrf.mxu0
  %v5736 = vadd.f32 0.0, %v5735
  %v5737 = vpop.f32.mrf.mxu0
  %5738 = vmatprep.mubr.f32.mxu0 0.0
  %5739 = vmatmul.mubr.f32.gmra.mxu0 %v5639
  %v5740 = vpop.f32.mrf.mxu0
  %v5741 = vadd.f32 0.0, %v5740
  %v5742 = vpop.f32.mrf.mxu0
  %5743 = vmatprep.mubr.f32.mxu0 0.0
  %5744 = vmatmul.mubr.f32.gmra.mxu0 %v5642
  %v5745 = vpop.f32.mrf.mxu0
  %v5746 = vadd.f32 0.0, %v5745
  %v5747 = vpop.f32.mrf.mxu0
  %5748 = vdwg.mxu0
  %v5749 = vmul.f32 %v5711, %v5711
  %v5750 = vmul.f32 %v5716, %v5716
  %v5751 = vmul.f32 %v5721, %v5721
  %v5752 = vmul.f32 %v5726, %v5726
  %v5753 = vmul.f32 %v5731, %v5731
  %v5754 = vmul.f32 %v5736, %v5736
  %v5755 = vmul.f32 %v5741, %v5741
  %v5756 = vmul.f32 %v5746, %v5746
  %5765 = vrot.lane.b32.xlu0 %v5749, 1
  %v5766 = vpop.permute.xlu0 %5765
  %5767 = vrot.lane.b32.xlu0 %v5750, 1
  %v5768 = vpop.permute.xlu0 %5767
  %5769 = vrot.lane.b32.xlu0 %v5751, 1
  %v5770 = vpop.permute.xlu0 %5769
  %5771 = vrot.lane.b32.xlu0 %v5752, 1
  %v5772 = vpop.permute.xlu0 %5771
  %5773 = vrot.lane.b32.xlu0 %v5753, 1
  %v5774 = vpop.permute.xlu0 %5773
  %5775 = vrot.lane.b32.xlu0 %v5754, 1
  %v5776 = vpop.permute.xlu0 %5775
  %5777 = vrot.lane.b32.xlu0 %v5755, 1
  %v5778 = vpop.permute.xlu0 %5777
  %5779 = vrot.lane.b32.xlu0 %v5756, 1
  %v5780 = vpop.permute.xlu0 %5779
  %v5789 = vsub.f32 %v5711, %v5766
  %v5790 = vsub.f32 %v5716, %v5768
  %v5791 = vsub.f32 %v5721, %v5770
  %v5792 = vsub.f32 %v5726, %v5772
  %v5793 = vsub.f32 %v5731, %v5774
  %v5794 = vsub.f32 %v5736, %v5776
  %v5795 = vsub.f32 %v5741, %v5778
  %v5796 = vsub.f32 %v5746, %v5780
  %v5797 = vmax.f32 %v5789, 0.0
  %v5798 = vmax.f32 %v5790, 0.0
  %v5799 = vmax.f32 %v5791, 0.0
  %v5800 = vmax.f32 %v5792, 0.0
  %v5801 = vmax.f32 %v5793, 0.0
  %v5802 = vmax.f32 %v5794, 0.0
  %v5803 = vmax.f32 %v5795, 0.0
  %v5804 = vmax.f32 %v5796, 0.0
  %v5805 = vld [vmem:[%s4] sm:$0xff]
  %v5806 = vld [vmem:[%s4 + $0x8] sm:$0xff]
  %v5807 = vld [vmem:[%s4 + $0x10] sm:$0xff]
  %v5808 = vld [vmem:[%s4 + $0x18] sm:$0xff]
  %v5809 = vld [vmem:[%s4 + $0x20] sm:$0xff]
  %v5810 = vld [vmem:[%s4 + $0x28] sm:$0xff]
  %v5811 = vld [vmem:[%s4 + $0x30] sm:$0xff]
  %v5812 = vld [vmem:[%s4 + $0x38] sm:$0xff]
  %5814 = vset.pattern.permute.xlu0 0
  %5815 = vperm.xlu0 %5814, %v5711
  %v5816 = vpop.permute.xlu0 %5815
  %5819 = vset.pattern.permute.xlu0 0
  %5820 = vperm.xlu0 %5819, %v5716
  %v5821 = vpop.permute.xlu0 %5820
  %5824 = vset.pattern.permute.xlu0 0
  %5825 = vperm.xlu0 %5824, %v5721
  %v5826 = vpop.permute.xlu0 %5825
  %5829 = vset.pattern.permute.xlu0 0
  %5830 = vperm.xlu0 %5829, %v5726
  %v5831 = vpop.permute.xlu0 %5830
  %5834 = vset.pattern.permute.xlu0 0
  %5835 = vperm.xlu0 %5834, %v5731
  %v5836 = vpop.permute.xlu0 %5835
  %5839 = vset.pattern.permute.xlu0 0
  %5840 = vperm.xlu0 %5839, %v5736
  %v5841 = vpop.permute.xlu0 %5840
  %5844 = vset.pattern.permute.xlu0 0
  %5845 = vperm.xlu0 %5844, %v5741
  %v5846 = vpop.permute.xlu0 %5845
  %5849 = vset.pattern.permute.xlu0 0
  %5850 = vperm.xlu0 %5849, %v5746
  %v5851 = vpop.permute.xlu0 %5850
  %v5853 = vsub.f32 %v5510, %v5816
  %v5854 = vsub.f32 %v5515, %v5821
  %v5855 = vsub.f32 %v5520, %v5826
  %v5856 = vsub.f32 %v5525, %v5831
  %v5857 = vsub.f32 %v5530, %v5836
  %v5858 = vsub.f32 %v5535, %v5841
  %v5859 = vsub.f32 %v5540, %v5846
  %v5860 = vsub.f32 %v5545, %v5851
  %v5861 = vadd.f32 %v5797, 1e-05
  %v5862 = vadd.f32 %v5798, 1e-05
  %v5863 = vadd.f32 %v5799, 1e-05
  %v5864 = vadd.f32 %v5800, 1e-05
  %v5865 = vadd.f32 %v5801, 1e-05
  %v5866 = vadd.f32 %v5802, 1e-05
  %v5867 = vadd.f32 %v5803, 1e-05
  %v5868 = vadd.f32 %v5804, 1e-05
  %v5869 = vrsqrt.pop %v5861
  %v5870 = vrsqrt.pop %v5862
  %v5871 = vrsqrt.pop %v5863
  %v5872 = vrsqrt.pop %v5864
  %v5873 = vrsqrt.pop %v5865
  %v5874 = vrsqrt.pop %v5866
  %v5875 = vrsqrt.pop %v5867
  %v5876 = vrsqrt.pop %v5868
  %5885 = vrot.lane.b32.xlu0 %v5869, 14
  %v5886 = vpop.permute.xlu0 %5885
  %5887 = vrot.lane.b32.xlu0 %v5870, 14
  %v5888 = vpop.permute.xlu0 %5887
  %5889 = vrot.lane.b32.xlu0 %v5871, 14
  %v5890 = vpop.permute.xlu0 %5889
  %5891 = vrot.lane.b32.xlu0 %v5872, 14
  %v5892 = vpop.permute.xlu0 %5891
  %5893 = vrot.lane.b32.xlu0 %v5873, 14
  %v5894 = vpop.permute.xlu0 %5893
  %5895 = vrot.lane.b32.xlu0 %v5874, 14
  %v5896 = vpop.permute.xlu0 %5895
  %5897 = vrot.lane.b32.xlu0 %v5875, 14
  %v5898 = vpop.permute.xlu0 %5897
  %5899 = vrot.lane.b32.xlu0 %v5876, 14
  %v5900 = vpop.permute.xlu0 %5899
  %v5909 = vmul.f32 %v5805, %v5886
  %v5910 = vmul.f32 %v5806, %v5888
  %v5911 = vmul.f32 %v5807, %v5890
  %v5912 = vmul.f32 %v5808, %v5892
  %v5913 = vmul.f32 %v5809, %v5894
  %v5914 = vmul.f32 %v5810, %v5896
  %v5915 = vmul.f32 %v5811, %v5898
  %v5916 = vmul.f32 %v5812, %v5900
  %5918 = vset.pattern.permute.xlu0 15
  %5919 = vperm.xlu0 %5918, %v5909
  %v5920 = vpop.permute.xlu0 %5919
  %5923 = vset.pattern.permute.xlu0 15
  %5924 = vperm.xlu0 %5923, %v5910
  %v5925 = vpop.permute.xlu0 %5924
  %5928 = vset.pattern.permute.xlu0 15
  %5929 = vperm.xlu0 %5928, %v5911
  %v5930 = vpop.permute.xlu0 %5929
  %5933 = vset.pattern.permute.xlu0 15
  %5934 = vperm.xlu0 %5933, %v5912
  %v5935 = vpop.permute.xlu0 %5934
  %5938 = vset.pattern.permute.xlu0 15
  %5939 = vperm.xlu0 %5938, %v5913
  %v5940 = vpop.permute.xlu0 %5939
  %5943 = vset.pattern.permute.xlu0 15
  %5944 = vperm.xlu0 %5943, %v5914
  %v5945 = vpop.permute.xlu0 %5944
  %5948 = vset.pattern.permute.xlu0 15
  %5949 = vperm.xlu0 %5948, %v5915
  %v5950 = vpop.permute.xlu0 %5949
  %5953 = vset.pattern.permute.xlu0 15
  %5954 = vperm.xlu0 %5953, %v5916
  %v5955 = vpop.permute.xlu0 %5954
  %v5957 = vmul.f32 %v5853, %v5920
  %v5958 = vmul.f32 %v5854, %v5925
  %v5959 = vmul.f32 %v5855, %v5930
  %v5960 = vmul.f32 %v5856, %v5935
  %v5961 = vmul.f32 %v5857, %v5940
  %v5962 = vmul.f32 %v5858, %v5945
  %v5963 = vmul.f32 %v5859, %v5950
  %v5964 = vmul.f32 %v5860, %v5955
  %5966 = vset.pattern.permute.xlu0 16
  %5967 = vperm.xlu0 %5966, %v5805
  %v5968 = vpop.permute.xlu0 %5967
  %5971 = vset.pattern.permute.xlu0 16
  %5972 = vperm.xlu0 %5971, %v5806
  %v5973 = vpop.permute.xlu0 %5972
  %5976 = vset.pattern.permute.xlu0 16
  %5977 = vperm.xlu0 %5976, %v5807
  %v5978 = vpop.permute.xlu0 %5977
  %5981 = vset.pattern.permute.xlu0 16
  %5982 = vperm.xlu0 %5981, %v5808
  %v5983 = vpop.permute.xlu0 %5982
  %5986 = vset.pattern.permute.xlu0 16
  %5987 = vperm.xlu0 %5986, %v5809
  %v5988 = vpop.permute.xlu0 %5987
  %5991 = vset.pattern.permute.xlu0 16
  %5992 = vperm.xlu0 %5991, %v5810
  %v5993 = vpop.permute.xlu0 %5992
  %5996 = vset.pattern.permute.xlu0 16
  %5997 = vperm.xlu0 %5996, %v5811
  %v5998 = vpop.permute.xlu0 %5997
  %6001 = vset.pattern.permute.xlu0 16
  %6002 = vperm.xlu0 %6001, %v5812
  %v6003 = vpop.permute.xlu0 %6002
  %v6005 = vadd.f32 %v5957, %v5968
  %v6006 = vadd.f32 %v5958, %v5973
  %v6007 = vadd.f32 %v5959, %v5978
  %v6008 = vadd.f32 %v5960, %v5983
  %v6009 = vadd.f32 %v5961, %v5988
  %v6010 = vadd.f32 %v5962, %v5993
  %v6011 = vadd.f32 %v5963, %v5998
  %v6012 = vadd.f32 %v5964, %v6003
  %v6013 = vmax.f32 %v6005, 0.0
  %v6014 = vmax.f32 %v6006, 0.0
  %v6015 = vmax.f32 %v6007, 0.0
  %v6016 = vmax.f32 %v6008, 0.0
  %v6017 = vmax.f32 %v6009, 0.0
  %v6018 = vmax.f32 %v6010, 0.0
  %v6019 = vmax.f32 %v6011, 0.0
  %v6020 = vmax.f32 %v6012, 0.0
  %v6021 = vld [vmem:[%s2 + $0x480] sm:$0xff]
  %v6022 = vld [vmem:[%s2 + $0x488] sm:$0xff]
  %v6023 = vld [vmem:[%s2 + $0x490] sm:$0xff]
  %v6024 = vld [vmem:[%s2 + $0x498] sm:$0xff]
  %v6025 = vld [vmem:[%s2 + $0x4a0] sm:$0xff]
  %v6026 = vld [vmem:[%s2 + $0x4a8] sm:$0xff]
  %v6027 = vld [vmem:[%s2 + $0x4b0] sm:$0xff]
  %v6028 = vld [vmem:[%s2 + $0x4b8] sm:$0xff]
  %v6030 = vsel %vm149, %v6013, 0
  %v6033 = vsel %vm149, %v6014, 0
  %v6036 = vsel %vm149, %v6015, 0
  %v6039 = vsel %vm149, %v6016, 0
  %v6042 = vsel %vm149, %v6017, 0
  %v6045 = vsel %vm149, %v6018, 0
  %v6048 = vsel %vm149, %v6019, 0
  %v6051 = vsel %vm149, %v6020, 0
  %6053 = vmatprep.subr.mxu0 0.0
  %6054 = vmatpush1.msra.mxu0 0.0
  %6055 = vmatprep.subr.mxu0 0.0
  %6056 = vmatpush1.msra.mxu0 0.0
  %6057 = vmatprep.subr.mxu0 0.0
  %6058 = vmatpush1.msra.mxu0 0.0
  %6059 = vmatprep.subr.mxu0 0.0
  %6060 = vmatpush1.msra.mxu0 0.0
  %6061 = vmatprep.subr.mxu0 0.0
  %6062 = vmatpush1.msra.mxu0 0.0
  %6063 = vmatprep.subr.mxu0 0.0
  %6064 = vmatpush1.msra.mxu0 0.0
  %6065 = vmatprep.subr.mxu0 0.0
  %6066 = vmatpush1.msra.mxu0 0.0
  %6067 = vmatprep.subr.mxu0 0.0
  %6068 = vmatpush1.msra.mxu0 0.0
  %6069 = vmatprep.subr.mxu0 0.0
  %6070 = vmatpush1.msra.mxu0 %v6028
  %6071 = vmatprep.subr.mxu0 0.0
  %6072 = vmatpush1.msra.mxu0 %v6027
  %6073 = vmatprep.subr.mxu0 0.0
  %6074 = vmatpush1.msra.mxu0 %v6026
  %6075 = vmatprep.subr.mxu0 0.0
  %6076 = vmatpush1.msra.mxu0 %v6025
  %6077 = vmatprep.subr.mxu0 0.0
  %6078 = vmatpush1.msra.mxu0 %v6024
  %6079 = vmatprep.subr.mxu0 0.0
  %6080 = vmatpush1.msra.mxu0 %v6023
  %6081 = vmatprep.subr.mxu0 0.0
  %6082 = vmatpush1.msra.mxu0 %v6022
  %6083 = vmatprep.subr.mxu0 0.0
  %6084 = vmatpush1.msra.mxu0 %v6021
  %6085 = vmatprep.subr.mxu0 0.0
  %6086 = vmatpush2.msra.mxu0 0.0
  %6087 = vmatprep.subr.mxu0 0.0
  %6088 = vmatpush2.msra.mxu0 0.0
  %6089 = vmatprep.subr.mxu0 0.0
  %6090 = vmatpush2.msra.mxu0 0.0
  %6091 = vmatprep.subr.mxu0 0.0
  %6092 = vmatpush2.msra.mxu0 0.0
  %6093 = vmatprep.subr.mxu0 0.0
  %6094 = vmatpush2.msra.mxu0 0.0
  %6095 = vmatprep.subr.mxu0 0.0
  %6096 = vmatpush2.msra.mxu0 0.0
  %6097 = vmatprep.subr.mxu0 0.0
  %6098 = vmatpush2.msra.mxu0 0.0
  %6099 = vmatprep.subr.mxu0 0.0
  %6100 = vmatpush2.msra.mxu0 0.0
  %6101 = vmatprep.subr.mxu0 0.0
  %6102 = vmatpush2.msra.mxu0 0.0
  %6103 = vmatprep.subr.mxu0 0.0
  %6104 = vmatpush2.msra.mxu0 0.0
  %6105 = vmatprep.subr.mxu0 0.0
  %6106 = vmatpush2.msra.mxu0 0.0
  %6107 = vmatprep.subr.mxu0 0.0
  %6108 = vmatpush2.msra.mxu0 0.0
  %6109 = vmatprep.subr.mxu0 0.0
  %6110 = vmatpush2.msra.mxu0 0.0
  %6111 = vmatprep.subr.mxu0 0.0
  %6112 = vmatpush2.msra.mxu0 0.0
  %6113 = vmatprep.subr.mxu0 0.0
  %6114 = vmatpush2.msra.mxu0 0.0
  %6115 = vmatprep.subr.mxu0 0.0
  %6116 = vmatpush2.msra.mxu0 0.0
  %6117 = vmatprep.mubr.f32.mxu0 0.0
  %6118 = vmatmul.mubr.f32.gmra.mxu0 %v6030
  %v6119 = vpop.f32.mrf.mxu0
  %v6120 = vadd.f32 0.0, %v6119
  %v6121 = vpop.f32.mrf.mxu0
  %6122 = vmatprep.mubr.f32.mxu0 0.0
  %6123 = vmatmul.mubr.f32.gmra.mxu0 %v6033
  %v6124 = vpop.f32.mrf.mxu0
  %v6125 = vadd.f32 0.0, %v6124
  %v6126 = vpop.f32.mrf.mxu0
  %6127 = vmatprep.mubr.f32.mxu0 0.0
  %6128 = vmatmul.mubr.f32.gmra.mxu0 %v6036
  %v6129 = vpop.f32.mrf.mxu0
  %v6130 = vadd.f32 0.0, %v6129
  %v6131 = vpop.f32.mrf.mxu0
  %6132 = vmatprep.mubr.f32.mxu0 0.0
  %6133 = vmatmul.mubr.f32.gmra.mxu0 %v6039
  %v6134 = vpop.f32.mrf.mxu0
  %v6135 = vadd.f32 0.0, %v6134
  %v6136 = vpop.f32.mrf.mxu0
  %6137 = vmatprep.mubr.f32.mxu0 0.0
  %6138 = vmatmul.mubr.f32.gmra.mxu0 %v6042
  %v6139 = vpop.f32.mrf.mxu0
  %v6140 = vadd.f32 0.0, %v6139
  %v6141 = vpop.f32.mrf.mxu0
  %6142 = vmatprep.mubr.f32.mxu0 0.0
  %6143 = vmatmul.mubr.f32.gmra.mxu0 %v6045
  %v6144 = vpop.f32.mrf.mxu0
  %v6145 = vadd.f32 0.0, %v6144
  %v6146 = vpop.f32.mrf.mxu0
  %6147 = vmatprep.mubr.f32.mxu0 0.0
  %6148 = vmatmul.mubr.f32.gmra.mxu0 %v6048
  %v6149 = vpop.f32.mrf.mxu0
  %v6150 = vadd.f32 0.0, %v6149
  %v6151 = vpop.f32.mrf.mxu0
  %6152 = vmatprep.mubr.f32.mxu0 0.0
  %6153 = vmatmul.mubr.f32.gmra.mxu0 %v6051
  %v6154 = vpop.f32.mrf.mxu0
  %v6155 = vadd.f32 0.0, %v6154
  %v6156 = vpop.f32.mrf.mxu0
  %6157 = vdwg.mxu0
  %6158 = vst [vmem:[#allocation2] sm:$0xff] %v6120
  %6159 = vst [vmem:[#allocation2 + $0x8] sm:$0xff] %v6125
  %6160 = vst [vmem:[#allocation2 + $0x10] sm:$0xff] %v6130
  %6161 = vst [vmem:[#allocation2 + $0x18] sm:$0xff] %v6135
  %6162 = vst [vmem:[#allocation2 + $0x20] sm:$0xff] %v6140
  %6163 = vst [vmem:[#allocation2 + $0x28] sm:$0xff] %v6145
  %6164 = vst [vmem:[#allocation2 + $0x30] sm:$0xff] %v6150
  %6165 = vst [vmem:[#allocation2 + $0x38] sm:$0xff] %v6155
  %v6166 = vld [vmem:[%s2 + $0x4c0] sm:$0xff]
  %v6167 = vld [vmem:[%s2 + $0x4c8] sm:$0xff]
  %v6168 = vld [vmem:[%s2 + $0x4d0] sm:$0xff]
  %v6169 = vld [vmem:[%s2 + $0x4d8] sm:$0xff]
  %v6170 = vld [vmem:[%s2 + $0x4e0] sm:$0xff]
  %v6171 = vld [vmem:[%s2 + $0x4e8] sm:$0xff]
  %v6172 = vld [vmem:[%s2 + $0x4f0] sm:$0xff]
  %v6173 = vld [vmem:[%s2 + $0x4f8] sm:$0xff]
  %6174 = vmatprep.subr.mxu0 0.0
  %6175 = vmatpush1.msra.mxu0 0.0
  %6176 = vmatprep.subr.mxu0 0.0
  %6177 = vmatpush1.msra.mxu0 0.0
  %6178 = vmatprep.subr.mxu0 0.0
  %6179 = vmatpush1.msra.mxu0 0.0
  %6180 = vmatprep.subr.mxu0 0.0
  %6181 = vmatpush1.msra.mxu0 0.0
  %6182 = vmatprep.subr.mxu0 0.0
  %6183 = vmatpush1.msra.mxu0 0.0
  %6184 = vmatprep.subr.mxu0 0.0
  %6185 = vmatpush1.msra.mxu0 0.0
  %6186 = vmatprep.subr.mxu0 0.0
  %6187 = vmatpush1.msra.mxu0 0.0
  %6188 = vmatprep.subr.mxu0 0.0
  %6189 = vmatpush1.msra.mxu0 0.0
  %6190 = vmatprep.subr.mxu0 0.0
  %6191 = vmatpush1.msra.mxu0 %v6173
  %6192 = vmatprep.subr.mxu0 0.0
  %6193 = vmatpush1.msra.mxu0 %v6172
  %6194 = vmatprep.subr.mxu0 0.0
  %6195 = vmatpush1.msra.mxu0 %v6171
  %6196 = vmatprep.subr.mxu0 0.0
  %6197 = vmatpush1.msra.mxu0 %v6170
  %6198 = vmatprep.subr.mxu0 0.0
  %6199 = vmatpush1.msra.mxu0 %v6169
  %6200 = vmatprep.subr.mxu0 0.0
  %6201 = vmatpush1.msra.mxu0 %v6168
  %6202 = vmatprep.subr.mxu0 0.0
  %6203 = vmatpush1.msra.mxu0 %v6167
  %6204 = vmatprep.subr.mxu0 0.0
  %6205 = vmatpush1.msra.mxu0 %v6166
  %6206 = vmatprep.subr.mxu0 0.0
  %6207 = vmatpush2.msra.mxu0 0.0
  %6208 = vmatprep.subr.mxu0 0.0
  %6209 = vmatpush2.msra.mxu0 0.0
  %6210 = vmatprep.subr.mxu0 0.0
  %6211 = vmatpush2.msra.mxu0 0.0
  %6212 = vmatprep.subr.mxu0 0.0
  %6213 = vmatpush2.msra.mxu0 0.0
  %6214 = vmatprep.subr.mxu0 0.0
  %6215 = vmatpush2.msra.mxu0 0.0
  %6216 = vmatprep.subr.mxu0 0.0
  %6217 = vmatpush2.msra.mxu0 0.0
  %6218 = vmatprep.subr.mxu0 0.0
  %6219 = vmatpush2.msra.mxu0 0.0
  %6220 = vmatprep.subr.mxu0 0.0
  %6221 = vmatpush2.msra.mxu0 0.0
  %6222 = vmatprep.subr.mxu0 0.0
  %6223 = vmatpush2.msra.mxu0 0.0
  %6224 = vmatprep.subr.mxu0 0.0
  %6225 = vmatpush2.msra.mxu0 0.0
  %6226 = vmatprep.subr.mxu0 0.0
  %6227 = vmatpush2.msra.mxu0 0.0
  %6228 = vmatprep.subr.mxu0 0.0
  %6229 = vmatpush2.msra.mxu0 0.0
  %6230 = vmatprep.subr.mxu0 0.0
  %6231 = vmatpush2.msra.mxu0 0.0
  %6232 = vmatprep.subr.mxu0 0.0
  %6233 = vmatpush2.msra.mxu0 0.0
  %6234 = vmatprep.subr.mxu0 0.0
  %6235 = vmatpush2.msra.mxu0 0.0
  %6236 = vmatprep.subr.mxu0 0.0
  %6237 = vmatpush2.msra.mxu0 0.0
  %6238 = vmatprep.mubr.f32.mxu0 0.0
  %6239 = vmatmul.mubr.f32.gmra.mxu0 %v6030
  %v6240 = vpop.f32.mrf.mxu0
  %v6241 = vadd.f32 0.0, %v6240
  %v6242 = vpop.f32.mrf.mxu0
  %6243 = vmatprep.mubr.f32.mxu0 0.0
  %6244 = vmatmul.mubr.f32.gmra.mxu0 %v6033
  %v6245 = vpop.f32.mrf.mxu0
  %v6246 = vadd.f32 0.0, %v6245
  %v6247 = vpop.f32.mrf.mxu0
  %6248 = vmatprep.mubr.f32.mxu0 0.0
  %6249 = vmatmul.mubr.f32.gmra.mxu0 %v6036
  %v6250 = vpop.f32.mrf.mxu0
  %v6251 = vadd.f32 0.0, %v6250
  %v6252 = vpop.f32.mrf.mxu0
  %6253 = vmatprep.mubr.f32.mxu0 0.0
  %6254 = vmatmul.mubr.f32.gmra.mxu0 %v6039
  %v6255 = vpop.f32.mrf.mxu0
  %v6256 = vadd.f32 0.0, %v6255
  %v6257 = vpop.f32.mrf.mxu0
  %6258 = vmatprep.mubr.f32.mxu0 0.0
  %6259 = vmatmul.mubr.f32.gmra.mxu0 %v6042
  %v6260 = vpop.f32.mrf.mxu0
  %v6261 = vadd.f32 0.0, %v6260
  %v6262 = vpop.f32.mrf.mxu0
  %6263 = vmatprep.mubr.f32.mxu0 0.0
  %6264 = vmatmul.mubr.f32.gmra.mxu0 %v6045
  %v6265 = vpop.f32.mrf.mxu0
  %v6266 = vadd.f32 0.0, %v6265
  %v6267 = vpop.f32.mrf.mxu0
  %6268 = vmatprep.mubr.f32.mxu0 0.0
  %6269 = vmatmul.mubr.f32.gmra.mxu0 %v6048
  %v6270 = vpop.f32.mrf.mxu0
  %v6271 = vadd.f32 0.0, %v6270
  %v6272 = vpop.f32.mrf.mxu0
  %6273 = vmatprep.mubr.f32.mxu0 0.0
  %6274 = vmatmul.mubr.f32.gmra.mxu0 %v6051
  %v6275 = vpop.f32.mrf.mxu0
  %v6276 = vadd.f32 0.0, %v6275
  %v6277 = vpop.f32.mrf.mxu0
  %6278 = vdwg.mxu0
  %6279 = vst [vmem:[#allocation2 + $0x40] sm:$0xff] %v6241
  %6280 = vst [vmem:[#allocation2 + $0x48] sm:$0xff] %v6246
  %6281 = vst [vmem:[#allocation2 + $0x50] sm:$0xff] %v6251
  %6282 = vst [vmem:[#allocation2 + $0x58] sm:$0xff] %v6256
  %6283 = vst [vmem:[#allocation2 + $0x60] sm:$0xff] %v6261
  %6284 = vst [vmem:[#allocation2 + $0x68] sm:$0xff] %v6266
  %6285 = vst [vmem:[#allocation2 + $0x70] sm:$0xff] %v6271
  %6286 = vst [vmem:[#allocation2 + $0x78] sm:$0xff] %v6276
  %v6287 = vld [vmem:[%s2 + $0x500] sm:$0xff]
  %v6288 = vld [vmem:[%s2 + $0x508] sm:$0xff]
  %v6289 = vld [vmem:[%s2 + $0x510] sm:$0xff]
  %v6290 = vld [vmem:[%s2 + $0x518] sm:$0xff]
  %v6291 = vld [vmem:[%s2 + $0x520] sm:$0xff]
  %v6292 = vld [vmem:[%s2 + $0x528] sm:$0xff]
  %v6293 = vld [vmem:[%s2 + $0x530] sm:$0xff]
  %v6294 = vld [vmem:[%s2 + $0x538] sm:$0xff]
  %6295 = vmatprep.subr.mxu0 0.0
  %6296 = vmatpush1.msra.mxu0 0.0
  %6297 = vmatprep.subr.mxu0 0.0
  %6298 = vmatpush1.msra.mxu0 0.0
  %6299 = vmatprep.subr.mxu0 0.0
  %6300 = vmatpush1.msra.mxu0 0.0
  %6301 = vmatprep.subr.mxu0 0.0
  %6302 = vmatpush1.msra.mxu0 0.0
  %6303 = vmatprep.subr.mxu0 0.0
  %6304 = vmatpush1.msra.mxu0 0.0
  %6305 = vmatprep.subr.mxu0 0.0
  %6306 = vmatpush1.msra.mxu0 0.0
  %6307 = vmatprep.subr.mxu0 0.0
  %6308 = vmatpush1.msra.mxu0 0.0
  %6309 = vmatprep.subr.mxu0 0.0
  %6310 = vmatpush1.msra.mxu0 0.0
  %6311 = vmatprep.subr.mxu0 0.0
  %6312 = vmatpush1.msra.mxu0 %v6294
  %6313 = vmatprep.subr.mxu0 0.0
  %6314 = vmatpush1.msra.mxu0 %v6293
  %6315 = vmatprep.subr.mxu0 0.0
  %6316 = vmatpush1.msra.mxu0 %v6292
  %6317 = vmatprep.subr.mxu0 0.0
  %6318 = vmatpush1.msra.mxu0 %v6291
  %6319 = vmatprep.subr.mxu0 0.0
  %6320 = vmatpush1.msra.mxu0 %v6290
  %6321 = vmatprep.subr.mxu0 0.0
  %6322 = vmatpush1.msra.mxu0 %v6289
  %6323 = vmatprep.subr.mxu0 0.0
  %6324 = vmatpush1.msra.mxu0 %v6288
  %6325 = vmatprep.subr.mxu0 0.0
  %6326 = vmatpush1.msra.mxu0 %v6287
  %6327 = vmatprep.subr.mxu0 0.0
  %6328 = vmatpush2.msra.mxu0 0.0
  %6329 = vmatprep.subr.mxu0 0.0
  %6330 = vmatpush2.msra.mxu0 0.0
  %6331 = vmatprep.subr.mxu0 0.0
  %6332 = vmatpush2.msra.mxu0 0.0
  %6333 = vmatprep.subr.mxu0 0.0
  %6334 = vmatpush2.msra.mxu0 0.0
  %6335 = vmatprep.subr.mxu0 0.0
  %6336 = vmatpush2.msra.mxu0 0.0
  %6337 = vmatprep.subr.mxu0 0.0
  %6338 = vmatpush2.msra.mxu0 0.0
  %6339 = vmatprep.subr.mxu0 0.0
  %6340 = vmatpush2.msra.mxu0 0.0
  %6341 = vmatprep.subr.mxu0 0.0
  %6342 = vmatpush2.msra.mxu0 0.0
  %6343 = vmatprep.subr.mxu0 0.0
  %6344 = vmatpush2.msra.mxu0 0.0
  %6345 = vmatprep.subr.mxu0 0.0
  %6346 = vmatpush2.msra.mxu0 0.0
  %6347 = vmatprep.subr.mxu0 0.0
  %6348 = vmatpush2.msra.mxu0 0.0
  %6349 = vmatprep.subr.mxu0 0.0
  %6350 = vmatpush2.msra.mxu0 0.0
  %6351 = vmatprep.subr.mxu0 0.0
  %6352 = vmatpush2.msra.mxu0 0.0
  %6353 = vmatprep.subr.mxu0 0.0
  %6354 = vmatpush2.msra.mxu0 0.0
  %6355 = vmatprep.subr.mxu0 0.0
  %6356 = vmatpush2.msra.mxu0 0.0
  %6357 = vmatprep.subr.mxu0 0.0
  %6358 = vmatpush2.msra.mxu0 0.0
  %6359 = vmatprep.mubr.f32.mxu0 0.0
  %6360 = vmatmul.mubr.f32.gmra.mxu0 %v6030
  %v6361 = vpop.f32.mrf.mxu0
  %v6362 = vadd.f32 0.0, %v6361
  %v6363 = vpop.f32.mrf.mxu0
  %6364 = vmatprep.mubr.f32.mxu0 0.0
  %6365 = vmatmul.mubr.f32.gmra.mxu0 %v6033
  %v6366 = vpop.f32.mrf.mxu0
  %v6367 = vadd.f32 0.0, %v6366
  %v6368 = vpop.f32.mrf.mxu0
  %6369 = vmatprep.mubr.f32.mxu0 0.0
  %6370 = vmatmul.mubr.f32.gmra.mxu0 %v6036
  %v6371 = vpop.f32.mrf.mxu0
  %v6372 = vadd.f32 0.0, %v6371
  %v6373 = vpop.f32.mrf.mxu0
  %6374 = vmatprep.mubr.f32.mxu0 0.0
  %6375 = vmatmul.mubr.f32.gmra.mxu0 %v6039
  %v6376 = vpop.f32.mrf.mxu0
  %v6377 = vadd.f32 0.0, %v6376
  %v6378 = vpop.f32.mrf.mxu0
  %6379 = vmatprep.mubr.f32.mxu0 0.0
  %6380 = vmatmul.mubr.f32.gmra.mxu0 %v6042
  %v6381 = vpop.f32.mrf.mxu0
  %v6382 = vadd.f32 0.0, %v6381
  %v6383 = vpop.f32.mrf.mxu0
  %6384 = vmatprep.mubr.f32.mxu0 0.0
  %6385 = vmatmul.mubr.f32.gmra.mxu0 %v6045
  %v6386 = vpop.f32.mrf.mxu0
  %v6387 = vadd.f32 0.0, %v6386
  %v6388 = vpop.f32.mrf.mxu0
  %6389 = vmatprep.mubr.f32.mxu0 0.0
  %6390 = vmatmul.mubr.f32.gmra.mxu0 %v6048
  %v6391 = vpop.f32.mrf.mxu0
  %v6392 = vadd.f32 0.0, %v6391
  %v6393 = vpop.f32.mrf.mxu0
  %6394 = vmatprep.mubr.f32.mxu0 0.0
  %6395 = vmatmul.mubr.f32.gmra.mxu0 %v6051
  %v6396 = vpop.f32.mrf.mxu0
  %v6397 = vadd.f32 0.0, %v6396
  %v6398 = vpop.f32.mrf.mxu0
  %6399 = vdwg.mxu0
  %6400 = vst [vmem:[#allocation2 + $0x80] sm:$0xff] %v6362
  %6401 = vst [vmem:[#allocation2 + $0x88] sm:$0xff] %v6367
  %6402 = vst [vmem:[#allocation2 + $0x90] sm:$0xff] %v6372
  %6403 = vst [vmem:[#allocation2 + $0x98] sm:$0xff] %v6377
  %6404 = vst [vmem:[#allocation2 + $0xa0] sm:$0xff] %v6382
  %6405 = vst [vmem:[#allocation2 + $0xa8] sm:$0xff] %v6387
  %6406 = vst [vmem:[#allocation2 + $0xb0] sm:$0xff] %v6392
  %6407 = vst [vmem:[#allocation2 + $0xb8] sm:$0xff] %v6397
  %v6408 = vld [vmem:[%s2 + $0x540] sm:$0xff]
  %v6409 = vld [vmem:[%s2 + $0x548] sm:$0xff]
  %v6410 = vld [vmem:[%s2 + $0x550] sm:$0xff]
  %v6411 = vld [vmem:[%s2 + $0x558] sm:$0xff]
  %v6412 = vld [vmem:[%s2 + $0x560] sm:$0xff]
  %v6413 = vld [vmem:[%s2 + $0x568] sm:$0xff]
  %v6414 = vld [vmem:[%s2 + $0x570] sm:$0xff]
  %v6415 = vld [vmem:[%s2 + $0x578] sm:$0xff]
  %6416 = vmatprep.subr.mxu0 0.0
  %6417 = vmatpush1.msra.mxu0 0.0
  %6418 = vmatprep.subr.mxu0 0.0
  %6419 = vmatpush1.msra.mxu0 0.0
  %6420 = vmatprep.subr.mxu0 0.0
  %6421 = vmatpush1.msra.mxu0 0.0
  %6422 = vmatprep.subr.mxu0 0.0
  %6423 = vmatpush1.msra.mxu0 0.0
  %6424 = vmatprep.subr.mxu0 0.0
  %6425 = vmatpush1.msra.mxu0 0.0
  %6426 = vmatprep.subr.mxu0 0.0
  %6427 = vmatpush1.msra.mxu0 0.0
  %6428 = vmatprep.subr.mxu0 0.0
  %6429 = vmatpush1.msra.mxu0 0.0
  %6430 = vmatprep.subr.mxu0 0.0
  %6431 = vmatpush1.msra.mxu0 0.0
  %6432 = vmatprep.subr.mxu0 0.0
  %6433 = vmatpush1.msra.mxu0 %v6415
  %6434 = vmatprep.subr.mxu0 0.0
  %6435 = vmatpush1.msra.mxu0 %v6414
  %6436 = vmatprep.subr.mxu0 0.0
  %6437 = vmatpush1.msra.mxu0 %v6413
  %6438 = vmatprep.subr.mxu0 0.0
  %6439 = vmatpush1.msra.mxu0 %v6412
  %6440 = vmatprep.subr.mxu0 0.0
  %6441 = vmatpush1.msra.mxu0 %v6411
  %6442 = vmatprep.subr.mxu0 0.0
  %6443 = vmatpush1.msra.mxu0 %v6410
  %6444 = vmatprep.subr.mxu0 0.0
  %6445 = vmatpush1.msra.mxu0 %v6409
  %6446 = vmatprep.subr.mxu0 0.0
  %6447 = vmatpush1.msra.mxu0 %v6408
  %6448 = vmatprep.subr.mxu0 0.0
  %6449 = vmatpush2.msra.mxu0 0.0
  %6450 = vmatprep.subr.mxu0 0.0
  %6451 = vmatpush2.msra.mxu0 0.0
  %6452 = vmatprep.subr.mxu0 0.0
  %6453 = vmatpush2.msra.mxu0 0.0
  %6454 = vmatprep.subr.mxu0 0.0
  %6455 = vmatpush2.msra.mxu0 0.0
  %6456 = vmatprep.subr.mxu0 0.0
  %6457 = vmatpush2.msra.mxu0 0.0
  %6458 = vmatprep.subr.mxu0 0.0
  %6459 = vmatpush2.msra.mxu0 0.0
  %6460 = vmatprep.subr.mxu0 0.0
  %6461 = vmatpush2.msra.mxu0 0.0
  %6462 = vmatprep.subr.mxu0 0.0
  %6463 = vmatpush2.msra.mxu0 0.0
  %6464 = vmatprep.subr.mxu0 0.0
  %6465 = vmatpush2.msra.mxu0 0.0
  %6466 = vmatprep.subr.mxu0 0.0
  %6467 = vmatpush2.msra.mxu0 0.0
  %6468 = vmatprep.subr.mxu0 0.0
  %6469 = vmatpush2.msra.mxu0 0.0
  %6470 = vmatprep.subr.mxu0 0.0
  %6471 = vmatpush2.msra.mxu0 0.0
  %6472 = vmatprep.subr.mxu0 0.0
  %6473 = vmatpush2.msra.mxu0 0.0
  %6474 = vmatprep.subr.mxu0 0.0
  %6475 = vmatpush2.msra.mxu0 0.0
  %6476 = vmatprep.subr.mxu0 0.0
  %6477 = vmatpush2.msra.mxu0 0.0
  %6478 = vmatprep.subr.mxu0 0.0
  %6479 = vmatpush2.msra.mxu0 0.0
  %6480 = vmatprep.mubr.f32.mxu0 0.0
  %6481 = vmatmul.mubr.f32.gmra.mxu0 %v6030
  %v6482 = vpop.f32.mrf.mxu0
  %v6483 = vadd.f32 0.0, %v6482
  %v6484 = vpop.f32.mrf.mxu0
  %6485 = vmatprep.mubr.f32.mxu0 0.0
  %6486 = vmatmul.mubr.f32.gmra.mxu0 %v6033
  %v6487 = vpop.f32.mrf.mxu0
  %v6488 = vadd.f32 0.0, %v6487
  %v6489 = vpop.f32.mrf.mxu0
  %6490 = vmatprep.mubr.f32.mxu0 0.0
  %6491 = vmatmul.mubr.f32.gmra.mxu0 %v6036
  %v6492 = vpop.f32.mrf.mxu0
  %v6493 = vadd.f32 0.0, %v6492
  %v6494 = vpop.f32.mrf.mxu0
  %6495 = vmatprep.mubr.f32.mxu0 0.0
  %6496 = vmatmul.mubr.f32.gmra.mxu0 %v6039
  %v6497 = vpop.f32.mrf.mxu0
  %v6498 = vadd.f32 0.0, %v6497
  %v6499 = vpop.f32.mrf.mxu0
  %6500 = vmatprep.mubr.f32.mxu0 0.0
  %6501 = vmatmul.mubr.f32.gmra.mxu0 %v6042
  %v6502 = vpop.f32.mrf.mxu0
  %v6503 = vadd.f32 0.0, %v6502
  %v6504 = vpop.f32.mrf.mxu0
  %6505 = vmatprep.mubr.f32.mxu0 0.0
  %6506 = vmatmul.mubr.f32.gmra.mxu0 %v6045
  %v6507 = vpop.f32.mrf.mxu0
  %v6508 = vadd.f32 0.0, %v6507
  %v6509 = vpop.f32.mrf.mxu0
  %6510 = vmatprep.mubr.f32.mxu0 0.0
  %6511 = vmatmul.mubr.f32.gmra.mxu0 %v6048
  %v6512 = vpop.f32.mrf.mxu0
  %v6513 = vadd.f32 0.0, %v6512
  %v6514 = vpop.f32.mrf.mxu0
  %6515 = vmatprep.mubr.f32.mxu0 0.0
  %6516 = vmatmul.mubr.f32.gmra.mxu0 %v6051
  %v6517 = vpop.f32.mrf.mxu0
  %v6518 = vadd.f32 0.0, %v6517
  %v6519 = vpop.f32.mrf.mxu0
  %6520 = vdwg.mxu0
  %6521 = vst [vmem:[#allocation2 + $0xc0] sm:$0xff] %v6483
  %6522 = vst [vmem:[#allocation2 + $0xc8] sm:$0xff] %v6488
  %6523 = vst [vmem:[#allocation2 + $0xd0] sm:$0xff] %v6493
  %6524 = vst [vmem:[#allocation2 + $0xd8] sm:$0xff] %v6498
  %6525 = vst [vmem:[#allocation2 + $0xe0] sm:$0xff] %v6503
  %6526 = vst [vmem:[#allocation2 + $0xe8] sm:$0xff] %v6508
  %6527 = vst [vmem:[#allocation2 + $0xf0] sm:$0xff] %v6513
  %6528 = vst [vmem:[#allocation2 + $0xf8] sm:$0xff] %v6518
  %v6529 = vld [vmem:[#allocation2] sm:$0xff]
  %v6530 = vld [vmem:[#allocation2 + $0x8] sm:$0xff]
  %v6531 = vld [vmem:[#allocation2 + $0x10] sm:$0xff]
  %v6532 = vld [vmem:[#allocation2 + $0x18] sm:$0xff]
  %v6533 = vld [vmem:[#allocation2 + $0x20] sm:$0xff]
  %v6534 = vld [vmem:[#allocation2 + $0x28] sm:$0xff]
  %v6535 = vld [vmem:[#allocation2 + $0x30] sm:$0xff]
  %v6536 = vld [vmem:[#allocation2 + $0x38] sm:$0xff]
  %v6537 = vld [vmem:[#allocation2 + $0x40] sm:$0xff]
  %v6538 = vld [vmem:[#allocation2 + $0x48] sm:$0xff]
  %v6539 = vld [vmem:[#allocation2 + $0x50] sm:$0xff]
  %v6540 = vld [vmem:[#allocation2 + $0x58] sm:$0xff]
  %v6541 = vld [vmem:[#allocation2 + $0x60] sm:$0xff]
  %v6542 = vld [vmem:[#allocation2 + $0x68] sm:$0xff]
  %v6543 = vld [vmem:[#allocation2 + $0x70] sm:$0xff]
  %v6544 = vld [vmem:[#allocation2 + $0x78] sm:$0xff]
  %v6545 = vld [vmem:[#allocation2 + $0x80] sm:$0xff]
  %v6546 = vld [vmem:[#allocation2 + $0x88] sm:$0xff]
  %v6547 = vld [vmem:[#allocation2 + $0x90] sm:$0xff]
  %v6548 = vld [vmem:[#allocation2 + $0x98] sm:$0xff]
  %v6549 = vld [vmem:[#allocation2 + $0xa0] sm:$0xff]
  %v6550 = vld [vmem:[#allocation2 + $0xa8] sm:$0xff]
  %v6551 = vld [vmem:[#allocation2 + $0xb0] sm:$0xff]
  %v6552 = vld [vmem:[#allocation2 + $0xb8] sm:$0xff]
  %v6553 = vld [vmem:[#allocation2 + $0xc0] sm:$0xff]
  %v6554 = vld [vmem:[#allocation2 + $0xc8] sm:$0xff]
  %v6555 = vld [vmem:[#allocation2 + $0xd0] sm:$0xff]
  %v6556 = vld [vmem:[#allocation2 + $0xd8] sm:$0xff]
  %v6557 = vld [vmem:[#allocation2 + $0xe0] sm:$0xff]
  %v6558 = vld [vmem:[#allocation2 + $0xe8] sm:$0xff]
  %v6559 = vld [vmem:[#allocation2 + $0xf0] sm:$0xff]
  %v6560 = vld [vmem:[#allocation2 + $0xf8] sm:$0xff]
  %v6561 = vld [vmem:[%s1 + $0x260] sm:$0xff]
  %v6562 = vld [vmem:[%s1 + $0x268] sm:$0xff]
  %v6563 = vld [vmem:[%s1 + $0x270] sm:$0xff]
  %v6564 = vld [vmem:[%s1 + $0x278] sm:$0xff]
  %v6565 = vld [vmem:[%s1 + $0x280] sm:$0xff]
  %v6566 = vld [vmem:[%s1 + $0x288] sm:$0xff]
  %v6567 = vld [vmem:[%s1 + $0x290] sm:$0xff]
  %v6568 = vld [vmem:[%s1 + $0x298] sm:$0xff]
  %v6569 = vld [vmem:[%s1 + $0x2a0] sm:$0xff]
  %v6570 = vld [vmem:[%s1 + $0x2a8] sm:$0xff]
  %v6571 = vld [vmem:[%s1 + $0x2b0] sm:$0xff]
  %v6572 = vld [vmem:[%s1 + $0x2b8] sm:$0xff]
  %v6573 = vld [vmem:[%s1 + $0x2c0] sm:$0xff]
  %v6574 = vld [vmem:[%s1 + $0x2c8] sm:$0xff]
  %v6575 = vld [vmem:[%s1 + $0x2d0] sm:$0xff]
  %v6576 = vld [vmem:[%s1 + $0x2d8] sm:$0xff]
  %v6577 = vld [vmem:[%s4] sm:$0xff]
  %v6578 = vld [vmem:[%s4 + $0x8] sm:$0xff]
  %v6579 = vld [vmem:[%s4 + $0x10] sm:$0xff]
  %v6580 = vld [vmem:[%s4 + $0x18] sm:$0xff]
  %v6581 = vld [vmem:[%s4 + $0x20] sm:$0xff]
  %v6582 = vld [vmem:[%s4 + $0x28] sm:$0xff]
  %v6583 = vld [vmem:[%s4 + $0x30] sm:$0xff]
  %v6584 = vld [vmem:[%s4 + $0x38] sm:$0xff]
  %6586 = vset.pattern.permute.xlu0 17
  %6587 = vperm.xlu0 %6586, %v6577
  %v6588 = vpop.permute.xlu0 %6587
  %6591 = vset.pattern.permute.xlu0 17
  %6592 = vperm.xlu0 %6591, %v6578
  %v6593 = vpop.permute.xlu0 %6592
  %6596 = vset.pattern.permute.xlu0 17
  %6597 = vperm.xlu0 %6596, %v6579
  %v6598 = vpop.permute.xlu0 %6597
  %6601 = vset.pattern.permute.xlu0 17
  %6602 = vperm.xlu0 %6601, %v6580
  %v6603 = vpop.permute.xlu0 %6602
  %6606 = vset.pattern.permute.xlu0 17
  %6607 = vperm.xlu0 %6606, %v6581
  %v6608 = vpop.permute.xlu0 %6607
  %6611 = vset.pattern.permute.xlu0 17
  %6612 = vperm.xlu0 %6611, %v6582
  %v6613 = vpop.permute.xlu0 %6612
  %6616 = vset.pattern.permute.xlu0 17
  %6617 = vperm.xlu0 %6616, %v6583
  %v6618 = vpop.permute.xlu0 %6617
  %6621 = vset.pattern.permute.xlu0 17
  %6622 = vperm.xlu0 %6621, %v6584
  %v6623 = vpop.permute.xlu0 %6622
  %6625 = vmatprep.subr.mxu0 0.0
  %6626 = vmatpush1.msra.mxu0 %v6544
  %6627 = vmatprep.subr.mxu0 0.0
  %6628 = vmatpush1.msra.mxu0 %v6543
  %6629 = vmatprep.subr.mxu0 0.0
  %6630 = vmatpush1.msra.mxu0 %v6542
  %6631 = vmatprep.subr.mxu0 0.0
  %6632 = vmatpush1.msra.mxu0 %v6541
  %6633 = vmatprep.subr.mxu0 0.0
  %6634 = vmatpush1.msra.mxu0 %v6540
  %6635 = vmatprep.subr.mxu0 0.0
  %6636 = vmatpush1.msra.mxu0 %v6539
  %6637 = vmatprep.subr.mxu0 0.0
  %6638 = vmatpush1.msra.mxu0 %v6538
  %6639 = vmatprep.subr.mxu0 0.0
  %6640 = vmatpush1.msra.mxu0 %v6537
  %6641 = vmatprep.subr.mxu0 0.0
  %6642 = vmatpush1.msra.mxu0 %v6536
  %6643 = vmatprep.subr.mxu0 0.0
  %6644 = vmatpush1.msra.mxu0 %v6535
  %6645 = vmatprep.subr.mxu0 0.0
  %6646 = vmatpush1.msra.mxu0 %v6534
  %6647 = vmatprep.subr.mxu0 0.0
  %6648 = vmatpush1.msra.mxu0 %v6533
  %6649 = vmatprep.subr.mxu0 0.0
  %6650 = vmatpush1.msra.mxu0 %v6532
  %6651 = vmatprep.subr.mxu0 0.0
  %6652 = vmatpush1.msra.mxu0 %v6531
  %6653 = vmatprep.subr.mxu0 0.0
  %6654 = vmatpush1.msra.mxu0 %v6530
  %6655 = vmatprep.subr.mxu0 0.0
  %6656 = vmatpush1.msra.mxu0 %v6529
  %6657 = vmatprep.subr.mxu0 0.0
  %6658 = vmatpush2.msra.mxu0 %v6560
  %6659 = vmatprep.subr.mxu0 0.0
  %6660 = vmatpush2.msra.mxu0 %v6559
  %6661 = vmatprep.subr.mxu0 0.0
  %6662 = vmatpush2.msra.mxu0 %v6558
  %6663 = vmatprep.subr.mxu0 0.0
  %6664 = vmatpush2.msra.mxu0 %v6557
  %6665 = vmatprep.subr.mxu0 0.0
  %6666 = vmatpush2.msra.mxu0 %v6556
  %6667 = vmatprep.subr.mxu0 0.0
  %6668 = vmatpush2.msra.mxu0 %v6555
  %6669 = vmatprep.subr.mxu0 0.0
  %6670 = vmatpush2.msra.mxu0 %v6554
  %6671 = vmatprep.subr.mxu0 0.0
  %6672 = vmatpush2.msra.mxu0 %v6553
  %6673 = vmatprep.subr.mxu0 0.0
  %6674 = vmatpush2.msra.mxu0 %v6552
  %6675 = vmatprep.subr.mxu0 0.0
  %6676 = vmatpush2.msra.mxu0 %v6551
  %6677 = vmatprep.subr.mxu0 0.0
  %6678 = vmatpush2.msra.mxu0 %v6550
  %6679 = vmatprep.subr.mxu0 0.0
  %6680 = vmatpush2.msra.mxu0 %v6549
  %6681 = vmatprep.subr.mxu0 0.0
  %6682 = vmatpush2.msra.mxu0 %v6548
  %6683 = vmatprep.subr.mxu0 0.0
  %6684 = vmatpush2.msra.mxu0 %v6547
  %6685 = vmatprep.subr.mxu0 0.0
  %6686 = vmatpush2.msra.mxu0 %v6546
  %6687 = vmatprep.subr.mxu0 0.0
  %6688 = vmatpush2.msra.mxu0 %v6545
  %6689 = vmatprep.mubr.f32.mxu0 %v6562
  %6690 = vmatmul.mubr.f32.gmra.mxu0 %v6561
  %v6691 = vpop.f32.mrf.mxu0
  %v6692 = vadd.f32 %v6588, %v6691
  %v6693 = vpop.f32.mrf.mxu0
  %6694 = vmatprep.mubr.f32.mxu0 %v6564
  %6695 = vmatmul.mubr.f32.gmra.mxu0 %v6563
  %v6696 = vpop.f32.mrf.mxu0
  %v6697 = vadd.f32 %v6593, %v6696
  %v6698 = vpop.f32.mrf.mxu0
  %6699 = vmatprep.mubr.f32.mxu0 %v6566
  %6700 = vmatmul.mubr.f32.gmra.mxu0 %v6565
  %v6701 = vpop.f32.mrf.mxu0
  %v6702 = vadd.f32 %v6598, %v6701
  %v6703 = vpop.f32.mrf.mxu0
  %6704 = vmatprep.mubr.f32.mxu0 %v6568
  %6705 = vmatmul.mubr.f32.gmra.mxu0 %v6567
  %v6706 = vpop.f32.mrf.mxu0
  %v6707 = vadd.f32 %v6603, %v6706
  %v6708 = vpop.f32.mrf.mxu0
  %6709 = vmatprep.mubr.f32.mxu0 %v6570
  %6710 = vmatmul.mubr.f32.gmra.mxu0 %v6569
  %v6711 = vpop.f32.mrf.mxu0
  %v6712 = vadd.f32 %v6608, %v6711
  %v6713 = vpop.f32.mrf.mxu0
  %6714 = vmatprep.mubr.f32.mxu0 %v6572
  %6715 = vmatmul.mubr.f32.gmra.mxu0 %v6571
  %v6716 = vpop.f32.mrf.mxu0
  %v6717 = vadd.f32 %v6613, %v6716
  %v6718 = vpop.f32.mrf.mxu0
  %6719 = vmatprep.mubr.f32.mxu0 %v6574
  %6720 = vmatmul.mubr.f32.gmra.mxu0 %v6573
  %v6721 = vpop.f32.mrf.mxu0
  %v6722 = vadd.f32 %v6618, %v6721
  %v6723 = vpop.f32.mrf.mxu0
  %6724 = vmatprep.mubr.f32.mxu0 %v6576
  %6725 = vmatmul.mubr.f32.gmra.mxu0 %v6575
  %v6726 = vpop.f32.mrf.mxu0
  %v6727 = vadd.f32 %v6623, %v6726
  %v6728 = vpop.f32.mrf.mxu0
  %6729 = vdwg.mxu0
  %6730 = vst [vmem:[%s5] sm:$0xff] %v6692
  %6731 = vst [vmem:[%s5 + $0x8] sm:$0xff] %v6697
  %6732 = vst [vmem:[%s5 + $0x10] sm:$0xff] %v6702
  %6733 = vst [vmem:[%s5 + $0x18] sm:$0xff] %v6707
  %6734 = vst [vmem:[%s5 + $0x20] sm:$0xff] %v6712
  %6735 = vst [vmem:[%s5 + $0x28] sm:$0xff] %v6717
  %6736 = vst [vmem:[%s5 + $0x30] sm:$0xff] %v6722
  %6737 = vst [vmem:[%s5 + $0x38] sm:$0xff] %v6727
  // Predicated region
  $region22: #{autoencoder_forward.1} parent=0 // pred_check
    _
  $region23: #{autoencoder_forward.1} parent=0 // pred_check_branch
    %6739 = sbr.rel (0) target = $region25
  $region24: #{autoencoder_forward.1} parent=0 // pred_region
    _
  $region25: #{autoencoder_forward.1} parent=0 // pred_fallthru
    _
  // Predicated region
  $region26: #{autoencoder_forward.1} parent=0 // pred_check
    _
  $region27: #{autoencoder_forward.1} parent=0 // pred_check_branch
    %6741 = sbr.rel (0) target = $region29
  $region28: #{autoencoder_forward.1} parent=0 // pred_region
    _
  $region29: #{autoencoder_forward.1} parent=0 // pred_fallthru
    _

</llo_original>
